<compile_context>
chip_gen: v7x
topology: tpu7x:2x2x1
jax: 0.10.0
libtpu: 0.0.40
codegen_flags: <defaults>
</compile_context>

<pallas_src>
import functools

import jax
import jax.numpy as jnp
from jax.experimental import pallas as pl
from jax.experimental.pallas import tpu as pltpu

_BOTTLENECK_EXPANSION = 4
_BN_EPS = 1e-5
# Below v7x's 64 MiB physical VMEM, above v5e/v6e scoped defaults.
_VMEM_LIMIT_BYTES = 48 * 1024 * 1024

_TM = 512          # M tile for the 1x1-conv matmuls
_TN = 256          # Cout tile (matches 2x256^2 MXU on v6e/v7x; fine on v5e)
_CONV_ROWS = 512   # target (rows * Wc) matmul-M rows per 3x3-conv grid step


def _round_up(x, m):
    return (x + m - 1) // m * m


def _clamp_tile(dim, pref):
    # Full dim is always a legal block extent; otherwise use the fixed
    # (8,128)-aligned preferred tile and let Pallas mask the edge block.
    return dim if dim <= pref else pref


# ----------------------------------------------------------------------------
# Fused 1x1 conv (+BN folded into weights) kernels:
#   out = act( bf16(X) @ Wscaled + bias (+ residual) )
# ----------------------------------------------------------------------------
def _mm_bias_kernel(x_ref, w_ref, b_ref, o_ref, *, apply_relu):
    x = x_ref[...].astype(jnp.bfloat16)          # fused f32->bf16 cast
    acc = jnp.dot(x, w_ref[...], preferred_element_type=jnp.float32)
    y = acc + b_ref[...]
    if apply_relu:
        y = jnp.maximum(y, 0.0)
    o_ref[...] = y.astype(o_ref.dtype)


def _mm_bias_res_kernel(x_ref, w_ref, b_ref, r_ref, o_ref, *, apply_relu):
    x = x_ref[...].astype(jnp.bfloat16)
    acc = jnp.dot(x, w_ref[...], preferred_element_type=jnp.float32)
    y = acc + b_ref[...] + r_ref[...].astype(jnp.float32)
    if apply_relu:
        y = jnp.maximum(y, 0.0)
    o_ref[...] = y.astype(o_ref.dtype)


def fused_matmul_bn(x2d, w, bias, residual=None, *, relu=True,
                    out_dtype=jnp.float32):
    """out = act(x2d @ w + bias (+ residual)) for a 1x1 conv with folded BN.

    x2d: (M, K) f32 or bf16 (cast to bf16 in-kernel), w: (K, Cout) bf16 with
    the BN scale folded in, bias: (1, Cout) f32, residual: (M, Cout).
    Tiled over (M, Cout) with cdiv grids (edge blocks masked); K kept whole.
    """
    M, K = x2d.shape
    Cout = w.shape[1]
    tm = _clamp_tile(M, _TM)
    tn = _clamp_tile(Cout, _TN)
    grid = (pl.cdiv(M, tm), pl.cdiv(Cout, tn))

    in_specs = [
        pl.BlockSpec((tm, K), lambda i, j: (i, 0)),
        pl.BlockSpec((K, tn), lambda i, j: (0, j)),
        pl.BlockSpec((1, tn), lambda i, j: (0, j)),
    ]
    args = [x2d, w, bias]
    bytes_accessed = (M * K * x2d.dtype.itemsize
                      + grid[0] * K * Cout * w.dtype.itemsize   # weights re-streamed per M tile
                      + Cout * 4
                      + M * Cout * jnp.dtype(out_dtype).itemsize)
    if residual is not None:
        in_specs.append(pl.BlockSpec((tm, tn), lambda i, j: (i, j)))
        args.append(residual)
        bytes_accessed += M * Cout * residual.dtype.itemsize
        kernel = functools.partial(_mm_bias_res_kernel, apply_relu=relu)
    else:
        kernel = functools.partial(_mm_bias_kernel, apply_relu=relu)

    return pl.pallas_call(
        kernel,
        out_shape=jax.ShapeDtypeStruct((M, Cout), out_dtype),
        grid=grid,
        in_specs=in_specs,
        out_specs=pl.BlockSpec((tm, tn), lambda i, j: (i, j)),
        compiler_params=pltpu.CompilerParams(
            dimension_semantics=("parallel", "parallel"),
            vmem_limit_bytes=_VMEM_LIMIT_BYTES),
        cost_estimate=pl.CostEstimate(
            flops=int(2 * M * K * Cout), transcendentals=0,
            bytes_accessed=int(bytes_accessed)),
    )(*args)


# ----------------------------------------------------------------------------
# Fused dilated 3x3 conv + BN + ReLU: 9 sublane-aligned shifted MXU taps into
# a VMEM scratch accumulator; compact NHWC output written directly.
# ----------------------------------------------------------------------------
def _conv3x3_bn_kernel(x_ref, w_ref, b_ref, o_ref, acc_ref, *,
                       rows, Wc, W, dilation):
    # x_ref : (3, Lp, C) bf16 -- kx-shifted, column-compacted padded planes,
    #         rows flattened (Hp, Wc) -> Lp; Wc % 8 == 0 so every tap start
    #         below is sublane (8-) aligned -> no relayout copies.
    # w_ref : (9, C, tn) bf16 (BN scale folded), b_ref: (1, tn) f32.
    # o_ref : (rows, W, tn) compact output block; acc_ref: (rows*Wc, tn) f32.
    r = pl.program_id(2)
    base = r * (rows * Wc)
    first = True
    for ky in range(3):
        start = pl.multiple_of(base + ky * dilation * Wc, 8)
        for kx in range(3):
            xs = x_ref[kx, pl.ds(start, rows * Wc), :]
            contrib = jnp.dot(xs, w_ref[ky * 3 + kx],
                              preferred_element_type=jnp.float32)
            if first:
                acc_ref[...] = contrib
                first = False
            else:
                acc_ref[...] += contrib
    y = jnp.maximum(acc_ref[...] + b_ref[...], 0.0)
    y = y.reshape(rows, Wc, -1)[:, :W, :]        # no-op when W % 8 == 0
    o_ref[...] = y.astype(o_ref.dtype)


def conv3x3_bn_relu(h_nhwc, w9, bias, *, dilation, out_dtype=jnp.bfloat16):
    """Dilated 3x3 conv (stride 1, padding == dilation as in the module) with
    folded BN + ReLU.  No im2col; the wrapper pre-builds three kx-shifted,
    column-compacted planes so the kernel only ever takes 8-aligned row-shift
    slices of a resident plane."""
    N, H, W, C = h_nhwc.shape
    Cout = w9.shape[-1]
    d = dilation

    Wc = _round_up(W, 8)                      # aligned output/plane width
    rows = max(1, min(H, _CONV_ROWS // Wc))   # output rows per grid step
    n_rb = -(-H // rows)
    Hp = n_rb * rows + 2 * d                  # guard rows for the last block
    Lp = Hp * Wc

    # Zero padding: conv padding (== dilation) + alignment/guard padding.
    xp = jnp.pad(h_nhwc.astype(jnp.bfloat16),
                 ((0, 0), (d, Hp - H - d), (d, Wc + d - W), (0, 0)))
    # Three kx-shifted planes, each compacted to Wc columns, rows flattened.
    planes = jnp.stack([xp[:, :, kx * d: kx * d + Wc, :] for kx in range(3)],
                       axis=1).reshape(N, 3, Lp, C)

    tn = _clamp_tile(Cout, _TN)
    n_cb = pl.cdiv(Cout, tn)
    # Plane is invariant over (j, r); weights invariant over r (innermost).
    grid = (N, n_cb, n_rb)

    kernel = functools.partial(_conv3x3_bn_kernel, rows=rows, Wc=Wc, W=W,
                               dilation=d)
    flops = 2 * N * (n_rb * rows) * Wc * 9 * C * Cout
    bytes_accessed = (N * 3 * Lp * C * 2 + N * 9 * C * Cout * 2 + Cout * 4
                      + N * H * W * Cout * jnp.dtype(out_dtype).itemsize)

    return pl.pallas_call(
        kernel,
        out_shape=jax.ShapeDtypeStruct((N, H, W, Cout), out_dtype),
        grid=grid,
        in_specs=[
            # Full per-image plane; changes only across N -> single-buffered.
            pl.BlockSpec((None, 3, Lp, C), lambda n, j, r: (n, 0, 0, 0),
                         pipeline_mode=pl.Buffered(1)),
            pl.BlockSpec((9, C, tn), lambda n, j, r: (0, 0, j)),
            pl.BlockSpec((1, tn), lambda n, j, r: (0, j)),
        ],
        out_specs=pl.BlockSpec((None, rows, W, tn),
                               lambda n, j, r: (n, r, 0, j)),
        scratch_shapes=[pltpu.VMEM((rows * Wc, tn), jnp.float32)],
        compiler_params=pltpu.CompilerParams(
            dimension_semantics=("parallel", "parallel", "parallel"),
            vmem_limit_bytes=_VMEM_LIMIT_BYTES),
        cost_estimate=pl.CostEstimate(
            flops=int(flops), transcendentals=0,
            bytes_accessed=int(bytes_accessed)),
    )(planes, w9, bias)


# ----------------------------------------------------------------------------
# _Bottleneck forward
# ----------------------------------------------------------------------------
def bottleneck_forward(x_nchw, params, *, stride, dilation, downsample,
                       out_dtype=jnp.float32):
    # TODO(synk): when chaining blocks, keep activations NHWC bf16 end-to-end
    #             (drop the entry/exit transposes and pass out_dtype=bfloat16).
    x = jnp.transpose(x_nchw, (0, 2, 3, 1))            # NCHW -> NHWC
    N, H, W, Cin = x.shape

    xs = x[:, ::stride, ::stride, :]                   # stride of the 1x1 convs
    Ho, Wo = xs.shape[1], xs.shape[2]
    mid = params["reduce_w"].shape[1]
    out_ch = params["increase_w"].shape[1]
    xs2d = xs.reshape(-1, Cin)                         # stays f32; bf16 cast in-kernel

    # reduce: 1x1 conv (stride) + BN + ReLU -> bf16 activations
    h = fused_matmul_bn(xs2d, params["reduce_w"], params["reduce_bias"],
                        relu=True, out_dtype=jnp.bfloat16)
    h = h.reshape(N, Ho, Wo, mid)

    # conv3x3: dilated 3x3 conv + BN + ReLU (compact NHWC output)
    h = conv3x3_bn_relu(h, params["conv3x3_w"], params["conv3x3_bias"],
                        dilation=dilation, out_dtype=jnp.bfloat16)

    # shortcut branch
    if downsample:
        sc = fused_matmul_bn(xs2d, params["shortcut_w"], params["shortcut_bias"],
                             relu=False, out_dtype=jnp.bfloat16)
    else:
        assert stride == 1 and Cin == out_ch, \
            "identity shortcut requires stride == 1 and Cin == out_ch"
        sc = xs2d                                      # identity (cast in-kernel)

    # increase: 1x1 conv + BN, fused with residual add + final ReLU
    out = fused_matmul_bn(h.reshape(-1, mid), params["increase_w"],
                          params["increase_bias"], residual=sc, relu=True,
                          out_dtype=out_dtype)
    out = out.reshape(N, Ho, Wo, out_ch)
    return jnp.transpose(out, (0, 3, 1, 2))            # NHWC -> NCHW


# ----------------------------------------------------------------------------
# Reference (pure f32 lax convs + unfused BN) for the correctness check
# ----------------------------------------------------------------------------
def _ref_conv(x_nhwc, w_oihw, stride, padding, dilation):
    return jax.lax.conv_general_dilated(
        x_nhwc, jnp.transpose(w_oihw, (2, 3, 1, 0)),
        window_strides=(stride, stride),
        padding=[(padding, padding), (padding, padding)],
        rhs_dilation=(dilation, dilation),
        dimension_numbers=("NHWC", "HWIO", "NHWC"))


def reference_forward(x_nchw, raw, *, stride, dilation, downsample):
    x = jnp.transpose(x_nchw, (0, 2, 3, 1))

    def cbr(x, w, g, b, m, v, s, p, d, relu):
        y = _ref_conv(x, w, s, p, d)
        scale = g / jnp.sqrt(v + _BN_EPS)
        y = y * scale + (b - m * scale)
        return jnp.maximum(y, 0.0) if relu else y

    h = cbr(x, raw["reduce_w"], *raw["reduce_bn"], stride, 0, 1, True)
    h = cbr(h, raw["conv3x3_w"], *raw["conv3x3_bn"], 1, dilation, dilation, True)
    h = cbr(h, raw["increase_w"], *raw["increase_bn"], 1, 0, 1, False)
    sc = (cbr(x, raw["shortcut_w"], *raw["shortcut_bn"], stride, 0, 1, False)
          if downsample else x)
    out = jnp.maximum(h + sc, 0.0)
    return jnp.transpose(out, (0, 3, 1, 2))


# ----------------------------------------------------------------------------
# Deterministic synthetic parameter construction (BN folded into weights)
# ----------------------------------------------------------------------------
def _fold_bn(gamma, beta, mean, var):
    scale = gamma / jnp.sqrt(var + _BN_EPS)
    bias = beta - mean * scale
    return scale, bias


def _w1x1_to_mat(w_oihw):
    # (Cout, Cin, 1, 1) -> (Cin, Cout)
    return jnp.transpose(w_oihw[:, :, 0, 0], (1, 0))


def _w3x3_to_taps(w_oihw):
    # (Cout, Cin, 3, 3) -> (ky, kx, Cin, Cout) -> (9, Cin, Cout)
    w = jnp.transpose(w_oihw, (2, 3, 1, 0))
    return w.reshape(9, w.shape[2], w.shape[3])


def make_params(key, in_ch, out_ch):
    mid = out_ch // _BOTTLENECK_EXPANSION
    ks = jax.random.split(key, 8)

    def bn(k, c):
        k1, k2, k3, k4 = jax.random.split(k, 4)
        gamma = 1.0 + 0.1 * jax.random.normal(k1, (c,), jnp.float32)
        beta = 0.1 * jax.random.normal(k2, (c,), jnp.float32)
        mean = 0.1 * jax.random.normal(k3, (c,), jnp.float32)
        var = jnp.abs(1.0 + 0.1 * jax.random.normal(k4, (c,), jnp.float32))
        return gamma, beta, mean, var

    raw = {
        "reduce_w":   0.2 * jax.random.normal(ks[0], (mid, in_ch, 1, 1), jnp.float32),
        "conv3x3_w":  0.2 * jax.random.normal(ks[1], (mid, mid, 3, 3), jnp.float32),
        "increase_w": 0.2 * jax.random.normal(ks[2], (out_ch, mid, 1, 1), jnp.float32),
        "shortcut_w": 0.2 * jax.random.normal(ks[3], (out_ch, in_ch, 1, 1), jnp.float32),
        "reduce_bn":   bn(ks[4], mid),
        "conv3x3_bn":  bn(ks[5], mid),
        "increase_bn": bn(ks[6], out_ch),
        "shortcut_bn": bn(ks[7], out_ch),
    }

    params = {}
    for name, to_mat in (("reduce", _w1x1_to_mat), ("increase", _w1x1_to_mat),
                         ("shortcut", _w1x1_to_mat), ("conv3x3", _w3x3_to_taps)):
        scale, bias = _fold_bn(*raw[name + "_bn"])
        wmat = to_mat(raw[name + "_w"])
        # Fold the BN scale into the weight (last axis = Cout); keep a single
        # f32 bias vector; matmul operands are bf16 (f32 accumulation).
        params[name + "_w"] = (wmat * scale).astype(jnp.bfloat16)
        params[name + "_bias"] = bias.reshape(1, -1).astype(jnp.float32)
    return params, raw


if __name__ == "__main__":
    key = jax.random.PRNGKey(0)
    k_x, k_p = jax.random.split(key)

    # Small shapes consistent with the module: batch=2, in_ch=4, out_ch=16,
    # spatial=16x16, stride=1, dilation=2, downsample=True.
    N, in_ch, H, W = 2, 4, 16, 16
    out_ch, stride, dilation, downsample = 16, 1, 2, True

    x = jax.random.normal(k_x, (N, in_ch, H, W), jnp.float32)  # NCHW like PyTorch
    params, raw = make_params(k_p, in_ch, out_ch)

    fwd = jax.jit(functools.partial(bottleneck_forward, stride=stride,
                                    dilation=dilation, downsample=downsample))
    out = jax.block_until_ready(fwd(x, params))

    ref = jax.block_until_ready(
        reference_forward(x, raw, stride=stride, dilation=dilation,
                          downsample=downsample))

    assert out.shape == (N, out_ch, H, W), out.shape
    # bf16 matmul operands / activations vs. full-f32 reference -> loose tol.
    max_err = float(jnp.max(jnp.abs(out - ref)))
    assert jnp.allclose(out, ref, atol=5e-2, rtol=5e-2), max_err

    print("KERNEL_OK")
</pallas_src>

<mosaic_0001>
module attributes {stable_mosaic.version = 11 : i64} {
  func.func @_mm_bias_kernel(%arg0: i32, %arg1: i32, %arg2: memref<512x4xf32, #tpu.memory_space<vmem>>, %arg3: memref<4x4xbf16, #tpu.memory_space<vmem>>, %arg4: memref<1x4xf32, #tpu.memory_space<vmem>>, %arg5: memref<512x4xbf16, #tpu.memory_space<vmem>>) attributes {dimension_semantics = [#tpu.dimension_semantics<parallel>, #tpu.dimension_semantics<parallel>], iteration_bounds = array<i64: 1, 1>, scalar_prefetch = 0 : i64, scratch_operands = 0 : i64, tpu.core_type = #tpu.core_type<tc>, window_params = [{transform_indices = @transform_0, window_bounds = array<i64: 512, 4>}, {transform_indices = @transform_1, window_bounds = array<i64: 4, 4>}, {transform_indices = @transform_2, window_bounds = array<i64: 1, 4>}, {transform_indices = @transform_3, window_bounds = array<i64: 512, 4>}]} {
    %c0 = arith.constant 0 : index
    %c0_0 = arith.constant 0 : index
    %0 = vector.load %arg2[%c0, %c0_0] : memref<512x4xf32, #tpu.memory_space<vmem>>, vector<512x4xf32>
    %1 = arith.truncf %0 : vector<512x4xf32> to vector<512x4xbf16>
    %c0_1 = arith.constant 0 : index
    %c0_2 = arith.constant 0 : index
    %2 = vector.load %arg3[%c0_1, %c0_2] : memref<4x4xbf16, #tpu.memory_space<vmem>>, vector<4x4xbf16>
    %cst = arith.constant dense<0.000000e+00> : vector<512x4xf32>
    %3 = tpu.matmul %1, %2, %cst {dimension_numbers = #tpu.dot_dimension_numbers<[1], [0], [0], [1], [0, 0, 1, 1], [], []>} : vector<512x4xbf16>, vector<4x4xbf16>, vector<512x4xf32> -> vector<512x4xf32>
    %c0_3 = arith.constant 0 : index
    %c0_4 = arith.constant 0 : index
    %4 = vector.load %arg4[%c0_3, %c0_4] : memref<1x4xf32, #tpu.memory_space<vmem>>, vector<1x4xf32>
    %5 = vector.broadcast %4 : vector<1x4xf32> to vector<512x4xf32>
    %6 = arith.addf %3, %5 : vector<512x4xf32>
    %cst_5 = arith.constant 0.000000e+00 : f32
    %7 = vector.broadcast %cst_5 : f32 to vector<512x4xf32>
    %8 = arith.maximumf %6, %7 : vector<512x4xf32>
    %9 = arith.truncf %8 : vector<512x4xf32> to vector<512x4xbf16>
    %c0_6 = arith.constant 0 : index
    %c0_7 = arith.constant 0 : index
    %10 = vector.load %arg5[%c0_6, %c0_7] : memref<512x4xbf16, #tpu.memory_space<vmem>>, vector<512x4xbf16>
    tpu.vector_store %arg5[%c0_6, %c0_7], %9 {strides = array<i32>} : memref<512x4xbf16, #tpu.memory_space<vmem>>, vector<512x4xbf16>,
    return
  }
  func.func @transform_0(%arg0: i32, %arg1: i32) -> (i32, i32) {
    %c0_i32 = arith.constant 0 : i32
    %c0_i32_0 = arith.constant 0 : i32
    return %arg0, %c0_i32 : i32, i32
  }
  func.func @transform_1(%arg0: i32, %arg1: i32) -> (i32, i32) {
    %c0_i32 = arith.constant 0 : i32
    %c0_i32_0 = arith.constant 0 : i32
    return %c0_i32, %arg1 : i32, i32
  }
  func.func @transform_2(%arg0: i32, %arg1: i32) -> (i32, i32) {
    %c0_i32 = arith.constant 0 : i32
    %c0_i32_0 = arith.constant 0 : i32
    return %c0_i32, %arg1 : i32, i32
  }
  func.func @transform_3(%arg0: i32, %arg1: i32) -> (i32, i32) {
    %c0_i32 = arith.constant 0 : i32
    return %arg0, %arg1 : i32, i32
  }
}

module attributes {stable_mosaic.version = 11 : i64} {
  func.func @_mm_bias_kernel(%arg0: i32, %arg1: i32, %arg2: memref<512x4xf32, #tpu.memory_space<vmem>>, %arg3: memref<4x16xbf16, #tpu.memory_space<vmem>>, %arg4: memref<1x16xf32, #tpu.memory_space<vmem>>, %arg5: memref<512x16xbf16, #tpu.memory_space<vmem>>) attributes {dimension_semantics = [#tpu.dimension_semantics<parallel>, #tpu.dimension_semantics<parallel>], iteration_bounds = array<i64: 1, 1>, scalar_prefetch = 0 : i64, scratch_operands = 0 : i64, tpu.core_type = #tpu.core_type<tc>, window_params = [{transform_indices = @transform_0, window_bounds = array<i64: 512, 4>}, {transform_indices = @transform_1, window_bounds = array<i64: 4, 16>}, {transform_indices = @transform_2, window_bounds = array<i64: 1, 16>}, {transform_indices = @transform_3, window_bounds = array<i64: 512, 16>}]} {
    %c0 = arith.constant 0 : index
    %c0_0 = arith.constant 0 : index
    %0 = vector.load %arg2[%c0, %c0_0] : memref<512x4xf32, #tpu.memory_space<vmem>>, vector<512x4xf32>
    %1 = arith.truncf %0 : vector<512x4xf32> to vector<512x4xbf16>
    %c0_1 = arith.constant 0 : index
    %c0_2 = arith.constant 0 : index
    %2 = vector.load %arg3[%c0_1, %c0_2] : memref<4x16xbf16, #tpu.memory_space<vmem>>, vector<4x16xbf16>
    %cst = arith.constant dense<0.000000e+00> : vector<512x16xf32>
    %3 = tpu.matmul %1, %2, %cst {dimension_numbers = #tpu.dot_dimension_numbers<[1], [0], [0], [1], [0, 0, 1, 1], [], []>} : vector<512x4xbf16>, vector<4x16xbf16>, vector<512x16xf32> -> vector<512x16xf32>
    %c0_3 = arith.constant 0 : index
    %c0_4 = arith.constant 0 : index
    %4 = vector.load %arg4[%c0_3, %c0_4] : memref<1x16xf32, #tpu.memory_space<vmem>>, vector<1x16xf32>
    %5 = vector.broadcast %4 : vector<1x16xf32> to vector<512x16xf32>
    %6 = arith.addf %3, %5 : vector<512x16xf32>
    %7 = arith.truncf %6 : vector<512x16xf32> to vector<512x16xbf16>
    %c0_5 = arith.constant 0 : index
    %c0_6 = arith.constant 0 : index
    %8 = vector.load %arg5[%c0_5, %c0_6] : memref<512x16xbf16, #tpu.memory_space<vmem>>, vector<512x16xbf16>
    tpu.vector_store %arg5[%c0_5, %c0_6], %7 {strides = array<i32>} : memref<512x16xbf16, #tpu.memory_space<vmem>>, vector<512x16xbf16>,
    return
  }
  func.func @transform_0(%arg0: i32, %arg1: i32) -> (i32, i32) {
    %c0_i32 = arith.constant 0 : i32
    %c0_i32_0 = arith.constant 0 : i32
    return %arg0, %c0_i32 : i32, i32
  }
  func.func @transform_1(%arg0: i32, %arg1: i32) -> (i32, i32) {
    %c0_i32 = arith.constant 0 : i32
    %c0_i32_0 = arith.constant 0 : i32
    return %c0_i32, %arg1 : i32, i32
  }
  func.func @transform_2(%arg0: i32, %arg1: i32) -> (i32, i32) {
    %c0_i32 = arith.constant 0 : i32
    %c0_i32_0 = arith.constant 0 : i32
    return %c0_i32, %arg1 : i32, i32
  }
  func.func @transform_3(%arg0: i32, %arg1: i32) -> (i32, i32) {
    %c0_i32 = arith.constant 0 : i32
    return %arg0, %arg1 : i32, i32
  }
}

module attributes {stable_mosaic.version = 11 : i64} {
  func.func @_conv3x3_bn_kernel(%arg0: i32, %arg1: i32, %arg2: i32, %arg3: memref<1x3x320x4xbf16, #tpu.memory_space<vmem>>, %arg4: memref<9x4x4xbf16, #tpu.memory_space<vmem>>, %arg5: memref<1x4xf32, #tpu.memory_space<vmem>>, %arg6: memref<1x16x16x4xbf16, #tpu.memory_space<vmem>>, %arg7: memref<256x4xf32, #tpu.memory_space<vmem>>) attributes {dimension_semantics = [#tpu.dimension_semantics<parallel>, #tpu.dimension_semantics<parallel>, #tpu.dimension_semantics<parallel>], iteration_bounds = array<i64: 2, 1, 1>, scalar_prefetch = 0 : i64, scratch_operands = 1 : i64, tpu.core_type = #tpu.core_type<tc>, window_params = [{pipeline_mode = #tpu.pipeline_mode<synchronous>, transform_indices = @transform_0, window_bounds = array<i64: 1, 3, 320, 4>}, {transform_indices = @transform_1, window_bounds = array<i64: 9, 4, 4>}, {transform_indices = @transform_2, window_bounds = array<i64: 1, 4>}, {transform_indices = @transform_3, window_bounds = array<i64: 1, 16, 16, 4>}]} {
    %c256_i32 = arith.constant 256 : i32
    %0 = arith.muli %arg2, %c256_i32 : i32
    %c0_i32 = arith.constant 0 : i32
    %1 = arith.addi %0, %c0_i32 : i32
    %2 = tpu.assume_multiple %1, 8 : i32
    %c0 = arith.constant 0 : index
    %c0_0 = arith.constant 0 : index
    %3 = arith.index_cast %2 : i32 to index
    %c0_1 = arith.constant 0 : index
    %4 = vector.load %arg3[%c0, %c0_0, %3, %c0_1] : memref<1x3x320x4xbf16, #tpu.memory_space<vmem>>, vector<1x1x256x4xbf16>
    %5 = vector.shape_cast %4 : vector<1x1x256x4xbf16> to vector<256x4xbf16>
    %c0_2 = arith.constant 0 : index
    %c0_3 = arith.constant 0 : index
    %c0_4 = arith.constant 0 : index
    %6 = vector.load %arg4[%c0_2, %c0_3, %c0_4] : memref<9x4x4xbf16, #tpu.memory_space<vmem>>, vector<1x4x4xbf16>
    %7 = vector.shape_cast %6 : vector<1x4x4xbf16> to vector<4x4xbf16>
    %cst = arith.constant dense<0.000000e+00> : vector<256x4xf32>
    %8 = tpu.matmul %5, %7, %cst {dimension_numbers = #tpu.dot_dimension_numbers<[1], [0], [0], [1], [0, 0, 1, 1], [], []>} : vector<256x4xbf16>, vector<4x4xbf16>, vector<256x4xf32> -> vector<256x4xf32>
    %c0_5 = arith.constant 0 : index
    %c0_6 = arith.constant 0 : index
    %9 = vector.load %arg7[%c0_5, %c0_6] : memref<256x4xf32, #tpu.memory_space<vmem>>, vector<256x4xf32>
    tpu.vector_store %arg7[%c0_5, %c0_6], %8 {strides = array<i32>} : memref<256x4xf32, #tpu.memory_space<vmem>>, vector<256x4xf32>,
    %c0_7 = arith.constant 0 : index
    %c1 = arith.constant 1 : index
    %10 = arith.index_cast %2 : i32 to index
    %c0_8 = arith.constant 0 : index
    %11 = vector.load %arg3[%c0_7, %c1, %10, %c0_8] : memref<1x3x320x4xbf16, #tpu.memory_space<vmem>>, vector<1x1x256x4xbf16>
    %12 = vector.shape_cast %11 : vector<1x1x256x4xbf16> to vector<256x4xbf16>
    %c1_9 = arith.constant 1 : index
    %c0_10 = arith.constant 0 : index
    %c0_11 = arith.constant 0 : index
    %13 = vector.load %arg4[%c1_9, %c0_10, %c0_11] : memref<9x4x4xbf16, #tpu.memory_space<vmem>>, vector<1x4x4xbf16>
    %14 = vector.shape_cast %13 : vector<1x4x4xbf16> to vector<4x4xbf16>
    %cst_12 = arith.constant dense<0.000000e+00> : vector<256x4xf32>
    %15 = tpu.matmul %12, %14, %cst_12 {dimension_numbers = #tpu.dot_dimension_numbers<[1], [0], [0], [1], [0, 0, 1, 1], [], []>} : vector<256x4xbf16>, vector<4x4xbf16>, vector<256x4xf32> -> vector<256x4xf32>
    %c0_13 = arith.constant 0 : index
    %c0_14 = arith.constant 0 : index
    %16 = vector.load %arg7[%c0_13, %c0_14] : memref<256x4xf32, #tpu.memory_space<vmem>>, vector<256x4xf32>
    %17 = arith.addf %16, %15 : vector<256x4xf32>
    %c0_15 = arith.constant 0 : index
    %c0_16 = arith.constant 0 : index
    %18 = vector.load %arg7[%c0_15, %c0_16] : memref<256x4xf32, #tpu.memory_space<vmem>>, vector<256x4xf32>
    tpu.vector_store %arg7[%c0_15, %c0_16], %17 {strides = array<i32>} : memref<256x4xf32, #tpu.memory_space<vmem>>, vector<256x4xf32>,
    %c0_17 = arith.constant 0 : index
    %c2 = arith.constant 2 : index
    %19 = arith.index_cast %2 : i32 to index
    %c0_18 = arith.constant 0 : index
    %20 = vector.load %arg3[%c0_17, %c2, %19, %c0_18] : memref<1x3x320x4xbf16, #tpu.memory_space<vmem>>, vector<1x1x256x4xbf16>
    %21 = vector.shape_cast %20 : vector<1x1x256x4xbf16> to vector<256x4xbf16>
    %c2_19 = arith.constant 2 : index
    %c0_20 = arith.constant 0 : index
    %c0_21 = arith.constant 0 : index
    %22 = vector.load %arg4[%c2_19, %c0_20, %c0_21] : memref<9x4x4xbf16, #tpu.memory_space<vmem>>, vector<1x4x4xbf16>
    %23 = vector.shape_cast %22 : vector<1x4x4xbf16> to vector<4x4xbf16>
    %cst_22 = arith.constant dense<0.000000e+00> : vector<256x4xf32>
    %24 = tpu.matmul %21, %23, %cst_22 {dimension_numbers = #tpu.dot_dimension_numbers<[1], [0], [0], [1], [0, 0, 1, 1], [], []>} : vector<256x4xbf16>, vector<4x4xbf16>, vector<256x4xf32> -> vector<256x4xf32>
    %c0_23 = arith.constant 0 : index
    %c0_24 = arith.constant 0 : index
    %25 = vector.load %arg7[%c0_23, %c0_24] : memref<256x4xf32, #tpu.memory_space<vmem>>, vector<256x4xf32>
    %26 = arith.addf %25, %24 : vector<256x4xf32>
    %c0_25 = arith.constant 0 : index
    %c0_26 = arith.constant 0 : index
    %27 = vector.load %arg7[%c0_25, %c0_26] : memref<256x4xf32, #tpu.memory_space<vmem>>, vector<256x4xf32>
    tpu.vector_store %arg7[%c0_25, %c0_26], %26 {strides = array<i32>} : memref<256x4xf32, #tpu.memory_space<vmem>>, vector<256x4xf32>,
    %c32_i32 = arith.constant 32 : i32
    %28 = arith.addi %0, %c32_i32 : i32
    %29 = tpu.assume_multiple %28, 8 : i32
    %c0_27 = arith.constant 0 : index
    %c0_28 = arith.constant 0 : index
    %30 = arith.index_cast %29 : i32 to index
    %c0_29 = arith.constant 0 : index
    %31 = vector.load %arg3[%c0_27, %c0_28, %30, %c0_29] : memref<1x3x320x4xbf16, #tpu.memory_space<vmem>>, vector<1x1x256x4xbf16>
    %32 = vector.shape_cast %31 : vector<1x1x256x4xbf16> to vector<256x4xbf16>
    %c3 = arith.constant 3 : index
    %c0_30 = arith.constant 0 : index
    %c0_31 = arith.constant 0 : index
    %33 = vector.load %arg4[%c3, %c0_30, %c0_31] : memref<9x4x4xbf16, #tpu.memory_space<vmem>>, vector<1x4x4xbf16>
    %34 = vector.shape_cast %33 : vector<1x4x4xbf16> to vector<4x4xbf16>
    %cst_32 = arith.constant dense<0.000000e+00> : vector<256x4xf32>
    %35 = tpu.matmul %32, %34, %cst_32 {dimension_numbers = #tpu.dot_dimension_numbers<[1], [0], [0], [1], [0, 0, 1, 1], [], []>} : vector<256x4xbf16>, vector<4x4xbf16>, vector<256x4xf32> -> vector<256x4xf32>
    %c0_33 = arith.constant 0 : index
    %c0_34 = arith.constant 0 : index
    %36 = vector.load %arg7[%c0_33, %c0_34] : memref<256x4xf32, #tpu.memory_space<vmem>>, vector<256x4xf32>
    %37 = arith.addf %36, %35 : vector<256x4xf32>
    %c0_35 = arith.constant 0 : index
    %c0_36 = arith.constant 0 : index
    %38 = vector.load %arg7[%c0_35, %c0_36] : memref<256x4xf32, #tpu.memory_space<vmem>>, vector<256x4xf32>
    tpu.vector_store %arg7[%c0_35, %c0_36], %37 {strides = array<i32>} : memref<256x4xf32, #tpu.memory_space<vmem>>, vector<256x4xf32>,
    %c0_37 = arith.constant 0 : index
    %c1_38 = arith.constant 1 : index
    %39 = arith.index_cast %29 : i32 to index
    %c0_39 = arith.constant 0 : index
    %40 = vector.load %arg3[%c0_37, %c1_38, %39, %c0_39] : memref<1x3x320x4xbf16, #tpu.memory_space<vmem>>, vector<1x1x256x4xbf16>
    %41 = vector.shape_cast %40 : vector<1x1x256x4xbf16> to vector<256x4xbf16>
    %c4 = arith.constant 4 : index
    %c0_40 = arith.constant 0 : index
    %c0_41 = arith.constant 0 : index
    %42 = vector.load %arg4[%c4, %c0_40, %c0_41] : memref<9x4x4xbf16, #tpu.memory_space<vmem>>, vector<1x4x4xbf16>
    %43 = vector.shape_cast %42 : vector<1x4x4xbf16> to vector<4x4xbf16>
    %cst_42 = arith.constant dense<0.000000e+00> : vector<256x4xf32>
    %44 = tpu.matmul %41, %43, %cst_42 {dimension_numbers = #tpu.dot_dimension_numbers<[1], [0], [0], [1], [0, 0, 1, 1], [], []>} : vector<256x4xbf16>, vector<4x4xbf16>, vector<256x4xf32> -> vector<256x4xf32>
    %c0_43 = arith.constant 0 : index
    %c0_44 = arith.constant 0 : index
    %45 = vector.load %arg7[%c0_43, %c0_44] : memref<256x4xf32, #tpu.memory_space<vmem>>, vector<256x4xf32>
    %46 = arith.addf %45, %44 : vector<256x4xf32>
    %c0_45 = arith.constant 0 : index
    %c0_46 = arith.constant 0 : index
    %47 = vector.load %arg7[%c0_45, %c0_46] : memref<256x4xf32, #tpu.memory_space<vmem>>, vector<256x4xf32>
    tpu.vector_store %arg7[%c0_45, %c0_46], %46 {strides = array<i32>} : memref<256x4xf32, #tpu.memory_space<vmem>>, vector<256x4xf32>,
    %c0_47 = arith.constant 0 : index
    %c2_48 = arith.constant 2 : index
    %48 = arith.index_cast %29 : i32 to index
    %c0_49 = arith.constant 0 : index
    %49 = vector.load %arg3[%c0_47, %c2_48, %48, %c0_49] : memref<1x3x320x4xbf16, #tpu.memory_space<vmem>>, vector<1x1x256x4xbf16>
    %50 = vector.shape_cast %49 : vector<1x1x256x4xbf16> to vector<256x4xbf16>
    %c5 = arith.constant 5 : index
    %c0_50 = arith.constant 0 : index
    %c0_51 = arith.constant 0 : index
    %51 = vector.load %arg4[%c5, %c0_50, %c0_51] : memref<9x4x4xbf16, #tpu.memory_space<vmem>>, vector<1x4x4xbf16>
    %52 = vector.shape_cast %51 : vector<1x4x4xbf16> to vector<4x4xbf16>
    %cst_52 = arith.constant dense<0.000000e+00> : vector<256x4xf32>
    %53 = tpu.matmul %50, %52, %cst_52 {dimension_numbers = #tpu.dot_dimension_numbers<[1], [0], [0], [1], [0, 0, 1, 1], [], []>} : vector<256x4xbf16>, vector<4x4xbf16>, vector<256x4xf32> -> vector<256x4xf32>
    %c0_53 = arith.constant 0 : index
    %c0_54 = arith.constant 0 : index
    %54 = vector.load %arg7[%c0_53, %c0_54] : memref<256x4xf32, #tpu.memory_space<vmem>>, vector<256x4xf32>
    %55 = arith.addf %54, %53 : vector<256x4xf32>
    %c0_55 = arith.constant 0 : index
    %c0_56 = arith.constant 0 : index
    %56 = vector.load %arg7[%c0_55, %c0_56] : memref<256x4xf32, #tpu.memory_space<vmem>>, vector<256x4xf32>
    tpu.vector_store %arg7[%c0_55, %c0_56], %55 {strides = array<i32>} : memref<256x4xf32, #tpu.memory_space<vmem>>, vector<256x4xf32>,
    %c64_i32 = arith.constant 64 : i32
    %57 = arith.addi %0, %c64_i32 : i32
    %58 = tpu.assume_multiple %57, 8 : i32
    %c0_57 = arith.constant 0 : index
    %c0_58 = arith.constant 0 : index
    %59 = arith.index_cast %58 : i32 to index
    %c0_59 = arith.constant 0 : index
    %60 = vector.load %arg3[%c0_57, %c0_58, %59, %c0_59] : memref<1x3x320x4xbf16, #tpu.memory_space<vmem>>, vector<1x1x256x4xbf16>
    %61 = vector.shape_cast %60 : vector<1x1x256x4xbf16> to vector<256x4xbf16>
    %c6 = arith.constant 6 : index
    %c0_60 = arith.constant 0 : index
    %c0_61 = arith.constant 0 : index
    %62 = vector.load %arg4[%c6, %c0_60, %c0_61] : memref<9x4x4xbf16, #tpu.memory_space<vmem>>, vector<1x4x4xbf16>
    %63 = vector.shape_cast %62 : vector<1x4x4xbf16> to vector<4x4xbf16>
    %cst_62 = arith.constant dense<0.000000e+00> : vector<256x4xf32>
    %64 = tpu.matmul %61, %63, %cst_62 {dimension_numbers = #tpu.dot_dimension_numbers<[1], [0], [0], [1], [0, 0, 1, 1], [], []>} : vector<256x4xbf16>, vector<4x4xbf16>, vector<256x4xf32> -> vector<256x4xf32>
    %c0_63 = arith.constant 0 : index
    %c0_64 = arith.constant 0 : index
    %65 = vector.load %arg7[%c0_63, %c0_64] : memref<256x4xf32, #tpu.memory_space<vmem>>, vector<256x4xf32>
    %66 = arith.addf %65, %64 : vector<256x4xf32>
    %c0_65 = arith.constant 0 : index
    %c0_66 = arith.constant 0 : index
    %67 = vector.load %arg7[%c0_65, %c0_66] : memref<256x4xf32, #tpu.memory_space<vmem>>, vector<256x4xf32>
    tpu.vector_store %arg7[%c0_65, %c0_66], %66 {strides = array<i32>} : memref<256x4xf32, #tpu.memory_space<vmem>>, vector<256x4xf32>,
    %c0_67 = arith.constant 0 : index
    %c1_68 = arith.constant 1 : index
    %68 = arith.index_cast %58 : i32 to index
    %c0_69 = arith.constant 0 : index
    %69 = vector.load %arg3[%c0_67, %c1_68, %68, %c0_69] : memref<1x3x320x4xbf16, #tpu.memory_space<vmem>>, vector<1x1x256x4xbf16>
    %70 = vector.shape_cast %69 : vector<1x1x256x4xbf16> to vector<256x4xbf16>
    %c7 = arith.constant 7 : index
    %c0_70 = arith.constant 0 : index
    %c0_71 = arith.constant 0 : index
    %71 = vector.load %arg4[%c7, %c0_70, %c0_71] : memref<9x4x4xbf16, #tpu.memory_space<vmem>>, vector<1x4x4xbf16>
    %72 = vector.shape_cast %71 : vector<1x4x4xbf16> to vector<4x4xbf16>
    %cst_72 = arith.constant dense<0.000000e+00> : vector<256x4xf32>
    %73 = tpu.matmul %70, %72, %cst_72 {dimension_numbers = #tpu.dot_dimension_numbers<[1], [0], [0], [1], [0, 0, 1, 1], [], []>} : vector<256x4xbf16>, vector<4x4xbf16>, vector<256x4xf32> -> vector<256x4xf32>
    %c0_73 = arith.constant 0 : index
    %c0_74 = arith.constant 0 : index
    %74 = vector.load %arg7[%c0_73, %c0_74] : memref<256x4xf32, #tpu.memory_space<vmem>>, vector<256x4xf32>
    %75 = arith.addf %74, %73 : vector<256x4xf32>
    %c0_75 = arith.constant 0 : index
    %c0_76 = arith.constant 0 : index
    %76 = vector.load %arg7[%c0_75, %c0_76] : memref<256x4xf32, #tpu.memory_space<vmem>>, vector<256x4xf32>
    tpu.vector_store %arg7[%c0_75, %c0_76], %75 {strides = array<i32>} : memref<256x4xf32, #tpu.memory_space<vmem>>, vector<256x4xf32>,
    %c0_77 = arith.constant 0 : index
    %c2_78 = arith.constant 2 : index
    %77 = arith.index_cast %58 : i32 to index
    %c0_79 = arith.constant 0 : index
    %78 = vector.load %arg3[%c0_77, %c2_78, %77, %c0_79] : memref<1x3x320x4xbf16, #tpu.memory_space<vmem>>, vector<1x1x256x4xbf16>
    %79 = vector.shape_cast %78 : vector<1x1x256x4xbf16> to vector<256x4xbf16>
    %c8 = arith.constant 8 : index
    %c0_80 = arith.constant 0 : index
    %c0_81 = arith.constant 0 : index
    %80 = vector.load %arg4[%c8, %c0_80, %c0_81] : memref<9x4x4xbf16, #tpu.memory_space<vmem>>, vector<1x4x4xbf16>
    %81 = vector.shape_cast %80 : vector<1x4x4xbf16> to vector<4x4xbf16>
    %cst_82 = arith.constant dense<0.000000e+00> : vector<256x4xf32>
    %82 = tpu.matmul %79, %81, %cst_82 {dimension_numbers = #tpu.dot_dimension_numbers<[1], [0], [0], [1], [0, 0, 1, 1], [], []>} : vector<256x4xbf16>, vector<4x4xbf16>, vector<256x4xf32> -> vector<256x4xf32>
    %c0_83 = arith.constant 0 : index
    %c0_84 = arith.constant 0 : index
    %83 = vector.load %arg7[%c0_83, %c0_84] : memref<256x4xf32, #tpu.memory_space<vmem>>, vector<256x4xf32>
    %84 = arith.addf %83, %82 : vector<256x4xf32>
    %c0_85 = arith.constant 0 : index
    %c0_86 = arith.constant 0 : index
    %85 = vector.load %arg7[%c0_85, %c0_86] : memref<256x4xf32, #tpu.memory_space<vmem>>, vector<256x4xf32>
    tpu.vector_store %arg7[%c0_85, %c0_86], %84 {strides = array<i32>} : memref<256x4xf32, #tpu.memory_space<vmem>>, vector<256x4xf32>,
    %c0_87 = arith.constant 0 : index
    %c0_88 = arith.constant 0 : index
    %86 = vector.load %arg7[%c0_87, %c0_88] : memref<256x4xf32, #tpu.memory_space<vmem>>, vector<256x4xf32>
    %c0_89 = arith.constant 0 : index
    %c0_90 = arith.constant 0 : index
    %87 = vector.load %arg5[%c0_89, %c0_90] : memref<1x4xf32, #tpu.memory_space<vmem>>, vector<1x4xf32>
    %88 = vector.broadcast %87 : vector<1x4xf32> to vector<256x4xf32>
    %89 = arith.addf %86, %88 : vector<256x4xf32>
    %cst_91 = arith.constant 0.000000e+00 : f32
    %90 = vector.broadcast %cst_91 : f32 to vector<256x4xf32>
    %91 = arith.maximumf %89, %90 : vector<256x4xf32>
    %92 = vector.shape_cast %91 : vector<256x4xf32> to vector<16x16x4xf32>
    %93 = arith.truncf %92 : vector<16x16x4xf32> to vector<16x16x4xbf16>
    %c0_92 = arith.constant 0 : index
    %c0_93 = arith.constant 0 : index
    %c0_94 = arith.constant 0 : index
    %c0_95 = arith.constant 0 : index
    %94 = vector.load %arg6[%c0_92, %c0_93, %c0_94, %c0_95] : memref<1x16x16x4xbf16, #tpu.memory_space<vmem>>, vector<1x16x16x4xbf16>
    %95 = vector.shape_cast %94 : vector<1x16x16x4xbf16> to vector<16x16x4xbf16>
    %96 = vector.shape_cast %93 : vector<16x16x4xbf16> to vector<1x16x16x4xbf16>
    tpu.vector_store %arg6[%c0_92, %c0_93, %c0_94, %c0_95], %96 {strides = array<i32>} : memref<1x16x16x4xbf16, #tpu.memory_space<vmem>>, vector<1x16x16x4xbf16>,
    return
  }
  func.func @transform_0(%arg0: i32, %arg1: i32, %arg2: i32) -> (i32, i32, i32, i32) {
    %c0_i32 = arith.constant 0 : i32
    %c0_i32_0 = arith.constant 0 : i32
    %c0_i32_1 = arith.constant 0 : i32
    %c0_i32_2 = arith.constant 0 : i32
    return %arg0, %c0_i32, %c0_i32_0, %c0_i32_1 : i32, i32, i32, i32
  }
  func.func @transform_1(%arg0: i32, %arg1: i32, %arg2: i32) -> (i32, i32, i32) {
    %c0_i32 = arith.constant 0 : i32
    %c0_i32_0 = arith.constant 0 : i32
    %c0_i32_1 = arith.constant 0 : i32
    return %c0_i32, %c0_i32_0, %arg1 : i32, i32, i32
  }
  func.func @transform_2(%arg0: i32, %arg1: i32, %arg2: i32) -> (i32, i32) {
    %c0_i32 = arith.constant 0 : i32
    %c0_i32_0 = arith.constant 0 : i32
    return %c0_i32, %arg1 : i32, i32
  }
  func.func @transform_3(%arg0: i32, %arg1: i32, %arg2: i32) -> (i32, i32, i32, i32) {
    %c0_i32 = arith.constant 0 : i32
    %c0_i32_0 = arith.constant 0 : i32
    return %arg0, %arg2, %c0_i32, %arg1 : i32, i32, i32, i32
  }
}

module attributes {stable_mosaic.version = 11 : i64} {
  func.func @_mm_bias_res_kernel(%arg0: i32, %arg1: i32, %arg2: memref<512x4xbf16, #tpu.memory_space<vmem>>, %arg3: memref<4x16xbf16, #tpu.memory_space<vmem>>, %arg4: memref<1x16xf32, #tpu.memory_space<vmem>>, %arg5: memref<512x16xbf16, #tpu.memory_space<vmem>>, %arg6: memref<512x16xf32, #tpu.memory_space<vmem>>) attributes {dimension_semantics = [#tpu.dimension_semantics<parallel>, #tpu.dimension_semantics<parallel>], iteration_bounds = array<i64: 1, 1>, scalar_prefetch = 0 : i64, scratch_operands = 0 : i64, tpu.core_type = #tpu.core_type<tc>, window_params = [{transform_indices = @transform_0, window_bounds = array<i64: 512, 4>}, {transform_indices = @transform_1, window_bounds = array<i64: 4, 16>}, {transform_indices = @transform_2, window_bounds = array<i64: 1, 16>}, {transform_indices = @transform_3, window_bounds = array<i64: 512, 16>}, {transform_indices = @transform_4, window_bounds = array<i64: 512, 16>}]} {
    %c0 = arith.constant 0 : index
    %c0_0 = arith.constant 0 : index
    %0 = vector.load %arg2[%c0, %c0_0] : memref<512x4xbf16, #tpu.memory_space<vmem>>, vector<512x4xbf16>
    %c0_1 = arith.constant 0 : index
    %c0_2 = arith.constant 0 : index
    %1 = vector.load %arg3[%c0_1, %c0_2] : memref<4x16xbf16, #tpu.memory_space<vmem>>, vector<4x16xbf16>
    %cst = arith.constant dense<0.000000e+00> : vector<512x16xf32>
    %2 = tpu.matmul %0, %1, %cst {dimension_numbers = #tpu.dot_dimension_numbers<[1], [0], [0], [1], [0, 0, 1, 1], [], []>} : vector<512x4xbf16>, vector<4x16xbf16>, vector<512x16xf32> -> vector<512x16xf32>
    %c0_3 = arith.constant 0 : index
    %c0_4 = arith.constant 0 : index
    %3 = vector.load %arg4[%c0_3, %c0_4] : memref<1x16xf32, #tpu.memory_space<vmem>>, vector<1x16xf32>
    %4 = vector.broadcast %3 : vector<1x16xf32> to vector<512x16xf32>
    %5 = arith.addf %2, %4 : vector<512x16xf32>
    %c0_5 = arith.constant 0 : index
    %c0_6 = arith.constant 0 : index
    %6 = vector.load %arg5[%c0_5, %c0_6] : memref<512x16xbf16, #tpu.memory_space<vmem>>, vector<512x16xbf16>
    %7 = arith.extf %6 : vector<512x16xbf16> to vector<512x16xf32>
    %8 = arith.addf %5, %7 : vector<512x16xf32>
    %cst_7 = arith.constant 0.000000e+00 : f32
    %9 = vector.broadcast %cst_7 : f32 to vector<512x16xf32>
    %10 = arith.maximumf %8, %9 : vector<512x16xf32>
    %c0_8 = arith.constant 0 : index
    %c0_9 = arith.constant 0 : index
    %11 = vector.load %arg6[%c0_8, %c0_9] : memref<512x16xf32, #tpu.memory_space<vmem>>, vector<512x16xf32>
    tpu.vector_store %arg6[%c0_8, %c0_9], %10 {strides = array<i32>} : memref<512x16xf32, #tpu.memory_space<vmem>>, vector<512x16xf32>,
    return
  }
  func.func @transform_0(%arg0: i32, %arg1: i32) -> (i32, i32) {
    %c0_i32 = arith.constant 0 : i32
    %c0_i32_0 = arith.constant 0 : i32
    return %arg0, %c0_i32 : i32, i32
  }
  func.func @transform_1(%arg0: i32, %arg1: i32) -> (i32, i32) {
    %c0_i32 = arith.constant 0 : i32
    %c0_i32_0 = arith.constant 0 : i32
    return %c0_i32, %arg1 : i32, i32
  }
  func.func @transform_2(%arg0: i32, %arg1: i32) -> (i32, i32) {
    %c0_i32 = arith.constant 0 : i32
    %c0_i32_0 = arith.constant 0 : i32
    return %c0_i32, %arg1 : i32, i32
  }
  func.func @transform_3(%arg0: i32, %arg1: i32) -> (i32, i32) {
    %c0_i32 = arith.constant 0 : i32
    return %arg0, %arg1 : i32, i32
  }
  func.func @transform_4(%arg0: i32, %arg1: i32) -> (i32, i32) {
    %c0_i32 = arith.constant 0 : i32
    return %arg0, %arg1 : i32, i32
  }
}

</mosaic_0001>

<llo_original>
// kernel: bottleneck_forward.4
$region0: #{bottleneck_forward.4}
  #allocation0 [shape = 'u32[]', space=smem, size = 0x4, offset = 0x4, fixed_abs, tag = 'smem constant byte address 0x4 - core index']
  #allocation1 [shape = 'u32[144,128]{1,0:T(1,128)}', space=vmem, size = 0x12000, scoped, tag = 'internal scratch']
  %s0 = inlined_call_operand.vmem [shape: f32[512,4], index: 0, kind: input, shape index: {}]
  %s1 = inlined_call_operand.vmem [shape: bf16[4,4], index: 1, kind: input, shape index: {}]
  %s2 = inlined_call_operand.vmem [shape: f32[1,4], index: 2, kind: input, shape index: {}]
  %s3 = inlined_call_operand.vmem [shape: bf16[512,4], index: 3, kind: output, shape index: {}]
  %s4 = sld [smem:[#allocation0]]
  $region22: #{bottleneck_forward.4} parent=0
    _
  %s6 = ssub.s32 1, %s4
  %s7 = scalar_select 0, %s6, %s4
  // Predicated region
  $region2: #{bottleneck_forward.4} parent=0 // pred_check
    _
  $region3: #{bottleneck_forward.4} parent=0 // pred_check_branch
    %9 = sbr.rel (0) target = $region5
  $region4: #{bottleneck_forward.4} parent=0 // pred_region
    _
  $region5: #{bottleneck_forward.4} parent=0 // pred_fallthru
    _
  // Predicated region
  $region6: #{bottleneck_forward.4} parent=0 // pred_check
    _
  $region7: #{bottleneck_forward.4} parent=0 // pred_check_branch
    %11 = sbr.rel (0) target = $region9
  $region8: #{bottleneck_forward.4} parent=0 // pred_region
    _
  $region9: #{bottleneck_forward.4} parent=0 // pred_fallthru
    _
  // Predicated region
  $region10: #{bottleneck_forward.4} parent=0 // pred_check
    _
  $region11: #{bottleneck_forward.4} parent=0 // pred_check_branch
    %13 = sbr.rel (0) target = $region13
  $region12: #{bottleneck_forward.4} parent=0 // pred_region
    _
  $region13: #{bottleneck_forward.4} parent=0 // pred_fallthru
    _
  %v15 = vld [vmem:[%s0] sm:$0xff]
  %v16 = vld [vmem:[%s0 + $0x8] sm:$0xff]
  %v17 = vld [vmem:[%s0 + $0x10] sm:$0xff]
  %v18 = vld [vmem:[%s0 + $0x18] sm:$0xff]
  %v19 = vld [vmem:[%s0 + $0x20] sm:$0xff]
  %v20 = vld [vmem:[%s0 + $0x28] sm:$0xff]
  %v21 = vld [vmem:[%s0 + $0x30] sm:$0xff]
  %v22 = vld [vmem:[%s0 + $0x38] sm:$0xff]
  %v23 = vld [vmem:[%s0 + $0x40] sm:$0xff]
  %v24 = vld [vmem:[%s0 + $0x48] sm:$0xff]
  %v25 = vld [vmem:[%s0 + $0x50] sm:$0xff]
  %v26 = vld [vmem:[%s0 + $0x58] sm:$0xff]
  %v27 = vld [vmem:[%s0 + $0x60] sm:$0xff]
  %v28 = vld [vmem:[%s0 + $0x68] sm:$0xff]
  %v29 = vld [vmem:[%s0 + $0x70] sm:$0xff]
  %v30 = vld [vmem:[%s0 + $0x78] sm:$0xff]
  %v31 = vld [vmem:[%s0 + $0x80] sm:$0xff]
  %v32 = vld [vmem:[%s0 + $0x88] sm:$0xff]
  %v33 = vld [vmem:[%s0 + $0x90] sm:$0xff]
  %v34 = vld [vmem:[%s0 + $0x98] sm:$0xff]
  %v35 = vld [vmem:[%s0 + $0xa0] sm:$0xff]
  %v36 = vld [vmem:[%s0 + $0xa8] sm:$0xff]
  %v37 = vld [vmem:[%s0 + $0xb0] sm:$0xff]
  %v38 = vld [vmem:[%s0 + $0xb8] sm:$0xff]
  %v39 = vld [vmem:[%s0 + $0xc0] sm:$0xff]
  %v40 = vld [vmem:[%s0 + $0xc8] sm:$0xff]
  %v41 = vld [vmem:[%s0 + $0xd0] sm:$0xff]
  %v42 = vld [vmem:[%s0 + $0xd8] sm:$0xff]
  %v43 = vld [vmem:[%s0 + $0xe0] sm:$0xff]
  %v44 = vld [vmem:[%s0 + $0xe8] sm:$0xff]
  %v45 = vld [vmem:[%s0 + $0xf0] sm:$0xff]
  %v46 = vld [vmem:[%s0 + $0xf8] sm:$0xff]
  %v47 = vld [vmem:[%s0 + $0x100] sm:$0xff]
  %v48 = vld [vmem:[%s0 + $0x108] sm:$0xff]
  %v49 = vld [vmem:[%s0 + $0x110] sm:$0xff]
  %v50 = vld [vmem:[%s0 + $0x118] sm:$0xff]
  %v51 = vld [vmem:[%s0 + $0x120] sm:$0xff]
  %v52 = vld [vmem:[%s0 + $0x128] sm:$0xff]
  %v53 = vld [vmem:[%s0 + $0x130] sm:$0xff]
  %v54 = vld [vmem:[%s0 + $0x138] sm:$0xff]
  %v55 = vld [vmem:[%s0 + $0x140] sm:$0xff]
  %v56 = vld [vmem:[%s0 + $0x148] sm:$0xff]
  %v57 = vld [vmem:[%s0 + $0x150] sm:$0xff]
  %v58 = vld [vmem:[%s0 + $0x158] sm:$0xff]
  %v59 = vld [vmem:[%s0 + $0x160] sm:$0xff]
  %v60 = vld [vmem:[%s0 + $0x168] sm:$0xff]
  %v61 = vld [vmem:[%s0 + $0x170] sm:$0xff]
  %v62 = vld [vmem:[%s0 + $0x178] sm:$0xff]
  %v63 = vld [vmem:[%s0 + $0x180] sm:$0xff]
  %v64 = vld [vmem:[%s0 + $0x188] sm:$0xff]
  %v65 = vld [vmem:[%s0 + $0x190] sm:$0xff]
  %v66 = vld [vmem:[%s0 + $0x198] sm:$0xff]
  %v67 = vld [vmem:[%s0 + $0x1a0] sm:$0xff]
  %v68 = vld [vmem:[%s0 + $0x1a8] sm:$0xff]
  %v69 = vld [vmem:[%s0 + $0x1b0] sm:$0xff]
  %v70 = vld [vmem:[%s0 + $0x1b8] sm:$0xff]
  %v71 = vld [vmem:[%s0 + $0x1c0] sm:$0xff]
  %v72 = vld [vmem:[%s0 + $0x1c8] sm:$0xff]
  %v73 = vld [vmem:[%s0 + $0x1d0] sm:$0xff]
  %v74 = vld [vmem:[%s0 + $0x1d8] sm:$0xff]
  %v75 = vld [vmem:[%s0 + $0x1e0] sm:$0xff]
  %v76 = vld [vmem:[%s0 + $0x1e8] sm:$0xff]
  %v77 = vld [vmem:[%s0 + $0x1f0] sm:$0xff]
  %v78 = vld [vmem:[%s0 + $0x1f8] sm:$0xff]
  %v79 = vpack.c.bf16 %v16, %v15
  %v80 = vpack.c.bf16 %v18, %v17
  %v81 = vpack.c.bf16 %v20, %v19
  %v82 = vpack.c.bf16 %v22, %v21
  %v83 = vpack.c.bf16 %v24, %v23
  %v84 = vpack.c.bf16 %v26, %v25
  %v85 = vpack.c.bf16 %v28, %v27
  %v86 = vpack.c.bf16 %v30, %v29
  %v87 = vpack.c.bf16 %v32, %v31
  %v88 = vpack.c.bf16 %v34, %v33
  %v89 = vpack.c.bf16 %v36, %v35
  %v90 = vpack.c.bf16 %v38, %v37
  %v91 = vpack.c.bf16 %v40, %v39
  %v92 = vpack.c.bf16 %v42, %v41
  %v93 = vpack.c.bf16 %v44, %v43
  %v94 = vpack.c.bf16 %v46, %v45
  %v95 = vpack.c.bf16 %v48, %v47
  %v96 = vpack.c.bf16 %v50, %v49
  %v97 = vpack.c.bf16 %v52, %v51
  %v98 = vpack.c.bf16 %v54, %v53
  %v99 = vpack.c.bf16 %v56, %v55
  %v100 = vpack.c.bf16 %v58, %v57
  %v101 = vpack.c.bf16 %v60, %v59
  %v102 = vpack.c.bf16 %v62, %v61
  %v103 = vpack.c.bf16 %v64, %v63
  %v104 = vpack.c.bf16 %v66, %v65
  %v105 = vpack.c.bf16 %v68, %v67
  %v106 = vpack.c.bf16 %v70, %v69
  %v107 = vpack.c.bf16 %v72, %v71
  %v108 = vpack.c.bf16 %v74, %v73
  %v109 = vpack.c.bf16 %v76, %v75
  %v110 = vpack.c.bf16 %v78, %v77
  %v111 = vld [vmem:[%s1] sm:$0x3]
  %v112 = vld [vmem:[%s2] sm:$0x1]
  %v114 = vlaneseq
  %v115 = vshrl.u32 %v114, 7
  %v116 = vsub.s32 0, %v115
  %v117 = vrot.slane %v112, %v116
  %vm119 = vcmask 31744
  %v121 = vsel %vm119, %v79, 0
  %v124 = vsel %vm119, %v80, 0
  %v127 = vsel %vm119, %v81, 0
  %v130 = vsel %vm119, %v82, 0
  %v133 = vsel %vm119, %v83, 0
  %v136 = vsel %vm119, %v84, 0
  %v139 = vsel %vm119, %v85, 0
  %v142 = vsel %vm119, %v86, 0
  %v145 = vsel %vm119, %v87, 0
  %v148 = vsel %vm119, %v88, 0
  %v151 = vsel %vm119, %v89, 0
  %v154 = vsel %vm119, %v90, 0
  %v157 = vsel %vm119, %v91, 0
  %v160 = vsel %vm119, %v92, 0
  %v163 = vsel %vm119, %v93, 0
  %v166 = vsel %vm119, %v94, 0
  %v169 = vsel %vm119, %v95, 0
  %v172 = vsel %vm119, %v96, 0
  %v175 = vsel %vm119, %v97, 0
  %v178 = vsel %vm119, %v98, 0
  %v181 = vsel %vm119, %v99, 0
  %v184 = vsel %vm119, %v100, 0
  %v187 = vsel %vm119, %v101, 0
  %v190 = vsel %vm119, %v102, 0
  %v193 = vsel %vm119, %v103, 0
  %v196 = vsel %vm119, %v104, 0
  %v199 = vsel %vm119, %v105, 0
  %v202 = vsel %vm119, %v106, 0
  %v205 = vsel %vm119, %v107, 0
  %v208 = vsel %vm119, %v108, 0
  %v211 = vsel %vm119, %v109, 0
  %v214 = vsel %vm119, %v110, 0
  %vm216 = vcmask 1041408
  %v218 = vsel %vm216, %v111, 0
  %220 = vmatprep.subr.bf16.mxu0 0
  %221 = vmatpush1.bf16.msra.mxu0 %v218
  %222 = vmatprep.subr.bf16.mxu0 0
  %223 = vmatpush1.bf16.msra.mxu0 0
  %224 = vmatprep.subr.bf16.mxu0 0
  %225 = vmatpush1.bf16.msra.mxu0 0
  %226 = vmatprep.subr.bf16.mxu0 0
  %227 = vmatpush1.bf16.msra.mxu0 0
  %228 = vmatprep.subr.bf16.mxu0 0
  %229 = vmatpush1.bf16.msra.mxu0 0
  %230 = vmatprep.subr.bf16.mxu0 0
  %231 = vmatpush1.bf16.msra.mxu0 0
  %232 = vmatprep.subr.bf16.mxu0 0
  %233 = vmatpush1.bf16.msra.mxu0 0
  %234 = vmatprep.subr.bf16.mxu0 0
  %235 = vmatpush1.bf16.msra.mxu0 0
  %236 = vmatprep.subr.bf16.mxu0 0
  %237 = vmatpush1.bf16.msra.mxu0 0
  %238 = vmatprep.subr.bf16.mxu0 0
  %239 = vmatpush1.bf16.msra.mxu0 0
  %240 = vmatprep.subr.bf16.mxu0 0
  %241 = vmatpush1.bf16.msra.mxu0 0
  %242 = vmatprep.subr.bf16.mxu0 0
  %243 = vmatpush1.bf16.msra.mxu0 0
  %244 = vmatprep.subr.bf16.mxu0 0
  %245 = vmatpush1.bf16.msra.mxu0 0
  %246 = vmatprep.subr.bf16.mxu0 0
  %247 = vmatpush1.bf16.msra.mxu0 0
  %248 = vmatprep.subr.bf16.mxu0 0
  %249 = vmatpush1.bf16.msra.mxu0 0
  %250 = vmatprep.subr.bf16.mxu0 0
  %251 = vmatpush1.bf16.msra.mxu0 0
  %252 = vmatprep.mubr.bf16.mxu0 0
  %253 = vmatmul.mubr.bf16.gmra.mrb[0].mxu0 %v121
  %v254 = vpop.f32.mrb[0].mxu0
  %v255 = vadd.f32 %v117, %v254
  %v256 = vpop.f32.mrb[0].mxu0
  %v257 = vpop.f32.mrb[0].mxu0
  %v258 = vadd.f32 %v117, %v257
  %v259 = vpop.f32.mrb[0].mxu0
  %260 = vmatprep.mubr.bf16.mxu0 0
  %261 = vmatmul.mubr.bf16.gmra.mrb[0].mxu0 %v124
  %v262 = vpop.f32.mrb[0].mxu0
  %v263 = vadd.f32 %v117, %v262
  %v264 = vpop.f32.mrb[0].mxu0
  %v265 = vpop.f32.mrb[0].mxu0
  %v266 = vadd.f32 %v117, %v265
  %v267 = vpop.f32.mrb[0].mxu0
  %268 = vmatprep.mubr.bf16.mxu0 0
  %269 = vmatmul.mubr.bf16.gmra.mrb[0].mxu0 %v127
  %v270 = vpop.f32.mrb[0].mxu0
  %v271 = vadd.f32 %v117, %v270
  %v272 = vpop.f32.mrb[0].mxu0
  %v273 = vpop.f32.mrb[0].mxu0
  %v274 = vadd.f32 %v117, %v273
  %v275 = vpop.f32.mrb[0].mxu0
  %276 = vmatprep.mubr.bf16.mxu0 0
  %277 = vmatmul.mubr.bf16.gmra.mrb[0].mxu0 %v130
  %v278 = vpop.f32.mrb[0].mxu0
  %v279 = vadd.f32 %v117, %v278
  %v280 = vpop.f32.mrb[0].mxu0
  %v281 = vpop.f32.mrb[0].mxu0
  %v282 = vadd.f32 %v117, %v281
  %v283 = vpop.f32.mrb[0].mxu0
  %284 = vmatprep.mubr.bf16.mxu0 0
  %285 = vmatmul.mubr.bf16.gmra.mrb[0].mxu0 %v133
  %v286 = vpop.f32.mrb[0].mxu0
  %v287 = vadd.f32 %v117, %v286
  %v288 = vpop.f32.mrb[0].mxu0
  %v289 = vpop.f32.mrb[0].mxu0
  %v290 = vadd.f32 %v117, %v289
  %v291 = vpop.f32.mrb[0].mxu0
  %292 = vmatprep.mubr.bf16.mxu0 0
  %293 = vmatmul.mubr.bf16.gmra.mrb[0].mxu0 %v136
  %v294 = vpop.f32.mrb[0].mxu0
  %v295 = vadd.f32 %v117, %v294
  %v296 = vpop.f32.mrb[0].mxu0
  %v297 = vpop.f32.mrb[0].mxu0
  %v298 = vadd.f32 %v117, %v297
  %v299 = vpop.f32.mrb[0].mxu0
  %300 = vmatprep.mubr.bf16.mxu0 0
  %301 = vmatmul.mubr.bf16.gmra.mrb[0].mxu0 %v139
  %v302 = vpop.f32.mrb[0].mxu0
  %v303 = vadd.f32 %v117, %v302
  %v304 = vpop.f32.mrb[0].mxu0
  %v305 = vpop.f32.mrb[0].mxu0
  %v306 = vadd.f32 %v117, %v305
  %v307 = vpop.f32.mrb[0].mxu0
  %308 = vmatprep.mubr.bf16.mxu0 0
  %309 = vmatmul.mubr.bf16.gmra.mrb[0].mxu0 %v142
  %v310 = vpop.f32.mrb[0].mxu0
  %v311 = vadd.f32 %v117, %v310
  %v312 = vpop.f32.mrb[0].mxu0
  %v313 = vpop.f32.mrb[0].mxu0
  %v314 = vadd.f32 %v117, %v313
  %v315 = vpop.f32.mrb[0].mxu0
  %316 = vmatprep.mubr.bf16.mxu0 0
  %317 = vmatmul.mubr.bf16.gmra.mrb[0].mxu0 %v145
  %v318 = vpop.f32.mrb[0].mxu0
  %v319 = vadd.f32 %v117, %v318
  %v320 = vpop.f32.mrb[0].mxu0
  %v321 = vpop.f32.mrb[0].mxu0
  %v322 = vadd.f32 %v117, %v321
  %v323 = vpop.f32.mrb[0].mxu0
  %324 = vmatprep.mubr.bf16.mxu0 0
  %325 = vmatmul.mubr.bf16.gmra.mrb[0].mxu0 %v148
  %v326 = vpop.f32.mrb[0].mxu0
  %v327 = vadd.f32 %v117, %v326
  %v328 = vpop.f32.mrb[0].mxu0
  %v329 = vpop.f32.mrb[0].mxu0
  %v330 = vadd.f32 %v117, %v329
  %v331 = vpop.f32.mrb[0].mxu0
  %332 = vmatprep.mubr.bf16.mxu0 0
  %333 = vmatmul.mubr.bf16.gmra.mrb[0].mxu0 %v151
  %v334 = vpop.f32.mrb[0].mxu0
  %v335 = vadd.f32 %v117, %v334
  %v336 = vpop.f32.mrb[0].mxu0
  %v337 = vpop.f32.mrb[0].mxu0
  %v338 = vadd.f32 %v117, %v337
  %v339 = vpop.f32.mrb[0].mxu0
  %340 = vmatprep.mubr.bf16.mxu0 0
  %341 = vmatmul.mubr.bf16.gmra.mrb[0].mxu0 %v154
  %v342 = vpop.f32.mrb[0].mxu0
  %v343 = vadd.f32 %v117, %v342
  %v344 = vpop.f32.mrb[0].mxu0
  %v345 = vpop.f32.mrb[0].mxu0
  %v346 = vadd.f32 %v117, %v345
  %v347 = vpop.f32.mrb[0].mxu0
  %348 = vmatprep.mubr.bf16.mxu0 0
  %349 = vmatmul.mubr.bf16.gmra.mrb[0].mxu0 %v157
  %v350 = vpop.f32.mrb[0].mxu0
  %v351 = vadd.f32 %v117, %v350
  %v352 = vpop.f32.mrb[0].mxu0
  %v353 = vpop.f32.mrb[0].mxu0
  %v354 = vadd.f32 %v117, %v353
  %v355 = vpop.f32.mrb[0].mxu0
  %356 = vmatprep.mubr.bf16.mxu0 0
  %357 = vmatmul.mubr.bf16.gmra.mrb[0].mxu0 %v160
  %v358 = vpop.f32.mrb[0].mxu0
  %v359 = vadd.f32 %v117, %v358
  %v360 = vpop.f32.mrb[0].mxu0
  %v361 = vpop.f32.mrb[0].mxu0
  %v362 = vadd.f32 %v117, %v361
  %v363 = vpop.f32.mrb[0].mxu0
  %364 = vmatprep.mubr.bf16.mxu0 0
  %365 = vmatmul.mubr.bf16.gmra.mrb[0].mxu0 %v163
  %v366 = vpop.f32.mrb[0].mxu0
  %v367 = vadd.f32 %v117, %v366
  %v368 = vpop.f32.mrb[0].mxu0
  %v369 = vpop.f32.mrb[0].mxu0
  %v370 = vadd.f32 %v117, %v369
  %v371 = vpop.f32.mrb[0].mxu0
  %372 = vmatprep.mubr.bf16.mxu0 0
  %373 = vmatmul.mubr.bf16.gmra.mrb[0].mxu0 %v166
  %v374 = vpop.f32.mrb[0].mxu0
  %v375 = vadd.f32 %v117, %v374
  %v376 = vpop.f32.mrb[0].mxu0
  %v377 = vpop.f32.mrb[0].mxu0
  %v378 = vadd.f32 %v117, %v377
  %v379 = vpop.f32.mrb[0].mxu0
  %380 = vmatprep.mubr.bf16.mxu0 0
  %381 = vmatmul.mubr.bf16.gmra.mrb[0].mxu0 %v169
  %v382 = vpop.f32.mrb[0].mxu0
  %v383 = vadd.f32 %v117, %v382
  %v384 = vpop.f32.mrb[0].mxu0
  %v385 = vpop.f32.mrb[0].mxu0
  %v386 = vadd.f32 %v117, %v385
  %v387 = vpop.f32.mrb[0].mxu0
  %388 = vmatprep.mubr.bf16.mxu0 0
  %389 = vmatmul.mubr.bf16.gmra.mrb[0].mxu0 %v172
  %v390 = vpop.f32.mrb[0].mxu0
  %v391 = vadd.f32 %v117, %v390
  %v392 = vpop.f32.mrb[0].mxu0
  %v393 = vpop.f32.mrb[0].mxu0
  %v394 = vadd.f32 %v117, %v393
  %v395 = vpop.f32.mrb[0].mxu0
  %396 = vmatprep.mubr.bf16.mxu0 0
  %397 = vmatmul.mubr.bf16.gmra.mrb[0].mxu0 %v175
  %v398 = vpop.f32.mrb[0].mxu0
  %v399 = vadd.f32 %v117, %v398
  %v400 = vpop.f32.mrb[0].mxu0
  %v401 = vpop.f32.mrb[0].mxu0
  %v402 = vadd.f32 %v117, %v401
  %v403 = vpop.f32.mrb[0].mxu0
  %404 = vmatprep.mubr.bf16.mxu0 0
  %405 = vmatmul.mubr.bf16.gmra.mrb[0].mxu0 %v178
  %v406 = vpop.f32.mrb[0].mxu0
  %v407 = vadd.f32 %v117, %v406
  %v408 = vpop.f32.mrb[0].mxu0
  %v409 = vpop.f32.mrb[0].mxu0
  %v410 = vadd.f32 %v117, %v409
  %v411 = vpop.f32.mrb[0].mxu0
  %412 = vmatprep.mubr.bf16.mxu0 0
  %413 = vmatmul.mubr.bf16.gmra.mrb[0].mxu0 %v181
  %v414 = vpop.f32.mrb[0].mxu0
  %v415 = vadd.f32 %v117, %v414
  %v416 = vpop.f32.mrb[0].mxu0
  %v417 = vpop.f32.mrb[0].mxu0
  %v418 = vadd.f32 %v117, %v417
  %v419 = vpop.f32.mrb[0].mxu0
  %420 = vmatprep.mubr.bf16.mxu0 0
  %421 = vmatmul.mubr.bf16.gmra.mrb[0].mxu0 %v184
  %v422 = vpop.f32.mrb[0].mxu0
  %v423 = vadd.f32 %v117, %v422
  %v424 = vpop.f32.mrb[0].mxu0
  %v425 = vpop.f32.mrb[0].mxu0
  %v426 = vadd.f32 %v117, %v425
  %v427 = vpop.f32.mrb[0].mxu0
  %428 = vmatprep.mubr.bf16.mxu0 0
  %429 = vmatmul.mubr.bf16.gmra.mrb[0].mxu0 %v187
  %v430 = vpop.f32.mrb[0].mxu0
  %v431 = vadd.f32 %v117, %v430
  %v432 = vpop.f32.mrb[0].mxu0
  %v433 = vpop.f32.mrb[0].mxu0
  %v434 = vadd.f32 %v117, %v433
  %v435 = vpop.f32.mrb[0].mxu0
  %436 = vmatprep.mubr.bf16.mxu0 0
  %437 = vmatmul.mubr.bf16.gmra.mrb[0].mxu0 %v190
  %v438 = vpop.f32.mrb[0].mxu0
  %v439 = vadd.f32 %v117, %v438
  %v440 = vpop.f32.mrb[0].mxu0
  %v441 = vpop.f32.mrb[0].mxu0
  %v442 = vadd.f32 %v117, %v441
  %v443 = vpop.f32.mrb[0].mxu0
  %444 = vmatprep.mubr.bf16.mxu0 0
  %445 = vmatmul.mubr.bf16.gmra.mrb[0].mxu0 %v193
  %v446 = vpop.f32.mrb[0].mxu0
  %v447 = vadd.f32 %v117, %v446
  %v448 = vpop.f32.mrb[0].mxu0
  %v449 = vpop.f32.mrb[0].mxu0
  %v450 = vadd.f32 %v117, %v449
  %v451 = vpop.f32.mrb[0].mxu0
  %452 = vmatprep.mubr.bf16.mxu0 0
  %453 = vmatmul.mubr.bf16.gmra.mrb[0].mxu0 %v196
  %v454 = vpop.f32.mrb[0].mxu0
  %v455 = vadd.f32 %v117, %v454
  %v456 = vpop.f32.mrb[0].mxu0
  %v457 = vpop.f32.mrb[0].mxu0
  %v458 = vadd.f32 %v117, %v457
  %v459 = vpop.f32.mrb[0].mxu0
  %460 = vmatprep.mubr.bf16.mxu0 0
  %461 = vmatmul.mubr.bf16.gmra.mrb[0].mxu0 %v199
  %v462 = vpop.f32.mrb[0].mxu0
  %v463 = vadd.f32 %v117, %v462
  %v464 = vpop.f32.mrb[0].mxu0
  %v465 = vpop.f32.mrb[0].mxu0
  %v466 = vadd.f32 %v117, %v465
  %v467 = vpop.f32.mrb[0].mxu0
  %468 = vmatprep.mubr.bf16.mxu0 0
  %469 = vmatmul.mubr.bf16.gmra.mrb[0].mxu0 %v202
  %v470 = vpop.f32.mrb[0].mxu0
  %v471 = vadd.f32 %v117, %v470
  %v472 = vpop.f32.mrb[0].mxu0
  %v473 = vpop.f32.mrb[0].mxu0
  %v474 = vadd.f32 %v117, %v473
  %v475 = vpop.f32.mrb[0].mxu0
  %476 = vmatprep.mubr.bf16.mxu0 0
  %477 = vmatmul.mubr.bf16.gmra.mrb[0].mxu0 %v205
  %v478 = vpop.f32.mrb[0].mxu0
  %v479 = vadd.f32 %v117, %v478
  %v480 = vpop.f32.mrb[0].mxu0
  %v481 = vpop.f32.mrb[0].mxu0
  %v482 = vadd.f32 %v117, %v481
  %v483 = vpop.f32.mrb[0].mxu0
  %484 = vmatprep.mubr.bf16.mxu0 0
  %485 = vmatmul.mubr.bf16.gmra.mrb[0].mxu0 %v208
  %v486 = vpop.f32.mrb[0].mxu0
  %v487 = vadd.f32 %v117, %v486
  %v488 = vpop.f32.mrb[0].mxu0
  %v489 = vpop.f32.mrb[0].mxu0
  %v490 = vadd.f32 %v117, %v489
  %v491 = vpop.f32.mrb[0].mxu0
  %492 = vmatprep.mubr.bf16.mxu0 0
  %493 = vmatmul.mubr.bf16.gmra.mrb[0].mxu0 %v211
  %v494 = vpop.f32.mrb[0].mxu0
  %v495 = vadd.f32 %v117, %v494
  %v496 = vpop.f32.mrb[0].mxu0
  %v497 = vpop.f32.mrb[0].mxu0
  %v498 = vadd.f32 %v117, %v497
  %v499 = vpop.f32.mrb[0].mxu0
  %500 = vmatprep.mubr.bf16.mxu0 0
  %501 = vmatmul.mubr.bf16.gmra.mrb[0].mxu0 %v214
  %v502 = vpop.f32.mrb[0].mxu0
  %v503 = vadd.f32 %v117, %v502
  %v504 = vpop.f32.mrb[0].mxu0
  %v505 = vpop.f32.mrb[0].mxu0
  %v506 = vadd.f32 %v117, %v505
  %v507 = vpop.f32.mrb[0].mxu0
  %508 = vdwg.mxu0
  %v509 = vmax.f32 %v255, 0.0
  %v510 = vmax.f32 %v258, 0.0
  %v511 = vmax.f32 %v263, 0.0
  %v512 = vmax.f32 %v266, 0.0
  %v513 = vmax.f32 %v271, 0.0
  %v514 = vmax.f32 %v274, 0.0
  %v515 = vmax.f32 %v279, 0.0
  %v516 = vmax.f32 %v282, 0.0
  %v517 = vmax.f32 %v287, 0.0
  %v518 = vmax.f32 %v290, 0.0
  %v519 = vmax.f32 %v295, 0.0
  %v520 = vmax.f32 %v298, 0.0
  %v521 = vmax.f32 %v303, 0.0
  %v522 = vmax.f32 %v306, 0.0
  %v523 = vmax.f32 %v311, 0.0
  %v524 = vmax.f32 %v314, 0.0
  %v525 = vmax.f32 %v319, 0.0
  %v526 = vmax.f32 %v322, 0.0
  %v527 = vmax.f32 %v327, 0.0
  %v528 = vmax.f32 %v330, 0.0
  %v529 = vmax.f32 %v335, 0.0
  %v530 = vmax.f32 %v338, 0.0
  %v531 = vmax.f32 %v343, 0.0
  %v532 = vmax.f32 %v346, 0.0
  %v533 = vmax.f32 %v351, 0.0
  %v534 = vmax.f32 %v354, 0.0
  %v535 = vmax.f32 %v359, 0.0
  %v536 = vmax.f32 %v362, 0.0
  %v537 = vmax.f32 %v367, 0.0
  %v538 = vmax.f32 %v370, 0.0
  %v539 = vmax.f32 %v375, 0.0
  %v540 = vmax.f32 %v378, 0.0
  %v541 = vmax.f32 %v383, 0.0
  %v542 = vmax.f32 %v386, 0.0
  %v543 = vmax.f32 %v391, 0.0
  %v544 = vmax.f32 %v394, 0.0
  %v545 = vmax.f32 %v399, 0.0
  %v546 = vmax.f32 %v402, 0.0
  %v547 = vmax.f32 %v407, 0.0
  %v548 = vmax.f32 %v410, 0.0
  %v549 = vmax.f32 %v415, 0.0
  %v550 = vmax.f32 %v418, 0.0
  %v551 = vmax.f32 %v423, 0.0
  %v552 = vmax.f32 %v426, 0.0
  %v553 = vmax.f32 %v431, 0.0
  %v554 = vmax.f32 %v434, 0.0
  %v555 = vmax.f32 %v439, 0.0
  %v556 = vmax.f32 %v442, 0.0
  %v557 = vmax.f32 %v447, 0.0
  %v558 = vmax.f32 %v450, 0.0
  %v559 = vmax.f32 %v455, 0.0
  %v560 = vmax.f32 %v458, 0.0
  %v561 = vmax.f32 %v463, 0.0
  %v562 = vmax.f32 %v466, 0.0
  %v563 = vmax.f32 %v471, 0.0
  %v564 = vmax.f32 %v474, 0.0
  %v565 = vmax.f32 %v479, 0.0
  %v566 = vmax.f32 %v482, 0.0
  %v567 = vmax.f32 %v487, 0.0
  %v568 = vmax.f32 %v490, 0.0
  %v569 = vmax.f32 %v495, 0.0
  %v570 = vmax.f32 %v498, 0.0
  %v571 = vmax.f32 %v503, 0.0
  %v572 = vmax.f32 %v506, 0.0
  %v573 = vpack.c.bf16 %v510, %v509
  %v574 = vpack.c.bf16 %v512, %v511
  %v575 = vpack.c.bf16 %v514, %v513
  %v576 = vpack.c.bf16 %v516, %v515
  %v577 = vpack.c.bf16 %v518, %v517
  %v578 = vpack.c.bf16 %v520, %v519
  %v579 = vpack.c.bf16 %v522, %v521
  %v580 = vpack.c.bf16 %v524, %v523
  %v581 = vpack.c.bf16 %v526, %v525
  %v582 = vpack.c.bf16 %v528, %v527
  %v583 = vpack.c.bf16 %v530, %v529
  %v584 = vpack.c.bf16 %v532, %v531
  %v585 = vpack.c.bf16 %v534, %v533
  %v586 = vpack.c.bf16 %v536, %v535
  %v587 = vpack.c.bf16 %v538, %v537
  %v588 = vpack.c.bf16 %v540, %v539
  %v589 = vpack.c.bf16 %v542, %v541
  %v590 = vpack.c.bf16 %v544, %v543
  %v591 = vpack.c.bf16 %v546, %v545
  %v592 = vpack.c.bf16 %v548, %v547
  %v593 = vpack.c.bf16 %v550, %v549
  %v594 = vpack.c.bf16 %v552, %v551
  %v595 = vpack.c.bf16 %v554, %v553
  %v596 = vpack.c.bf16 %v556, %v555
  %v597 = vpack.c.bf16 %v558, %v557
  %v598 = vpack.c.bf16 %v560, %v559
  %v599 = vpack.c.bf16 %v562, %v561
  %v600 = vpack.c.bf16 %v564, %v563
  %v601 = vpack.c.bf16 %v566, %v565
  %v602 = vpack.c.bf16 %v568, %v567
  %v603 = vpack.c.bf16 %v570, %v569
  %v604 = vpack.c.bf16 %v572, %v571
  %v637 = vunpack.c.l.b16 %v573
  %v638 = vunpack.c.h.b16 %v573
  %v639 = vunpack.c.l.b16 %v574
  %v640 = vunpack.c.h.b16 %v574
  %v641 = vunpack.c.l.b16 %v575
  %v642 = vunpack.c.h.b16 %v575
  %v643 = vunpack.c.l.b16 %v576
  %v644 = vunpack.c.h.b16 %v576
  %v645 = vunpack.c.l.b16 %v577
  %v646 = vunpack.c.h.b16 %v577
  %v647 = vunpack.c.l.b16 %v578
  %v648 = vunpack.c.h.b16 %v578
  %v649 = vunpack.c.l.b16 %v579
  %v650 = vunpack.c.h.b16 %v579
  %v651 = vunpack.c.l.b16 %v580
  %v652 = vunpack.c.h.b16 %v580
  %v653 = vunpack.c.l.b16 %v581
  %v654 = vunpack.c.h.b16 %v581
  %v655 = vunpack.c.l.b16 %v582
  %v656 = vunpack.c.h.b16 %v582
  %v657 = vunpack.c.l.b16 %v583
  %v658 = vunpack.c.h.b16 %v583
  %v659 = vunpack.c.l.b16 %v584
  %v660 = vunpack.c.h.b16 %v584
  %v661 = vunpack.c.l.b16 %v585
  %v662 = vunpack.c.h.b16 %v585
  %v663 = vunpack.c.l.b16 %v586
  %v664 = vunpack.c.h.b16 %v586
  %v665 = vunpack.c.l.b16 %v587
  %v666 = vunpack.c.h.b16 %v587
  %v667 = vunpack.c.l.b16 %v588
  %v668 = vunpack.c.h.b16 %v588
  %v669 = vunpack.c.l.b16 %v589
  %v670 = vunpack.c.h.b16 %v589
  %v671 = vunpack.c.l.b16 %v590
  %v672 = vunpack.c.h.b16 %v590
  %v673 = vunpack.c.l.b16 %v591
  %v674 = vunpack.c.h.b16 %v591
  %v675 = vunpack.c.l.b16 %v592
  %v676 = vunpack.c.h.b16 %v592
  %v677 = vunpack.c.l.b16 %v593
  %v678 = vunpack.c.h.b16 %v593
  %v679 = vunpack.c.l.b16 %v594
  %v680 = vunpack.c.h.b16 %v594
  %v681 = vunpack.c.l.b16 %v595
  %v682 = vunpack.c.h.b16 %v595
  %v683 = vunpack.c.l.b16 %v596
  %v684 = vunpack.c.h.b16 %v596
  %v685 = vunpack.c.l.b16 %v597
  %v686 = vunpack.c.h.b16 %v597
  %v687 = vunpack.c.l.b16 %v598
  %v688 = vunpack.c.h.b16 %v598
  %v689 = vunpack.c.l.b16 %v599
  %v690 = vunpack.c.h.b16 %v599
  %v691 = vunpack.c.l.b16 %v600
  %v692 = vunpack.c.h.b16 %v600
  %v693 = vunpack.c.l.b16 %v601
  %v694 = vunpack.c.h.b16 %v601
  %v695 = vunpack.c.l.b16 %v602
  %v696 = vunpack.c.h.b16 %v602
  %v697 = vunpack.c.l.b16 %v603
  %v698 = vunpack.c.h.b16 %v603
  %v699 = vunpack.c.l.b16 %v604
  %v700 = vunpack.c.h.b16 %v604
  %v701 = vpack.c.b16 %v637, %v637
  %v702 = vpack.c.b16 %v638, %v638
  %v703 = vpack.c.b16 %v639, %v639
  %v704 = vpack.c.b16 %v640, %v640
  %v705 = vpack.c.b16 %v641, %v641
  %v706 = vpack.c.b16 %v642, %v642
  %v707 = vpack.c.b16 %v643, %v643
  %v708 = vpack.c.b16 %v644, %v644
  %v709 = vpack.c.b16 %v645, %v645
  %v710 = vpack.c.b16 %v646, %v646
  %v711 = vpack.c.b16 %v647, %v647
  %v712 = vpack.c.b16 %v648, %v648
  %v713 = vpack.c.b16 %v649, %v649
  %v714 = vpack.c.b16 %v650, %v650
  %v715 = vpack.c.b16 %v651, %v651
  %v716 = vpack.c.b16 %v652, %v652
  %v717 = vpack.c.b16 %v653, %v653
  %v718 = vpack.c.b16 %v654, %v654
  %v719 = vpack.c.b16 %v655, %v655
  %v720 = vpack.c.b16 %v656, %v656
  %v721 = vpack.c.b16 %v657, %v657
  %v722 = vpack.c.b16 %v658, %v658
  %v723 = vpack.c.b16 %v659, %v659
  %v724 = vpack.c.b16 %v660, %v660
  %v725 = vpack.c.b16 %v661, %v661
  %v726 = vpack.c.b16 %v662, %v662
  %v727 = vpack.c.b16 %v663, %v663
  %v728 = vpack.c.b16 %v664, %v664
  %v729 = vpack.c.b16 %v665, %v665
  %v730 = vpack.c.b16 %v666, %v666
  %v731 = vpack.c.b16 %v667, %v667
  %v732 = vpack.c.b16 %v668, %v668
  %v733 = vpack.c.b16 %v669, %v669
  %v734 = vpack.c.b16 %v670, %v670
  %v735 = vpack.c.b16 %v671, %v671
  %v736 = vpack.c.b16 %v672, %v672
  %v737 = vpack.c.b16 %v673, %v673
  %v738 = vpack.c.b16 %v674, %v674
  %v739 = vpack.c.b16 %v675, %v675
  %v740 = vpack.c.b16 %v676, %v676
  %v741 = vpack.c.b16 %v677, %v677
  %v742 = vpack.c.b16 %v678, %v678
  %v743 = vpack.c.b16 %v679, %v679
  %v744 = vpack.c.b16 %v680, %v680
  %v745 = vpack.c.b16 %v681, %v681
  %v746 = vpack.c.b16 %v682, %v682
  %v747 = vpack.c.b16 %v683, %v683
  %v748 = vpack.c.b16 %v684, %v684
  %v749 = vpack.c.b16 %v685, %v685
  %v750 = vpack.c.b16 %v686, %v686
  %v751 = vpack.c.b16 %v687, %v687
  %v752 = vpack.c.b16 %v688, %v688
  %v753 = vpack.c.b16 %v689, %v689
  %v754 = vpack.c.b16 %v690, %v690
  %v755 = vpack.c.b16 %v691, %v691
  %v756 = vpack.c.b16 %v692, %v692
  %v757 = vpack.c.b16 %v693, %v693
  %v758 = vpack.c.b16 %v694, %v694
  %v759 = vpack.c.b16 %v695, %v695
  %v760 = vpack.c.b16 %v696, %v696
  %v761 = vpack.c.b16 %v697, %v697
  %v762 = vpack.c.b16 %v698, %v698
  %v763 = vpack.c.b16 %v699, %v699
  %v764 = vpack.c.b16 %v700, %v700
  %vm829 = vcmask 27648
  %830 = vst.msk [vmem:[%s3] sm:$0xf] %vm829, %v701
  %831 = vst.msk [vmem:[%s3 + $0x4] sm:$0xf] %vm829, %v702
  %832 = vst.msk [vmem:[%s3 + $0x8] sm:$0xf] %vm829, %v703
  %833 = vst.msk [vmem:[%s3 + $0xc] sm:$0xf] %vm829, %v704
  %834 = vst.msk [vmem:[%s3 + $0x10] sm:$0xf] %vm829, %v705
  %835 = vst.msk [vmem:[%s3 + $0x14] sm:$0xf] %vm829, %v706
  %836 = vst.msk [vmem:[%s3 + $0x18] sm:$0xf] %vm829, %v707
  %837 = vst.msk [vmem:[%s3 + $0x1c] sm:$0xf] %vm829, %v708
  %838 = vst.msk [vmem:[%s3 + $0x20] sm:$0xf] %vm829, %v709
  %839 = vst.msk [vmem:[%s3 + $0x24] sm:$0xf] %vm829, %v710
  %840 = vst.msk [vmem:[%s3 + $0x28] sm:$0xf] %vm829, %v711
  %841 = vst.msk [vmem:[%s3 + $0x2c] sm:$0xf] %vm829, %v712
  %842 = vst.msk [vmem:[%s3 + $0x30] sm:$0xf] %vm829, %v713
  %843 = vst.msk [vmem:[%s3 + $0x34] sm:$0xf] %vm829, %v714
  %844 = vst.msk [vmem:[%s3 + $0x38] sm:$0xf] %vm829, %v715
  %845 = vst.msk [vmem:[%s3 + $0x3c] sm:$0xf] %vm829, %v716
  %846 = vst.msk [vmem:[%s3 + $0x40] sm:$0xf] %vm829, %v717
  %847 = vst.msk [vmem:[%s3 + $0x44] sm:$0xf] %vm829, %v718
  %848 = vst.msk [vmem:[%s3 + $0x48] sm:$0xf] %vm829, %v719
  %849 = vst.msk [vmem:[%s3 + $0x4c] sm:$0xf] %vm829, %v720
  %850 = vst.msk [vmem:[%s3 + $0x50] sm:$0xf] %vm829, %v721
  %851 = vst.msk [vmem:[%s3 + $0x54] sm:$0xf] %vm829, %v722
  %852 = vst.msk [vmem:[%s3 + $0x58] sm:$0xf] %vm829, %v723
  %853 = vst.msk [vmem:[%s3 + $0x5c] sm:$0xf] %vm829, %v724
  %854 = vst.msk [vmem:[%s3 + $0x60] sm:$0xf] %vm829, %v725
  %855 = vst.msk [vmem:[%s3 + $0x64] sm:$0xf] %vm829, %v726
  %856 = vst.msk [vmem:[%s3 + $0x68] sm:$0xf] %vm829, %v727
  %857 = vst.msk [vmem:[%s3 + $0x6c] sm:$0xf] %vm829, %v728
  %858 = vst.msk [vmem:[%s3 + $0x70] sm:$0xf] %vm829, %v729
  %859 = vst.msk [vmem:[%s3 + $0x74] sm:$0xf] %vm829, %v730
  %860 = vst.msk [vmem:[%s3 + $0x78] sm:$0xf] %vm829, %v731
  %861 = vst.msk [vmem:[%s3 + $0x7c] sm:$0xf] %vm829, %v732
  %862 = vst.msk [vmem:[%s3 + $0x80] sm:$0xf] %vm829, %v733
  %863 = vst.msk [vmem:[%s3 + $0x84] sm:$0xf] %vm829, %v734
  %864 = vst.msk [vmem:[%s3 + $0x88] sm:$0xf] %vm829, %v735
  %865 = vst.msk [vmem:[%s3 + $0x8c] sm:$0xf] %vm829, %v736
  %866 = vst.msk [vmem:[%s3 + $0x90] sm:$0xf] %vm829, %v737
  %867 = vst.msk [vmem:[%s3 + $0x94] sm:$0xf] %vm829, %v738
  %868 = vst.msk [vmem:[%s3 + $0x98] sm:$0xf] %vm829, %v739
  %869 = vst.msk [vmem:[%s3 + $0x9c] sm:$0xf] %vm829, %v740
  %870 = vst.msk [vmem:[%s3 + $0xa0] sm:$0xf] %vm829, %v741
  %871 = vst.msk [vmem:[%s3 + $0xa4] sm:$0xf] %vm829, %v742
  %872 = vst.msk [vmem:[%s3 + $0xa8] sm:$0xf] %vm829, %v743
  %873 = vst.msk [vmem:[%s3 + $0xac] sm:$0xf] %vm829, %v744
  %874 = vst.msk [vmem:[%s3 + $0xb0] sm:$0xf] %vm829, %v745
  %875 = vst.msk [vmem:[%s3 + $0xb4] sm:$0xf] %vm829, %v746
  %876 = vst.msk [vmem:[%s3 + $0xb8] sm:$0xf] %vm829, %v747
  %877 = vst.msk [vmem:[%s3 + $0xbc] sm:$0xf] %vm829, %v748
  %878 = vst.msk [vmem:[%s3 + $0xc0] sm:$0xf] %vm829, %v749
  %879 = vst.msk [vmem:[%s3 + $0xc4] sm:$0xf] %vm829, %v750
  %880 = vst.msk [vmem:[%s3 + $0xc8] sm:$0xf] %vm829, %v751
  %881 = vst.msk [vmem:[%s3 + $0xcc] sm:$0xf] %vm829, %v752
  %882 = vst.msk [vmem:[%s3 + $0xd0] sm:$0xf] %vm829, %v753
  %883 = vst.msk [vmem:[%s3 + $0xd4] sm:$0xf] %vm829, %v754
  %884 = vst.msk [vmem:[%s3 + $0xd8] sm:$0xf] %vm829, %v755
  %885 = vst.msk [vmem:[%s3 + $0xdc] sm:$0xf] %vm829, %v756
  %886 = vst.msk [vmem:[%s3 + $0xe0] sm:$0xf] %vm829, %v757
  %887 = vst.msk [vmem:[%s3 + $0xe4] sm:$0xf] %vm829, %v758
  %888 = vst.msk [vmem:[%s3 + $0xe8] sm:$0xf] %vm829, %v759
  %889 = vst.msk [vmem:[%s3 + $0xec] sm:$0xf] %vm829, %v760
  %890 = vst.msk [vmem:[%s3 + $0xf0] sm:$0xf] %vm829, %v761
  %891 = vst.msk [vmem:[%s3 + $0xf4] sm:$0xf] %vm829, %v762
  %892 = vst.msk [vmem:[%s3 + $0xf8] sm:$0xf] %vm829, %v763
  %893 = vst.msk [vmem:[%s3 + $0xfc] sm:$0xf] %vm829, %v764
  // Predicated region
  $region14: #{bottleneck_forward.4} parent=0 // pred_check
    _
  $region15: #{bottleneck_forward.4} parent=0 // pred_check_branch
    %895 = sbr.rel (0) target = $region17
  $region16: #{bottleneck_forward.4} parent=0 // pred_region
    _
  $region17: #{bottleneck_forward.4} parent=0 // pred_fallthru
    _
  // Predicated region
  $region18: #{bottleneck_forward.4} parent=0 // pred_check
    _
  $region19: #{bottleneck_forward.4} parent=0 // pred_check_branch
    %897 = sbr.rel (0) target = $region21
  $region20: #{bottleneck_forward.4} parent=0 // pred_region
    _
  $region21: #{bottleneck_forward.4} parent=0 // pred_fallthru
    _

// kernel: bottleneck_forward.6
$region0: #{bottleneck_forward.6}
  #allocation0 [shape = 'u32[]', space=smem, size = 0x4, offset = 0x4, fixed_abs, tag = 'smem constant byte address 0x4 - core index']
  #allocation1 [shape = 'u32[144,128]{1,0:T(1,128)}', space=vmem, size = 0x12000, scoped, tag = 'internal scratch']
  %s0 = inlined_call_operand.vmem [shape: f32[512,4], index: 0, kind: input, shape index: {}]
  %s1 = inlined_call_operand.vmem [shape: bf16[4,16], index: 1, kind: input, shape index: {}]
  %s2 = inlined_call_operand.vmem [shape: f32[1,16], index: 2, kind: input, shape index: {}]
  %s3 = inlined_call_operand.vmem [shape: bf16[512,16], index: 3, kind: output, shape index: {}]
  %s4 = sld [smem:[#allocation0]]
  $region22: #{bottleneck_forward.6} parent=0
    _
  %s6 = ssub.s32 1, %s4
  %s7 = scalar_select 0, %s6, %s4
  // Predicated region
  $region2: #{bottleneck_forward.6} parent=0 // pred_check
    _
  $region3: #{bottleneck_forward.6} parent=0 // pred_check_branch
    %9 = sbr.rel (0) target = $region5
  $region4: #{bottleneck_forward.6} parent=0 // pred_region
    _
  $region5: #{bottleneck_forward.6} parent=0 // pred_fallthru
    _
  // Predicated region
  $region6: #{bottleneck_forward.6} parent=0 // pred_check
    _
  $region7: #{bottleneck_forward.6} parent=0 // pred_check_branch
    %11 = sbr.rel (0) target = $region9
  $region8: #{bottleneck_forward.6} parent=0 // pred_region
    _
  $region9: #{bottleneck_forward.6} parent=0 // pred_fallthru
    _
  // Predicated region
  $region10: #{bottleneck_forward.6} parent=0 // pred_check
    _
  $region11: #{bottleneck_forward.6} parent=0 // pred_check_branch
    %13 = sbr.rel (0) target = $region13
  $region12: #{bottleneck_forward.6} parent=0 // pred_region
    _
  $region13: #{bottleneck_forward.6} parent=0 // pred_fallthru
    _
  %v15 = vld [vmem:[%s0] sm:$0xff]
  %v16 = vld [vmem:[%s0 + $0x8] sm:$0xff]
  %v17 = vld [vmem:[%s0 + $0x10] sm:$0xff]
  %v18 = vld [vmem:[%s0 + $0x18] sm:$0xff]
  %v19 = vld [vmem:[%s0 + $0x20] sm:$0xff]
  %v20 = vld [vmem:[%s0 + $0x28] sm:$0xff]
  %v21 = vld [vmem:[%s0 + $0x30] sm:$0xff]
  %v22 = vld [vmem:[%s0 + $0x38] sm:$0xff]
  %v23 = vld [vmem:[%s0 + $0x40] sm:$0xff]
  %v24 = vld [vmem:[%s0 + $0x48] sm:$0xff]
  %v25 = vld [vmem:[%s0 + $0x50] sm:$0xff]
  %v26 = vld [vmem:[%s0 + $0x58] sm:$0xff]
  %v27 = vld [vmem:[%s0 + $0x60] sm:$0xff]
  %v28 = vld [vmem:[%s0 + $0x68] sm:$0xff]
  %v29 = vld [vmem:[%s0 + $0x70] sm:$0xff]
  %v30 = vld [vmem:[%s0 + $0x78] sm:$0xff]
  %v31 = vld [vmem:[%s0 + $0x80] sm:$0xff]
  %v32 = vld [vmem:[%s0 + $0x88] sm:$0xff]
  %v33 = vld [vmem:[%s0 + $0x90] sm:$0xff]
  %v34 = vld [vmem:[%s0 + $0x98] sm:$0xff]
  %v35 = vld [vmem:[%s0 + $0xa0] sm:$0xff]
  %v36 = vld [vmem:[%s0 + $0xa8] sm:$0xff]
  %v37 = vld [vmem:[%s0 + $0xb0] sm:$0xff]
  %v38 = vld [vmem:[%s0 + $0xb8] sm:$0xff]
  %v39 = vld [vmem:[%s0 + $0xc0] sm:$0xff]
  %v40 = vld [vmem:[%s0 + $0xc8] sm:$0xff]
  %v41 = vld [vmem:[%s0 + $0xd0] sm:$0xff]
  %v42 = vld [vmem:[%s0 + $0xd8] sm:$0xff]
  %v43 = vld [vmem:[%s0 + $0xe0] sm:$0xff]
  %v44 = vld [vmem:[%s0 + $0xe8] sm:$0xff]
  %v45 = vld [vmem:[%s0 + $0xf0] sm:$0xff]
  %v46 = vld [vmem:[%s0 + $0xf8] sm:$0xff]
  %v47 = vld [vmem:[%s0 + $0x100] sm:$0xff]
  %v48 = vld [vmem:[%s0 + $0x108] sm:$0xff]
  %v49 = vld [vmem:[%s0 + $0x110] sm:$0xff]
  %v50 = vld [vmem:[%s0 + $0x118] sm:$0xff]
  %v51 = vld [vmem:[%s0 + $0x120] sm:$0xff]
  %v52 = vld [vmem:[%s0 + $0x128] sm:$0xff]
  %v53 = vld [vmem:[%s0 + $0x130] sm:$0xff]
  %v54 = vld [vmem:[%s0 + $0x138] sm:$0xff]
  %v55 = vld [vmem:[%s0 + $0x140] sm:$0xff]
  %v56 = vld [vmem:[%s0 + $0x148] sm:$0xff]
  %v57 = vld [vmem:[%s0 + $0x150] sm:$0xff]
  %v58 = vld [vmem:[%s0 + $0x158] sm:$0xff]
  %v59 = vld [vmem:[%s0 + $0x160] sm:$0xff]
  %v60 = vld [vmem:[%s0 + $0x168] sm:$0xff]
  %v61 = vld [vmem:[%s0 + $0x170] sm:$0xff]
  %v62 = vld [vmem:[%s0 + $0x178] sm:$0xff]
  %v63 = vld [vmem:[%s0 + $0x180] sm:$0xff]
  %v64 = vld [vmem:[%s0 + $0x188] sm:$0xff]
  %v65 = vld [vmem:[%s0 + $0x190] sm:$0xff]
  %v66 = vld [vmem:[%s0 + $0x198] sm:$0xff]
  %v67 = vld [vmem:[%s0 + $0x1a0] sm:$0xff]
  %v68 = vld [vmem:[%s0 + $0x1a8] sm:$0xff]
  %v69 = vld [vmem:[%s0 + $0x1b0] sm:$0xff]
  %v70 = vld [vmem:[%s0 + $0x1b8] sm:$0xff]
  %v71 = vld [vmem:[%s0 + $0x1c0] sm:$0xff]
  %v72 = vld [vmem:[%s0 + $0x1c8] sm:$0xff]
  %v73 = vld [vmem:[%s0 + $0x1d0] sm:$0xff]
  %v74 = vld [vmem:[%s0 + $0x1d8] sm:$0xff]
  %v75 = vld [vmem:[%s0 + $0x1e0] sm:$0xff]
  %v76 = vld [vmem:[%s0 + $0x1e8] sm:$0xff]
  %v77 = vld [vmem:[%s0 + $0x1f0] sm:$0xff]
  %v78 = vld [vmem:[%s0 + $0x1f8] sm:$0xff]
  %v79 = vpack.c.bf16 %v16, %v15
  %v80 = vpack.c.bf16 %v18, %v17
  %v81 = vpack.c.bf16 %v20, %v19
  %v82 = vpack.c.bf16 %v22, %v21
  %v83 = vpack.c.bf16 %v24, %v23
  %v84 = vpack.c.bf16 %v26, %v25
  %v85 = vpack.c.bf16 %v28, %v27
  %v86 = vpack.c.bf16 %v30, %v29
  %v87 = vpack.c.bf16 %v32, %v31
  %v88 = vpack.c.bf16 %v34, %v33
  %v89 = vpack.c.bf16 %v36, %v35
  %v90 = vpack.c.bf16 %v38, %v37
  %v91 = vpack.c.bf16 %v40, %v39
  %v92 = vpack.c.bf16 %v42, %v41
  %v93 = vpack.c.bf16 %v44, %v43
  %v94 = vpack.c.bf16 %v46, %v45
  %v95 = vpack.c.bf16 %v48, %v47
  %v96 = vpack.c.bf16 %v50, %v49
  %v97 = vpack.c.bf16 %v52, %v51
  %v98 = vpack.c.bf16 %v54, %v53
  %v99 = vpack.c.bf16 %v56, %v55
  %v100 = vpack.c.bf16 %v58, %v57
  %v101 = vpack.c.bf16 %v60, %v59
  %v102 = vpack.c.bf16 %v62, %v61
  %v103 = vpack.c.bf16 %v64, %v63
  %v104 = vpack.c.bf16 %v66, %v65
  %v105 = vpack.c.bf16 %v68, %v67
  %v106 = vpack.c.bf16 %v70, %v69
  %v107 = vpack.c.bf16 %v72, %v71
  %v108 = vpack.c.bf16 %v74, %v73
  %v109 = vpack.c.bf16 %v76, %v75
  %v110 = vpack.c.bf16 %v78, %v77
  %v111 = vld [vmem:[%s1] sm:$0x3]
  %v112 = vld [vmem:[%s2] sm:$0x1]
  %v114 = vlaneseq
  %v115 = vshrl.u32 %v114, 7
  %v116 = vsub.s32 0, %v115
  %v117 = vrot.slane %v112, %v116
  %vm119 = vcmask 31744
  %v121 = vsel %vm119, %v79, 0
  %v124 = vsel %vm119, %v80, 0
  %v127 = vsel %vm119, %v81, 0
  %v130 = vsel %vm119, %v82, 0
  %v133 = vsel %vm119, %v83, 0
  %v136 = vsel %vm119, %v84, 0
  %v139 = vsel %vm119, %v85, 0
  %v142 = vsel %vm119, %v86, 0
  %v145 = vsel %vm119, %v87, 0
  %v148 = vsel %vm119, %v88, 0
  %v151 = vsel %vm119, %v89, 0
  %v154 = vsel %vm119, %v90, 0
  %v157 = vsel %vm119, %v91, 0
  %v160 = vsel %vm119, %v92, 0
  %v163 = vsel %vm119, %v93, 0
  %v166 = vsel %vm119, %v94, 0
  %v169 = vsel %vm119, %v95, 0
  %v172 = vsel %vm119, %v96, 0
  %v175 = vsel %vm119, %v97, 0
  %v178 = vsel %vm119, %v98, 0
  %v181 = vsel %vm119, %v99, 0
  %v184 = vsel %vm119, %v100, 0
  %v187 = vsel %vm119, %v101, 0
  %v190 = vsel %vm119, %v102, 0
  %v193 = vsel %vm119, %v103, 0
  %v196 = vsel %vm119, %v104, 0
  %v199 = vsel %vm119, %v105, 0
  %v202 = vsel %vm119, %v106, 0
  %v205 = vsel %vm119, %v107, 0
  %v208 = vsel %vm119, %v108, 0
  %v211 = vsel %vm119, %v109, 0
  %v214 = vsel %vm119, %v110, 0
  %vm216 = vcmask 1041408
  %v218 = vsel %vm216, %v111, 0
  %220 = vmatprep.subr.bf16.mxu0 0
  %221 = vmatpush1.bf16.msra.mxu0 %v218
  %222 = vmatprep.subr.bf16.mxu0 0
  %223 = vmatpush1.bf16.msra.mxu0 0
  %224 = vmatprep.subr.bf16.mxu0 0
  %225 = vmatpush1.bf16.msra.mxu0 0
  %226 = vmatprep.subr.bf16.mxu0 0
  %227 = vmatpush1.bf16.msra.mxu0 0
  %228 = vmatprep.subr.bf16.mxu0 0
  %229 = vmatpush1.bf16.msra.mxu0 0
  %230 = vmatprep.subr.bf16.mxu0 0
  %231 = vmatpush1.bf16.msra.mxu0 0
  %232 = vmatprep.subr.bf16.mxu0 0
  %233 = vmatpush1.bf16.msra.mxu0 0
  %234 = vmatprep.subr.bf16.mxu0 0
  %235 = vmatpush1.bf16.msra.mxu0 0
  %236 = vmatprep.subr.bf16.mxu0 0
  %237 = vmatpush1.bf16.msra.mxu0 0
  %238 = vmatprep.subr.bf16.mxu0 0
  %239 = vmatpush1.bf16.msra.mxu0 0
  %240 = vmatprep.subr.bf16.mxu0 0
  %241 = vmatpush1.bf16.msra.mxu0 0
  %242 = vmatprep.subr.bf16.mxu0 0
  %243 = vmatpush1.bf16.msra.mxu0 0
  %244 = vmatprep.subr.bf16.mxu0 0
  %245 = vmatpush1.bf16.msra.mxu0 0
  %246 = vmatprep.subr.bf16.mxu0 0
  %247 = vmatpush1.bf16.msra.mxu0 0
  %248 = vmatprep.subr.bf16.mxu0 0
  %249 = vmatpush1.bf16.msra.mxu0 0
  %250 = vmatprep.subr.bf16.mxu0 0
  %251 = vmatpush1.bf16.msra.mxu0 0
  %252 = vmatprep.mubr.bf16.mxu0 0
  %253 = vmatmul.mubr.bf16.gmra.mrb[0].mxu0 %v121
  %v254 = vpop.f32.mrb[0].mxu0
  %v255 = vadd.f32 %v117, %v254
  %v256 = vpop.f32.mrb[0].mxu0
  %v257 = vpop.f32.mrb[0].mxu0
  %v258 = vadd.f32 %v117, %v257
  %v259 = vpop.f32.mrb[0].mxu0
  %260 = vmatprep.mubr.bf16.mxu0 0
  %261 = vmatmul.mubr.bf16.gmra.mrb[0].mxu0 %v124
  %v262 = vpop.f32.mrb[0].mxu0
  %v263 = vadd.f32 %v117, %v262
  %v264 = vpop.f32.mrb[0].mxu0
  %v265 = vpop.f32.mrb[0].mxu0
  %v266 = vadd.f32 %v117, %v265
  %v267 = vpop.f32.mrb[0].mxu0
  %268 = vmatprep.mubr.bf16.mxu0 0
  %269 = vmatmul.mubr.bf16.gmra.mrb[0].mxu0 %v127
  %v270 = vpop.f32.mrb[0].mxu0
  %v271 = vadd.f32 %v117, %v270
  %v272 = vpop.f32.mrb[0].mxu0
  %v273 = vpop.f32.mrb[0].mxu0
  %v274 = vadd.f32 %v117, %v273
  %v275 = vpop.f32.mrb[0].mxu0
  %276 = vmatprep.mubr.bf16.mxu0 0
  %277 = vmatmul.mubr.bf16.gmra.mrb[0].mxu0 %v130
  %v278 = vpop.f32.mrb[0].mxu0
  %v279 = vadd.f32 %v117, %v278
  %v280 = vpop.f32.mrb[0].mxu0
  %v281 = vpop.f32.mrb[0].mxu0
  %v282 = vadd.f32 %v117, %v281
  %v283 = vpop.f32.mrb[0].mxu0
  %284 = vmatprep.mubr.bf16.mxu0 0
  %285 = vmatmul.mubr.bf16.gmra.mrb[0].mxu0 %v133
  %v286 = vpop.f32.mrb[0].mxu0
  %v287 = vadd.f32 %v117, %v286
  %v288 = vpop.f32.mrb[0].mxu0
  %v289 = vpop.f32.mrb[0].mxu0
  %v290 = vadd.f32 %v117, %v289
  %v291 = vpop.f32.mrb[0].mxu0
  %292 = vmatprep.mubr.bf16.mxu0 0
  %293 = vmatmul.mubr.bf16.gmra.mrb[0].mxu0 %v136
  %v294 = vpop.f32.mrb[0].mxu0
  %v295 = vadd.f32 %v117, %v294
  %v296 = vpop.f32.mrb[0].mxu0
  %v297 = vpop.f32.mrb[0].mxu0
  %v298 = vadd.f32 %v117, %v297
  %v299 = vpop.f32.mrb[0].mxu0
  %300 = vmatprep.mubr.bf16.mxu0 0
  %301 = vmatmul.mubr.bf16.gmra.mrb[0].mxu0 %v139
  %v302 = vpop.f32.mrb[0].mxu0
  %v303 = vadd.f32 %v117, %v302
  %v304 = vpop.f32.mrb[0].mxu0
  %v305 = vpop.f32.mrb[0].mxu0
  %v306 = vadd.f32 %v117, %v305
  %v307 = vpop.f32.mrb[0].mxu0
  %308 = vmatprep.mubr.bf16.mxu0 0
  %309 = vmatmul.mubr.bf16.gmra.mrb[0].mxu0 %v142
  %v310 = vpop.f32.mrb[0].mxu0
  %v311 = vadd.f32 %v117, %v310
  %v312 = vpop.f32.mrb[0].mxu0
  %v313 = vpop.f32.mrb[0].mxu0
  %v314 = vadd.f32 %v117, %v313
  %v315 = vpop.f32.mrb[0].mxu0
  %316 = vmatprep.mubr.bf16.mxu0 0
  %317 = vmatmul.mubr.bf16.gmra.mrb[0].mxu0 %v145
  %v318 = vpop.f32.mrb[0].mxu0
  %v319 = vadd.f32 %v117, %v318
  %v320 = vpop.f32.mrb[0].mxu0
  %v321 = vpop.f32.mrb[0].mxu0
  %v322 = vadd.f32 %v117, %v321
  %v323 = vpop.f32.mrb[0].mxu0
  %324 = vmatprep.mubr.bf16.mxu0 0
  %325 = vmatmul.mubr.bf16.gmra.mrb[0].mxu0 %v148
  %v326 = vpop.f32.mrb[0].mxu0
  %v327 = vadd.f32 %v117, %v326
  %v328 = vpop.f32.mrb[0].mxu0
  %v329 = vpop.f32.mrb[0].mxu0
  %v330 = vadd.f32 %v117, %v329
  %v331 = vpop.f32.mrb[0].mxu0
  %332 = vmatprep.mubr.bf16.mxu0 0
  %333 = vmatmul.mubr.bf16.gmra.mrb[0].mxu0 %v151
  %v334 = vpop.f32.mrb[0].mxu0
  %v335 = vadd.f32 %v117, %v334
  %v336 = vpop.f32.mrb[0].mxu0
  %v337 = vpop.f32.mrb[0].mxu0
  %v338 = vadd.f32 %v117, %v337
  %v339 = vpop.f32.mrb[0].mxu0
  %340 = vmatprep.mubr.bf16.mxu0 0
  %341 = vmatmul.mubr.bf16.gmra.mrb[0].mxu0 %v154
  %v342 = vpop.f32.mrb[0].mxu0
  %v343 = vadd.f32 %v117, %v342
  %v344 = vpop.f32.mrb[0].mxu0
  %v345 = vpop.f32.mrb[0].mxu0
  %v346 = vadd.f32 %v117, %v345
  %v347 = vpop.f32.mrb[0].mxu0
  %348 = vmatprep.mubr.bf16.mxu0 0
  %349 = vmatmul.mubr.bf16.gmra.mrb[0].mxu0 %v157
  %v350 = vpop.f32.mrb[0].mxu0
  %v351 = vadd.f32 %v117, %v350
  %v352 = vpop.f32.mrb[0].mxu0
  %v353 = vpop.f32.mrb[0].mxu0
  %v354 = vadd.f32 %v117, %v353
  %v355 = vpop.f32.mrb[0].mxu0
  %356 = vmatprep.mubr.bf16.mxu0 0
  %357 = vmatmul.mubr.bf16.gmra.mrb[0].mxu0 %v160
  %v358 = vpop.f32.mrb[0].mxu0
  %v359 = vadd.f32 %v117, %v358
  %v360 = vpop.f32.mrb[0].mxu0
  %v361 = vpop.f32.mrb[0].mxu0
  %v362 = vadd.f32 %v117, %v361
  %v363 = vpop.f32.mrb[0].mxu0
  %364 = vmatprep.mubr.bf16.mxu0 0
  %365 = vmatmul.mubr.bf16.gmra.mrb[0].mxu0 %v163
  %v366 = vpop.f32.mrb[0].mxu0
  %v367 = vadd.f32 %v117, %v366
  %v368 = vpop.f32.mrb[0].mxu0
  %v369 = vpop.f32.mrb[0].mxu0
  %v370 = vadd.f32 %v117, %v369
  %v371 = vpop.f32.mrb[0].mxu0
  %372 = vmatprep.mubr.bf16.mxu0 0
  %373 = vmatmul.mubr.bf16.gmra.mrb[0].mxu0 %v166
  %v374 = vpop.f32.mrb[0].mxu0
  %v375 = vadd.f32 %v117, %v374
  %v376 = vpop.f32.mrb[0].mxu0
  %v377 = vpop.f32.mrb[0].mxu0
  %v378 = vadd.f32 %v117, %v377
  %v379 = vpop.f32.mrb[0].mxu0
  %380 = vmatprep.mubr.bf16.mxu0 0
  %381 = vmatmul.mubr.bf16.gmra.mrb[0].mxu0 %v169
  %v382 = vpop.f32.mrb[0].mxu0
  %v383 = vadd.f32 %v117, %v382
  %v384 = vpop.f32.mrb[0].mxu0
  %v385 = vpop.f32.mrb[0].mxu0
  %v386 = vadd.f32 %v117, %v385
  %v387 = vpop.f32.mrb[0].mxu0
  %388 = vmatprep.mubr.bf16.mxu0 0
  %389 = vmatmul.mubr.bf16.gmra.mrb[0].mxu0 %v172
  %v390 = vpop.f32.mrb[0].mxu0
  %v391 = vadd.f32 %v117, %v390
  %v392 = vpop.f32.mrb[0].mxu0
  %v393 = vpop.f32.mrb[0].mxu0
  %v394 = vadd.f32 %v117, %v393
  %v395 = vpop.f32.mrb[0].mxu0
  %396 = vmatprep.mubr.bf16.mxu0 0
  %397 = vmatmul.mubr.bf16.gmra.mrb[0].mxu0 %v175
  %v398 = vpop.f32.mrb[0].mxu0
  %v399 = vadd.f32 %v117, %v398
  %v400 = vpop.f32.mrb[0].mxu0
  %v401 = vpop.f32.mrb[0].mxu0
  %v402 = vadd.f32 %v117, %v401
  %v403 = vpop.f32.mrb[0].mxu0
  %404 = vmatprep.mubr.bf16.mxu0 0
  %405 = vmatmul.mubr.bf16.gmra.mrb[0].mxu0 %v178
  %v406 = vpop.f32.mrb[0].mxu0
  %v407 = vadd.f32 %v117, %v406
  %v408 = vpop.f32.mrb[0].mxu0
  %v409 = vpop.f32.mrb[0].mxu0
  %v410 = vadd.f32 %v117, %v409
  %v411 = vpop.f32.mrb[0].mxu0
  %412 = vmatprep.mubr.bf16.mxu0 0
  %413 = vmatmul.mubr.bf16.gmra.mrb[0].mxu0 %v181
  %v414 = vpop.f32.mrb[0].mxu0
  %v415 = vadd.f32 %v117, %v414
  %v416 = vpop.f32.mrb[0].mxu0
  %v417 = vpop.f32.mrb[0].mxu0
  %v418 = vadd.f32 %v117, %v417
  %v419 = vpop.f32.mrb[0].mxu0
  %420 = vmatprep.mubr.bf16.mxu0 0
  %421 = vmatmul.mubr.bf16.gmra.mrb[0].mxu0 %v184
  %v422 = vpop.f32.mrb[0].mxu0
  %v423 = vadd.f32 %v117, %v422
  %v424 = vpop.f32.mrb[0].mxu0
  %v425 = vpop.f32.mrb[0].mxu0
  %v426 = vadd.f32 %v117, %v425
  %v427 = vpop.f32.mrb[0].mxu0
  %428 = vmatprep.mubr.bf16.mxu0 0
  %429 = vmatmul.mubr.bf16.gmra.mrb[0].mxu0 %v187
  %v430 = vpop.f32.mrb[0].mxu0
  %v431 = vadd.f32 %v117, %v430
  %v432 = vpop.f32.mrb[0].mxu0
  %v433 = vpop.f32.mrb[0].mxu0
  %v434 = vadd.f32 %v117, %v433
  %v435 = vpop.f32.mrb[0].mxu0
  %436 = vmatprep.mubr.bf16.mxu0 0
  %437 = vmatmul.mubr.bf16.gmra.mrb[0].mxu0 %v190
  %v438 = vpop.f32.mrb[0].mxu0
  %v439 = vadd.f32 %v117, %v438
  %v440 = vpop.f32.mrb[0].mxu0
  %v441 = vpop.f32.mrb[0].mxu0
  %v442 = vadd.f32 %v117, %v441
  %v443 = vpop.f32.mrb[0].mxu0
  %444 = vmatprep.mubr.bf16.mxu0 0
  %445 = vmatmul.mubr.bf16.gmra.mrb[0].mxu0 %v193
  %v446 = vpop.f32.mrb[0].mxu0
  %v447 = vadd.f32 %v117, %v446
  %v448 = vpop.f32.mrb[0].mxu0
  %v449 = vpop.f32.mrb[0].mxu0
  %v450 = vadd.f32 %v117, %v449
  %v451 = vpop.f32.mrb[0].mxu0
  %452 = vmatprep.mubr.bf16.mxu0 0
  %453 = vmatmul.mubr.bf16.gmra.mrb[0].mxu0 %v196
  %v454 = vpop.f32.mrb[0].mxu0
  %v455 = vadd.f32 %v117, %v454
  %v456 = vpop.f32.mrb[0].mxu0
  %v457 = vpop.f32.mrb[0].mxu0
  %v458 = vadd.f32 %v117, %v457
  %v459 = vpop.f32.mrb[0].mxu0
  %460 = vmatprep.mubr.bf16.mxu0 0
  %461 = vmatmul.mubr.bf16.gmra.mrb[0].mxu0 %v199
  %v462 = vpop.f32.mrb[0].mxu0
  %v463 = vadd.f32 %v117, %v462
  %v464 = vpop.f32.mrb[0].mxu0
  %v465 = vpop.f32.mrb[0].mxu0
  %v466 = vadd.f32 %v117, %v465
  %v467 = vpop.f32.mrb[0].mxu0
  %468 = vmatprep.mubr.bf16.mxu0 0
  %469 = vmatmul.mubr.bf16.gmra.mrb[0].mxu0 %v202
  %v470 = vpop.f32.mrb[0].mxu0
  %v471 = vadd.f32 %v117, %v470
  %v472 = vpop.f32.mrb[0].mxu0
  %v473 = vpop.f32.mrb[0].mxu0
  %v474 = vadd.f32 %v117, %v473
  %v475 = vpop.f32.mrb[0].mxu0
  %476 = vmatprep.mubr.bf16.mxu0 0
  %477 = vmatmul.mubr.bf16.gmra.mrb[0].mxu0 %v205
  %v478 = vpop.f32.mrb[0].mxu0
  %v479 = vadd.f32 %v117, %v478
  %v480 = vpop.f32.mrb[0].mxu0
  %v481 = vpop.f32.mrb[0].mxu0
  %v482 = vadd.f32 %v117, %v481
  %v483 = vpop.f32.mrb[0].mxu0
  %484 = vmatprep.mubr.bf16.mxu0 0
  %485 = vmatmul.mubr.bf16.gmra.mrb[0].mxu0 %v208
  %v486 = vpop.f32.mrb[0].mxu0
  %v487 = vadd.f32 %v117, %v486
  %v488 = vpop.f32.mrb[0].mxu0
  %v489 = vpop.f32.mrb[0].mxu0
  %v490 = vadd.f32 %v117, %v489
  %v491 = vpop.f32.mrb[0].mxu0
  %492 = vmatprep.mubr.bf16.mxu0 0
  %493 = vmatmul.mubr.bf16.gmra.mrb[0].mxu0 %v211
  %v494 = vpop.f32.mrb[0].mxu0
  %v495 = vadd.f32 %v117, %v494
  %v496 = vpop.f32.mrb[0].mxu0
  %v497 = vpop.f32.mrb[0].mxu0
  %v498 = vadd.f32 %v117, %v497
  %v499 = vpop.f32.mrb[0].mxu0
  %500 = vmatprep.mubr.bf16.mxu0 0
  %501 = vmatmul.mubr.bf16.gmra.mrb[0].mxu0 %v214
  %v502 = vpop.f32.mrb[0].mxu0
  %v503 = vadd.f32 %v117, %v502
  %v504 = vpop.f32.mrb[0].mxu0
  %v505 = vpop.f32.mrb[0].mxu0
  %v506 = vadd.f32 %v117, %v505
  %v507 = vpop.f32.mrb[0].mxu0
  %508 = vdwg.mxu0
  %v509 = vpack.c.bf16 %v258, %v255
  %v510 = vpack.c.bf16 %v266, %v263
  %v511 = vpack.c.bf16 %v274, %v271
  %v512 = vpack.c.bf16 %v282, %v279
  %v513 = vpack.c.bf16 %v290, %v287
  %v514 = vpack.c.bf16 %v298, %v295
  %v515 = vpack.c.bf16 %v306, %v303
  %v516 = vpack.c.bf16 %v314, %v311
  %v517 = vpack.c.bf16 %v322, %v319
  %v518 = vpack.c.bf16 %v330, %v327
  %v519 = vpack.c.bf16 %v338, %v335
  %v520 = vpack.c.bf16 %v346, %v343
  %v521 = vpack.c.bf16 %v354, %v351
  %v522 = vpack.c.bf16 %v362, %v359
  %v523 = vpack.c.bf16 %v370, %v367
  %v524 = vpack.c.bf16 %v378, %v375
  %v525 = vpack.c.bf16 %v386, %v383
  %v526 = vpack.c.bf16 %v394, %v391
  %v527 = vpack.c.bf16 %v402, %v399
  %v528 = vpack.c.bf16 %v410, %v407
  %v529 = vpack.c.bf16 %v418, %v415
  %v530 = vpack.c.bf16 %v426, %v423
  %v531 = vpack.c.bf16 %v434, %v431
  %v532 = vpack.c.bf16 %v442, %v439
  %v533 = vpack.c.bf16 %v450, %v447
  %v534 = vpack.c.bf16 %v458, %v455
  %v535 = vpack.c.bf16 %v466, %v463
  %v536 = vpack.c.bf16 %v474, %v471
  %v537 = vpack.c.bf16 %v482, %v479
  %v538 = vpack.c.bf16 %v490, %v487
  %v539 = vpack.c.bf16 %v498, %v495
  %v540 = vpack.c.bf16 %v506, %v503
  %v573 = vunpack.c.l.b16 %v509
  %v574 = vunpack.c.h.b16 %v509
  %v575 = vunpack.c.l.b16 %v510
  %v576 = vunpack.c.h.b16 %v510
  %v577 = vunpack.c.l.b16 %v511
  %v578 = vunpack.c.h.b16 %v511
  %v579 = vunpack.c.l.b16 %v512
  %v580 = vunpack.c.h.b16 %v512
  %v581 = vunpack.c.l.b16 %v513
  %v582 = vunpack.c.h.b16 %v513
  %v583 = vunpack.c.l.b16 %v514
  %v584 = vunpack.c.h.b16 %v514
  %v585 = vunpack.c.l.b16 %v515
  %v586 = vunpack.c.h.b16 %v515
  %v587 = vunpack.c.l.b16 %v516
  %v588 = vunpack.c.h.b16 %v516
  %v589 = vunpack.c.l.b16 %v517
  %v590 = vunpack.c.h.b16 %v517
  %v591 = vunpack.c.l.b16 %v518
  %v592 = vunpack.c.h.b16 %v518
  %v593 = vunpack.c.l.b16 %v519
  %v594 = vunpack.c.h.b16 %v519
  %v595 = vunpack.c.l.b16 %v520
  %v596 = vunpack.c.h.b16 %v520
  %v597 = vunpack.c.l.b16 %v521
  %v598 = vunpack.c.h.b16 %v521
  %v599 = vunpack.c.l.b16 %v522
  %v600 = vunpack.c.h.b16 %v522
  %v601 = vunpack.c.l.b16 %v523
  %v602 = vunpack.c.h.b16 %v523
  %v603 = vunpack.c.l.b16 %v524
  %v604 = vunpack.c.h.b16 %v524
  %v605 = vunpack.c.l.b16 %v525
  %v606 = vunpack.c.h.b16 %v525
  %v607 = vunpack.c.l.b16 %v526
  %v608 = vunpack.c.h.b16 %v526
  %v609 = vunpack.c.l.b16 %v527
  %v610 = vunpack.c.h.b16 %v527
  %v611 = vunpack.c.l.b16 %v528
  %v612 = vunpack.c.h.b16 %v528
  %v613 = vunpack.c.l.b16 %v529
  %v614 = vunpack.c.h.b16 %v529
  %v615 = vunpack.c.l.b16 %v530
  %v616 = vunpack.c.h.b16 %v530
  %v617 = vunpack.c.l.b16 %v531
  %v618 = vunpack.c.h.b16 %v531
  %v619 = vunpack.c.l.b16 %v532
  %v620 = vunpack.c.h.b16 %v532
  %v621 = vunpack.c.l.b16 %v533
  %v622 = vunpack.c.h.b16 %v533
  %v623 = vunpack.c.l.b16 %v534
  %v624 = vunpack.c.h.b16 %v534
  %v625 = vunpack.c.l.b16 %v535
  %v626 = vunpack.c.h.b16 %v535
  %v627 = vunpack.c.l.b16 %v536
  %v628 = vunpack.c.h.b16 %v536
  %v629 = vunpack.c.l.b16 %v537
  %v630 = vunpack.c.h.b16 %v537
  %v631 = vunpack.c.l.b16 %v538
  %v632 = vunpack.c.h.b16 %v538
  %v633 = vunpack.c.l.b16 %v539
  %v634 = vunpack.c.h.b16 %v539
  %v635 = vunpack.c.l.b16 %v540
  %v636 = vunpack.c.h.b16 %v540
  %v637 = vpack.c.b16 %v573, %v573
  %v638 = vpack.c.b16 %v574, %v574
  %v639 = vpack.c.b16 %v575, %v575
  %v640 = vpack.c.b16 %v576, %v576
  %v641 = vpack.c.b16 %v577, %v577
  %v642 = vpack.c.b16 %v578, %v578
  %v643 = vpack.c.b16 %v579, %v579
  %v644 = vpack.c.b16 %v580, %v580
  %v645 = vpack.c.b16 %v581, %v581
  %v646 = vpack.c.b16 %v582, %v582
  %v647 = vpack.c.b16 %v583, %v583
  %v648 = vpack.c.b16 %v584, %v584
  %v649 = vpack.c.b16 %v585, %v585
  %v650 = vpack.c.b16 %v586, %v586
  %v651 = vpack.c.b16 %v587, %v587
  %v652 = vpack.c.b16 %v588, %v588
  %v653 = vpack.c.b16 %v589, %v589
  %v654 = vpack.c.b16 %v590, %v590
  %v655 = vpack.c.b16 %v591, %v591
  %v656 = vpack.c.b16 %v592, %v592
  %v657 = vpack.c.b16 %v593, %v593
  %v658 = vpack.c.b16 %v594, %v594
  %v659 = vpack.c.b16 %v595, %v595
  %v660 = vpack.c.b16 %v596, %v596
  %v661 = vpack.c.b16 %v597, %v597
  %v662 = vpack.c.b16 %v598, %v598
  %v663 = vpack.c.b16 %v599, %v599
  %v664 = vpack.c.b16 %v600, %v600
  %v665 = vpack.c.b16 %v601, %v601
  %v666 = vpack.c.b16 %v602, %v602
  %v667 = vpack.c.b16 %v603, %v603
  %v668 = vpack.c.b16 %v604, %v604
  %v669 = vpack.c.b16 %v605, %v605
  %v670 = vpack.c.b16 %v606, %v606
  %v671 = vpack.c.b16 %v607, %v607
  %v672 = vpack.c.b16 %v608, %v608
  %v673 = vpack.c.b16 %v609, %v609
  %v674 = vpack.c.b16 %v610, %v610
  %v675 = vpack.c.b16 %v611, %v611
  %v676 = vpack.c.b16 %v612, %v612
  %v677 = vpack.c.b16 %v613, %v613
  %v678 = vpack.c.b16 %v614, %v614
  %v679 = vpack.c.b16 %v615, %v615
  %v680 = vpack.c.b16 %v616, %v616
  %v681 = vpack.c.b16 %v617, %v617
  %v682 = vpack.c.b16 %v618, %v618
  %v683 = vpack.c.b16 %v619, %v619
  %v684 = vpack.c.b16 %v620, %v620
  %v685 = vpack.c.b16 %v621, %v621
  %v686 = vpack.c.b16 %v622, %v622
  %v687 = vpack.c.b16 %v623, %v623
  %v688 = vpack.c.b16 %v624, %v624
  %v689 = vpack.c.b16 %v625, %v625
  %v690 = vpack.c.b16 %v626, %v626
  %v691 = vpack.c.b16 %v627, %v627
  %v692 = vpack.c.b16 %v628, %v628
  %v693 = vpack.c.b16 %v629, %v629
  %v694 = vpack.c.b16 %v630, %v630
  %v695 = vpack.c.b16 %v631, %v631
  %v696 = vpack.c.b16 %v632, %v632
  %v697 = vpack.c.b16 %v633, %v633
  %v698 = vpack.c.b16 %v634, %v634
  %v699 = vpack.c.b16 %v635, %v635
  %v700 = vpack.c.b16 %v636, %v636
  %vm765 = vcmask 125952
  %766 = vst.msk [vmem:[%s3] sm:$0xf] %vm765, %v637
  %767 = vst.msk [vmem:[%s3 + $0x4] sm:$0xf] %vm765, %v638
  %768 = vst.msk [vmem:[%s3 + $0x8] sm:$0xf] %vm765, %v639
  %769 = vst.msk [vmem:[%s3 + $0xc] sm:$0xf] %vm765, %v640
  %770 = vst.msk [vmem:[%s3 + $0x10] sm:$0xf] %vm765, %v641
  %771 = vst.msk [vmem:[%s3 + $0x14] sm:$0xf] %vm765, %v642
  %772 = vst.msk [vmem:[%s3 + $0x18] sm:$0xf] %vm765, %v643
  %773 = vst.msk [vmem:[%s3 + $0x1c] sm:$0xf] %vm765, %v644
  %774 = vst.msk [vmem:[%s3 + $0x20] sm:$0xf] %vm765, %v645
  %775 = vst.msk [vmem:[%s3 + $0x24] sm:$0xf] %vm765, %v646
  %776 = vst.msk [vmem:[%s3 + $0x28] sm:$0xf] %vm765, %v647
  %777 = vst.msk [vmem:[%s3 + $0x2c] sm:$0xf] %vm765, %v648
  %778 = vst.msk [vmem:[%s3 + $0x30] sm:$0xf] %vm765, %v649
  %779 = vst.msk [vmem:[%s3 + $0x34] sm:$0xf] %vm765, %v650
  %780 = vst.msk [vmem:[%s3 + $0x38] sm:$0xf] %vm765, %v651
  %781 = vst.msk [vmem:[%s3 + $0x3c] sm:$0xf] %vm765, %v652
  %782 = vst.msk [vmem:[%s3 + $0x40] sm:$0xf] %vm765, %v653
  %783 = vst.msk [vmem:[%s3 + $0x44] sm:$0xf] %vm765, %v654
  %784 = vst.msk [vmem:[%s3 + $0x48] sm:$0xf] %vm765, %v655
  %785 = vst.msk [vmem:[%s3 + $0x4c] sm:$0xf] %vm765, %v656
  %786 = vst.msk [vmem:[%s3 + $0x50] sm:$0xf] %vm765, %v657
  %787 = vst.msk [vmem:[%s3 + $0x54] sm:$0xf] %vm765, %v658
  %788 = vst.msk [vmem:[%s3 + $0x58] sm:$0xf] %vm765, %v659
  %789 = vst.msk [vmem:[%s3 + $0x5c] sm:$0xf] %vm765, %v660
  %790 = vst.msk [vmem:[%s3 + $0x60] sm:$0xf] %vm765, %v661
  %791 = vst.msk [vmem:[%s3 + $0x64] sm:$0xf] %vm765, %v662
  %792 = vst.msk [vmem:[%s3 + $0x68] sm:$0xf] %vm765, %v663
  %793 = vst.msk [vmem:[%s3 + $0x6c] sm:$0xf] %vm765, %v664
  %794 = vst.msk [vmem:[%s3 + $0x70] sm:$0xf] %vm765, %v665
  %795 = vst.msk [vmem:[%s3 + $0x74] sm:$0xf] %vm765, %v666
  %796 = vst.msk [vmem:[%s3 + $0x78] sm:$0xf] %vm765, %v667
  %797 = vst.msk [vmem:[%s3 + $0x7c] sm:$0xf] %vm765, %v668
  %798 = vst.msk [vmem:[%s3 + $0x80] sm:$0xf] %vm765, %v669
  %799 = vst.msk [vmem:[%s3 + $0x84] sm:$0xf] %vm765, %v670
  %800 = vst.msk [vmem:[%s3 + $0x88] sm:$0xf] %vm765, %v671
  %801 = vst.msk [vmem:[%s3 + $0x8c] sm:$0xf] %vm765, %v672
  %802 = vst.msk [vmem:[%s3 + $0x90] sm:$0xf] %vm765, %v673
  %803 = vst.msk [vmem:[%s3 + $0x94] sm:$0xf] %vm765, %v674
  %804 = vst.msk [vmem:[%s3 + $0x98] sm:$0xf] %vm765, %v675
  %805 = vst.msk [vmem:[%s3 + $0x9c] sm:$0xf] %vm765, %v676
  %806 = vst.msk [vmem:[%s3 + $0xa0] sm:$0xf] %vm765, %v677
  %807 = vst.msk [vmem:[%s3 + $0xa4] sm:$0xf] %vm765, %v678
  %808 = vst.msk [vmem:[%s3 + $0xa8] sm:$0xf] %vm765, %v679
  %809 = vst.msk [vmem:[%s3 + $0xac] sm:$0xf] %vm765, %v680
  %810 = vst.msk [vmem:[%s3 + $0xb0] sm:$0xf] %vm765, %v681
  %811 = vst.msk [vmem:[%s3 + $0xb4] sm:$0xf] %vm765, %v682
  %812 = vst.msk [vmem:[%s3 + $0xb8] sm:$0xf] %vm765, %v683
  %813 = vst.msk [vmem:[%s3 + $0xbc] sm:$0xf] %vm765, %v684
  %814 = vst.msk [vmem:[%s3 + $0xc0] sm:$0xf] %vm765, %v685
  %815 = vst.msk [vmem:[%s3 + $0xc4] sm:$0xf] %vm765, %v686
  %816 = vst.msk [vmem:[%s3 + $0xc8] sm:$0xf] %vm765, %v687
  %817 = vst.msk [vmem:[%s3 + $0xcc] sm:$0xf] %vm765, %v688
  %818 = vst.msk [vmem:[%s3 + $0xd0] sm:$0xf] %vm765, %v689
  %819 = vst.msk [vmem:[%s3 + $0xd4] sm:$0xf] %vm765, %v690
  %820 = vst.msk [vmem:[%s3 + $0xd8] sm:$0xf] %vm765, %v691
  %821 = vst.msk [vmem:[%s3 + $0xdc] sm:$0xf] %vm765, %v692
  %822 = vst.msk [vmem:[%s3 + $0xe0] sm:$0xf] %vm765, %v693
  %823 = vst.msk [vmem:[%s3 + $0xe4] sm:$0xf] %vm765, %v694
  %824 = vst.msk [vmem:[%s3 + $0xe8] sm:$0xf] %vm765, %v695
  %825 = vst.msk [vmem:[%s3 + $0xec] sm:$0xf] %vm765, %v696
  %826 = vst.msk [vmem:[%s3 + $0xf0] sm:$0xf] %vm765, %v697
  %827 = vst.msk [vmem:[%s3 + $0xf4] sm:$0xf] %vm765, %v698
  %828 = vst.msk [vmem:[%s3 + $0xf8] sm:$0xf] %vm765, %v699
  %829 = vst.msk [vmem:[%s3 + $0xfc] sm:$0xf] %vm765, %v700
  // Predicated region
  $region14: #{bottleneck_forward.6} parent=0 // pred_check
    _
  $region15: #{bottleneck_forward.6} parent=0 // pred_check_branch
    %831 = sbr.rel (0) target = $region17
  $region16: #{bottleneck_forward.6} parent=0 // pred_region
    _
  $region17: #{bottleneck_forward.6} parent=0 // pred_fallthru
    _
  // Predicated region
  $region18: #{bottleneck_forward.6} parent=0 // pred_check
    _
  $region19: #{bottleneck_forward.6} parent=0 // pred_check_branch
    %833 = sbr.rel (0) target = $region21
  $region20: #{bottleneck_forward.6} parent=0 // pred_region
    _
  $region21: #{bottleneck_forward.6} parent=0 // pred_fallthru
    _

// kernel: bottleneck_forward.7
$region0: #{bottleneck_forward.7}
  #allocation0 [shape = 'u32[]', space=smem, size = 0x4, offset = 0x4, fixed_abs, tag = 'smem constant byte address 0x4 - core index']
  #allocation1 [shape = 'u32[144,128]{1,0:T(1,128)}', space=vmem, size = 0x12000, scoped, tag = 'internal scratch']
  %s0 = inlined_call_operand.vmem [shape: bf16[512,4], index: 0, kind: input, shape index: {}]
  %s1 = inlined_call_operand.vmem [shape: bf16[4,16], index: 1, kind: input, shape index: {}]
  %s2 = inlined_call_operand.vmem [shape: f32[1,16], index: 2, kind: input, shape index: {}]
  %s3 = inlined_call_operand.vmem [shape: bf16[512,16], index: 3, kind: input, shape index: {}]
  %s4 = inlined_call_operand.vmem [shape: f32[512,16], index: 4, kind: output, shape index: {}]
  %s5 = sld [smem:[#allocation0]]
  $region26: #{bottleneck_forward.7} parent=0
    _
  %s7 = ssub.s32 1, %s5
  %s8 = scalar_select 0, %s7, %s5
  // Predicated region
  $region2: #{bottleneck_forward.7} parent=0 // pred_check
    _
  $region3: #{bottleneck_forward.7} parent=0 // pred_check_branch
    %10 = sbr.rel (0) target = $region5
  $region4: #{bottleneck_forward.7} parent=0 // pred_region
    _
  $region5: #{bottleneck_forward.7} parent=0 // pred_fallthru
    _
  // Predicated region
  $region6: #{bottleneck_forward.7} parent=0 // pred_check
    _
  $region7: #{bottleneck_forward.7} parent=0 // pred_check_branch
    %12 = sbr.rel (0) target = $region9
  $region8: #{bottleneck_forward.7} parent=0 // pred_region
    _
  $region9: #{bottleneck_forward.7} parent=0 // pred_fallthru
    _
  // Predicated region
  $region10: #{bottleneck_forward.7} parent=0 // pred_check
    _
  $region11: #{bottleneck_forward.7} parent=0 // pred_check_branch
    %14 = sbr.rel (0) target = $region13
  $region12: #{bottleneck_forward.7} parent=0 // pred_region
    _
  $region13: #{bottleneck_forward.7} parent=0 // pred_fallthru
    _
  // Predicated region
  $region14: #{bottleneck_forward.7} parent=0 // pred_check
    _
  $region15: #{bottleneck_forward.7} parent=0 // pred_check_branch
    %16 = sbr.rel (0) target = $region17
  $region16: #{bottleneck_forward.7} parent=0 // pred_region
    _
  $region17: #{bottleneck_forward.7} parent=0 // pred_fallthru
    _
  %v18 = vld [vmem:[%s0] sm:$0xf]
  %v19 = vld [vmem:[%s0 + $0x4] sm:$0xf]
  %v20 = vld [vmem:[%s0 + $0x8] sm:$0xf]
  %v21 = vld [vmem:[%s0 + $0xc] sm:$0xf]
  %v22 = vld [vmem:[%s0 + $0x10] sm:$0xf]
  %v23 = vld [vmem:[%s0 + $0x14] sm:$0xf]
  %v24 = vld [vmem:[%s0 + $0x18] sm:$0xf]
  %v25 = vld [vmem:[%s0 + $0x1c] sm:$0xf]
  %v26 = vld [vmem:[%s0 + $0x20] sm:$0xf]
  %v27 = vld [vmem:[%s0 + $0x24] sm:$0xf]
  %v28 = vld [vmem:[%s0 + $0x28] sm:$0xf]
  %v29 = vld [vmem:[%s0 + $0x2c] sm:$0xf]
  %v30 = vld [vmem:[%s0 + $0x30] sm:$0xf]
  %v31 = vld [vmem:[%s0 + $0x34] sm:$0xf]
  %v32 = vld [vmem:[%s0 + $0x38] sm:$0xf]
  %v33 = vld [vmem:[%s0 + $0x3c] sm:$0xf]
  %v34 = vld [vmem:[%s0 + $0x40] sm:$0xf]
  %v35 = vld [vmem:[%s0 + $0x44] sm:$0xf]
  %v36 = vld [vmem:[%s0 + $0x48] sm:$0xf]
  %v37 = vld [vmem:[%s0 + $0x4c] sm:$0xf]
  %v38 = vld [vmem:[%s0 + $0x50] sm:$0xf]
  %v39 = vld [vmem:[%s0 + $0x54] sm:$0xf]
  %v40 = vld [vmem:[%s0 + $0x58] sm:$0xf]
  %v41 = vld [vmem:[%s0 + $0x5c] sm:$0xf]
  %v42 = vld [vmem:[%s0 + $0x60] sm:$0xf]
  %v43 = vld [vmem:[%s0 + $0x64] sm:$0xf]
  %v44 = vld [vmem:[%s0 + $0x68] sm:$0xf]
  %v45 = vld [vmem:[%s0 + $0x6c] sm:$0xf]
  %v46 = vld [vmem:[%s0 + $0x70] sm:$0xf]
  %v47 = vld [vmem:[%s0 + $0x74] sm:$0xf]
  %v48 = vld [vmem:[%s0 + $0x78] sm:$0xf]
  %v49 = vld [vmem:[%s0 + $0x7c] sm:$0xf]
  %v50 = vld [vmem:[%s0 + $0x80] sm:$0xf]
  %v51 = vld [vmem:[%s0 + $0x84] sm:$0xf]
  %v52 = vld [vmem:[%s0 + $0x88] sm:$0xf]
  %v53 = vld [vmem:[%s0 + $0x8c] sm:$0xf]
  %v54 = vld [vmem:[%s0 + $0x90] sm:$0xf]
  %v55 = vld [vmem:[%s0 + $0x94] sm:$0xf]
  %v56 = vld [vmem:[%s0 + $0x98] sm:$0xf]
  %v57 = vld [vmem:[%s0 + $0x9c] sm:$0xf]
  %v58 = vld [vmem:[%s0 + $0xa0] sm:$0xf]
  %v59 = vld [vmem:[%s0 + $0xa4] sm:$0xf]
  %v60 = vld [vmem:[%s0 + $0xa8] sm:$0xf]
  %v61 = vld [vmem:[%s0 + $0xac] sm:$0xf]
  %v62 = vld [vmem:[%s0 + $0xb0] sm:$0xf]
  %v63 = vld [vmem:[%s0 + $0xb4] sm:$0xf]
  %v64 = vld [vmem:[%s0 + $0xb8] sm:$0xf]
  %v65 = vld [vmem:[%s0 + $0xbc] sm:$0xf]
  %v66 = vld [vmem:[%s0 + $0xc0] sm:$0xf]
  %v67 = vld [vmem:[%s0 + $0xc4] sm:$0xf]
  %v68 = vld [vmem:[%s0 + $0xc8] sm:$0xf]
  %v69 = vld [vmem:[%s0 + $0xcc] sm:$0xf]
  %v70 = vld [vmem:[%s0 + $0xd0] sm:$0xf]
  %v71 = vld [vmem:[%s0 + $0xd4] sm:$0xf]
  %v72 = vld [vmem:[%s0 + $0xd8] sm:$0xf]
  %v73 = vld [vmem:[%s0 + $0xdc] sm:$0xf]
  %v74 = vld [vmem:[%s0 + $0xe0] sm:$0xf]
  %v75 = vld [vmem:[%s0 + $0xe4] sm:$0xf]
  %v76 = vld [vmem:[%s0 + $0xe8] sm:$0xf]
  %v77 = vld [vmem:[%s0 + $0xec] sm:$0xf]
  %v78 = vld [vmem:[%s0 + $0xf0] sm:$0xf]
  %v79 = vld [vmem:[%s0 + $0xf4] sm:$0xf]
  %v80 = vld [vmem:[%s0 + $0xf8] sm:$0xf]
  %v81 = vld [vmem:[%s0 + $0xfc] sm:$0xf]
  %v82 = vld [vmem:[%s1] sm:$0x3]
  %v83 = vld [vmem:[%s2] sm:$0x1]
  %v85 = vlaneseq
  %v86 = vshrl.u32 %v85, 7
  %v87 = vsub.s32 0, %v86
  %v88 = vrot.slane %v83, %v87
  %v154 = vunpack.c.l.b16 %v18
  %v155 = vunpack.c.l.b16 %v19
  %v156 = vunpack.c.l.b16 %v20
  %v157 = vunpack.c.l.b16 %v21
  %v158 = vunpack.c.l.b16 %v22
  %v159 = vunpack.c.l.b16 %v23
  %v160 = vunpack.c.l.b16 %v24
  %v161 = vunpack.c.l.b16 %v25
  %v162 = vunpack.c.l.b16 %v26
  %v163 = vunpack.c.l.b16 %v27
  %v164 = vunpack.c.l.b16 %v28
  %v165 = vunpack.c.l.b16 %v29
  %v166 = vunpack.c.l.b16 %v30
  %v167 = vunpack.c.l.b16 %v31
  %v168 = vunpack.c.l.b16 %v32
  %v169 = vunpack.c.l.b16 %v33
  %v170 = vunpack.c.l.b16 %v34
  %v171 = vunpack.c.l.b16 %v35
  %v172 = vunpack.c.l.b16 %v36
  %v173 = vunpack.c.l.b16 %v37
  %v174 = vunpack.c.l.b16 %v38
  %v175 = vunpack.c.l.b16 %v39
  %v176 = vunpack.c.l.b16 %v40
  %v177 = vunpack.c.l.b16 %v41
  %v178 = vunpack.c.l.b16 %v42
  %v179 = vunpack.c.l.b16 %v43
  %v180 = vunpack.c.l.b16 %v44
  %v181 = vunpack.c.l.b16 %v45
  %v182 = vunpack.c.l.b16 %v46
  %v183 = vunpack.c.l.b16 %v47
  %v184 = vunpack.c.l.b16 %v48
  %v185 = vunpack.c.l.b16 %v49
  %v186 = vunpack.c.l.b16 %v50
  %v187 = vunpack.c.l.b16 %v51
  %v188 = vunpack.c.l.b16 %v52
  %v189 = vunpack.c.l.b16 %v53
  %v190 = vunpack.c.l.b16 %v54
  %v191 = vunpack.c.l.b16 %v55
  %v192 = vunpack.c.l.b16 %v56
  %v193 = vunpack.c.l.b16 %v57
  %v194 = vunpack.c.l.b16 %v58
  %v195 = vunpack.c.l.b16 %v59
  %v196 = vunpack.c.l.b16 %v60
  %v197 = vunpack.c.l.b16 %v61
  %v198 = vunpack.c.l.b16 %v62
  %v199 = vunpack.c.l.b16 %v63
  %v200 = vunpack.c.l.b16 %v64
  %v201 = vunpack.c.l.b16 %v65
  %v202 = vunpack.c.l.b16 %v66
  %v203 = vunpack.c.l.b16 %v67
  %v204 = vunpack.c.l.b16 %v68
  %v205 = vunpack.c.l.b16 %v69
  %v206 = vunpack.c.l.b16 %v70
  %v207 = vunpack.c.l.b16 %v71
  %v208 = vunpack.c.l.b16 %v72
  %v209 = vunpack.c.l.b16 %v73
  %v210 = vunpack.c.l.b16 %v74
  %v211 = vunpack.c.l.b16 %v75
  %v212 = vunpack.c.l.b16 %v76
  %v213 = vunpack.c.l.b16 %v77
  %v214 = vunpack.c.l.b16 %v78
  %v215 = vunpack.c.l.b16 %v79
  %v216 = vunpack.c.l.b16 %v80
  %v217 = vunpack.c.l.b16 %v81
  %v218 = vpack.c.b16 %v155, %v154
  %v219 = vpack.c.b16 %v157, %v156
  %v220 = vpack.c.b16 %v159, %v158
  %v221 = vpack.c.b16 %v161, %v160
  %v222 = vpack.c.b16 %v163, %v162
  %v223 = vpack.c.b16 %v165, %v164
  %v224 = vpack.c.b16 %v167, %v166
  %v225 = vpack.c.b16 %v169, %v168
  %v226 = vpack.c.b16 %v171, %v170
  %v227 = vpack.c.b16 %v173, %v172
  %v228 = vpack.c.b16 %v175, %v174
  %v229 = vpack.c.b16 %v177, %v176
  %v230 = vpack.c.b16 %v179, %v178
  %v231 = vpack.c.b16 %v181, %v180
  %v232 = vpack.c.b16 %v183, %v182
  %v233 = vpack.c.b16 %v185, %v184
  %v234 = vpack.c.b16 %v187, %v186
  %v235 = vpack.c.b16 %v189, %v188
  %v236 = vpack.c.b16 %v191, %v190
  %v237 = vpack.c.b16 %v193, %v192
  %v238 = vpack.c.b16 %v195, %v194
  %v239 = vpack.c.b16 %v197, %v196
  %v240 = vpack.c.b16 %v199, %v198
  %v241 = vpack.c.b16 %v201, %v200
  %v242 = vpack.c.b16 %v203, %v202
  %v243 = vpack.c.b16 %v205, %v204
  %v244 = vpack.c.b16 %v207, %v206
  %v245 = vpack.c.b16 %v209, %v208
  %v246 = vpack.c.b16 %v211, %v210
  %v247 = vpack.c.b16 %v213, %v212
  %v248 = vpack.c.b16 %v215, %v214
  %v249 = vpack.c.b16 %v217, %v216
  %vm250 = vcmask 31744
  %v252 = vsel %vm250, %v218, 0
  %v255 = vsel %vm250, %v219, 0
  %v258 = vsel %vm250, %v220, 0
  %v261 = vsel %vm250, %v221, 0
  %v264 = vsel %vm250, %v222, 0
  %v267 = vsel %vm250, %v223, 0
  %v270 = vsel %vm250, %v224, 0
  %v273 = vsel %vm250, %v225, 0
  %v276 = vsel %vm250, %v226, 0
  %v279 = vsel %vm250, %v227, 0
  %v282 = vsel %vm250, %v228, 0
  %v285 = vsel %vm250, %v229, 0
  %v288 = vsel %vm250, %v230, 0
  %v291 = vsel %vm250, %v231, 0
  %v294 = vsel %vm250, %v232, 0
  %v297 = vsel %vm250, %v233, 0
  %v300 = vsel %vm250, %v234, 0
  %v303 = vsel %vm250, %v235, 0
  %v306 = vsel %vm250, %v236, 0
  %v309 = vsel %vm250, %v237, 0
  %v312 = vsel %vm250, %v238, 0
  %v315 = vsel %vm250, %v239, 0
  %v318 = vsel %vm250, %v240, 0
  %v321 = vsel %vm250, %v241, 0
  %v324 = vsel %vm250, %v242, 0
  %v327 = vsel %vm250, %v243, 0
  %v330 = vsel %vm250, %v244, 0
  %v333 = vsel %vm250, %v245, 0
  %v336 = vsel %vm250, %v246, 0
  %v339 = vsel %vm250, %v247, 0
  %v342 = vsel %vm250, %v248, 0
  %v345 = vsel %vm250, %v249, 0
  %vm347 = vcmask 1041408
  %v349 = vsel %vm347, %v82, 0
  %351 = vmatprep.subr.bf16.mxu0 0
  %352 = vmatpush1.bf16.msra.mxu0 %v349
  %353 = vmatprep.subr.bf16.mxu0 0
  %354 = vmatpush1.bf16.msra.mxu0 0
  %355 = vmatprep.subr.bf16.mxu0 0
  %356 = vmatpush1.bf16.msra.mxu0 0
  %357 = vmatprep.subr.bf16.mxu0 0
  %358 = vmatpush1.bf16.msra.mxu0 0
  %359 = vmatprep.subr.bf16.mxu0 0
  %360 = vmatpush1.bf16.msra.mxu0 0
  %361 = vmatprep.subr.bf16.mxu0 0
  %362 = vmatpush1.bf16.msra.mxu0 0
  %363 = vmatprep.subr.bf16.mxu0 0
  %364 = vmatpush1.bf16.msra.mxu0 0
  %365 = vmatprep.subr.bf16.mxu0 0
  %366 = vmatpush1.bf16.msra.mxu0 0
  %367 = vmatprep.subr.bf16.mxu0 0
  %368 = vmatpush1.bf16.msra.mxu0 0
  %369 = vmatprep.subr.bf16.mxu0 0
  %370 = vmatpush1.bf16.msra.mxu0 0
  %371 = vmatprep.subr.bf16.mxu0 0
  %372 = vmatpush1.bf16.msra.mxu0 0
  %373 = vmatprep.subr.bf16.mxu0 0
  %374 = vmatpush1.bf16.msra.mxu0 0
  %375 = vmatprep.subr.bf16.mxu0 0
  %376 = vmatpush1.bf16.msra.mxu0 0
  %377 = vmatprep.subr.bf16.mxu0 0
  %378 = vmatpush1.bf16.msra.mxu0 0
  %379 = vmatprep.subr.bf16.mxu0 0
  %380 = vmatpush1.bf16.msra.mxu0 0
  %381 = vmatprep.subr.bf16.mxu0 0
  %382 = vmatpush1.bf16.msra.mxu0 0
  %383 = vmatprep.mubr.bf16.mxu0 0
  %384 = vmatmul.mubr.bf16.gmra.mrb[0].mxu0 %v252
  %v385 = vpop.f32.mrb[0].mxu0
  %v386 = vadd.f32 %v88, %v385
  %v387 = vpop.f32.mrb[0].mxu0
  %v388 = vpop.f32.mrb[0].mxu0
  %v389 = vadd.f32 %v88, %v388
  %v390 = vpop.f32.mrb[0].mxu0
  %391 = vmatprep.mubr.bf16.mxu0 0
  %392 = vmatmul.mubr.bf16.gmra.mrb[0].mxu0 %v255
  %v393 = vpop.f32.mrb[0].mxu0
  %v394 = vadd.f32 %v88, %v393
  %v395 = vpop.f32.mrb[0].mxu0
  %v396 = vpop.f32.mrb[0].mxu0
  %v397 = vadd.f32 %v88, %v396
  %v398 = vpop.f32.mrb[0].mxu0
  %399 = vmatprep.mubr.bf16.mxu0 0
  %400 = vmatmul.mubr.bf16.gmra.mrb[0].mxu0 %v258
  %v401 = vpop.f32.mrb[0].mxu0
  %v402 = vadd.f32 %v88, %v401
  %v403 = vpop.f32.mrb[0].mxu0
  %v404 = vpop.f32.mrb[0].mxu0
  %v405 = vadd.f32 %v88, %v404
  %v406 = vpop.f32.mrb[0].mxu0
  %407 = vmatprep.mubr.bf16.mxu0 0
  %408 = vmatmul.mubr.bf16.gmra.mrb[0].mxu0 %v261
  %v409 = vpop.f32.mrb[0].mxu0
  %v410 = vadd.f32 %v88, %v409
  %v411 = vpop.f32.mrb[0].mxu0
  %v412 = vpop.f32.mrb[0].mxu0
  %v413 = vadd.f32 %v88, %v412
  %v414 = vpop.f32.mrb[0].mxu0
  %415 = vmatprep.mubr.bf16.mxu0 0
  %416 = vmatmul.mubr.bf16.gmra.mrb[0].mxu0 %v264
  %v417 = vpop.f32.mrb[0].mxu0
  %v418 = vadd.f32 %v88, %v417
  %v419 = vpop.f32.mrb[0].mxu0
  %v420 = vpop.f32.mrb[0].mxu0
  %v421 = vadd.f32 %v88, %v420
  %v422 = vpop.f32.mrb[0].mxu0
  %423 = vmatprep.mubr.bf16.mxu0 0
  %424 = vmatmul.mubr.bf16.gmra.mrb[0].mxu0 %v267
  %v425 = vpop.f32.mrb[0].mxu0
  %v426 = vadd.f32 %v88, %v425
  %v427 = vpop.f32.mrb[0].mxu0
  %v428 = vpop.f32.mrb[0].mxu0
  %v429 = vadd.f32 %v88, %v428
  %v430 = vpop.f32.mrb[0].mxu0
  %431 = vmatprep.mubr.bf16.mxu0 0
  %432 = vmatmul.mubr.bf16.gmra.mrb[0].mxu0 %v270
  %v433 = vpop.f32.mrb[0].mxu0
  %v434 = vadd.f32 %v88, %v433
  %v435 = vpop.f32.mrb[0].mxu0
  %v436 = vpop.f32.mrb[0].mxu0
  %v437 = vadd.f32 %v88, %v436
  %v438 = vpop.f32.mrb[0].mxu0
  %439 = vmatprep.mubr.bf16.mxu0 0
  %440 = vmatmul.mubr.bf16.gmra.mrb[0].mxu0 %v273
  %v441 = vpop.f32.mrb[0].mxu0
  %v442 = vadd.f32 %v88, %v441
  %v443 = vpop.f32.mrb[0].mxu0
  %v444 = vpop.f32.mrb[0].mxu0
  %v445 = vadd.f32 %v88, %v444
  %v446 = vpop.f32.mrb[0].mxu0
  %447 = vmatprep.mubr.bf16.mxu0 0
  %448 = vmatmul.mubr.bf16.gmra.mrb[0].mxu0 %v276
  %v449 = vpop.f32.mrb[0].mxu0
  %v450 = vadd.f32 %v88, %v449
  %v451 = vpop.f32.mrb[0].mxu0
  %v452 = vpop.f32.mrb[0].mxu0
  %v453 = vadd.f32 %v88, %v452
  %v454 = vpop.f32.mrb[0].mxu0
  %455 = vmatprep.mubr.bf16.mxu0 0
  %456 = vmatmul.mubr.bf16.gmra.mrb[0].mxu0 %v279
  %v457 = vpop.f32.mrb[0].mxu0
  %v458 = vadd.f32 %v88, %v457
  %v459 = vpop.f32.mrb[0].mxu0
  %v460 = vpop.f32.mrb[0].mxu0
  %v461 = vadd.f32 %v88, %v460
  %v462 = vpop.f32.mrb[0].mxu0
  %463 = vmatprep.mubr.bf16.mxu0 0
  %464 = vmatmul.mubr.bf16.gmra.mrb[0].mxu0 %v282
  %v465 = vpop.f32.mrb[0].mxu0
  %v466 = vadd.f32 %v88, %v465
  %v467 = vpop.f32.mrb[0].mxu0
  %v468 = vpop.f32.mrb[0].mxu0
  %v469 = vadd.f32 %v88, %v468
  %v470 = vpop.f32.mrb[0].mxu0
  %471 = vmatprep.mubr.bf16.mxu0 0
  %472 = vmatmul.mubr.bf16.gmra.mrb[0].mxu0 %v285
  %v473 = vpop.f32.mrb[0].mxu0
  %v474 = vadd.f32 %v88, %v473
  %v475 = vpop.f32.mrb[0].mxu0
  %v476 = vpop.f32.mrb[0].mxu0
  %v477 = vadd.f32 %v88, %v476
  %v478 = vpop.f32.mrb[0].mxu0
  %479 = vmatprep.mubr.bf16.mxu0 0
  %480 = vmatmul.mubr.bf16.gmra.mrb[0].mxu0 %v288
  %v481 = vpop.f32.mrb[0].mxu0
  %v482 = vadd.f32 %v88, %v481
  %v483 = vpop.f32.mrb[0].mxu0
  %v484 = vpop.f32.mrb[0].mxu0
  %v485 = vadd.f32 %v88, %v484
  %v486 = vpop.f32.mrb[0].mxu0
  %487 = vmatprep.mubr.bf16.mxu0 0
  %488 = vmatmul.mubr.bf16.gmra.mrb[0].mxu0 %v291
  %v489 = vpop.f32.mrb[0].mxu0
  %v490 = vadd.f32 %v88, %v489
  %v491 = vpop.f32.mrb[0].mxu0
  %v492 = vpop.f32.mrb[0].mxu0
  %v493 = vadd.f32 %v88, %v492
  %v494 = vpop.f32.mrb[0].mxu0
  %495 = vmatprep.mubr.bf16.mxu0 0
  %496 = vmatmul.mubr.bf16.gmra.mrb[0].mxu0 %v294
  %v497 = vpop.f32.mrb[0].mxu0
  %v498 = vadd.f32 %v88, %v497
  %v499 = vpop.f32.mrb[0].mxu0
  %v500 = vpop.f32.mrb[0].mxu0
  %v501 = vadd.f32 %v88, %v500
  %v502 = vpop.f32.mrb[0].mxu0
  %503 = vmatprep.mubr.bf16.mxu0 0
  %504 = vmatmul.mubr.bf16.gmra.mrb[0].mxu0 %v297
  %v505 = vpop.f32.mrb[0].mxu0
  %v506 = vadd.f32 %v88, %v505
  %v507 = vpop.f32.mrb[0].mxu0
  %v508 = vpop.f32.mrb[0].mxu0
  %v509 = vadd.f32 %v88, %v508
  %v510 = vpop.f32.mrb[0].mxu0
  %511 = vmatprep.mubr.bf16.mxu0 0
  %512 = vmatmul.mubr.bf16.gmra.mrb[0].mxu0 %v300
  %v513 = vpop.f32.mrb[0].mxu0
  %v514 = vadd.f32 %v88, %v513
  %v515 = vpop.f32.mrb[0].mxu0
  %v516 = vpop.f32.mrb[0].mxu0
  %v517 = vadd.f32 %v88, %v516
  %v518 = vpop.f32.mrb[0].mxu0
  %519 = vmatprep.mubr.bf16.mxu0 0
  %520 = vmatmul.mubr.bf16.gmra.mrb[0].mxu0 %v303
  %v521 = vpop.f32.mrb[0].mxu0
  %v522 = vadd.f32 %v88, %v521
  %v523 = vpop.f32.mrb[0].mxu0
  %v524 = vpop.f32.mrb[0].mxu0
  %v525 = vadd.f32 %v88, %v524
  %v526 = vpop.f32.mrb[0].mxu0
  %527 = vmatprep.mubr.bf16.mxu0 0
  %528 = vmatmul.mubr.bf16.gmra.mrb[0].mxu0 %v306
  %v529 = vpop.f32.mrb[0].mxu0
  %v530 = vadd.f32 %v88, %v529
  %v531 = vpop.f32.mrb[0].mxu0
  %v532 = vpop.f32.mrb[0].mxu0
  %v533 = vadd.f32 %v88, %v532
  %v534 = vpop.f32.mrb[0].mxu0
  %535 = vmatprep.mubr.bf16.mxu0 0
  %536 = vmatmul.mubr.bf16.gmra.mrb[0].mxu0 %v309
  %v537 = vpop.f32.mrb[0].mxu0
  %v538 = vadd.f32 %v88, %v537
  %v539 = vpop.f32.mrb[0].mxu0
  %v540 = vpop.f32.mrb[0].mxu0
  %v541 = vadd.f32 %v88, %v540
  %v542 = vpop.f32.mrb[0].mxu0
  %543 = vmatprep.mubr.bf16.mxu0 0
  %544 = vmatmul.mubr.bf16.gmra.mrb[0].mxu0 %v312
  %v545 = vpop.f32.mrb[0].mxu0
  %v546 = vadd.f32 %v88, %v545
  %v547 = vpop.f32.mrb[0].mxu0
  %v548 = vpop.f32.mrb[0].mxu0
  %v549 = vadd.f32 %v88, %v548
  %v550 = vpop.f32.mrb[0].mxu0
  %551 = vmatprep.mubr.bf16.mxu0 0
  %552 = vmatmul.mubr.bf16.gmra.mrb[0].mxu0 %v315
  %v553 = vpop.f32.mrb[0].mxu0
  %v554 = vadd.f32 %v88, %v553
  %v555 = vpop.f32.mrb[0].mxu0
  %v556 = vpop.f32.mrb[0].mxu0
  %v557 = vadd.f32 %v88, %v556
  %v558 = vpop.f32.mrb[0].mxu0
  %559 = vmatprep.mubr.bf16.mxu0 0
  %560 = vmatmul.mubr.bf16.gmra.mrb[0].mxu0 %v318
  %v561 = vpop.f32.mrb[0].mxu0
  %v562 = vadd.f32 %v88, %v561
  %v563 = vpop.f32.mrb[0].mxu0
  %v564 = vpop.f32.mrb[0].mxu0
  %v565 = vadd.f32 %v88, %v564
  %v566 = vpop.f32.mrb[0].mxu0
  %567 = vmatprep.mubr.bf16.mxu0 0
  %568 = vmatmul.mubr.bf16.gmra.mrb[0].mxu0 %v321
  %v569 = vpop.f32.mrb[0].mxu0
  %v570 = vadd.f32 %v88, %v569
  %v571 = vpop.f32.mrb[0].mxu0
  %v572 = vpop.f32.mrb[0].mxu0
  %v573 = vadd.f32 %v88, %v572
  %v574 = vpop.f32.mrb[0].mxu0
  %575 = vmatprep.mubr.bf16.mxu0 0
  %576 = vmatmul.mubr.bf16.gmra.mrb[0].mxu0 %v324
  %v577 = vpop.f32.mrb[0].mxu0
  %v578 = vadd.f32 %v88, %v577
  %v579 = vpop.f32.mrb[0].mxu0
  %v580 = vpop.f32.mrb[0].mxu0
  %v581 = vadd.f32 %v88, %v580
  %v582 = vpop.f32.mrb[0].mxu0
  %583 = vmatprep.mubr.bf16.mxu0 0
  %584 = vmatmul.mubr.bf16.gmra.mrb[0].mxu0 %v327
  %v585 = vpop.f32.mrb[0].mxu0
  %v586 = vadd.f32 %v88, %v585
  %v587 = vpop.f32.mrb[0].mxu0
  %v588 = vpop.f32.mrb[0].mxu0
  %v589 = vadd.f32 %v88, %v588
  %v590 = vpop.f32.mrb[0].mxu0
  %591 = vmatprep.mubr.bf16.mxu0 0
  %592 = vmatmul.mubr.bf16.gmra.mrb[0].mxu0 %v330
  %v593 = vpop.f32.mrb[0].mxu0
  %v594 = vadd.f32 %v88, %v593
  %v595 = vpop.f32.mrb[0].mxu0
  %v596 = vpop.f32.mrb[0].mxu0
  %v597 = vadd.f32 %v88, %v596
  %v598 = vpop.f32.mrb[0].mxu0
  %599 = vmatprep.mubr.bf16.mxu0 0
  %600 = vmatmul.mubr.bf16.gmra.mrb[0].mxu0 %v333
  %v601 = vpop.f32.mrb[0].mxu0
  %v602 = vadd.f32 %v88, %v601
  %v603 = vpop.f32.mrb[0].mxu0
  %v604 = vpop.f32.mrb[0].mxu0
  %v605 = vadd.f32 %v88, %v604
  %v606 = vpop.f32.mrb[0].mxu0
  %607 = vmatprep.mubr.bf16.mxu0 0
  %608 = vmatmul.mubr.bf16.gmra.mrb[0].mxu0 %v336
  %v609 = vpop.f32.mrb[0].mxu0
  %v610 = vadd.f32 %v88, %v609
  %v611 = vpop.f32.mrb[0].mxu0
  %v612 = vpop.f32.mrb[0].mxu0
  %v613 = vadd.f32 %v88, %v612
  %v614 = vpop.f32.mrb[0].mxu0
  %615 = vmatprep.mubr.bf16.mxu0 0
  %616 = vmatmul.mubr.bf16.gmra.mrb[0].mxu0 %v339
  %v617 = vpop.f32.mrb[0].mxu0
  %v618 = vadd.f32 %v88, %v617
  %v619 = vpop.f32.mrb[0].mxu0
  %v620 = vpop.f32.mrb[0].mxu0
  %v621 = vadd.f32 %v88, %v620
  %v622 = vpop.f32.mrb[0].mxu0
  %623 = vmatprep.mubr.bf16.mxu0 0
  %624 = vmatmul.mubr.bf16.gmra.mrb[0].mxu0 %v342
  %v625 = vpop.f32.mrb[0].mxu0
  %v626 = vadd.f32 %v88, %v625
  %v627 = vpop.f32.mrb[0].mxu0
  %v628 = vpop.f32.mrb[0].mxu0
  %v629 = vadd.f32 %v88, %v628
  %v630 = vpop.f32.mrb[0].mxu0
  %631 = vmatprep.mubr.bf16.mxu0 0
  %632 = vmatmul.mubr.bf16.gmra.mrb[0].mxu0 %v345
  %v633 = vpop.f32.mrb[0].mxu0
  %v634 = vadd.f32 %v88, %v633
  %v635 = vpop.f32.mrb[0].mxu0
  %v636 = vpop.f32.mrb[0].mxu0
  %v637 = vadd.f32 %v88, %v636
  %v638 = vpop.f32.mrb[0].mxu0
  %639 = vdwg.mxu0
  %v640 = vld [vmem:[%s3] sm:$0xf]
  %v641 = vld [vmem:[%s3 + $0x4] sm:$0xf]
  %v642 = vld [vmem:[%s3 + $0x8] sm:$0xf]
  %v643 = vld [vmem:[%s3 + $0xc] sm:$0xf]
  %v644 = vld [vmem:[%s3 + $0x10] sm:$0xf]
  %v645 = vld [vmem:[%s3 + $0x14] sm:$0xf]
  %v646 = vld [vmem:[%s3 + $0x18] sm:$0xf]
  %v647 = vld [vmem:[%s3 + $0x1c] sm:$0xf]
  %v648 = vld [vmem:[%s3 + $0x20] sm:$0xf]
  %v649 = vld [vmem:[%s3 + $0x24] sm:$0xf]
  %v650 = vld [vmem:[%s3 + $0x28] sm:$0xf]
  %v651 = vld [vmem:[%s3 + $0x2c] sm:$0xf]
  %v652 = vld [vmem:[%s3 + $0x30] sm:$0xf]
  %v653 = vld [vmem:[%s3 + $0x34] sm:$0xf]
  %v654 = vld [vmem:[%s3 + $0x38] sm:$0xf]
  %v655 = vld [vmem:[%s3 + $0x3c] sm:$0xf]
  %v656 = vld [vmem:[%s3 + $0x40] sm:$0xf]
  %v657 = vld [vmem:[%s3 + $0x44] sm:$0xf]
  %v658 = vld [vmem:[%s3 + $0x48] sm:$0xf]
  %v659 = vld [vmem:[%s3 + $0x4c] sm:$0xf]
  %v660 = vld [vmem:[%s3 + $0x50] sm:$0xf]
  %v661 = vld [vmem:[%s3 + $0x54] sm:$0xf]
  %v662 = vld [vmem:[%s3 + $0x58] sm:$0xf]
  %v663 = vld [vmem:[%s3 + $0x5c] sm:$0xf]
  %v664 = vld [vmem:[%s3 + $0x60] sm:$0xf]
  %v665 = vld [vmem:[%s3 + $0x64] sm:$0xf]
  %v666 = vld [vmem:[%s3 + $0x68] sm:$0xf]
  %v667 = vld [vmem:[%s3 + $0x6c] sm:$0xf]
  %v668 = vld [vmem:[%s3 + $0x70] sm:$0xf]
  %v669 = vld [vmem:[%s3 + $0x74] sm:$0xf]
  %v670 = vld [vmem:[%s3 + $0x78] sm:$0xf]
  %v671 = vld [vmem:[%s3 + $0x7c] sm:$0xf]
  %v672 = vld [vmem:[%s3 + $0x80] sm:$0xf]
  %v673 = vld [vmem:[%s3 + $0x84] sm:$0xf]
  %v674 = vld [vmem:[%s3 + $0x88] sm:$0xf]
  %v675 = vld [vmem:[%s3 + $0x8c] sm:$0xf]
  %v676 = vld [vmem:[%s3 + $0x90] sm:$0xf]
  %v677 = vld [vmem:[%s3 + $0x94] sm:$0xf]
  %v678 = vld [vmem:[%s3 + $0x98] sm:$0xf]
  %v679 = vld [vmem:[%s3 + $0x9c] sm:$0xf]
  %v680 = vld [vmem:[%s3 + $0xa0] sm:$0xf]
  %v681 = vld [vmem:[%s3 + $0xa4] sm:$0xf]
  %v682 = vld [vmem:[%s3 + $0xa8] sm:$0xf]
  %v683 = vld [vmem:[%s3 + $0xac] sm:$0xf]
  %v684 = vld [vmem:[%s3 + $0xb0] sm:$0xf]
  %v685 = vld [vmem:[%s3 + $0xb4] sm:$0xf]
  %v686 = vld [vmem:[%s3 + $0xb8] sm:$0xf]
  %v687 = vld [vmem:[%s3 + $0xbc] sm:$0xf]
  %v688 = vld [vmem:[%s3 + $0xc0] sm:$0xf]
  %v689 = vld [vmem:[%s3 + $0xc4] sm:$0xf]
  %v690 = vld [vmem:[%s3 + $0xc8] sm:$0xf]
  %v691 = vld [vmem:[%s3 + $0xcc] sm:$0xf]
  %v692 = vld [vmem:[%s3 + $0xd0] sm:$0xf]
  %v693 = vld [vmem:[%s3 + $0xd4] sm:$0xf]
  %v694 = vld [vmem:[%s3 + $0xd8] sm:$0xf]
  %v695 = vld [vmem:[%s3 + $0xdc] sm:$0xf]
  %v696 = vld [vmem:[%s3 + $0xe0] sm:$0xf]
  %v697 = vld [vmem:[%s3 + $0xe4] sm:$0xf]
  %v698 = vld [vmem:[%s3 + $0xe8] sm:$0xf]
  %v699 = vld [vmem:[%s3 + $0xec] sm:$0xf]
  %v700 = vld [vmem:[%s3 + $0xf0] sm:$0xf]
  %v701 = vld [vmem:[%s3 + $0xf4] sm:$0xf]
  %v702 = vld [vmem:[%s3 + $0xf8] sm:$0xf]
  %v703 = vld [vmem:[%s3 + $0xfc] sm:$0xf]
  %v704 = vunpack.c.l.bf16 %v640
  %v705 = vunpack.c.l.bf16 %v641
  %v706 = vunpack.c.l.bf16 %v642
  %v707 = vunpack.c.l.bf16 %v643
  %v708 = vunpack.c.l.bf16 %v644
  %v709 = vunpack.c.l.bf16 %v645
  %v710 = vunpack.c.l.bf16 %v646
  %v711 = vunpack.c.l.bf16 %v647
  %v712 = vunpack.c.l.bf16 %v648
  %v713 = vunpack.c.l.bf16 %v649
  %v714 = vunpack.c.l.bf16 %v650
  %v715 = vunpack.c.l.bf16 %v651
  %v716 = vunpack.c.l.bf16 %v652
  %v717 = vunpack.c.l.bf16 %v653
  %v718 = vunpack.c.l.bf16 %v654
  %v719 = vunpack.c.l.bf16 %v655
  %v720 = vunpack.c.l.bf16 %v656
  %v721 = vunpack.c.l.bf16 %v657
  %v722 = vunpack.c.l.bf16 %v658
  %v723 = vunpack.c.l.bf16 %v659
  %v724 = vunpack.c.l.bf16 %v660
  %v725 = vunpack.c.l.bf16 %v661
  %v726 = vunpack.c.l.bf16 %v662
  %v727 = vunpack.c.l.bf16 %v663
  %v728 = vunpack.c.l.bf16 %v664
  %v729 = vunpack.c.l.bf16 %v665
  %v730 = vunpack.c.l.bf16 %v666
  %v731 = vunpack.c.l.bf16 %v667
  %v732 = vunpack.c.l.bf16 %v668
  %v733 = vunpack.c.l.bf16 %v669
  %v734 = vunpack.c.l.bf16 %v670
  %v735 = vunpack.c.l.bf16 %v671
  %v736 = vunpack.c.l.bf16 %v672
  %v737 = vunpack.c.l.bf16 %v673
  %v738 = vunpack.c.l.bf16 %v674
  %v739 = vunpack.c.l.bf16 %v675
  %v740 = vunpack.c.l.bf16 %v676
  %v741 = vunpack.c.l.bf16 %v677
  %v742 = vunpack.c.l.bf16 %v678
  %v743 = vunpack.c.l.bf16 %v679
  %v744 = vunpack.c.l.bf16 %v680
  %v745 = vunpack.c.l.bf16 %v681
  %v746 = vunpack.c.l.bf16 %v682
  %v747 = vunpack.c.l.bf16 %v683
  %v748 = vunpack.c.l.bf16 %v684
  %v749 = vunpack.c.l.bf16 %v685
  %v750 = vunpack.c.l.bf16 %v686
  %v751 = vunpack.c.l.bf16 %v687
  %v752 = vunpack.c.l.bf16 %v688
  %v753 = vunpack.c.l.bf16 %v689
  %v754 = vunpack.c.l.bf16 %v690
  %v755 = vunpack.c.l.bf16 %v691
  %v756 = vunpack.c.l.bf16 %v692
  %v757 = vunpack.c.l.bf16 %v693
  %v758 = vunpack.c.l.bf16 %v694
  %v759 = vunpack.c.l.bf16 %v695
  %v760 = vunpack.c.l.bf16 %v696
  %v761 = vunpack.c.l.bf16 %v697
  %v762 = vunpack.c.l.bf16 %v698
  %v763 = vunpack.c.l.bf16 %v699
  %v764 = vunpack.c.l.bf16 %v700
  %v765 = vunpack.c.l.bf16 %v701
  %v766 = vunpack.c.l.bf16 %v702
  %v767 = vunpack.c.l.bf16 %v703
  %v768 = vadd.f32 %v386, %v704
  %v769 = vadd.f32 %v389, %v705
  %v770 = vadd.f32 %v394, %v706
  %v771 = vadd.f32 %v397, %v707
  %v772 = vadd.f32 %v402, %v708
  %v773 = vadd.f32 %v405, %v709
  %v774 = vadd.f32 %v410, %v710
  %v775 = vadd.f32 %v413, %v711
  %v776 = vadd.f32 %v418, %v712
  %v777 = vadd.f32 %v421, %v713
  %v778 = vadd.f32 %v426, %v714
  %v779 = vadd.f32 %v429, %v715
  %v780 = vadd.f32 %v434, %v716
  %v781 = vadd.f32 %v437, %v717
  %v782 = vadd.f32 %v442, %v718
  %v783 = vadd.f32 %v445, %v719
  %v784 = vadd.f32 %v450, %v720
  %v785 = vadd.f32 %v453, %v721
  %v786 = vadd.f32 %v458, %v722
  %v787 = vadd.f32 %v461, %v723
  %v788 = vadd.f32 %v466, %v724
  %v789 = vadd.f32 %v469, %v725
  %v790 = vadd.f32 %v474, %v726
  %v791 = vadd.f32 %v477, %v727
  %v792 = vadd.f32 %v482, %v728
  %v793 = vadd.f32 %v485, %v729
  %v794 = vadd.f32 %v490, %v730
  %v795 = vadd.f32 %v493, %v731
  %v796 = vadd.f32 %v498, %v732
  %v797 = vadd.f32 %v501, %v733
  %v798 = vadd.f32 %v506, %v734
  %v799 = vadd.f32 %v509, %v735
  %v800 = vadd.f32 %v514, %v736
  %v801 = vadd.f32 %v517, %v737
  %v802 = vadd.f32 %v522, %v738
  %v803 = vadd.f32 %v525, %v739
  %v804 = vadd.f32 %v530, %v740
  %v805 = vadd.f32 %v533, %v741
  %v806 = vadd.f32 %v538, %v742
  %v807 = vadd.f32 %v541, %v743
  %v808 = vadd.f32 %v546, %v744
  %v809 = vadd.f32 %v549, %v745
  %v810 = vadd.f32 %v554, %v746
  %v811 = vadd.f32 %v557, %v747
  %v812 = vadd.f32 %v562, %v748
  %v813 = vadd.f32 %v565, %v749
  %v814 = vadd.f32 %v570, %v750
  %v815 = vadd.f32 %v573, %v751
  %v816 = vadd.f32 %v578, %v752
  %v817 = vadd.f32 %v581, %v753
  %v818 = vadd.f32 %v586, %v754
  %v819 = vadd.f32 %v589, %v755
  %v820 = vadd.f32 %v594, %v756
  %v821 = vadd.f32 %v597, %v757
  %v822 = vadd.f32 %v602, %v758
  %v823 = vadd.f32 %v605, %v759
  %v824 = vadd.f32 %v610, %v760
  %v825 = vadd.f32 %v613, %v761
  %v826 = vadd.f32 %v618, %v762
  %v827 = vadd.f32 %v621, %v763
  %v828 = vadd.f32 %v626, %v764
  %v829 = vadd.f32 %v629, %v765
  %v830 = vadd.f32 %v634, %v766
  %v831 = vadd.f32 %v637, %v767
  %v832 = vmax.f32 %v768, 0.0
  %v833 = vmax.f32 %v769, 0.0
  %v834 = vmax.f32 %v770, 0.0
  %v835 = vmax.f32 %v771, 0.0
  %v836 = vmax.f32 %v772, 0.0
  %v837 = vmax.f32 %v773, 0.0
  %v838 = vmax.f32 %v774, 0.0
  %v839 = vmax.f32 %v775, 0.0
  %v840 = vmax.f32 %v776, 0.0
  %v841 = vmax.f32 %v777, 0.0
  %v842 = vmax.f32 %v778, 0.0
  %v843 = vmax.f32 %v779, 0.0
  %v844 = vmax.f32 %v780, 0.0
  %v845 = vmax.f32 %v781, 0.0
  %v846 = vmax.f32 %v782, 0.0
  %v847 = vmax.f32 %v783, 0.0
  %v848 = vmax.f32 %v784, 0.0
  %v849 = vmax.f32 %v785, 0.0
  %v850 = vmax.f32 %v786, 0.0
  %v851 = vmax.f32 %v787, 0.0
  %v852 = vmax.f32 %v788, 0.0
  %v853 = vmax.f32 %v789, 0.0
  %v854 = vmax.f32 %v790, 0.0
  %v855 = vmax.f32 %v791, 0.0
  %v856 = vmax.f32 %v792, 0.0
  %v857 = vmax.f32 %v793, 0.0
  %v858 = vmax.f32 %v794, 0.0
  %v859 = vmax.f32 %v795, 0.0
  %v860 = vmax.f32 %v796, 0.0
  %v861 = vmax.f32 %v797, 0.0
  %v862 = vmax.f32 %v798, 0.0
  %v863 = vmax.f32 %v799, 0.0
  %v864 = vmax.f32 %v800, 0.0
  %v865 = vmax.f32 %v801, 0.0
  %v866 = vmax.f32 %v802, 0.0
  %v867 = vmax.f32 %v803, 0.0
  %v868 = vmax.f32 %v804, 0.0
  %v869 = vmax.f32 %v805, 0.0
  %v870 = vmax.f32 %v806, 0.0
  %v871 = vmax.f32 %v807, 0.0
  %v872 = vmax.f32 %v808, 0.0
  %v873 = vmax.f32 %v809, 0.0
  %v874 = vmax.f32 %v810, 0.0
  %v875 = vmax.f32 %v811, 0.0
  %v876 = vmax.f32 %v812, 0.0
  %v877 = vmax.f32 %v813, 0.0
  %v878 = vmax.f32 %v814, 0.0
  %v879 = vmax.f32 %v815, 0.0
  %v880 = vmax.f32 %v816, 0.0
  %v881 = vmax.f32 %v817, 0.0
  %v882 = vmax.f32 %v818, 0.0
  %v883 = vmax.f32 %v819, 0.0
  %v884 = vmax.f32 %v820, 0.0
  %v885 = vmax.f32 %v821, 0.0
  %v886 = vmax.f32 %v822, 0.0
  %v887 = vmax.f32 %v823, 0.0
  %v888 = vmax.f32 %v824, 0.0
  %v889 = vmax.f32 %v825, 0.0
  %v890 = vmax.f32 %v826, 0.0
  %v891 = vmax.f32 %v827, 0.0
  %v892 = vmax.f32 %v828, 0.0
  %v893 = vmax.f32 %v829, 0.0
  %v894 = vmax.f32 %v830, 0.0
  %v895 = vmax.f32 %v831, 0.0
  %vm896 = vcmask 130048
  %897 = vst.msk [vmem:[%s4] sm:$0xff] %vm896, %v832
  %898 = vst.msk [vmem:[%s4 + $0x8] sm:$0xff] %vm896, %v833
  %899 = vst.msk [vmem:[%s4 + $0x10] sm:$0xff] %vm896, %v834
  %900 = vst.msk [vmem:[%s4 + $0x18] sm:$0xff] %vm896, %v835
  %901 = vst.msk [vmem:[%s4 + $0x20] sm:$0xff] %vm896, %v836
  %902 = vst.msk [vmem:[%s4 + $0x28] sm:$0xff] %vm896, %v837
  %903 = vst.msk [vmem:[%s4 + $0x30] sm:$0xff] %vm896, %v838
  %904 = vst.msk [vmem:[%s4 + $0x38] sm:$0xff] %vm896, %v839
  %905 = vst.msk [vmem:[%s4 + $0x40] sm:$0xff] %vm896, %v840
  %906 = vst.msk [vmem:[%s4 + $0x48] sm:$0xff] %vm896, %v841
  %907 = vst.msk [vmem:[%s4 + $0x50] sm:$0xff] %vm896, %v842
  %908 = vst.msk [vmem:[%s4 + $0x58] sm:$0xff] %vm896, %v843
  %909 = vst.msk [vmem:[%s4 + $0x60] sm:$0xff] %vm896, %v844
  %910 = vst.msk [vmem:[%s4 + $0x68] sm:$0xff] %vm896, %v845
  %911 = vst.msk [vmem:[%s4 + $0x70] sm:$0xff] %vm896, %v846
  %912 = vst.msk [vmem:[%s4 + $0x78] sm:$0xff] %vm896, %v847
  %913 = vst.msk [vmem:[%s4 + $0x80] sm:$0xff] %vm896, %v848
  %914 = vst.msk [vmem:[%s4 + $0x88] sm:$0xff] %vm896, %v849
  %915 = vst.msk [vmem:[%s4 + $0x90] sm:$0xff] %vm896, %v850
  %916 = vst.msk [vmem:[%s4 + $0x98] sm:$0xff] %vm896, %v851
  %917 = vst.msk [vmem:[%s4 + $0xa0] sm:$0xff] %vm896, %v852
  %918 = vst.msk [vmem:[%s4 + $0xa8] sm:$0xff] %vm896, %v853
  %919 = vst.msk [vmem:[%s4 + $0xb0] sm:$0xff] %vm896, %v854
  %920 = vst.msk [vmem:[%s4 + $0xb8] sm:$0xff] %vm896, %v855
  %921 = vst.msk [vmem:[%s4 + $0xc0] sm:$0xff] %vm896, %v856
  %922 = vst.msk [vmem:[%s4 + $0xc8] sm:$0xff] %vm896, %v857
  %923 = vst.msk [vmem:[%s4 + $0xd0] sm:$0xff] %vm896, %v858
  %924 = vst.msk [vmem:[%s4 + $0xd8] sm:$0xff] %vm896, %v859
  %925 = vst.msk [vmem:[%s4 + $0xe0] sm:$0xff] %vm896, %v860
  %926 = vst.msk [vmem:[%s4 + $0xe8] sm:$0xff] %vm896, %v861
  %927 = vst.msk [vmem:[%s4 + $0xf0] sm:$0xff] %vm896, %v862
  %928 = vst.msk [vmem:[%s4 + $0xf8] sm:$0xff] %vm896, %v863
  %929 = vst.msk [vmem:[%s4 + $0x100] sm:$0xff] %vm896, %v864
  %930 = vst.msk [vmem:[%s4 + $0x108] sm:$0xff] %vm896, %v865
  %931 = vst.msk [vmem:[%s4 + $0x110] sm:$0xff] %vm896, %v866
  %932 = vst.msk [vmem:[%s4 + $0x118] sm:$0xff] %vm896, %v867
  %933 = vst.msk [vmem:[%s4 + $0x120] sm:$0xff] %vm896, %v868
  %934 = vst.msk [vmem:[%s4 + $0x128] sm:$0xff] %vm896, %v869
  %935 = vst.msk [vmem:[%s4 + $0x130] sm:$0xff] %vm896, %v870
  %936 = vst.msk [vmem:[%s4 + $0x138] sm:$0xff] %vm896, %v871
  %937 = vst.msk [vmem:[%s4 + $0x140] sm:$0xff] %vm896, %v872
  %938 = vst.msk [vmem:[%s4 + $0x148] sm:$0xff] %vm896, %v873
  %939 = vst.msk [vmem:[%s4 + $0x150] sm:$0xff] %vm896, %v874
  %940 = vst.msk [vmem:[%s4 + $0x158] sm:$0xff] %vm896, %v875
  %941 = vst.msk [vmem:[%s4 + $0x160] sm:$0xff] %vm896, %v876
  %942 = vst.msk [vmem:[%s4 + $0x168] sm:$0xff] %vm896, %v877
  %943 = vst.msk [vmem:[%s4 + $0x170] sm:$0xff] %vm896, %v878
  %944 = vst.msk [vmem:[%s4 + $0x178] sm:$0xff] %vm896, %v879
  %945 = vst.msk [vmem:[%s4 + $0x180] sm:$0xff] %vm896, %v880
  %946 = vst.msk [vmem:[%s4 + $0x188] sm:$0xff] %vm896, %v881
  %947 = vst.msk [vmem:[%s4 + $0x190] sm:$0xff] %vm896, %v882
  %948 = vst.msk [vmem:[%s4 + $0x198] sm:$0xff] %vm896, %v883
  %949 = vst.msk [vmem:[%s4 + $0x1a0] sm:$0xff] %vm896, %v884
  %950 = vst.msk [vmem:[%s4 + $0x1a8] sm:$0xff] %vm896, %v885
  %951 = vst.msk [vmem:[%s4 + $0x1b0] sm:$0xff] %vm896, %v886
  %952 = vst.msk [vmem:[%s4 + $0x1b8] sm:$0xff] %vm896, %v887
  %953 = vst.msk [vmem:[%s4 + $0x1c0] sm:$0xff] %vm896, %v888
  %954 = vst.msk [vmem:[%s4 + $0x1c8] sm:$0xff] %vm896, %v889
  %955 = vst.msk [vmem:[%s4 + $0x1d0] sm:$0xff] %vm896, %v890
  %956 = vst.msk [vmem:[%s4 + $0x1d8] sm:$0xff] %vm896, %v891
  %957 = vst.msk [vmem:[%s4 + $0x1e0] sm:$0xff] %vm896, %v892
  %958 = vst.msk [vmem:[%s4 + $0x1e8] sm:$0xff] %vm896, %v893
  %959 = vst.msk [vmem:[%s4 + $0x1f0] sm:$0xff] %vm896, %v894
  %960 = vst.msk [vmem:[%s4 + $0x1f8] sm:$0xff] %vm896, %v895
  // Predicated region
  $region18: #{bottleneck_forward.7} parent=0 // pred_check
    _
  $region19: #{bottleneck_forward.7} parent=0 // pred_check_branch
    %962 = sbr.rel (0) target = $region21
  $region20: #{bottleneck_forward.7} parent=0 // pred_region
    _
  $region21: #{bottleneck_forward.7} parent=0 // pred_fallthru
    _
  // Predicated region
  $region22: #{bottleneck_forward.7} parent=0 // pred_check
    _
  $region23: #{bottleneck_forward.7} parent=0 // pred_check_branch
    %964 = sbr.rel (0) target = $region25
  $region24: #{bottleneck_forward.7} parent=0 // pred_region
    _
  $region25: #{bottleneck_forward.7} parent=0 // pred_fallthru
    _

// kernel: bottleneck_forward.5
$region0: #{bottleneck_forward.5}
  #allocation0 [shape = 'u32[]', space=smem, size = 0x4, offset = 0x4, fixed_abs, tag = 'smem constant byte address 0x4 - core index']
  #allocation1 [shape = 'u32[144,128]{1,0:T(1,128)}', space=vmem, size = 0x12000, scoped, tag = 'internal scratch']
  #allocation2 [shape = 'f32[256,4]{1,0:T(8,128)}', space=vmem, size = 0x20000, scoped, tag = 'scratch operand']
  %s0 = inlined_call_operand.vmem [shape: bf16[2,3,320,4], index: 0, kind: input, shape index: {}]
  %s1 = inlined_call_operand.vmem [shape: bf16[9,4,4], index: 1, kind: input, shape index: {}]
  %s2 = inlined_call_operand.vmem [shape: f32[1,4], index: 2, kind: input, shape index: {}]
  %s3 = inlined_call_operand.vmem [shape: bf16[2,16,16,4], index: 3, kind: output, shape index: {}]
  %s4 = sld [smem:[#allocation0]]
  $region45: #{bottleneck_forward.5} parent=0
    _
  %s6 = ssub.s32 1, %s4
  %s7 = scalar_select 0, %s6, %s4
  loop: start=0, step=1, limit=4
  $region2: #{bottleneck_forward.5} parent=0 // loop_pre_header
    _
  $region3: #{bottleneck_forward.5} parent=0 // loop_header
    %s9 = sphi 0, %s13
    %p10 = scmp.ge.s32.totalorder %s9, 4
    %s16 = sphi 0, %s35
    %s17 = sphi 0, %s31
    %s18 = sphi 0, %s27
    %s19 = sphi 0, %s16
    %s20 = sphi 0, %s17
    %s21 = sphi 0, %s18
    %s22 = sphi 0, %s19
    %s23 = sphi 0, %s20
    %s24 = sphi 0, %s21
    %s38 = sphi 0, %s40
    %s41 = sphi 0, %s38
    %s42 = sphi 0, %s41
    %s58 = sphi 0, %s42
    %s64 = sphi 0, %s66
    %s67 = sphi 0, %s64
    %s68 = sphi 0, %s67
    %s84 = sphi 0, %s68
    %s90 = sphi 0, %s92
    %s93 = sphi 0, %s90
    %s94 = sphi 0, %s93
    %s110 = sphi 0, %s94
    %s120 = sphi 0, %s122
    %s123 = sphi 0, %s120
    %s124 = sphi 0, %s123
    %s140 = sphi 0, %s124
  $region4: #{bottleneck_forward.5} parent=0 // loop_header_branch
    %12 = sbr.rel (%p10) target = $region8
  $region5: #{bottleneck_forward.5} parent=0 // loop_body
    %s14 = ssub.s32 %s9, 1
    %s15 = ssub.s32 %s9, 2
    %s25 = sadd.s32 1, %s18
    %p26 = scmp.ge.s32.totalorder %s25, 1
    %s27 = scalar_select %p26, 0, %s25
    %s28 = sadd.s32 1, %s17
    %s29 = scalar_select %p26, %s28, %s17
    %p30 = scmp.ge.s32.totalorder %s29, 1
    %s31 = scalar_select %p30, 0, %s29
    %s32 = sadd.s32 1, %s16
    %s33 = scalar_select %p30, %s32, %s16
    %p34 = scmp.ge.s32.totalorder %s33, 2
    %s35 = scalar_select %p34, 0, %s33
    %s36 = ssub.s32 %s16, %s35
    %p37 = scmp.eq.s32.totalorder %s36, 0
    %s39 = sadd.s32 %s38, 1
    %s40 = scalar_select %p37, %s38, %s39
    %p43 = pneg %p37
    %p44 = scmp.eq.s32.totalorder %s9, 1
    %p45 = por %p43, %p44
    %p46 = scmp.ne.s32.totalorder %s38, %s41
    %p47 = scmp.eq.s32.totalorder %s9, 0
    %p48 = por %p46, %p47
    %p49 = scmp.ne.s32.totalorder %s38, %s41
    %p50 = scmp.eq.s32.totalorder %s14, 1
    %p51 = por %p49, %p50
    %p52 = scmp.ne.s32.totalorder %s41, %s42
    %p53 = scmp.eq.s32.totalorder %s14, 0
    %p54 = por %p52, %p53
    %p55 = scmp.ne.s32.totalorder %s41, %s42
    %p56 = scmp.eq.s32.totalorder %s15, 1
    %p57 = por %p55, %p56
    %p59 = scmp.ne.s32.totalorder %s42, %s58
    %p60 = scmp.eq.s32.totalorder %s15, 0
    %p61 = por %p59, %p60
    %s62 = ssub.s32 %s17, %s31
    %p63 = scmp.eq.s32.totalorder %s62, 0
    %s65 = sadd.s32 %s64, 1
    %s66 = scalar_select %p63, %s64, %s65
    %p69 = pneg %p63
    %p70 = scmp.eq.s32.totalorder %s9, 1
    %p71 = por %p69, %p70
    %p72 = scmp.ne.s32.totalorder %s64, %s67
    %p73 = scmp.eq.s32.totalorder %s9, 0
    %p74 = por %p72, %p73
    %p75 = scmp.ne.s32.totalorder %s64, %s67
    %p76 = scmp.eq.s32.totalorder %s14, 1
    %p77 = por %p75, %p76
    %p78 = scmp.ne.s32.totalorder %s67, %s68
    %p79 = scmp.eq.s32.totalorder %s14, 0
    %p80 = por %p78, %p79
    %p81 = scmp.ne.s32.totalorder %s67, %s68
    %p82 = scmp.eq.s32.totalorder %s15, 1
    %p83 = por %p81, %p82
    %p85 = scmp.ne.s32.totalorder %s68, %s84
    %p86 = scmp.eq.s32.totalorder %s15, 0
    %p87 = por %p85, %p86
    %s88 = ssub.s32 %s17, %s31
    %p89 = scmp.eq.s32.totalorder %s88, 0
    %s91 = sadd.s32 %s90, 1
    %s92 = scalar_select %p89, %s90, %s91
    %p95 = pneg %p89
    %p96 = scmp.eq.s32.totalorder %s9, 1
    %p97 = por %p95, %p96
    %p98 = scmp.ne.s32.totalorder %s90, %s93
    %p99 = scmp.eq.s32.totalorder %s9, 0
    %p100 = por %p98, %p99
    %p101 = scmp.ne.s32.totalorder %s90, %s93
    %p102 = scmp.eq.s32.totalorder %s14, 1
    %p103 = por %p101, %p102
    %p104 = scmp.ne.s32.totalorder %s93, %s94
    %p105 = scmp.eq.s32.totalorder %s14, 0
    %p106 = por %p104, %p105
    %p107 = scmp.ne.s32.totalorder %s93, %s94
    %p108 = scmp.eq.s32.totalorder %s15, 1
    %p109 = por %p107, %p108
    %p111 = scmp.ne.s32.totalorder %s94, %s110
    %p112 = scmp.eq.s32.totalorder %s15, 0
    %p113 = por %p111, %p112
    %s114 = ssub.s32 %s16, %s35
    %s115 = ssub.s32 %s18, %s27
    %s116 = sor.u32 %s114, %s115
    %s117 = ssub.s32 %s17, %s31
    %s118 = sor.u32 %s116, %s117
    %p119 = scmp.eq.s32.totalorder %s118, 0
    %s121 = sadd.s32 %s120, 1
    %s122 = scalar_select %p119, %s120, %s121
    %p125 = pneg %p119
    %p126 = scmp.eq.s32.totalorder %s9, 1
    %p127 = por %p125, %p126
    %p128 = scmp.ne.s32.totalorder %s120, %s123
    %p129 = scmp.eq.s32.totalorder %s9, 0
    %p130 = por %p128, %p129
    %p131 = scmp.ne.s32.totalorder %s120, %s123
    %p132 = scmp.eq.s32.totalorder %s14, 1
    %p133 = por %p131, %p132
    %p134 = scmp.ne.s32.totalorder %s123, %s124
    %p135 = scmp.eq.s32.totalorder %s14, 0
    %p136 = por %p134, %p135
    %p137 = scmp.ne.s32.totalorder %s123, %s124
    %p138 = scmp.eq.s32.totalorder %s15, 1
    %p139 = por %p137, %p138
    %p141 = scmp.ne.s32.totalorder %s124, %s140
    %p142 = scmp.eq.s32.totalorder %s15, 0
    %p143 = por %p141, %p142
    %p144 = scmp.le.s32.totalorder 1, %s9
    %p145 = scmp.lt.s32.totalorder %s9, 3
    %p146 = pnand %p144, %p145
    %p147 = pneg %p146
    // Predicated region
    $region9: #{bottleneck_forward.5} parent=5 // pred_check
      _
    $region10: #{bottleneck_forward.5} parent=5 // pred_check_branch
      %149 = sbr.rel (%p146) target = $region12
    $region11: #{bottleneck_forward.5} parent=5 // pred_region
      %s150 = ssub.s32 %s9, 1
      // Predicated region
      $region13: #{bottleneck_forward.5} parent=11 // pred_check
        %p151 = pneg %p54
      $region14: #{bottleneck_forward.5} parent=11 // pred_check_branch
        %153 = sbr.rel (%p151) target = $region16
      $region15: #{bottleneck_forward.5} parent=11 // pred_region
        %p154 = scmp.lt.s32.totalorder %s19, 1
        %s155 = scalar_select %p154, %s19, 1
        %s156 = smul.addr %s155, 120
        %s157 = smul.addr %s156, 4
        %s158 = scalar_lea.vmem %s0, %s157
      $region16: #{bottleneck_forward.5} parent=11 // pred_fallthru
        _
      // Predicated region
      $region17: #{bottleneck_forward.5} parent=11 // pred_check
        %p159 = pneg %p80
      $region18: #{bottleneck_forward.5} parent=11 // pred_check_branch
        %161 = sbr.rel (%p159) target = $region20
      $region19: #{bottleneck_forward.5} parent=11 // pred_region
        %p162 = scmp.lt.s32.totalorder %s20, 0
        %s163 = scalar_select %p162, %s20, 0
        %s164 = smul.addr %s163, 2
        %s165 = scalar_lea.vmem %s1, %s164
      $region20: #{bottleneck_forward.5} parent=11 // pred_fallthru
        _
      // Predicated region
      $region21: #{bottleneck_forward.5} parent=11 // pred_check
        %p166 = pneg %p106
      $region22: #{bottleneck_forward.5} parent=11 // pred_check_branch
        %168 = sbr.rel (%p166) target = $region24
      $region23: #{bottleneck_forward.5} parent=11 // pred_region
        %p169 = scmp.lt.s32.totalorder %s20, 0
        %s170 = scalar_select %p169, %s20, 0
        %s171 = scalar_lea.vmem %s2, %s170
      $region24: #{bottleneck_forward.5} parent=11 // pred_fallthru
        _
    $region12: #{bottleneck_forward.5} parent=5 // pred_fallthru
      _
    %p172 = scmp.lt.s32.totalorder %s9, 2
    // Predicated region
    $region25: #{bottleneck_forward.5} parent=5 // pred_check
      %p173 = pneg %p172
    $region26: #{bottleneck_forward.5} parent=5 // pred_check_branch
      %175 = sbr.rel (%p173) target = $region28
    $region27: #{bottleneck_forward.5} parent=5 // pred_region
      _
    $region28: #{bottleneck_forward.5} parent=5 // pred_fallthru
      _
    %p176 = scmp.le.s32.totalorder 1, %s9
    %p177 = scmp.lt.s32.totalorder %s9, 3
    %p178 = pnand %p176, %p177
    %p179 = pneg %p178
    // Predicated region
    $region29: #{bottleneck_forward.5} parent=5 // pred_check
      _
    $region30: #{bottleneck_forward.5} parent=5 // pred_check_branch
      %181 = sbr.rel (%p178) target = $region32
    $region31: #{bottleneck_forward.5} parent=5 // pred_region
      %s182 = ssub.s32 %s9, 1
      %p183 = scmp.lt.s32.totalorder %s19, 1
      %s184 = scalar_select %p183, %s19, 1
      %s185 = smul.addr %s184, 120
      %s186 = smul.addr %s185, 4
      %s187 = scalar_lea.vmem %s0, %s186
      %p188 = pneg %p54
      %p189 = pneg %p51
      %p190 = scmp.lt.s32.totalorder %s20, 0
      %s191 = scalar_select %p190, %s20, 0
      %s192 = smul.addr %s191, 2
      %s193 = scalar_lea.vmem %s1, %s192
      %p194 = pneg %p80
      %p195 = pneg %p77
      %p196 = scmp.lt.s32.totalorder %s20, 0
      %s197 = scalar_select %p196, %s20, 0
      %s198 = scalar_lea.vmem %s2, %s197
      %p199 = pneg %p106
      %p200 = pneg %p103
      %p201 = pneg %p136
      %p202 = pneg %p133
      %s203 = smul.u32 16, %s21
      %p204 = scmp.lt.s32.totalorder %s19, 1
      %s205 = scalar_select %p204, %s19, 1
      %p206 = scmp.lt.s32.totalorder %s203, 15
      %s207 = scalar_select %p206, %s203, 15
      %p208 = scmp.lt.s32.totalorder %s20, 0
      %s209 = scalar_select %p208, %s20, 0
      %s210 = smul.addr %s207, 2
      %s211 = sadd.s32 %s209, %s210
      %s212 = smul.addr %s205, 32
      %s213 = sadd.s32 %s211, %s212
      %s214 = smul.addr %s213, 4
      %s215 = scalar_lea.vmem %s3, %s214
      %p216 = scmp.lt.s32.totalorder %s19, 1
      %s217 = scalar_select %p216, %s19, 1
      %s218 = smul.addr %s217, 120
      %s219 = smul.addr %s218, 4
      %s220 = scalar_lea.vmem %s0, %s219
      %p221 = scmp.lt.s32.totalorder %s20, 0
      %s222 = scalar_select %p221, %s20, 0
      %s223 = smul.addr %s222, 2
      %s224 = scalar_lea.vmem %s1, %s223
      %p225 = scmp.lt.s32.totalorder %s20, 0
      %s226 = scalar_select %p225, %s20, 0
      %s227 = scalar_lea.vmem %s2, %s226
      %s228 = smul.u32 16, %s21
      %p229 = scmp.lt.s32.totalorder %s19, 1
      %s230 = scalar_select %p229, %s19, 1
      %p231 = scmp.lt.s32.totalorder %s228, 15
      %s232 = scalar_select %p231, %s228, 15
      %p233 = scmp.lt.s32.totalorder %s20, 0
      %s234 = scalar_select %p233, %s20, 0
      %s235 = smul.addr %s232, 2
      %s236 = sadd.s32 %s234, %s235
      %s237 = smul.addr %s230, 32
      %s238 = sadd.s32 %s236, %s237
      %s239 = smul.addr %s238, 4
      %s240 = scalar_lea.vmem %s3, %s239
      %s241 = smul.u32 16, %s21
      %s243 = smul.u32 %s21, 256
      %s244 = sshra.s32 %s243, 3
      %s245 = sand.u32 %s243, 7
      %s246 = smul.addr %s244, 4
      %s247 = scalar_lea.vmem %s220, %s246
      %v248 = vld [vmem:[%s247] sm:$0xf]
      %v249 = vld [vmem:[%s247 + $0x4] sm:$0xf]
      %v250 = vld [vmem:[%s247 + $0x8] sm:$0xf]
      %v251 = vld [vmem:[%s247 + $0xc] sm:$0xf]
      %v252 = vld [vmem:[%s247 + $0x10] sm:$0xf]
      %v253 = vld [vmem:[%s247 + $0x14] sm:$0xf]
      %v254 = vld [vmem:[%s247 + $0x18] sm:$0xf]
      %v255 = vld [vmem:[%s247 + $0x1c] sm:$0xf]
      %v256 = vld [vmem:[%s247 + $0x20] sm:$0xf]
      %v257 = vld [vmem:[%s247 + $0x24] sm:$0xf]
      %v258 = vld [vmem:[%s247 + $0x28] sm:$0xf]
      %v259 = vld [vmem:[%s247 + $0x2c] sm:$0xf]
      %v260 = vld [vmem:[%s247 + $0x30] sm:$0xf]
      %v261 = vld [vmem:[%s247 + $0x34] sm:$0xf]
      %v262 = vld [vmem:[%s247 + $0x38] sm:$0xf]
      %v263 = vld [vmem:[%s247 + $0x3c] sm:$0xf]
      %v264 = vld [vmem:[%s247 + $0x40] sm:$0xf]
      %v265 = vld [vmem:[%s247 + $0x44] sm:$0xf]
      %v266 = vld [vmem:[%s247 + $0x48] sm:$0xf]
      %v267 = vld [vmem:[%s247 + $0x4c] sm:$0xf]
      %v268 = vld [vmem:[%s247 + $0x50] sm:$0xf]
      %v269 = vld [vmem:[%s247 + $0x54] sm:$0xf]
      %v270 = vld [vmem:[%s247 + $0x58] sm:$0xf]
      %v271 = vld [vmem:[%s247 + $0x5c] sm:$0xf]
      %v272 = vld [vmem:[%s247 + $0x60] sm:$0xf]
      %v273 = vld [vmem:[%s247 + $0x64] sm:$0xf]
      %v274 = vld [vmem:[%s247 + $0x68] sm:$0xf]
      %v275 = vld [vmem:[%s247 + $0x6c] sm:$0xf]
      %v276 = vld [vmem:[%s247 + $0x70] sm:$0xf]
      %v277 = vld [vmem:[%s247 + $0x74] sm:$0xf]
      %v278 = vld [vmem:[%s247 + $0x78] sm:$0xf]
      %v279 = vld [vmem:[%s247 + $0x7c] sm:$0xf]
      %v280 = vld [vmem:[%s224] sm:$0x3]
      %v313 = vunpack.c.l.b16 %v248
      %v314 = vunpack.c.l.b16 %v249
      %v315 = vunpack.c.l.b16 %v250
      %v316 = vunpack.c.l.b16 %v251
      %v317 = vunpack.c.l.b16 %v252
      %v318 = vunpack.c.l.b16 %v253
      %v319 = vunpack.c.l.b16 %v254
      %v320 = vunpack.c.l.b16 %v255
      %v321 = vunpack.c.l.b16 %v256
      %v322 = vunpack.c.l.b16 %v257
      %v323 = vunpack.c.l.b16 %v258
      %v324 = vunpack.c.l.b16 %v259
      %v325 = vunpack.c.l.b16 %v260
      %v326 = vunpack.c.l.b16 %v261
      %v327 = vunpack.c.l.b16 %v262
      %v328 = vunpack.c.l.b16 %v263
      %v329 = vunpack.c.l.b16 %v264
      %v330 = vunpack.c.l.b16 %v265
      %v331 = vunpack.c.l.b16 %v266
      %v332 = vunpack.c.l.b16 %v267
      %v333 = vunpack.c.l.b16 %v268
      %v334 = vunpack.c.l.b16 %v269
      %v335 = vunpack.c.l.b16 %v270
      %v336 = vunpack.c.l.b16 %v271
      %v337 = vunpack.c.l.b16 %v272
      %v338 = vunpack.c.l.b16 %v273
      %v339 = vunpack.c.l.b16 %v274
      %v340 = vunpack.c.l.b16 %v275
      %v341 = vunpack.c.l.b16 %v276
      %v342 = vunpack.c.l.b16 %v277
      %v343 = vunpack.c.l.b16 %v278
      %v344 = vunpack.c.l.b16 %v279
      %v345 = vpack.c.b16 %v314, %v313
      %v346 = vpack.c.b16 %v316, %v315
      %v347 = vpack.c.b16 %v318, %v317
      %v348 = vpack.c.b16 %v320, %v319
      %v349 = vpack.c.b16 %v322, %v321
      %v350 = vpack.c.b16 %v324, %v323
      %v351 = vpack.c.b16 %v326, %v325
      %v352 = vpack.c.b16 %v328, %v327
      %v353 = vpack.c.b16 %v330, %v329
      %v354 = vpack.c.b16 %v332, %v331
      %v355 = vpack.c.b16 %v334, %v333
      %v356 = vpack.c.b16 %v336, %v335
      %v357 = vpack.c.b16 %v338, %v337
      %v358 = vpack.c.b16 %v340, %v339
      %v359 = vpack.c.b16 %v342, %v341
      %v360 = vpack.c.b16 %v344, %v343
      %vm361 = vcmask 31744
      %v363 = vsel %vm361, %v345, 0
      %v366 = vsel %vm361, %v346, 0
      %v369 = vsel %vm361, %v347, 0
      %v372 = vsel %vm361, %v348, 0
      %v375 = vsel %vm361, %v349, 0
      %v378 = vsel %vm361, %v350, 0
      %v381 = vsel %vm361, %v351, 0
      %v384 = vsel %vm361, %v352, 0
      %v387 = vsel %vm361, %v353, 0
      %v390 = vsel %vm361, %v354, 0
      %v393 = vsel %vm361, %v355, 0
      %v396 = vsel %vm361, %v356, 0
      %v399 = vsel %vm361, %v357, 0
      %v402 = vsel %vm361, %v358, 0
      %v405 = vsel %vm361, %v359, 0
      %v408 = vsel %vm361, %v360, 0
      %vm410 = vcmask 1041408
      %v412 = vsel %vm410, %v280, 0
      %414 = vmatprep.subr.bf16.mxu0 0
      %415 = vmatpush1.bf16.msra.mxu0 %v412
      %416 = vmatprep.subr.bf16.mxu0 0
      %417 = vmatpush1.bf16.msra.mxu0 0
      %418 = vmatprep.subr.bf16.mxu0 0
      %419 = vmatpush1.bf16.msra.mxu0 0
      %420 = vmatprep.subr.bf16.mxu0 0
      %421 = vmatpush1.bf16.msra.mxu0 0
      %422 = vmatprep.subr.bf16.mxu0 0
      %423 = vmatpush1.bf16.msra.mxu0 0
      %424 = vmatprep.subr.bf16.mxu0 0
      %425 = vmatpush1.bf16.msra.mxu0 0
      %426 = vmatprep.subr.bf16.mxu0 0
      %427 = vmatpush1.bf16.msra.mxu0 0
      %428 = vmatprep.subr.bf16.mxu0 0
      %429 = vmatpush1.bf16.msra.mxu0 0
      %430 = vmatprep.subr.bf16.mxu0 0
      %431 = vmatpush1.bf16.msra.mxu0 0
      %432 = vmatprep.subr.bf16.mxu0 0
      %433 = vmatpush1.bf16.msra.mxu0 0
      %434 = vmatprep.subr.bf16.mxu0 0
      %435 = vmatpush1.bf16.msra.mxu0 0
      %436 = vmatprep.subr.bf16.mxu0 0
      %437 = vmatpush1.bf16.msra.mxu0 0
      %438 = vmatprep.subr.bf16.mxu0 0
      %439 = vmatpush1.bf16.msra.mxu0 0
      %440 = vmatprep.subr.bf16.mxu0 0
      %441 = vmatpush1.bf16.msra.mxu0 0
      %442 = vmatprep.subr.bf16.mxu0 0
      %443 = vmatpush1.bf16.msra.mxu0 0
      %444 = vmatprep.subr.bf16.mxu0 0
      %445 = vmatpush1.bf16.msra.mxu0 0
      %446 = vmatprep.mubr.bf16.mxu0 0
      %447 = vmatmul.mubr.bf16.gmra.mrb[0].mxu0 %v363
      %v448 = vpop.f32.mrb[0].mxu0
      %v449 = vadd.f32 0.0, %v448
      %v450 = vpop.f32.mrb[0].mxu0
      %v451 = vpop.f32.mrb[0].mxu0
      %v452 = vadd.f32 0.0, %v451
      %v453 = vpop.f32.mrb[0].mxu0
      %454 = vmatprep.mubr.bf16.mxu0 0
      %455 = vmatmul.mubr.bf16.gmra.mrb[0].mxu0 %v366
      %v456 = vpop.f32.mrb[0].mxu0
      %v457 = vadd.f32 0.0, %v456
      %v458 = vpop.f32.mrb[0].mxu0
      %v459 = vpop.f32.mrb[0].mxu0
      %v460 = vadd.f32 0.0, %v459
      %v461 = vpop.f32.mrb[0].mxu0
      %462 = vmatprep.mubr.bf16.mxu0 0
      %463 = vmatmul.mubr.bf16.gmra.mrb[0].mxu0 %v369
      %v464 = vpop.f32.mrb[0].mxu0
      %v465 = vadd.f32 0.0, %v464
      %v466 = vpop.f32.mrb[0].mxu0
      %v467 = vpop.f32.mrb[0].mxu0
      %v468 = vadd.f32 0.0, %v467
      %v469 = vpop.f32.mrb[0].mxu0
      %470 = vmatprep.mubr.bf16.mxu0 0
      %471 = vmatmul.mubr.bf16.gmra.mrb[0].mxu0 %v372
      %v472 = vpop.f32.mrb[0].mxu0
      %v473 = vadd.f32 0.0, %v472
      %v474 = vpop.f32.mrb[0].mxu0
      %v475 = vpop.f32.mrb[0].mxu0
      %v476 = vadd.f32 0.0, %v475
      %v477 = vpop.f32.mrb[0].mxu0
      %478 = vmatprep.mubr.bf16.mxu0 0
      %479 = vmatmul.mubr.bf16.gmra.mrb[0].mxu0 %v375
      %v480 = vpop.f32.mrb[0].mxu0
      %v481 = vadd.f32 0.0, %v480
      %v482 = vpop.f32.mrb[0].mxu0
      %v483 = vpop.f32.mrb[0].mxu0
      %v484 = vadd.f32 0.0, %v483
      %v485 = vpop.f32.mrb[0].mxu0
      %486 = vmatprep.mubr.bf16.mxu0 0
      %487 = vmatmul.mubr.bf16.gmra.mrb[0].mxu0 %v378
      %v488 = vpop.f32.mrb[0].mxu0
      %v489 = vadd.f32 0.0, %v488
      %v490 = vpop.f32.mrb[0].mxu0
      %v491 = vpop.f32.mrb[0].mxu0
      %v492 = vadd.f32 0.0, %v491
      %v493 = vpop.f32.mrb[0].mxu0
      %494 = vmatprep.mubr.bf16.mxu0 0
      %495 = vmatmul.mubr.bf16.gmra.mrb[0].mxu0 %v381
      %v496 = vpop.f32.mrb[0].mxu0
      %v497 = vadd.f32 0.0, %v496
      %v498 = vpop.f32.mrb[0].mxu0
      %v499 = vpop.f32.mrb[0].mxu0
      %v500 = vadd.f32 0.0, %v499
      %v501 = vpop.f32.mrb[0].mxu0
      %502 = vmatprep.mubr.bf16.mxu0 0
      %503 = vmatmul.mubr.bf16.gmra.mrb[0].mxu0 %v384
      %v504 = vpop.f32.mrb[0].mxu0
      %v505 = vadd.f32 0.0, %v504
      %v506 = vpop.f32.mrb[0].mxu0
      %v507 = vpop.f32.mrb[0].mxu0
      %v508 = vadd.f32 0.0, %v507
      %v509 = vpop.f32.mrb[0].mxu0
      %510 = vmatprep.mubr.bf16.mxu0 0
      %511 = vmatmul.mubr.bf16.gmra.mrb[0].mxu0 %v387
      %v512 = vpop.f32.mrb[0].mxu0
      %v513 = vadd.f32 0.0, %v512
      %v514 = vpop.f32.mrb[0].mxu0
      %v515 = vpop.f32.mrb[0].mxu0
      %v516 = vadd.f32 0.0, %v515
      %v517 = vpop.f32.mrb[0].mxu0
      %518 = vmatprep.mubr.bf16.mxu0 0
      %519 = vmatmul.mubr.bf16.gmra.mrb[0].mxu0 %v390
      %v520 = vpop.f32.mrb[0].mxu0
      %v521 = vadd.f32 0.0, %v520
      %v522 = vpop.f32.mrb[0].mxu0
      %v523 = vpop.f32.mrb[0].mxu0
      %v524 = vadd.f32 0.0, %v523
      %v525 = vpop.f32.mrb[0].mxu0
      %526 = vmatprep.mubr.bf16.mxu0 0
      %527 = vmatmul.mubr.bf16.gmra.mrb[0].mxu0 %v393
      %v528 = vpop.f32.mrb[0].mxu0
      %v529 = vadd.f32 0.0, %v528
      %v530 = vpop.f32.mrb[0].mxu0
      %v531 = vpop.f32.mrb[0].mxu0
      %v532 = vadd.f32 0.0, %v531
      %v533 = vpop.f32.mrb[0].mxu0
      %534 = vmatprep.mubr.bf16.mxu0 0
      %535 = vmatmul.mubr.bf16.gmra.mrb[0].mxu0 %v396
      %v536 = vpop.f32.mrb[0].mxu0
      %v537 = vadd.f32 0.0, %v536
      %v538 = vpop.f32.mrb[0].mxu0
      %v539 = vpop.f32.mrb[0].mxu0
      %v540 = vadd.f32 0.0, %v539
      %v541 = vpop.f32.mrb[0].mxu0
      %542 = vmatprep.mubr.bf16.mxu0 0
      %543 = vmatmul.mubr.bf16.gmra.mrb[0].mxu0 %v399
      %v544 = vpop.f32.mrb[0].mxu0
      %v545 = vadd.f32 0.0, %v544
      %v546 = vpop.f32.mrb[0].mxu0
      %v547 = vpop.f32.mrb[0].mxu0
      %v548 = vadd.f32 0.0, %v547
      %v549 = vpop.f32.mrb[0].mxu0
      %550 = vmatprep.mubr.bf16.mxu0 0
      %551 = vmatmul.mubr.bf16.gmra.mrb[0].mxu0 %v402
      %v552 = vpop.f32.mrb[0].mxu0
      %v553 = vadd.f32 0.0, %v552
      %v554 = vpop.f32.mrb[0].mxu0
      %v555 = vpop.f32.mrb[0].mxu0
      %v556 = vadd.f32 0.0, %v555
      %v557 = vpop.f32.mrb[0].mxu0
      %558 = vmatprep.mubr.bf16.mxu0 0
      %559 = vmatmul.mubr.bf16.gmra.mrb[0].mxu0 %v405
      %v560 = vpop.f32.mrb[0].mxu0
      %v561 = vadd.f32 0.0, %v560
      %v562 = vpop.f32.mrb[0].mxu0
      %v563 = vpop.f32.mrb[0].mxu0
      %v564 = vadd.f32 0.0, %v563
      %v565 = vpop.f32.mrb[0].mxu0
      %566 = vmatprep.mubr.bf16.mxu0 0
      %567 = vmatmul.mubr.bf16.gmra.mrb[0].mxu0 %v408
      %v568 = vpop.f32.mrb[0].mxu0
      %v569 = vadd.f32 0.0, %v568
      %v570 = vpop.f32.mrb[0].mxu0
      %v571 = vpop.f32.mrb[0].mxu0
      %v572 = vadd.f32 0.0, %v571
      %v573 = vpop.f32.mrb[0].mxu0
      %574 = vdwg.mxu0
      %575 = vst.msk [vmem:[#allocation2] sm:$0xff] %vm361, %v449
      %576 = vst.msk [vmem:[#allocation2 + $0x8] sm:$0xff] %vm361, %v452
      %577 = vst.msk [vmem:[#allocation2 + $0x10] sm:$0xff] %vm361, %v457
      %578 = vst.msk [vmem:[#allocation2 + $0x18] sm:$0xff] %vm361, %v460
      %579 = vst.msk [vmem:[#allocation2 + $0x20] sm:$0xff] %vm361, %v465
      %580 = vst.msk [vmem:[#allocation2 + $0x28] sm:$0xff] %vm361, %v468
      %581 = vst.msk [vmem:[#allocation2 + $0x30] sm:$0xff] %vm361, %v473
      %582 = vst.msk [vmem:[#allocation2 + $0x38] sm:$0xff] %vm361, %v476
      %583 = vst.msk [vmem:[#allocation2 + $0x40] sm:$0xff] %vm361, %v481
      %584 = vst.msk [vmem:[#allocation2 + $0x48] sm:$0xff] %vm361, %v484
      %585 = vst.msk [vmem:[#allocation2 + $0x50] sm:$0xff] %vm361, %v489
      %586 = vst.msk [vmem:[#allocation2 + $0x58] sm:$0xff] %vm361, %v492
      %587 = vst.msk [vmem:[#allocation2 + $0x60] sm:$0xff] %vm361, %v497
      %588 = vst.msk [vmem:[#allocation2 + $0x68] sm:$0xff] %vm361, %v500
      %589 = vst.msk [vmem:[#allocation2 + $0x70] sm:$0xff] %vm361, %v505
      %590 = vst.msk [vmem:[#allocation2 + $0x78] sm:$0xff] %vm361, %v508
      %591 = vst.msk [vmem:[#allocation2 + $0x80] sm:$0xff] %vm361, %v513
      %592 = vst.msk [vmem:[#allocation2 + $0x88] sm:$0xff] %vm361, %v516
      %593 = vst.msk [vmem:[#allocation2 + $0x90] sm:$0xff] %vm361, %v521
      %594 = vst.msk [vmem:[#allocation2 + $0x98] sm:$0xff] %vm361, %v524
      %595 = vst.msk [vmem:[#allocation2 + $0xa0] sm:$0xff] %vm361, %v529
      %596 = vst.msk [vmem:[#allocation2 + $0xa8] sm:$0xff] %vm361, %v532
      %597 = vst.msk [vmem:[#allocation2 + $0xb0] sm:$0xff] %vm361, %v537
      %598 = vst.msk [vmem:[#allocation2 + $0xb8] sm:$0xff] %vm361, %v540
      %599 = vst.msk [vmem:[#allocation2 + $0xc0] sm:$0xff] %vm361, %v545
      %600 = vst.msk [vmem:[#allocation2 + $0xc8] sm:$0xff] %vm361, %v548
      %601 = vst.msk [vmem:[#allocation2 + $0xd0] sm:$0xff] %vm361, %v553
      %602 = vst.msk [vmem:[#allocation2 + $0xd8] sm:$0xff] %vm361, %v556
      %603 = vst.msk [vmem:[#allocation2 + $0xe0] sm:$0xff] %vm361, %v561
      %604 = vst.msk [vmem:[#allocation2 + $0xe8] sm:$0xff] %vm361, %v564
      %605 = vst.msk [vmem:[#allocation2 + $0xf0] sm:$0xff] %vm361, %v569
      %606 = vst.msk [vmem:[#allocation2 + $0xf8] sm:$0xff] %vm361, %v572
      %s607 = sadd.s32 %s244, 40
      %s608 = smul.addr %s607, 4
      %s609 = scalar_lea.vmem %s220, %s608
      %v610 = vld [vmem:[%s609] sm:$0xf]
      %v611 = vld [vmem:[%s609 + $0x4] sm:$0xf]
      %v612 = vld [vmem:[%s609 + $0x8] sm:$0xf]
      %v613 = vld [vmem:[%s609 + $0xc] sm:$0xf]
      %v614 = vld [vmem:[%s609 + $0x10] sm:$0xf]
      %v615 = vld [vmem:[%s609 + $0x14] sm:$0xf]
      %v616 = vld [vmem:[%s609 + $0x18] sm:$0xf]
      %v617 = vld [vmem:[%s609 + $0x1c] sm:$0xf]
      %v618 = vld [vmem:[%s609 + $0x20] sm:$0xf]
      %v619 = vld [vmem:[%s609 + $0x24] sm:$0xf]
      %v620 = vld [vmem:[%s609 + $0x28] sm:$0xf]
      %v621 = vld [vmem:[%s609 + $0x2c] sm:$0xf]
      %v622 = vld [vmem:[%s609 + $0x30] sm:$0xf]
      %v623 = vld [vmem:[%s609 + $0x34] sm:$0xf]
      %v624 = vld [vmem:[%s609 + $0x38] sm:$0xf]
      %v625 = vld [vmem:[%s609 + $0x3c] sm:$0xf]
      %v626 = vld [vmem:[%s609 + $0x40] sm:$0xf]
      %v627 = vld [vmem:[%s609 + $0x44] sm:$0xf]
      %v628 = vld [vmem:[%s609 + $0x48] sm:$0xf]
      %v629 = vld [vmem:[%s609 + $0x4c] sm:$0xf]
      %v630 = vld [vmem:[%s609 + $0x50] sm:$0xf]
      %v631 = vld [vmem:[%s609 + $0x54] sm:$0xf]
      %v632 = vld [vmem:[%s609 + $0x58] sm:$0xf]
      %v633 = vld [vmem:[%s609 + $0x5c] sm:$0xf]
      %v634 = vld [vmem:[%s609 + $0x60] sm:$0xf]
      %v635 = vld [vmem:[%s609 + $0x64] sm:$0xf]
      %v636 = vld [vmem:[%s609 + $0x68] sm:$0xf]
      %v637 = vld [vmem:[%s609 + $0x6c] sm:$0xf]
      %v638 = vld [vmem:[%s609 + $0x70] sm:$0xf]
      %v639 = vld [vmem:[%s609 + $0x74] sm:$0xf]
      %v640 = vld [vmem:[%s609 + $0x78] sm:$0xf]
      %v641 = vld [vmem:[%s609 + $0x7c] sm:$0xf]
      %s642 = scalar_lea.vmem %s224, 2
      %v643 = vld [vmem:[%s642] sm:$0x3]
      %v676 = vunpack.c.l.b16 %v610
      %v677 = vunpack.c.l.b16 %v611
      %v678 = vunpack.c.l.b16 %v612
      %v679 = vunpack.c.l.b16 %v613
      %v680 = vunpack.c.l.b16 %v614
      %v681 = vunpack.c.l.b16 %v615
      %v682 = vunpack.c.l.b16 %v616
      %v683 = vunpack.c.l.b16 %v617
      %v684 = vunpack.c.l.b16 %v618
      %v685 = vunpack.c.l.b16 %v619
      %v686 = vunpack.c.l.b16 %v620
      %v687 = vunpack.c.l.b16 %v621
      %v688 = vunpack.c.l.b16 %v622
      %v689 = vunpack.c.l.b16 %v623
      %v690 = vunpack.c.l.b16 %v624
      %v691 = vunpack.c.l.b16 %v625
      %v692 = vunpack.c.l.b16 %v626
      %v693 = vunpack.c.l.b16 %v627
      %v694 = vunpack.c.l.b16 %v628
      %v695 = vunpack.c.l.b16 %v629
      %v696 = vunpack.c.l.b16 %v630
      %v697 = vunpack.c.l.b16 %v631
      %v698 = vunpack.c.l.b16 %v632
      %v699 = vunpack.c.l.b16 %v633
      %v700 = vunpack.c.l.b16 %v634
      %v701 = vunpack.c.l.b16 %v635
      %v702 = vunpack.c.l.b16 %v636
      %v703 = vunpack.c.l.b16 %v637
      %v704 = vunpack.c.l.b16 %v638
      %v705 = vunpack.c.l.b16 %v639
      %v706 = vunpack.c.l.b16 %v640
      %v707 = vunpack.c.l.b16 %v641
      %v708 = vpack.c.b16 %v677, %v676
      %v709 = vpack.c.b16 %v679, %v678
      %v710 = vpack.c.b16 %v681, %v680
      %v711 = vpack.c.b16 %v683, %v682
      %v712 = vpack.c.b16 %v685, %v684
      %v713 = vpack.c.b16 %v687, %v686
      %v714 = vpack.c.b16 %v689, %v688
      %v715 = vpack.c.b16 %v691, %v690
      %v716 = vpack.c.b16 %v693, %v692
      %v717 = vpack.c.b16 %v695, %v694
      %v718 = vpack.c.b16 %v697, %v696
      %v719 = vpack.c.b16 %v699, %v698
      %v720 = vpack.c.b16 %v701, %v700
      %v721 = vpack.c.b16 %v703, %v702
      %v722 = vpack.c.b16 %v705, %v704
      %v723 = vpack.c.b16 %v707, %v706
      %v725 = vsel %vm361, %v708, 0
      %v728 = vsel %vm361, %v709, 0
      %v731 = vsel %vm361, %v710, 0
      %v734 = vsel %vm361, %v711, 0
      %v737 = vsel %vm361, %v712, 0
      %v740 = vsel %vm361, %v713, 0
      %v743 = vsel %vm361, %v714, 0
      %v746 = vsel %vm361, %v715, 0
      %v749 = vsel %vm361, %v716, 0
      %v752 = vsel %vm361, %v717, 0
      %v755 = vsel %vm361, %v718, 0
      %v758 = vsel %vm361, %v719, 0
      %v761 = vsel %vm361, %v720, 0
      %v764 = vsel %vm361, %v721, 0
      %v767 = vsel %vm361, %v722, 0
      %v770 = vsel %vm361, %v723, 0
      %v773 = vsel %vm410, %v643, 0
      %775 = vmatprep.subr.bf16.mxu0 0
      %776 = vmatpush1.bf16.msra.mxu0 %v773
      %777 = vmatprep.subr.bf16.mxu0 0
      %778 = vmatpush1.bf16.msra.mxu0 0
      %779 = vmatprep.subr.bf16.mxu0 0
      %780 = vmatpush1.bf16.msra.mxu0 0
      %781 = vmatprep.subr.bf16.mxu0 0
      %782 = vmatpush1.bf16.msra.mxu0 0
      %783 = vmatprep.subr.bf16.mxu0 0
      %784 = vmatpush1.bf16.msra.mxu0 0
      %785 = vmatprep.subr.bf16.mxu0 0
      %786 = vmatpush1.bf16.msra.mxu0 0
      %787 = vmatprep.subr.bf16.mxu0 0
      %788 = vmatpush1.bf16.msra.mxu0 0
      %789 = vmatprep.subr.bf16.mxu0 0
      %790 = vmatpush1.bf16.msra.mxu0 0
      %791 = vmatprep.subr.bf16.mxu0 0
      %792 = vmatpush1.bf16.msra.mxu0 0
      %793 = vmatprep.subr.bf16.mxu0 0
      %794 = vmatpush1.bf16.msra.mxu0 0
      %795 = vmatprep.subr.bf16.mxu0 0
      %796 = vmatpush1.bf16.msra.mxu0 0
      %797 = vmatprep.subr.bf16.mxu0 0
      %798 = vmatpush1.bf16.msra.mxu0 0
      %799 = vmatprep.subr.bf16.mxu0 0
      %800 = vmatpush1.bf16.msra.mxu0 0
      %801 = vmatprep.subr.bf16.mxu0 0
      %802 = vmatpush1.bf16.msra.mxu0 0
      %803 = vmatprep.subr.bf16.mxu0 0
      %804 = vmatpush1.bf16.msra.mxu0 0
      %805 = vmatprep.subr.bf16.mxu0 0
      %806 = vmatpush1.bf16.msra.mxu0 0
      %807 = vmatprep.mubr.bf16.mxu0 0
      %808 = vmatmul.mubr.bf16.gmra.mrb[0].mxu0 %v725
      %v809 = vpop.f32.mrb[0].mxu0
      %v810 = vadd.f32 0.0, %v809
      %v811 = vpop.f32.mrb[0].mxu0
      %v812 = vpop.f32.mrb[0].mxu0
      %v813 = vadd.f32 0.0, %v812
      %v814 = vpop.f32.mrb[0].mxu0
      %815 = vmatprep.mubr.bf16.mxu0 0
      %816 = vmatmul.mubr.bf16.gmra.mrb[0].mxu0 %v728
      %v817 = vpop.f32.mrb[0].mxu0
      %v818 = vadd.f32 0.0, %v817
      %v819 = vpop.f32.mrb[0].mxu0
      %v820 = vpop.f32.mrb[0].mxu0
      %v821 = vadd.f32 0.0, %v820
      %v822 = vpop.f32.mrb[0].mxu0
      %823 = vmatprep.mubr.bf16.mxu0 0
      %824 = vmatmul.mubr.bf16.gmra.mrb[0].mxu0 %v731
      %v825 = vpop.f32.mrb[0].mxu0
      %v826 = vadd.f32 0.0, %v825
      %v827 = vpop.f32.mrb[0].mxu0
      %v828 = vpop.f32.mrb[0].mxu0
      %v829 = vadd.f32 0.0, %v828
      %v830 = vpop.f32.mrb[0].mxu0
      %831 = vmatprep.mubr.bf16.mxu0 0
      %832 = vmatmul.mubr.bf16.gmra.mrb[0].mxu0 %v734
      %v833 = vpop.f32.mrb[0].mxu0
      %v834 = vadd.f32 0.0, %v833
      %v835 = vpop.f32.mrb[0].mxu0
      %v836 = vpop.f32.mrb[0].mxu0
      %v837 = vadd.f32 0.0, %v836
      %v838 = vpop.f32.mrb[0].mxu0
      %839 = vmatprep.mubr.bf16.mxu0 0
      %840 = vmatmul.mubr.bf16.gmra.mrb[0].mxu0 %v737
      %v841 = vpop.f32.mrb[0].mxu0
      %v842 = vadd.f32 0.0, %v841
      %v843 = vpop.f32.mrb[0].mxu0
      %v844 = vpop.f32.mrb[0].mxu0
      %v845 = vadd.f32 0.0, %v844
      %v846 = vpop.f32.mrb[0].mxu0
      %847 = vmatprep.mubr.bf16.mxu0 0
      %848 = vmatmul.mubr.bf16.gmra.mrb[0].mxu0 %v740
      %v849 = vpop.f32.mrb[0].mxu0
      %v850 = vadd.f32 0.0, %v849
      %v851 = vpop.f32.mrb[0].mxu0
      %v852 = vpop.f32.mrb[0].mxu0
      %v853 = vadd.f32 0.0, %v852
      %v854 = vpop.f32.mrb[0].mxu0
      %855 = vmatprep.mubr.bf16.mxu0 0
      %856 = vmatmul.mubr.bf16.gmra.mrb[0].mxu0 %v743
      %v857 = vpop.f32.mrb[0].mxu0
      %v858 = vadd.f32 0.0, %v857
      %v859 = vpop.f32.mrb[0].mxu0
      %v860 = vpop.f32.mrb[0].mxu0
      %v861 = vadd.f32 0.0, %v860
      %v862 = vpop.f32.mrb[0].mxu0
      %863 = vmatprep.mubr.bf16.mxu0 0
      %864 = vmatmul.mubr.bf16.gmra.mrb[0].mxu0 %v746
      %v865 = vpop.f32.mrb[0].mxu0
      %v866 = vadd.f32 0.0, %v865
      %v867 = vpop.f32.mrb[0].mxu0
      %v868 = vpop.f32.mrb[0].mxu0
      %v869 = vadd.f32 0.0, %v868
      %v870 = vpop.f32.mrb[0].mxu0
      %871 = vmatprep.mubr.bf16.mxu0 0
      %872 = vmatmul.mubr.bf16.gmra.mrb[0].mxu0 %v749
      %v873 = vpop.f32.mrb[0].mxu0
      %v874 = vadd.f32 0.0, %v873
      %v875 = vpop.f32.mrb[0].mxu0
      %v876 = vpop.f32.mrb[0].mxu0
      %v877 = vadd.f32 0.0, %v876
      %v878 = vpop.f32.mrb[0].mxu0
      %879 = vmatprep.mubr.bf16.mxu0 0
      %880 = vmatmul.mubr.bf16.gmra.mrb[0].mxu0 %v752
      %v881 = vpop.f32.mrb[0].mxu0
      %v882 = vadd.f32 0.0, %v881
      %v883 = vpop.f32.mrb[0].mxu0
      %v884 = vpop.f32.mrb[0].mxu0
      %v885 = vadd.f32 0.0, %v884
      %v886 = vpop.f32.mrb[0].mxu0
      %887 = vmatprep.mubr.bf16.mxu0 0
      %888 = vmatmul.mubr.bf16.gmra.mrb[0].mxu0 %v755
      %v889 = vpop.f32.mrb[0].mxu0
      %v890 = vadd.f32 0.0, %v889
      %v891 = vpop.f32.mrb[0].mxu0
      %v892 = vpop.f32.mrb[0].mxu0
      %v893 = vadd.f32 0.0, %v892
      %v894 = vpop.f32.mrb[0].mxu0
      %895 = vmatprep.mubr.bf16.mxu0 0
      %896 = vmatmul.mubr.bf16.gmra.mrb[0].mxu0 %v758
      %v897 = vpop.f32.mrb[0].mxu0
      %v898 = vadd.f32 0.0, %v897
      %v899 = vpop.f32.mrb[0].mxu0
      %v900 = vpop.f32.mrb[0].mxu0
      %v901 = vadd.f32 0.0, %v900
      %v902 = vpop.f32.mrb[0].mxu0
      %903 = vmatprep.mubr.bf16.mxu0 0
      %904 = vmatmul.mubr.bf16.gmra.mrb[0].mxu0 %v761
      %v905 = vpop.f32.mrb[0].mxu0
      %v906 = vadd.f32 0.0, %v905
      %v907 = vpop.f32.mrb[0].mxu0
      %v908 = vpop.f32.mrb[0].mxu0
      %v909 = vadd.f32 0.0, %v908
      %v910 = vpop.f32.mrb[0].mxu0
      %911 = vmatprep.mubr.bf16.mxu0 0
      %912 = vmatmul.mubr.bf16.gmra.mrb[0].mxu0 %v764
      %v913 = vpop.f32.mrb[0].mxu0
      %v914 = vadd.f32 0.0, %v913
      %v915 = vpop.f32.mrb[0].mxu0
      %v916 = vpop.f32.mrb[0].mxu0
      %v917 = vadd.f32 0.0, %v916
      %v918 = vpop.f32.mrb[0].mxu0
      %919 = vmatprep.mubr.bf16.mxu0 0
      %920 = vmatmul.mubr.bf16.gmra.mrb[0].mxu0 %v767
      %v921 = vpop.f32.mrb[0].mxu0
      %v922 = vadd.f32 0.0, %v921
      %v923 = vpop.f32.mrb[0].mxu0
      %v924 = vpop.f32.mrb[0].mxu0
      %v925 = vadd.f32 0.0, %v924
      %v926 = vpop.f32.mrb[0].mxu0
      %927 = vmatprep.mubr.bf16.mxu0 0
      %928 = vmatmul.mubr.bf16.gmra.mrb[0].mxu0 %v770
      %v929 = vpop.f32.mrb[0].mxu0
      %v930 = vadd.f32 0.0, %v929
      %v931 = vpop.f32.mrb[0].mxu0
      %v932 = vpop.f32.mrb[0].mxu0
      %v933 = vadd.f32 0.0, %v932
      %v934 = vpop.f32.mrb[0].mxu0
      %935 = vdwg.mxu0
      %v936 = vld [vmem:[#allocation2] sm:$0xff]
      %v937 = vld [vmem:[#allocation2 + $0x8] sm:$0xff]
      %v938 = vld [vmem:[#allocation2 + $0x10] sm:$0xff]
      %v939 = vld [vmem:[#allocation2 + $0x18] sm:$0xff]
      %v940 = vld [vmem:[#allocation2 + $0x20] sm:$0xff]
      %v941 = vld [vmem:[#allocation2 + $0x28] sm:$0xff]
      %v942 = vld [vmem:[#allocation2 + $0x30] sm:$0xff]
      %v943 = vld [vmem:[#allocation2 + $0x38] sm:$0xff]
      %v944 = vld [vmem:[#allocation2 + $0x40] sm:$0xff]
      %v945 = vld [vmem:[#allocation2 + $0x48] sm:$0xff]
      %v946 = vld [vmem:[#allocation2 + $0x50] sm:$0xff]
      %v947 = vld [vmem:[#allocation2 + $0x58] sm:$0xff]
      %v948 = vld [vmem:[#allocation2 + $0x60] sm:$0xff]
      %v949 = vld [vmem:[#allocation2 + $0x68] sm:$0xff]
      %v950 = vld [vmem:[#allocation2 + $0x70] sm:$0xff]
      %v951 = vld [vmem:[#allocation2 + $0x78] sm:$0xff]
      %v952 = vld [vmem:[#allocation2 + $0x80] sm:$0xff]
      %v953 = vld [vmem:[#allocation2 + $0x88] sm:$0xff]
      %v954 = vld [vmem:[#allocation2 + $0x90] sm:$0xff]
      %v955 = vld [vmem:[#allocation2 + $0x98] sm:$0xff]
      %v956 = vld [vmem:[#allocation2 + $0xa0] sm:$0xff]
      %v957 = vld [vmem:[#allocation2 + $0xa8] sm:$0xff]
      %v958 = vld [vmem:[#allocation2 + $0xb0] sm:$0xff]
      %v959 = vld [vmem:[#allocation2 + $0xb8] sm:$0xff]
      %v960 = vld [vmem:[#allocation2 + $0xc0] sm:$0xff]
      %v961 = vld [vmem:[#allocation2 + $0xc8] sm:$0xff]
      %v962 = vld [vmem:[#allocation2 + $0xd0] sm:$0xff]
      %v963 = vld [vmem:[#allocation2 + $0xd8] sm:$0xff]
      %v964 = vld [vmem:[#allocation2 + $0xe0] sm:$0xff]
      %v965 = vld [vmem:[#allocation2 + $0xe8] sm:$0xff]
      %v966 = vld [vmem:[#allocation2 + $0xf0] sm:$0xff]
      %v967 = vld [vmem:[#allocation2 + $0xf8] sm:$0xff]
      %v968 = vadd.f32 %v936, %v810
      %v969 = vadd.f32 %v937, %v813
      %v970 = vadd.f32 %v938, %v818
      %v971 = vadd.f32 %v939, %v821
      %v972 = vadd.f32 %v940, %v826
      %v973 = vadd.f32 %v941, %v829
      %v974 = vadd.f32 %v942, %v834
      %v975 = vadd.f32 %v943, %v837
      %v976 = vadd.f32 %v944, %v842
      %v977 = vadd.f32 %v945, %v845
      %v978 = vadd.f32 %v946, %v850
      %v979 = vadd.f32 %v947, %v853
      %v980 = vadd.f32 %v948, %v858
      %v981 = vadd.f32 %v949, %v861
      %v982 = vadd.f32 %v950, %v866
      %v983 = vadd.f32 %v951, %v869
      %v984 = vadd.f32 %v952, %v874
      %v985 = vadd.f32 %v953, %v877
      %v986 = vadd.f32 %v954, %v882
      %v987 = vadd.f32 %v955, %v885
      %v988 = vadd.f32 %v956, %v890
      %v989 = vadd.f32 %v957, %v893
      %v990 = vadd.f32 %v958, %v898
      %v991 = vadd.f32 %v959, %v901
      %v992 = vadd.f32 %v960, %v906
      %v993 = vadd.f32 %v961, %v909
      %v994 = vadd.f32 %v962, %v914
      %v995 = vadd.f32 %v963, %v917
      %v996 = vadd.f32 %v964, %v922
      %v997 = vadd.f32 %v965, %v925
      %v998 = vadd.f32 %v966, %v930
      %v999 = vadd.f32 %v967, %v933
      %1000 = vst.msk [vmem:[#allocation2] sm:$0xff] %vm361, %v968
      %1001 = vst.msk [vmem:[#allocation2 + $0x8] sm:$0xff] %vm361, %v969
      %1002 = vst.msk [vmem:[#allocation2 + $0x10] sm:$0xff] %vm361, %v970
      %1003 = vst.msk [vmem:[#allocation2 + $0x18] sm:$0xff] %vm361, %v971
      %1004 = vst.msk [vmem:[#allocation2 + $0x20] sm:$0xff] %vm361, %v972
      %1005 = vst.msk [vmem:[#allocation2 + $0x28] sm:$0xff] %vm361, %v973
      %1006 = vst.msk [vmem:[#allocation2 + $0x30] sm:$0xff] %vm361, %v974
      %1007 = vst.msk [vmem:[#allocation2 + $0x38] sm:$0xff] %vm361, %v975
      %1008 = vst.msk [vmem:[#allocation2 + $0x40] sm:$0xff] %vm361, %v976
      %1009 = vst.msk [vmem:[#allocation2 + $0x48] sm:$0xff] %vm361, %v977
      %1010 = vst.msk [vmem:[#allocation2 + $0x50] sm:$0xff] %vm361, %v978
      %1011 = vst.msk [vmem:[#allocation2 + $0x58] sm:$0xff] %vm361, %v979
      %1012 = vst.msk [vmem:[#allocation2 + $0x60] sm:$0xff] %vm361, %v980
      %1013 = vst.msk [vmem:[#allocation2 + $0x68] sm:$0xff] %vm361, %v981
      %1014 = vst.msk [vmem:[#allocation2 + $0x70] sm:$0xff] %vm361, %v982
      %1015 = vst.msk [vmem:[#allocation2 + $0x78] sm:$0xff] %vm361, %v983
      %1016 = vst.msk [vmem:[#allocation2 + $0x80] sm:$0xff] %vm361, %v984
      %1017 = vst.msk [vmem:[#allocation2 + $0x88] sm:$0xff] %vm361, %v985
      %1018 = vst.msk [vmem:[#allocation2 + $0x90] sm:$0xff] %vm361, %v986
      %1019 = vst.msk [vmem:[#allocation2 + $0x98] sm:$0xff] %vm361, %v987
      %1020 = vst.msk [vmem:[#allocation2 + $0xa0] sm:$0xff] %vm361, %v988
      %1021 = vst.msk [vmem:[#allocation2 + $0xa8] sm:$0xff] %vm361, %v989
      %1022 = vst.msk [vmem:[#allocation2 + $0xb0] sm:$0xff] %vm361, %v990
      %1023 = vst.msk [vmem:[#allocation2 + $0xb8] sm:$0xff] %vm361, %v991
      %1024 = vst.msk [vmem:[#allocation2 + $0xc0] sm:$0xff] %vm361, %v992
      %1025 = vst.msk [vmem:[#allocation2 + $0xc8] sm:$0xff] %vm361, %v993
      %1026 = vst.msk [vmem:[#allocation2 + $0xd0] sm:$0xff] %vm361, %v994
      %1027 = vst.msk [vmem:[#allocation2 + $0xd8] sm:$0xff] %vm361, %v995
      %1028 = vst.msk [vmem:[#allocation2 + $0xe0] sm:$0xff] %vm361, %v996
      %1029 = vst.msk [vmem:[#allocation2 + $0xe8] sm:$0xff] %vm361, %v997
      %1030 = vst.msk [vmem:[#allocation2 + $0xf0] sm:$0xff] %vm361, %v998
      %1031 = vst.msk [vmem:[#allocation2 + $0xf8] sm:$0xff] %vm361, %v999
      %s1032 = sadd.s32 %s244, 80
      %s1033 = smul.addr %s1032, 4
      %s1034 = scalar_lea.vmem %s220, %s1033
      %v1035 = vld [vmem:[%s1034] sm:$0xf]
      %v1036 = vld [vmem:[%s1034 + $0x4] sm:$0xf]
      %v1037 = vld [vmem:[%s1034 + $0x8] sm:$0xf]
      %v1038 = vld [vmem:[%s1034 + $0xc] sm:$0xf]
      %v1039 = vld [vmem:[%s1034 + $0x10] sm:$0xf]
      %v1040 = vld [vmem:[%s1034 + $0x14] sm:$0xf]
      %v1041 = vld [vmem:[%s1034 + $0x18] sm:$0xf]
      %v1042 = vld [vmem:[%s1034 + $0x1c] sm:$0xf]
      %v1043 = vld [vmem:[%s1034 + $0x20] sm:$0xf]
      %v1044 = vld [vmem:[%s1034 + $0x24] sm:$0xf]
      %v1045 = vld [vmem:[%s1034 + $0x28] sm:$0xf]
      %v1046 = vld [vmem:[%s1034 + $0x2c] sm:$0xf]
      %v1047 = vld [vmem:[%s1034 + $0x30] sm:$0xf]
      %v1048 = vld [vmem:[%s1034 + $0x34] sm:$0xf]
      %v1049 = vld [vmem:[%s1034 + $0x38] sm:$0xf]
      %v1050 = vld [vmem:[%s1034 + $0x3c] sm:$0xf]
      %v1051 = vld [vmem:[%s1034 + $0x40] sm:$0xf]
      %v1052 = vld [vmem:[%s1034 + $0x44] sm:$0xf]
      %v1053 = vld [vmem:[%s1034 + $0x48] sm:$0xf]
      %v1054 = vld [vmem:[%s1034 + $0x4c] sm:$0xf]
      %v1055 = vld [vmem:[%s1034 + $0x50] sm:$0xf]
      %v1056 = vld [vmem:[%s1034 + $0x54] sm:$0xf]
      %v1057 = vld [vmem:[%s1034 + $0x58] sm:$0xf]
      %v1058 = vld [vmem:[%s1034 + $0x5c] sm:$0xf]
      %v1059 = vld [vmem:[%s1034 + $0x60] sm:$0xf]
      %v1060 = vld [vmem:[%s1034 + $0x64] sm:$0xf]
      %v1061 = vld [vmem:[%s1034 + $0x68] sm:$0xf]
      %v1062 = vld [vmem:[%s1034 + $0x6c] sm:$0xf]
      %v1063 = vld [vmem:[%s1034 + $0x70] sm:$0xf]
      %v1064 = vld [vmem:[%s1034 + $0x74] sm:$0xf]
      %v1065 = vld [vmem:[%s1034 + $0x78] sm:$0xf]
      %v1066 = vld [vmem:[%s1034 + $0x7c] sm:$0xf]
      %s1067 = scalar_lea.vmem %s224, 4
      %v1068 = vld [vmem:[%s1067] sm:$0x3]
      %v1101 = vunpack.c.l.b16 %v1035
      %v1102 = vunpack.c.l.b16 %v1036
      %v1103 = vunpack.c.l.b16 %v1037
      %v1104 = vunpack.c.l.b16 %v1038
      %v1105 = vunpack.c.l.b16 %v1039
      %v1106 = vunpack.c.l.b16 %v1040
      %v1107 = vunpack.c.l.b16 %v1041
      %v1108 = vunpack.c.l.b16 %v1042
      %v1109 = vunpack.c.l.b16 %v1043
      %v1110 = vunpack.c.l.b16 %v1044
      %v1111 = vunpack.c.l.b16 %v1045
      %v1112 = vunpack.c.l.b16 %v1046
      %v1113 = vunpack.c.l.b16 %v1047
      %v1114 = vunpack.c.l.b16 %v1048
      %v1115 = vunpack.c.l.b16 %v1049
      %v1116 = vunpack.c.l.b16 %v1050
      %v1117 = vunpack.c.l.b16 %v1051
      %v1118 = vunpack.c.l.b16 %v1052
      %v1119 = vunpack.c.l.b16 %v1053
      %v1120 = vunpack.c.l.b16 %v1054
      %v1121 = vunpack.c.l.b16 %v1055
      %v1122 = vunpack.c.l.b16 %v1056
      %v1123 = vunpack.c.l.b16 %v1057
      %v1124 = vunpack.c.l.b16 %v1058
      %v1125 = vunpack.c.l.b16 %v1059
      %v1126 = vunpack.c.l.b16 %v1060
      %v1127 = vunpack.c.l.b16 %v1061
      %v1128 = vunpack.c.l.b16 %v1062
      %v1129 = vunpack.c.l.b16 %v1063
      %v1130 = vunpack.c.l.b16 %v1064
      %v1131 = vunpack.c.l.b16 %v1065
      %v1132 = vunpack.c.l.b16 %v1066
      %v1133 = vpack.c.b16 %v1102, %v1101
      %v1134 = vpack.c.b16 %v1104, %v1103
      %v1135 = vpack.c.b16 %v1106, %v1105
      %v1136 = vpack.c.b16 %v1108, %v1107
      %v1137 = vpack.c.b16 %v1110, %v1109
      %v1138 = vpack.c.b16 %v1112, %v1111
      %v1139 = vpack.c.b16 %v1114, %v1113
      %v1140 = vpack.c.b16 %v1116, %v1115
      %v1141 = vpack.c.b16 %v1118, %v1117
      %v1142 = vpack.c.b16 %v1120, %v1119
      %v1143 = vpack.c.b16 %v1122, %v1121
      %v1144 = vpack.c.b16 %v1124, %v1123
      %v1145 = vpack.c.b16 %v1126, %v1125
      %v1146 = vpack.c.b16 %v1128, %v1127
      %v1147 = vpack.c.b16 %v1130, %v1129
      %v1148 = vpack.c.b16 %v1132, %v1131
      %v1150 = vsel %vm361, %v1133, 0
      %v1153 = vsel %vm361, %v1134, 0
      %v1156 = vsel %vm361, %v1135, 0
      %v1159 = vsel %vm361, %v1136, 0
      %v1162 = vsel %vm361, %v1137, 0
      %v1165 = vsel %vm361, %v1138, 0
      %v1168 = vsel %vm361, %v1139, 0
      %v1171 = vsel %vm361, %v1140, 0
      %v1174 = vsel %vm361, %v1141, 0
      %v1177 = vsel %vm361, %v1142, 0
      %v1180 = vsel %vm361, %v1143, 0
      %v1183 = vsel %vm361, %v1144, 0
      %v1186 = vsel %vm361, %v1145, 0
      %v1189 = vsel %vm361, %v1146, 0
      %v1192 = vsel %vm361, %v1147, 0
      %v1195 = vsel %vm361, %v1148, 0
      %v1198 = vsel %vm410, %v1068, 0
      %1200 = vmatprep.subr.bf16.mxu0 0
      %1201 = vmatpush1.bf16.msra.mxu0 %v1198
      %1202 = vmatprep.subr.bf16.mxu0 0
      %1203 = vmatpush1.bf16.msra.mxu0 0
      %1204 = vmatprep.subr.bf16.mxu0 0
      %1205 = vmatpush1.bf16.msra.mxu0 0
      %1206 = vmatprep.subr.bf16.mxu0 0
      %1207 = vmatpush1.bf16.msra.mxu0 0
      %1208 = vmatprep.subr.bf16.mxu0 0
      %1209 = vmatpush1.bf16.msra.mxu0 0
      %1210 = vmatprep.subr.bf16.mxu0 0
      %1211 = vmatpush1.bf16.msra.mxu0 0
      %1212 = vmatprep.subr.bf16.mxu0 0
      %1213 = vmatpush1.bf16.msra.mxu0 0
      %1214 = vmatprep.subr.bf16.mxu0 0
      %1215 = vmatpush1.bf16.msra.mxu0 0
      %1216 = vmatprep.subr.bf16.mxu0 0
      %1217 = vmatpush1.bf16.msra.mxu0 0
      %1218 = vmatprep.subr.bf16.mxu0 0
      %1219 = vmatpush1.bf16.msra.mxu0 0
      %1220 = vmatprep.subr.bf16.mxu0 0
      %1221 = vmatpush1.bf16.msra.mxu0 0
      %1222 = vmatprep.subr.bf16.mxu0 0
      %1223 = vmatpush1.bf16.msra.mxu0 0
      %1224 = vmatprep.subr.bf16.mxu0 0
      %1225 = vmatpush1.bf16.msra.mxu0 0
      %1226 = vmatprep.subr.bf16.mxu0 0
      %1227 = vmatpush1.bf16.msra.mxu0 0
      %1228 = vmatprep.subr.bf16.mxu0 0
      %1229 = vmatpush1.bf16.msra.mxu0 0
      %1230 = vmatprep.subr.bf16.mxu0 0
      %1231 = vmatpush1.bf16.msra.mxu0 0
      %1232 = vmatprep.mubr.bf16.mxu0 0
      %1233 = vmatmul.mubr.bf16.gmra.mrb[0].mxu0 %v1150
      %v1234 = vpop.f32.mrb[0].mxu0
      %v1235 = vadd.f32 0.0, %v1234
      %v1236 = vpop.f32.mrb[0].mxu0
      %v1237 = vpop.f32.mrb[0].mxu0
      %v1238 = vadd.f32 0.0, %v1237
      %v1239 = vpop.f32.mrb[0].mxu0
      %1240 = vmatprep.mubr.bf16.mxu0 0
      %1241 = vmatmul.mubr.bf16.gmra.mrb[0].mxu0 %v1153
      %v1242 = vpop.f32.mrb[0].mxu0
      %v1243 = vadd.f32 0.0, %v1242
      %v1244 = vpop.f32.mrb[0].mxu0
      %v1245 = vpop.f32.mrb[0].mxu0
      %v1246 = vadd.f32 0.0, %v1245
      %v1247 = vpop.f32.mrb[0].mxu0
      %1248 = vmatprep.mubr.bf16.mxu0 0
      %1249 = vmatmul.mubr.bf16.gmra.mrb[0].mxu0 %v1156
      %v1250 = vpop.f32.mrb[0].mxu0
      %v1251 = vadd.f32 0.0, %v1250
      %v1252 = vpop.f32.mrb[0].mxu0
      %v1253 = vpop.f32.mrb[0].mxu0
      %v1254 = vadd.f32 0.0, %v1253
      %v1255 = vpop.f32.mrb[0].mxu0
      %1256 = vmatprep.mubr.bf16.mxu0 0
      %1257 = vmatmul.mubr.bf16.gmra.mrb[0].mxu0 %v1159
      %v1258 = vpop.f32.mrb[0].mxu0
      %v1259 = vadd.f32 0.0, %v1258
      %v1260 = vpop.f32.mrb[0].mxu0
      %v1261 = vpop.f32.mrb[0].mxu0
      %v1262 = vadd.f32 0.0, %v1261
      %v1263 = vpop.f32.mrb[0].mxu0
      %1264 = vmatprep.mubr.bf16.mxu0 0
      %1265 = vmatmul.mubr.bf16.gmra.mrb[0].mxu0 %v1162
      %v1266 = vpop.f32.mrb[0].mxu0
      %v1267 = vadd.f32 0.0, %v1266
      %v1268 = vpop.f32.mrb[0].mxu0
      %v1269 = vpop.f32.mrb[0].mxu0
      %v1270 = vadd.f32 0.0, %v1269
      %v1271 = vpop.f32.mrb[0].mxu0
      %1272 = vmatprep.mubr.bf16.mxu0 0
      %1273 = vmatmul.mubr.bf16.gmra.mrb[0].mxu0 %v1165
      %v1274 = vpop.f32.mrb[0].mxu0
      %v1275 = vadd.f32 0.0, %v1274
      %v1276 = vpop.f32.mrb[0].mxu0
      %v1277 = vpop.f32.mrb[0].mxu0
      %v1278 = vadd.f32 0.0, %v1277
      %v1279 = vpop.f32.mrb[0].mxu0
      %1280 = vmatprep.mubr.bf16.mxu0 0
      %1281 = vmatmul.mubr.bf16.gmra.mrb[0].mxu0 %v1168
      %v1282 = vpop.f32.mrb[0].mxu0
      %v1283 = vadd.f32 0.0, %v1282
      %v1284 = vpop.f32.mrb[0].mxu0
      %v1285 = vpop.f32.mrb[0].mxu0
      %v1286 = vadd.f32 0.0, %v1285
      %v1287 = vpop.f32.mrb[0].mxu0
      %1288 = vmatprep.mubr.bf16.mxu0 0
      %1289 = vmatmul.mubr.bf16.gmra.mrb[0].mxu0 %v1171
      %v1290 = vpop.f32.mrb[0].mxu0
      %v1291 = vadd.f32 0.0, %v1290
      %v1292 = vpop.f32.mrb[0].mxu0
      %v1293 = vpop.f32.mrb[0].mxu0
      %v1294 = vadd.f32 0.0, %v1293
      %v1295 = vpop.f32.mrb[0].mxu0
      %1296 = vmatprep.mubr.bf16.mxu0 0
      %1297 = vmatmul.mubr.bf16.gmra.mrb[0].mxu0 %v1174
      %v1298 = vpop.f32.mrb[0].mxu0
      %v1299 = vadd.f32 0.0, %v1298
      %v1300 = vpop.f32.mrb[0].mxu0
      %v1301 = vpop.f32.mrb[0].mxu0
      %v1302 = vadd.f32 0.0, %v1301
      %v1303 = vpop.f32.mrb[0].mxu0
      %1304 = vmatprep.mubr.bf16.mxu0 0
      %1305 = vmatmul.mubr.bf16.gmra.mrb[0].mxu0 %v1177
      %v1306 = vpop.f32.mrb[0].mxu0
      %v1307 = vadd.f32 0.0, %v1306
      %v1308 = vpop.f32.mrb[0].mxu0
      %v1309 = vpop.f32.mrb[0].mxu0
      %v1310 = vadd.f32 0.0, %v1309
      %v1311 = vpop.f32.mrb[0].mxu0
      %1312 = vmatprep.mubr.bf16.mxu0 0
      %1313 = vmatmul.mubr.bf16.gmra.mrb[0].mxu0 %v1180
      %v1314 = vpop.f32.mrb[0].mxu0
      %v1315 = vadd.f32 0.0, %v1314
      %v1316 = vpop.f32.mrb[0].mxu0
      %v1317 = vpop.f32.mrb[0].mxu0
      %v1318 = vadd.f32 0.0, %v1317
      %v1319 = vpop.f32.mrb[0].mxu0
      %1320 = vmatprep.mubr.bf16.mxu0 0
      %1321 = vmatmul.mubr.bf16.gmra.mrb[0].mxu0 %v1183
      %v1322 = vpop.f32.mrb[0].mxu0
      %v1323 = vadd.f32 0.0, %v1322
      %v1324 = vpop.f32.mrb[0].mxu0
      %v1325 = vpop.f32.mrb[0].mxu0
      %v1326 = vadd.f32 0.0, %v1325
      %v1327 = vpop.f32.mrb[0].mxu0
      %1328 = vmatprep.mubr.bf16.mxu0 0
      %1329 = vmatmul.mubr.bf16.gmra.mrb[0].mxu0 %v1186
      %v1330 = vpop.f32.mrb[0].mxu0
      %v1331 = vadd.f32 0.0, %v1330
      %v1332 = vpop.f32.mrb[0].mxu0
      %v1333 = vpop.f32.mrb[0].mxu0
      %v1334 = vadd.f32 0.0, %v1333
      %v1335 = vpop.f32.mrb[0].mxu0
      %1336 = vmatprep.mubr.bf16.mxu0 0
      %1337 = vmatmul.mubr.bf16.gmra.mrb[0].mxu0 %v1189
      %v1338 = vpop.f32.mrb[0].mxu0
      %v1339 = vadd.f32 0.0, %v1338
      %v1340 = vpop.f32.mrb[0].mxu0
      %v1341 = vpop.f32.mrb[0].mxu0
      %v1342 = vadd.f32 0.0, %v1341
      %v1343 = vpop.f32.mrb[0].mxu0
      %1344 = vmatprep.mubr.bf16.mxu0 0
      %1345 = vmatmul.mubr.bf16.gmra.mrb[0].mxu0 %v1192
      %v1346 = vpop.f32.mrb[0].mxu0
      %v1347 = vadd.f32 0.0, %v1346
      %v1348 = vpop.f32.mrb[0].mxu0
      %v1349 = vpop.f32.mrb[0].mxu0
      %v1350 = vadd.f32 0.0, %v1349
      %v1351 = vpop.f32.mrb[0].mxu0
      %1352 = vmatprep.mubr.bf16.mxu0 0
      %1353 = vmatmul.mubr.bf16.gmra.mrb[0].mxu0 %v1195
      %v1354 = vpop.f32.mrb[0].mxu0
      %v1355 = vadd.f32 0.0, %v1354
      %v1356 = vpop.f32.mrb[0].mxu0
      %v1357 = vpop.f32.mrb[0].mxu0
      %v1358 = vadd.f32 0.0, %v1357
      %v1359 = vpop.f32.mrb[0].mxu0
      %1360 = vdwg.mxu0
      %v1361 = vld [vmem:[#allocation2] sm:$0xff]
      %v1362 = vld [vmem:[#allocation2 + $0x8] sm:$0xff]
      %v1363 = vld [vmem:[#allocation2 + $0x10] sm:$0xff]
      %v1364 = vld [vmem:[#allocation2 + $0x18] sm:$0xff]
      %v1365 = vld [vmem:[#allocation2 + $0x20] sm:$0xff]
      %v1366 = vld [vmem:[#allocation2 + $0x28] sm:$0xff]
      %v1367 = vld [vmem:[#allocation2 + $0x30] sm:$0xff]
      %v1368 = vld [vmem:[#allocation2 + $0x38] sm:$0xff]
      %v1369 = vld [vmem:[#allocation2 + $0x40] sm:$0xff]
      %v1370 = vld [vmem:[#allocation2 + $0x48] sm:$0xff]
      %v1371 = vld [vmem:[#allocation2 + $0x50] sm:$0xff]
      %v1372 = vld [vmem:[#allocation2 + $0x58] sm:$0xff]
      %v1373 = vld [vmem:[#allocation2 + $0x60] sm:$0xff]
      %v1374 = vld [vmem:[#allocation2 + $0x68] sm:$0xff]
      %v1375 = vld [vmem:[#allocation2 + $0x70] sm:$0xff]
      %v1376 = vld [vmem:[#allocation2 + $0x78] sm:$0xff]
      %v1377 = vld [vmem:[#allocation2 + $0x80] sm:$0xff]
      %v1378 = vld [vmem:[#allocation2 + $0x88] sm:$0xff]
      %v1379 = vld [vmem:[#allocation2 + $0x90] sm:$0xff]
      %v1380 = vld [vmem:[#allocation2 + $0x98] sm:$0xff]
      %v1381 = vld [vmem:[#allocation2 + $0xa0] sm:$0xff]
      %v1382 = vld [vmem:[#allocation2 + $0xa8] sm:$0xff]
      %v1383 = vld [vmem:[#allocation2 + $0xb0] sm:$0xff]
      %v1384 = vld [vmem:[#allocation2 + $0xb8] sm:$0xff]
      %v1385 = vld [vmem:[#allocation2 + $0xc0] sm:$0xff]
      %v1386 = vld [vmem:[#allocation2 + $0xc8] sm:$0xff]
      %v1387 = vld [vmem:[#allocation2 + $0xd0] sm:$0xff]
      %v1388 = vld [vmem:[#allocation2 + $0xd8] sm:$0xff]
      %v1389 = vld [vmem:[#allocation2 + $0xe0] sm:$0xff]
      %v1390 = vld [vmem:[#allocation2 + $0xe8] sm:$0xff]
      %v1391 = vld [vmem:[#allocation2 + $0xf0] sm:$0xff]
      %v1392 = vld [vmem:[#allocation2 + $0xf8] sm:$0xff]
      %v1393 = vadd.f32 %v1361, %v1235
      %v1394 = vadd.f32 %v1362, %v1238
      %v1395 = vadd.f32 %v1363, %v1243
      %v1396 = vadd.f32 %v1364, %v1246
      %v1397 = vadd.f32 %v1365, %v1251
      %v1398 = vadd.f32 %v1366, %v1254
      %v1399 = vadd.f32 %v1367, %v1259
      %v1400 = vadd.f32 %v1368, %v1262
      %v1401 = vadd.f32 %v1369, %v1267
      %v1402 = vadd.f32 %v1370, %v1270
      %v1403 = vadd.f32 %v1371, %v1275
      %v1404 = vadd.f32 %v1372, %v1278
      %v1405 = vadd.f32 %v1373, %v1283
      %v1406 = vadd.f32 %v1374, %v1286
      %v1407 = vadd.f32 %v1375, %v1291
      %v1408 = vadd.f32 %v1376, %v1294
      %v1409 = vadd.f32 %v1377, %v1299
      %v1410 = vadd.f32 %v1378, %v1302
      %v1411 = vadd.f32 %v1379, %v1307
      %v1412 = vadd.f32 %v1380, %v1310
      %v1413 = vadd.f32 %v1381, %v1315
      %v1414 = vadd.f32 %v1382, %v1318
      %v1415 = vadd.f32 %v1383, %v1323
      %v1416 = vadd.f32 %v1384, %v1326
      %v1417 = vadd.f32 %v1385, %v1331
      %v1418 = vadd.f32 %v1386, %v1334
      %v1419 = vadd.f32 %v1387, %v1339
      %v1420 = vadd.f32 %v1388, %v1342
      %v1421 = vadd.f32 %v1389, %v1347
      %v1422 = vadd.f32 %v1390, %v1350
      %v1423 = vadd.f32 %v1391, %v1355
      %v1424 = vadd.f32 %v1392, %v1358
      %1425 = vst.msk [vmem:[#allocation2] sm:$0xff] %vm361, %v1393
      %1426 = vst.msk [vmem:[#allocation2 + $0x8] sm:$0xff] %vm361, %v1394
      %1427 = vst.msk [vmem:[#allocation2 + $0x10] sm:$0xff] %vm361, %v1395
      %1428 = vst.msk [vmem:[#allocation2 + $0x18] sm:$0xff] %vm361, %v1396
      %1429 = vst.msk [vmem:[#allocation2 + $0x20] sm:$0xff] %vm361, %v1397
      %1430 = vst.msk [vmem:[#allocation2 + $0x28] sm:$0xff] %vm361, %v1398
      %1431 = vst.msk [vmem:[#allocation2 + $0x30] sm:$0xff] %vm361, %v1399
      %1432 = vst.msk [vmem:[#allocation2 + $0x38] sm:$0xff] %vm361, %v1400
      %1433 = vst.msk [vmem:[#allocation2 + $0x40] sm:$0xff] %vm361, %v1401
      %1434 = vst.msk [vmem:[#allocation2 + $0x48] sm:$0xff] %vm361, %v1402
      %1435 = vst.msk [vmem:[#allocation2 + $0x50] sm:$0xff] %vm361, %v1403
      %1436 = vst.msk [vmem:[#allocation2 + $0x58] sm:$0xff] %vm361, %v1404
      %1437 = vst.msk [vmem:[#allocation2 + $0x60] sm:$0xff] %vm361, %v1405
      %1438 = vst.msk [vmem:[#allocation2 + $0x68] sm:$0xff] %vm361, %v1406
      %1439 = vst.msk [vmem:[#allocation2 + $0x70] sm:$0xff] %vm361, %v1407
      %1440 = vst.msk [vmem:[#allocation2 + $0x78] sm:$0xff] %vm361, %v1408
      %1441 = vst.msk [vmem:[#allocation2 + $0x80] sm:$0xff] %vm361, %v1409
      %1442 = vst.msk [vmem:[#allocation2 + $0x88] sm:$0xff] %vm361, %v1410
      %1443 = vst.msk [vmem:[#allocation2 + $0x90] sm:$0xff] %vm361, %v1411
      %1444 = vst.msk [vmem:[#allocation2 + $0x98] sm:$0xff] %vm361, %v1412
      %1445 = vst.msk [vmem:[#allocation2 + $0xa0] sm:$0xff] %vm361, %v1413
      %1446 = vst.msk [vmem:[#allocation2 + $0xa8] sm:$0xff] %vm361, %v1414
      %1447 = vst.msk [vmem:[#allocation2 + $0xb0] sm:$0xff] %vm361, %v1415
      %1448 = vst.msk [vmem:[#allocation2 + $0xb8] sm:$0xff] %vm361, %v1416
      %1449 = vst.msk [vmem:[#allocation2 + $0xc0] sm:$0xff] %vm361, %v1417
      %1450 = vst.msk [vmem:[#allocation2 + $0xc8] sm:$0xff] %vm361, %v1418
      %1451 = vst.msk [vmem:[#allocation2 + $0xd0] sm:$0xff] %vm361, %v1419
      %1452 = vst.msk [vmem:[#allocation2 + $0xd8] sm:$0xff] %vm361, %v1420
      %1453 = vst.msk [vmem:[#allocation2 + $0xe0] sm:$0xff] %vm361, %v1421
      %1454 = vst.msk [vmem:[#allocation2 + $0xe8] sm:$0xff] %vm361, %v1422
      %1455 = vst.msk [vmem:[#allocation2 + $0xf0] sm:$0xff] %vm361, %v1423
      %1456 = vst.msk [vmem:[#allocation2 + $0xf8] sm:$0xff] %vm361, %v1424
      %s1457 = sadd.s32 %s243, 32
      %s1458 = sshra.s32 %s1457, 3
      %s1459 = sand.u32 %s1457, 7
      %s1460 = smul.addr %s1458, 4
      %s1461 = scalar_lea.vmem %s220, %s1460
      %v1462 = vld [vmem:[%s1461] sm:$0xf]
      %v1463 = vld [vmem:[%s1461 + $0x4] sm:$0xf]
      %v1464 = vld [vmem:[%s1461 + $0x8] sm:$0xf]
      %v1465 = vld [vmem:[%s1461 + $0xc] sm:$0xf]
      %v1466 = vld [vmem:[%s1461 + $0x10] sm:$0xf]
      %v1467 = vld [vmem:[%s1461 + $0x14] sm:$0xf]
      %v1468 = vld [vmem:[%s1461 + $0x18] sm:$0xf]
      %v1469 = vld [vmem:[%s1461 + $0x1c] sm:$0xf]
      %v1470 = vld [vmem:[%s1461 + $0x20] sm:$0xf]
      %v1471 = vld [vmem:[%s1461 + $0x24] sm:$0xf]
      %v1472 = vld [vmem:[%s1461 + $0x28] sm:$0xf]
      %v1473 = vld [vmem:[%s1461 + $0x2c] sm:$0xf]
      %v1474 = vld [vmem:[%s1461 + $0x30] sm:$0xf]
      %v1475 = vld [vmem:[%s1461 + $0x34] sm:$0xf]
      %v1476 = vld [vmem:[%s1461 + $0x38] sm:$0xf]
      %v1477 = vld [vmem:[%s1461 + $0x3c] sm:$0xf]
      %v1478 = vld [vmem:[%s1461 + $0x40] sm:$0xf]
      %v1479 = vld [vmem:[%s1461 + $0x44] sm:$0xf]
      %v1480 = vld [vmem:[%s1461 + $0x48] sm:$0xf]
      %v1481 = vld [vmem:[%s1461 + $0x4c] sm:$0xf]
      %v1482 = vld [vmem:[%s1461 + $0x50] sm:$0xf]
      %v1483 = vld [vmem:[%s1461 + $0x54] sm:$0xf]
      %v1484 = vld [vmem:[%s1461 + $0x58] sm:$0xf]
      %v1485 = vld [vmem:[%s1461 + $0x5c] sm:$0xf]
      %v1486 = vld [vmem:[%s1461 + $0x60] sm:$0xf]
      %v1487 = vld [vmem:[%s1461 + $0x64] sm:$0xf]
      %v1488 = vld [vmem:[%s1461 + $0x68] sm:$0xf]
      %v1489 = vld [vmem:[%s1461 + $0x6c] sm:$0xf]
      %v1490 = vld [vmem:[%s1461 + $0x70] sm:$0xf]
      %v1491 = vld [vmem:[%s1461 + $0x74] sm:$0xf]
      %v1492 = vld [vmem:[%s1461 + $0x78] sm:$0xf]
      %v1493 = vld [vmem:[%s1461 + $0x7c] sm:$0xf]
      %s1494 = scalar_lea.vmem %s224, 6
      %v1495 = vld [vmem:[%s1494] sm:$0x3]
      %v1528 = vunpack.c.l.b16 %v1462
      %v1529 = vunpack.c.l.b16 %v1463
      %v1530 = vunpack.c.l.b16 %v1464
      %v1531 = vunpack.c.l.b16 %v1465
      %v1532 = vunpack.c.l.b16 %v1466
      %v1533 = vunpack.c.l.b16 %v1467
      %v1534 = vunpack.c.l.b16 %v1468
      %v1535 = vunpack.c.l.b16 %v1469
      %v1536 = vunpack.c.l.b16 %v1470
      %v1537 = vunpack.c.l.b16 %v1471
      %v1538 = vunpack.c.l.b16 %v1472
      %v1539 = vunpack.c.l.b16 %v1473
      %v1540 = vunpack.c.l.b16 %v1474
      %v1541 = vunpack.c.l.b16 %v1475
      %v1542 = vunpack.c.l.b16 %v1476
      %v1543 = vunpack.c.l.b16 %v1477
      %v1544 = vunpack.c.l.b16 %v1478
      %v1545 = vunpack.c.l.b16 %v1479
      %v1546 = vunpack.c.l.b16 %v1480
      %v1547 = vunpack.c.l.b16 %v1481
      %v1548 = vunpack.c.l.b16 %v1482
      %v1549 = vunpack.c.l.b16 %v1483
      %v1550 = vunpack.c.l.b16 %v1484
      %v1551 = vunpack.c.l.b16 %v1485
      %v1552 = vunpack.c.l.b16 %v1486
      %v1553 = vunpack.c.l.b16 %v1487
      %v1554 = vunpack.c.l.b16 %v1488
      %v1555 = vunpack.c.l.b16 %v1489
      %v1556 = vunpack.c.l.b16 %v1490
      %v1557 = vunpack.c.l.b16 %v1491
      %v1558 = vunpack.c.l.b16 %v1492
      %v1559 = vunpack.c.l.b16 %v1493
      %v1560 = vpack.c.b16 %v1529, %v1528
      %v1561 = vpack.c.b16 %v1531, %v1530
      %v1562 = vpack.c.b16 %v1533, %v1532
      %v1563 = vpack.c.b16 %v1535, %v1534
      %v1564 = vpack.c.b16 %v1537, %v1536
      %v1565 = vpack.c.b16 %v1539, %v1538
      %v1566 = vpack.c.b16 %v1541, %v1540
      %v1567 = vpack.c.b16 %v1543, %v1542
      %v1568 = vpack.c.b16 %v1545, %v1544
      %v1569 = vpack.c.b16 %v1547, %v1546
      %v1570 = vpack.c.b16 %v1549, %v1548
      %v1571 = vpack.c.b16 %v1551, %v1550
      %v1572 = vpack.c.b16 %v1553, %v1552
      %v1573 = vpack.c.b16 %v1555, %v1554
      %v1574 = vpack.c.b16 %v1557, %v1556
      %v1575 = vpack.c.b16 %v1559, %v1558
      %v1577 = vsel %vm361, %v1560, 0
      %v1580 = vsel %vm361, %v1561, 0
      %v1583 = vsel %vm361, %v1562, 0
      %v1586 = vsel %vm361, %v1563, 0
      %v1589 = vsel %vm361, %v1564, 0
      %v1592 = vsel %vm361, %v1565, 0
      %v1595 = vsel %vm361, %v1566, 0
      %v1598 = vsel %vm361, %v1567, 0
      %v1601 = vsel %vm361, %v1568, 0
      %v1604 = vsel %vm361, %v1569, 0
      %v1607 = vsel %vm361, %v1570, 0
      %v1610 = vsel %vm361, %v1571, 0
      %v1613 = vsel %vm361, %v1572, 0
      %v1616 = vsel %vm361, %v1573, 0
      %v1619 = vsel %vm361, %v1574, 0
      %v1622 = vsel %vm361, %v1575, 0
      %v1625 = vsel %vm410, %v1495, 0
      %1627 = vmatprep.subr.bf16.mxu0 0
      %1628 = vmatpush1.bf16.msra.mxu0 %v1625
      %1629 = vmatprep.subr.bf16.mxu0 0
      %1630 = vmatpush1.bf16.msra.mxu0 0
      %1631 = vmatprep.subr.bf16.mxu0 0
      %1632 = vmatpush1.bf16.msra.mxu0 0
      %1633 = vmatprep.subr.bf16.mxu0 0
      %1634 = vmatpush1.bf16.msra.mxu0 0
      %1635 = vmatprep.subr.bf16.mxu0 0
      %1636 = vmatpush1.bf16.msra.mxu0 0
      %1637 = vmatprep.subr.bf16.mxu0 0
      %1638 = vmatpush1.bf16.msra.mxu0 0
      %1639 = vmatprep.subr.bf16.mxu0 0
      %1640 = vmatpush1.bf16.msra.mxu0 0
      %1641 = vmatprep.subr.bf16.mxu0 0
      %1642 = vmatpush1.bf16.msra.mxu0 0
      %1643 = vmatprep.subr.bf16.mxu0 0
      %1644 = vmatpush1.bf16.msra.mxu0 0
      %1645 = vmatprep.subr.bf16.mxu0 0
      %1646 = vmatpush1.bf16.msra.mxu0 0
      %1647 = vmatprep.subr.bf16.mxu0 0
      %1648 = vmatpush1.bf16.msra.mxu0 0
      %1649 = vmatprep.subr.bf16.mxu0 0
      %1650 = vmatpush1.bf16.msra.mxu0 0
      %1651 = vmatprep.subr.bf16.mxu0 0
      %1652 = vmatpush1.bf16.msra.mxu0 0
      %1653 = vmatprep.subr.bf16.mxu0 0
      %1654 = vmatpush1.bf16.msra.mxu0 0
      %1655 = vmatprep.subr.bf16.mxu0 0
      %1656 = vmatpush1.bf16.msra.mxu0 0
      %1657 = vmatprep.subr.bf16.mxu0 0
      %1658 = vmatpush1.bf16.msra.mxu0 0
      %1659 = vmatprep.mubr.bf16.mxu0 0
      %1660 = vmatmul.mubr.bf16.gmra.mrb[0].mxu0 %v1577
      %v1661 = vpop.f32.mrb[0].mxu0
      %v1662 = vadd.f32 0.0, %v1661
      %v1663 = vpop.f32.mrb[0].mxu0
      %v1664 = vpop.f32.mrb[0].mxu0
      %v1665 = vadd.f32 0.0, %v1664
      %v1666 = vpop.f32.mrb[0].mxu0
      %1667 = vmatprep.mubr.bf16.mxu0 0
      %1668 = vmatmul.mubr.bf16.gmra.mrb[0].mxu0 %v1580
      %v1669 = vpop.f32.mrb[0].mxu0
      %v1670 = vadd.f32 0.0, %v1669
      %v1671 = vpop.f32.mrb[0].mxu0
      %v1672 = vpop.f32.mrb[0].mxu0
      %v1673 = vadd.f32 0.0, %v1672
      %v1674 = vpop.f32.mrb[0].mxu0
      %1675 = vmatprep.mubr.bf16.mxu0 0
      %1676 = vmatmul.mubr.bf16.gmra.mrb[0].mxu0 %v1583
      %v1677 = vpop.f32.mrb[0].mxu0
      %v1678 = vadd.f32 0.0, %v1677
      %v1679 = vpop.f32.mrb[0].mxu0
      %v1680 = vpop.f32.mrb[0].mxu0
      %v1681 = vadd.f32 0.0, %v1680
      %v1682 = vpop.f32.mrb[0].mxu0
      %1683 = vmatprep.mubr.bf16.mxu0 0
      %1684 = vmatmul.mubr.bf16.gmra.mrb[0].mxu0 %v1586
      %v1685 = vpop.f32.mrb[0].mxu0
      %v1686 = vadd.f32 0.0, %v1685
      %v1687 = vpop.f32.mrb[0].mxu0
      %v1688 = vpop.f32.mrb[0].mxu0
      %v1689 = vadd.f32 0.0, %v1688
      %v1690 = vpop.f32.mrb[0].mxu0
      %1691 = vmatprep.mubr.bf16.mxu0 0
      %1692 = vmatmul.mubr.bf16.gmra.mrb[0].mxu0 %v1589
      %v1693 = vpop.f32.mrb[0].mxu0
      %v1694 = vadd.f32 0.0, %v1693
      %v1695 = vpop.f32.mrb[0].mxu0
      %v1696 = vpop.f32.mrb[0].mxu0
      %v1697 = vadd.f32 0.0, %v1696
      %v1698 = vpop.f32.mrb[0].mxu0
      %1699 = vmatprep.mubr.bf16.mxu0 0
      %1700 = vmatmul.mubr.bf16.gmra.mrb[0].mxu0 %v1592
      %v1701 = vpop.f32.mrb[0].mxu0
      %v1702 = vadd.f32 0.0, %v1701
      %v1703 = vpop.f32.mrb[0].mxu0
      %v1704 = vpop.f32.mrb[0].mxu0
      %v1705 = vadd.f32 0.0, %v1704
      %v1706 = vpop.f32.mrb[0].mxu0
      %1707 = vmatprep.mubr.bf16.mxu0 0
      %1708 = vmatmul.mubr.bf16.gmra.mrb[0].mxu0 %v1595
      %v1709 = vpop.f32.mrb[0].mxu0
      %v1710 = vadd.f32 0.0, %v1709
      %v1711 = vpop.f32.mrb[0].mxu0
      %v1712 = vpop.f32.mrb[0].mxu0
      %v1713 = vadd.f32 0.0, %v1712
      %v1714 = vpop.f32.mrb[0].mxu0
      %1715 = vmatprep.mubr.bf16.mxu0 0
      %1716 = vmatmul.mubr.bf16.gmra.mrb[0].mxu0 %v1598
      %v1717 = vpop.f32.mrb[0].mxu0
      %v1718 = vadd.f32 0.0, %v1717
      %v1719 = vpop.f32.mrb[0].mxu0
      %v1720 = vpop.f32.mrb[0].mxu0
      %v1721 = vadd.f32 0.0, %v1720
      %v1722 = vpop.f32.mrb[0].mxu0
      %1723 = vmatprep.mubr.bf16.mxu0 0
      %1724 = vmatmul.mubr.bf16.gmra.mrb[0].mxu0 %v1601
      %v1725 = vpop.f32.mrb[0].mxu0
      %v1726 = vadd.f32 0.0, %v1725
      %v1727 = vpop.f32.mrb[0].mxu0
      %v1728 = vpop.f32.mrb[0].mxu0
      %v1729 = vadd.f32 0.0, %v1728
      %v1730 = vpop.f32.mrb[0].mxu0
      %1731 = vmatprep.mubr.bf16.mxu0 0
      %1732 = vmatmul.mubr.bf16.gmra.mrb[0].mxu0 %v1604
      %v1733 = vpop.f32.mrb[0].mxu0
      %v1734 = vadd.f32 0.0, %v1733
      %v1735 = vpop.f32.mrb[0].mxu0
      %v1736 = vpop.f32.mrb[0].mxu0
      %v1737 = vadd.f32 0.0, %v1736
      %v1738 = vpop.f32.mrb[0].mxu0
      %1739 = vmatprep.mubr.bf16.mxu0 0
      %1740 = vmatmul.mubr.bf16.gmra.mrb[0].mxu0 %v1607
      %v1741 = vpop.f32.mrb[0].mxu0
      %v1742 = vadd.f32 0.0, %v1741
      %v1743 = vpop.f32.mrb[0].mxu0
      %v1744 = vpop.f32.mrb[0].mxu0
      %v1745 = vadd.f32 0.0, %v1744
      %v1746 = vpop.f32.mrb[0].mxu0
      %1747 = vmatprep.mubr.bf16.mxu0 0
      %1748 = vmatmul.mubr.bf16.gmra.mrb[0].mxu0 %v1610
      %v1749 = vpop.f32.mrb[0].mxu0
      %v1750 = vadd.f32 0.0, %v1749
      %v1751 = vpop.f32.mrb[0].mxu0
      %v1752 = vpop.f32.mrb[0].mxu0
      %v1753 = vadd.f32 0.0, %v1752
      %v1754 = vpop.f32.mrb[0].mxu0
      %1755 = vmatprep.mubr.bf16.mxu0 0
      %1756 = vmatmul.mubr.bf16.gmra.mrb[0].mxu0 %v1613
      %v1757 = vpop.f32.mrb[0].mxu0
      %v1758 = vadd.f32 0.0, %v1757
      %v1759 = vpop.f32.mrb[0].mxu0
      %v1760 = vpop.f32.mrb[0].mxu0
      %v1761 = vadd.f32 0.0, %v1760
      %v1762 = vpop.f32.mrb[0].mxu0
      %1763 = vmatprep.mubr.bf16.mxu0 0
      %1764 = vmatmul.mubr.bf16.gmra.mrb[0].mxu0 %v1616
      %v1765 = vpop.f32.mrb[0].mxu0
      %v1766 = vadd.f32 0.0, %v1765
      %v1767 = vpop.f32.mrb[0].mxu0
      %v1768 = vpop.f32.mrb[0].mxu0
      %v1769 = vadd.f32 0.0, %v1768
      %v1770 = vpop.f32.mrb[0].mxu0
      %1771 = vmatprep.mubr.bf16.mxu0 0
      %1772 = vmatmul.mubr.bf16.gmra.mrb[0].mxu0 %v1619
      %v1773 = vpop.f32.mrb[0].mxu0
      %v1774 = vadd.f32 0.0, %v1773
      %v1775 = vpop.f32.mrb[0].mxu0
      %v1776 = vpop.f32.mrb[0].mxu0
      %v1777 = vadd.f32 0.0, %v1776
      %v1778 = vpop.f32.mrb[0].mxu0
      %1779 = vmatprep.mubr.bf16.mxu0 0
      %1780 = vmatmul.mubr.bf16.gmra.mrb[0].mxu0 %v1622
      %v1781 = vpop.f32.mrb[0].mxu0
      %v1782 = vadd.f32 0.0, %v1781
      %v1783 = vpop.f32.mrb[0].mxu0
      %v1784 = vpop.f32.mrb[0].mxu0
      %v1785 = vadd.f32 0.0, %v1784
      %v1786 = vpop.f32.mrb[0].mxu0
      %1787 = vdwg.mxu0
      %v1788 = vld [vmem:[#allocation2] sm:$0xff]
      %v1789 = vld [vmem:[#allocation2 + $0x8] sm:$0xff]
      %v1790 = vld [vmem:[#allocation2 + $0x10] sm:$0xff]
      %v1791 = vld [vmem:[#allocation2 + $0x18] sm:$0xff]
      %v1792 = vld [vmem:[#allocation2 + $0x20] sm:$0xff]
      %v1793 = vld [vmem:[#allocation2 + $0x28] sm:$0xff]
      %v1794 = vld [vmem:[#allocation2 + $0x30] sm:$0xff]
      %v1795 = vld [vmem:[#allocation2 + $0x38] sm:$0xff]
      %v1796 = vld [vmem:[#allocation2 + $0x40] sm:$0xff]
      %v1797 = vld [vmem:[#allocation2 + $0x48] sm:$0xff]
      %v1798 = vld [vmem:[#allocation2 + $0x50] sm:$0xff]
      %v1799 = vld [vmem:[#allocation2 + $0x58] sm:$0xff]
      %v1800 = vld [vmem:[#allocation2 + $0x60] sm:$0xff]
      %v1801 = vld [vmem:[#allocation2 + $0x68] sm:$0xff]
      %v1802 = vld [vmem:[#allocation2 + $0x70] sm:$0xff]
      %v1803 = vld [vmem:[#allocation2 + $0x78] sm:$0xff]
      %v1804 = vld [vmem:[#allocation2 + $0x80] sm:$0xff]
      %v1805 = vld [vmem:[#allocation2 + $0x88] sm:$0xff]
      %v1806 = vld [vmem:[#allocation2 + $0x90] sm:$0xff]
      %v1807 = vld [vmem:[#allocation2 + $0x98] sm:$0xff]
      %v1808 = vld [vmem:[#allocation2 + $0xa0] sm:$0xff]
      %v1809 = vld [vmem:[#allocation2 + $0xa8] sm:$0xff]
      %v1810 = vld [vmem:[#allocation2 + $0xb0] sm:$0xff]
      %v1811 = vld [vmem:[#allocation2 + $0xb8] sm:$0xff]
      %v1812 = vld [vmem:[#allocation2 + $0xc0] sm:$0xff]
      %v1813 = vld [vmem:[#allocation2 + $0xc8] sm:$0xff]
      %v1814 = vld [vmem:[#allocation2 + $0xd0] sm:$0xff]
      %v1815 = vld [vmem:[#allocation2 + $0xd8] sm:$0xff]
      %v1816 = vld [vmem:[#allocation2 + $0xe0] sm:$0xff]
      %v1817 = vld [vmem:[#allocation2 + $0xe8] sm:$0xff]
      %v1818 = vld [vmem:[#allocation2 + $0xf0] sm:$0xff]
      %v1819 = vld [vmem:[#allocation2 + $0xf8] sm:$0xff]
      %v1820 = vadd.f32 %v1788, %v1662
      %v1821 = vadd.f32 %v1789, %v1665
      %v1822 = vadd.f32 %v1790, %v1670
      %v1823 = vadd.f32 %v1791, %v1673
      %v1824 = vadd.f32 %v1792, %v1678
      %v1825 = vadd.f32 %v1793, %v1681
      %v1826 = vadd.f32 %v1794, %v1686
      %v1827 = vadd.f32 %v1795, %v1689
      %v1828 = vadd.f32 %v1796, %v1694
      %v1829 = vadd.f32 %v1797, %v1697
      %v1830 = vadd.f32 %v1798, %v1702
      %v1831 = vadd.f32 %v1799, %v1705
      %v1832 = vadd.f32 %v1800, %v1710
      %v1833 = vadd.f32 %v1801, %v1713
      %v1834 = vadd.f32 %v1802, %v1718
      %v1835 = vadd.f32 %v1803, %v1721
      %v1836 = vadd.f32 %v1804, %v1726
      %v1837 = vadd.f32 %v1805, %v1729
      %v1838 = vadd.f32 %v1806, %v1734
      %v1839 = vadd.f32 %v1807, %v1737
      %v1840 = vadd.f32 %v1808, %v1742
      %v1841 = vadd.f32 %v1809, %v1745
      %v1842 = vadd.f32 %v1810, %v1750
      %v1843 = vadd.f32 %v1811, %v1753
      %v1844 = vadd.f32 %v1812, %v1758
      %v1845 = vadd.f32 %v1813, %v1761
      %v1846 = vadd.f32 %v1814, %v1766
      %v1847 = vadd.f32 %v1815, %v1769
      %v1848 = vadd.f32 %v1816, %v1774
      %v1849 = vadd.f32 %v1817, %v1777
      %v1850 = vadd.f32 %v1818, %v1782
      %v1851 = vadd.f32 %v1819, %v1785
      %1852 = vst.msk [vmem:[#allocation2] sm:$0xff] %vm361, %v1820
      %1853 = vst.msk [vmem:[#allocation2 + $0x8] sm:$0xff] %vm361, %v1821
      %1854 = vst.msk [vmem:[#allocation2 + $0x10] sm:$0xff] %vm361, %v1822
      %1855 = vst.msk [vmem:[#allocation2 + $0x18] sm:$0xff] %vm361, %v1823
      %1856 = vst.msk [vmem:[#allocation2 + $0x20] sm:$0xff] %vm361, %v1824
      %1857 = vst.msk [vmem:[#allocation2 + $0x28] sm:$0xff] %vm361, %v1825
      %1858 = vst.msk [vmem:[#allocation2 + $0x30] sm:$0xff] %vm361, %v1826
      %1859 = vst.msk [vmem:[#allocation2 + $0x38] sm:$0xff] %vm361, %v1827
      %1860 = vst.msk [vmem:[#allocation2 + $0x40] sm:$0xff] %vm361, %v1828
      %1861 = vst.msk [vmem:[#allocation2 + $0x48] sm:$0xff] %vm361, %v1829
      %1862 = vst.msk [vmem:[#allocation2 + $0x50] sm:$0xff] %vm361, %v1830
      %1863 = vst.msk [vmem:[#allocation2 + $0x58] sm:$0xff] %vm361, %v1831
      %1864 = vst.msk [vmem:[#allocation2 + $0x60] sm:$0xff] %vm361, %v1832
      %1865 = vst.msk [vmem:[#allocation2 + $0x68] sm:$0xff] %vm361, %v1833
      %1866 = vst.msk [vmem:[#allocation2 + $0x70] sm:$0xff] %vm361, %v1834
      %1867 = vst.msk [vmem:[#allocation2 + $0x78] sm:$0xff] %vm361, %v1835
      %1868 = vst.msk [vmem:[#allocation2 + $0x80] sm:$0xff] %vm361, %v1836
      %1869 = vst.msk [vmem:[#allocation2 + $0x88] sm:$0xff] %vm361, %v1837
      %1870 = vst.msk [vmem:[#allocation2 + $0x90] sm:$0xff] %vm361, %v1838
      %1871 = vst.msk [vmem:[#allocation2 + $0x98] sm:$0xff] %vm361, %v1839
      %1872 = vst.msk [vmem:[#allocation2 + $0xa0] sm:$0xff] %vm361, %v1840
      %1873 = vst.msk [vmem:[#allocation2 + $0xa8] sm:$0xff] %vm361, %v1841
      %1874 = vst.msk [vmem:[#allocation2 + $0xb0] sm:$0xff] %vm361, %v1842
      %1875 = vst.msk [vmem:[#allocation2 + $0xb8] sm:$0xff] %vm361, %v1843
      %1876 = vst.msk [vmem:[#allocation2 + $0xc0] sm:$0xff] %vm361, %v1844
      %1877 = vst.msk [vmem:[#allocation2 + $0xc8] sm:$0xff] %vm361, %v1845
      %1878 = vst.msk [vmem:[#allocation2 + $0xd0] sm:$0xff] %vm361, %v1846
      %1879 = vst.msk [vmem:[#allocation2 + $0xd8] sm:$0xff] %vm361, %v1847
      %1880 = vst.msk [vmem:[#allocation2 + $0xe0] sm:$0xff] %vm361, %v1848
      %1881 = vst.msk [vmem:[#allocation2 + $0xe8] sm:$0xff] %vm361, %v1849
      %1882 = vst.msk [vmem:[#allocation2 + $0xf0] sm:$0xff] %vm361, %v1850
      %1883 = vst.msk [vmem:[#allocation2 + $0xf8] sm:$0xff] %vm361, %v1851
      %s1884 = sadd.s32 %s1458, 40
      %s1885 = smul.addr %s1884, 4
      %s1886 = scalar_lea.vmem %s220, %s1885
      %v1887 = vld [vmem:[%s1886] sm:$0xf]
      %v1888 = vld [vmem:[%s1886 + $0x4] sm:$0xf]
      %v1889 = vld [vmem:[%s1886 + $0x8] sm:$0xf]
      %v1890 = vld [vmem:[%s1886 + $0xc] sm:$0xf]
      %v1891 = vld [vmem:[%s1886 + $0x10] sm:$0xf]
      %v1892 = vld [vmem:[%s1886 + $0x14] sm:$0xf]
      %v1893 = vld [vmem:[%s1886 + $0x18] sm:$0xf]
      %v1894 = vld [vmem:[%s1886 + $0x1c] sm:$0xf]
      %v1895 = vld [vmem:[%s1886 + $0x20] sm:$0xf]
      %v1896 = vld [vmem:[%s1886 + $0x24] sm:$0xf]
      %v1897 = vld [vmem:[%s1886 + $0x28] sm:$0xf]
      %v1898 = vld [vmem:[%s1886 + $0x2c] sm:$0xf]
      %v1899 = vld [vmem:[%s1886 + $0x30] sm:$0xf]
      %v1900 = vld [vmem:[%s1886 + $0x34] sm:$0xf]
      %v1901 = vld [vmem:[%s1886 + $0x38] sm:$0xf]
      %v1902 = vld [vmem:[%s1886 + $0x3c] sm:$0xf]
      %v1903 = vld [vmem:[%s1886 + $0x40] sm:$0xf]
      %v1904 = vld [vmem:[%s1886 + $0x44] sm:$0xf]
      %v1905 = vld [vmem:[%s1886 + $0x48] sm:$0xf]
      %v1906 = vld [vmem:[%s1886 + $0x4c] sm:$0xf]
      %v1907 = vld [vmem:[%s1886 + $0x50] sm:$0xf]
      %v1908 = vld [vmem:[%s1886 + $0x54] sm:$0xf]
      %v1909 = vld [vmem:[%s1886 + $0x58] sm:$0xf]
      %v1910 = vld [vmem:[%s1886 + $0x5c] sm:$0xf]
      %v1911 = vld [vmem:[%s1886 + $0x60] sm:$0xf]
      %v1912 = vld [vmem:[%s1886 + $0x64] sm:$0xf]
      %v1913 = vld [vmem:[%s1886 + $0x68] sm:$0xf]
      %v1914 = vld [vmem:[%s1886 + $0x6c] sm:$0xf]
      %v1915 = vld [vmem:[%s1886 + $0x70] sm:$0xf]
      %v1916 = vld [vmem:[%s1886 + $0x74] sm:$0xf]
      %v1917 = vld [vmem:[%s1886 + $0x78] sm:$0xf]
      %v1918 = vld [vmem:[%s1886 + $0x7c] sm:$0xf]
      %s1919 = scalar_lea.vmem %s224, 8
      %v1920 = vld [vmem:[%s1919] sm:$0x3]
      %v1953 = vunpack.c.l.b16 %v1887
      %v1954 = vunpack.c.l.b16 %v1888
      %v1955 = vunpack.c.l.b16 %v1889
      %v1956 = vunpack.c.l.b16 %v1890
      %v1957 = vunpack.c.l.b16 %v1891
      %v1958 = vunpack.c.l.b16 %v1892
      %v1959 = vunpack.c.l.b16 %v1893
      %v1960 = vunpack.c.l.b16 %v1894
      %v1961 = vunpack.c.l.b16 %v1895
      %v1962 = vunpack.c.l.b16 %v1896
      %v1963 = vunpack.c.l.b16 %v1897
      %v1964 = vunpack.c.l.b16 %v1898
      %v1965 = vunpack.c.l.b16 %v1899
      %v1966 = vunpack.c.l.b16 %v1900
      %v1967 = vunpack.c.l.b16 %v1901
      %v1968 = vunpack.c.l.b16 %v1902
      %v1969 = vunpack.c.l.b16 %v1903
      %v1970 = vunpack.c.l.b16 %v1904
      %v1971 = vunpack.c.l.b16 %v1905
      %v1972 = vunpack.c.l.b16 %v1906
      %v1973 = vunpack.c.l.b16 %v1907
      %v1974 = vunpack.c.l.b16 %v1908
      %v1975 = vunpack.c.l.b16 %v1909
      %v1976 = vunpack.c.l.b16 %v1910
      %v1977 = vunpack.c.l.b16 %v1911
      %v1978 = vunpack.c.l.b16 %v1912
      %v1979 = vunpack.c.l.b16 %v1913
      %v1980 = vunpack.c.l.b16 %v1914
      %v1981 = vunpack.c.l.b16 %v1915
      %v1982 = vunpack.c.l.b16 %v1916
      %v1983 = vunpack.c.l.b16 %v1917
      %v1984 = vunpack.c.l.b16 %v1918
      %v1985 = vpack.c.b16 %v1954, %v1953
      %v1986 = vpack.c.b16 %v1956, %v1955
      %v1987 = vpack.c.b16 %v1958, %v1957
      %v1988 = vpack.c.b16 %v1960, %v1959
      %v1989 = vpack.c.b16 %v1962, %v1961
      %v1990 = vpack.c.b16 %v1964, %v1963
      %v1991 = vpack.c.b16 %v1966, %v1965
      %v1992 = vpack.c.b16 %v1968, %v1967
      %v1993 = vpack.c.b16 %v1970, %v1969
      %v1994 = vpack.c.b16 %v1972, %v1971
      %v1995 = vpack.c.b16 %v1974, %v1973
      %v1996 = vpack.c.b16 %v1976, %v1975
      %v1997 = vpack.c.b16 %v1978, %v1977
      %v1998 = vpack.c.b16 %v1980, %v1979
      %v1999 = vpack.c.b16 %v1982, %v1981
      %v2000 = vpack.c.b16 %v1984, %v1983
      %v2002 = vsel %vm361, %v1985, 0
      %v2005 = vsel %vm361, %v1986, 0
      %v2008 = vsel %vm361, %v1987, 0
      %v2011 = vsel %vm361, %v1988, 0
      %v2014 = vsel %vm361, %v1989, 0
      %v2017 = vsel %vm361, %v1990, 0
      %v2020 = vsel %vm361, %v1991, 0
      %v2023 = vsel %vm361, %v1992, 0
      %v2026 = vsel %vm361, %v1993, 0
      %v2029 = vsel %vm361, %v1994, 0
      %v2032 = vsel %vm361, %v1995, 0
      %v2035 = vsel %vm361, %v1996, 0
      %v2038 = vsel %vm361, %v1997, 0
      %v2041 = vsel %vm361, %v1998, 0
      %v2044 = vsel %vm361, %v1999, 0
      %v2047 = vsel %vm361, %v2000, 0
      %v2050 = vsel %vm410, %v1920, 0
      %2052 = vmatprep.subr.bf16.mxu0 0
      %2053 = vmatpush1.bf16.msra.mxu0 %v2050
      %2054 = vmatprep.subr.bf16.mxu0 0
      %2055 = vmatpush1.bf16.msra.mxu0 0
      %2056 = vmatprep.subr.bf16.mxu0 0
      %2057 = vmatpush1.bf16.msra.mxu0 0
      %2058 = vmatprep.subr.bf16.mxu0 0
      %2059 = vmatpush1.bf16.msra.mxu0 0
      %2060 = vmatprep.subr.bf16.mxu0 0
      %2061 = vmatpush1.bf16.msra.mxu0 0
      %2062 = vmatprep.subr.bf16.mxu0 0
      %2063 = vmatpush1.bf16.msra.mxu0 0
      %2064 = vmatprep.subr.bf16.mxu0 0
      %2065 = vmatpush1.bf16.msra.mxu0 0
      %2066 = vmatprep.subr.bf16.mxu0 0
      %2067 = vmatpush1.bf16.msra.mxu0 0
      %2068 = vmatprep.subr.bf16.mxu0 0
      %2069 = vmatpush1.bf16.msra.mxu0 0
      %2070 = vmatprep.subr.bf16.mxu0 0
      %2071 = vmatpush1.bf16.msra.mxu0 0
      %2072 = vmatprep.subr.bf16.mxu0 0
      %2073 = vmatpush1.bf16.msra.mxu0 0
      %2074 = vmatprep.subr.bf16.mxu0 0
      %2075 = vmatpush1.bf16.msra.mxu0 0
      %2076 = vmatprep.subr.bf16.mxu0 0
      %2077 = vmatpush1.bf16.msra.mxu0 0
      %2078 = vmatprep.subr.bf16.mxu0 0
      %2079 = vmatpush1.bf16.msra.mxu0 0
      %2080 = vmatprep.subr.bf16.mxu0 0
      %2081 = vmatpush1.bf16.msra.mxu0 0
      %2082 = vmatprep.subr.bf16.mxu0 0
      %2083 = vmatpush1.bf16.msra.mxu0 0
      %2084 = vmatprep.mubr.bf16.mxu0 0
      %2085 = vmatmul.mubr.bf16.gmra.mrb[0].mxu0 %v2002
      %v2086 = vpop.f32.mrb[0].mxu0
      %v2087 = vadd.f32 0.0, %v2086
      %v2088 = vpop.f32.mrb[0].mxu0
      %v2089 = vpop.f32.mrb[0].mxu0
      %v2090 = vadd.f32 0.0, %v2089
      %v2091 = vpop.f32.mrb[0].mxu0
      %2092 = vmatprep.mubr.bf16.mxu0 0
      %2093 = vmatmul.mubr.bf16.gmra.mrb[0].mxu0 %v2005
      %v2094 = vpop.f32.mrb[0].mxu0
      %v2095 = vadd.f32 0.0, %v2094
      %v2096 = vpop.f32.mrb[0].mxu0
      %v2097 = vpop.f32.mrb[0].mxu0
      %v2098 = vadd.f32 0.0, %v2097
      %v2099 = vpop.f32.mrb[0].mxu0
      %2100 = vmatprep.mubr.bf16.mxu0 0
      %2101 = vmatmul.mubr.bf16.gmra.mrb[0].mxu0 %v2008
      %v2102 = vpop.f32.mrb[0].mxu0
      %v2103 = vadd.f32 0.0, %v2102
      %v2104 = vpop.f32.mrb[0].mxu0
      %v2105 = vpop.f32.mrb[0].mxu0
      %v2106 = vadd.f32 0.0, %v2105
      %v2107 = vpop.f32.mrb[0].mxu0
      %2108 = vmatprep.mubr.bf16.mxu0 0
      %2109 = vmatmul.mubr.bf16.gmra.mrb[0].mxu0 %v2011
      %v2110 = vpop.f32.mrb[0].mxu0
      %v2111 = vadd.f32 0.0, %v2110
      %v2112 = vpop.f32.mrb[0].mxu0
      %v2113 = vpop.f32.mrb[0].mxu0
      %v2114 = vadd.f32 0.0, %v2113
      %v2115 = vpop.f32.mrb[0].mxu0
      %2116 = vmatprep.mubr.bf16.mxu0 0
      %2117 = vmatmul.mubr.bf16.gmra.mrb[0].mxu0 %v2014
      %v2118 = vpop.f32.mrb[0].mxu0
      %v2119 = vadd.f32 0.0, %v2118
      %v2120 = vpop.f32.mrb[0].mxu0
      %v2121 = vpop.f32.mrb[0].mxu0
      %v2122 = vadd.f32 0.0, %v2121
      %v2123 = vpop.f32.mrb[0].mxu0
      %2124 = vmatprep.mubr.bf16.mxu0 0
      %2125 = vmatmul.mubr.bf16.gmra.mrb[0].mxu0 %v2017
      %v2126 = vpop.f32.mrb[0].mxu0
      %v2127 = vadd.f32 0.0, %v2126
      %v2128 = vpop.f32.mrb[0].mxu0
      %v2129 = vpop.f32.mrb[0].mxu0
      %v2130 = vadd.f32 0.0, %v2129
      %v2131 = vpop.f32.mrb[0].mxu0
      %2132 = vmatprep.mubr.bf16.mxu0 0
      %2133 = vmatmul.mubr.bf16.gmra.mrb[0].mxu0 %v2020
      %v2134 = vpop.f32.mrb[0].mxu0
      %v2135 = vadd.f32 0.0, %v2134
      %v2136 = vpop.f32.mrb[0].mxu0
      %v2137 = vpop.f32.mrb[0].mxu0
      %v2138 = vadd.f32 0.0, %v2137
      %v2139 = vpop.f32.mrb[0].mxu0
      %2140 = vmatprep.mubr.bf16.mxu0 0
      %2141 = vmatmul.mubr.bf16.gmra.mrb[0].mxu0 %v2023
      %v2142 = vpop.f32.mrb[0].mxu0
      %v2143 = vadd.f32 0.0, %v2142
      %v2144 = vpop.f32.mrb[0].mxu0
      %v2145 = vpop.f32.mrb[0].mxu0
      %v2146 = vadd.f32 0.0, %v2145
      %v2147 = vpop.f32.mrb[0].mxu0
      %2148 = vmatprep.mubr.bf16.mxu0 0
      %2149 = vmatmul.mubr.bf16.gmra.mrb[0].mxu0 %v2026
      %v2150 = vpop.f32.mrb[0].mxu0
      %v2151 = vadd.f32 0.0, %v2150
      %v2152 = vpop.f32.mrb[0].mxu0
      %v2153 = vpop.f32.mrb[0].mxu0
      %v2154 = vadd.f32 0.0, %v2153
      %v2155 = vpop.f32.mrb[0].mxu0
      %2156 = vmatprep.mubr.bf16.mxu0 0
      %2157 = vmatmul.mubr.bf16.gmra.mrb[0].mxu0 %v2029
      %v2158 = vpop.f32.mrb[0].mxu0
      %v2159 = vadd.f32 0.0, %v2158
      %v2160 = vpop.f32.mrb[0].mxu0
      %v2161 = vpop.f32.mrb[0].mxu0
      %v2162 = vadd.f32 0.0, %v2161
      %v2163 = vpop.f32.mrb[0].mxu0
      %2164 = vmatprep.mubr.bf16.mxu0 0
      %2165 = vmatmul.mubr.bf16.gmra.mrb[0].mxu0 %v2032
      %v2166 = vpop.f32.mrb[0].mxu0
      %v2167 = vadd.f32 0.0, %v2166
      %v2168 = vpop.f32.mrb[0].mxu0
      %v2169 = vpop.f32.mrb[0].mxu0
      %v2170 = vadd.f32 0.0, %v2169
      %v2171 = vpop.f32.mrb[0].mxu0
      %2172 = vmatprep.mubr.bf16.mxu0 0
      %2173 = vmatmul.mubr.bf16.gmra.mrb[0].mxu0 %v2035
      %v2174 = vpop.f32.mrb[0].mxu0
      %v2175 = vadd.f32 0.0, %v2174
      %v2176 = vpop.f32.mrb[0].mxu0
      %v2177 = vpop.f32.mrb[0].mxu0
      %v2178 = vadd.f32 0.0, %v2177
      %v2179 = vpop.f32.mrb[0].mxu0
      %2180 = vmatprep.mubr.bf16.mxu0 0
      %2181 = vmatmul.mubr.bf16.gmra.mrb[0].mxu0 %v2038
      %v2182 = vpop.f32.mrb[0].mxu0
      %v2183 = vadd.f32 0.0, %v2182
      %v2184 = vpop.f32.mrb[0].mxu0
      %v2185 = vpop.f32.mrb[0].mxu0
      %v2186 = vadd.f32 0.0, %v2185
      %v2187 = vpop.f32.mrb[0].mxu0
      %2188 = vmatprep.mubr.bf16.mxu0 0
      %2189 = vmatmul.mubr.bf16.gmra.mrb[0].mxu0 %v2041
      %v2190 = vpop.f32.mrb[0].mxu0
      %v2191 = vadd.f32 0.0, %v2190
      %v2192 = vpop.f32.mrb[0].mxu0
      %v2193 = vpop.f32.mrb[0].mxu0
      %v2194 = vadd.f32 0.0, %v2193
      %v2195 = vpop.f32.mrb[0].mxu0
      %2196 = vmatprep.mubr.bf16.mxu0 0
      %2197 = vmatmul.mubr.bf16.gmra.mrb[0].mxu0 %v2044
      %v2198 = vpop.f32.mrb[0].mxu0
      %v2199 = vadd.f32 0.0, %v2198
      %v2200 = vpop.f32.mrb[0].mxu0
      %v2201 = vpop.f32.mrb[0].mxu0
      %v2202 = vadd.f32 0.0, %v2201
      %v2203 = vpop.f32.mrb[0].mxu0
      %2204 = vmatprep.mubr.bf16.mxu0 0
      %2205 = vmatmul.mubr.bf16.gmra.mrb[0].mxu0 %v2047
      %v2206 = vpop.f32.mrb[0].mxu0
      %v2207 = vadd.f32 0.0, %v2206
      %v2208 = vpop.f32.mrb[0].mxu0
      %v2209 = vpop.f32.mrb[0].mxu0
      %v2210 = vadd.f32 0.0, %v2209
      %v2211 = vpop.f32.mrb[0].mxu0
      %2212 = vdwg.mxu0
      %v2213 = vld [vmem:[#allocation2] sm:$0xff]
      %v2214 = vld [vmem:[#allocation2 + $0x8] sm:$0xff]
      %v2215 = vld [vmem:[#allocation2 + $0x10] sm:$0xff]
      %v2216 = vld [vmem:[#allocation2 + $0x18] sm:$0xff]
      %v2217 = vld [vmem:[#allocation2 + $0x20] sm:$0xff]
      %v2218 = vld [vmem:[#allocation2 + $0x28] sm:$0xff]
      %v2219 = vld [vmem:[#allocation2 + $0x30] sm:$0xff]
      %v2220 = vld [vmem:[#allocation2 + $0x38] sm:$0xff]
      %v2221 = vld [vmem:[#allocation2 + $0x40] sm:$0xff]
      %v2222 = vld [vmem:[#allocation2 + $0x48] sm:$0xff]
      %v2223 = vld [vmem:[#allocation2 + $0x50] sm:$0xff]
      %v2224 = vld [vmem:[#allocation2 + $0x58] sm:$0xff]
      %v2225 = vld [vmem:[#allocation2 + $0x60] sm:$0xff]
      %v2226 = vld [vmem:[#allocation2 + $0x68] sm:$0xff]
      %v2227 = vld [vmem:[#allocation2 + $0x70] sm:$0xff]
      %v2228 = vld [vmem:[#allocation2 + $0x78] sm:$0xff]
      %v2229 = vld [vmem:[#allocation2 + $0x80] sm:$0xff]
      %v2230 = vld [vmem:[#allocation2 + $0x88] sm:$0xff]
      %v2231 = vld [vmem:[#allocation2 + $0x90] sm:$0xff]
      %v2232 = vld [vmem:[#allocation2 + $0x98] sm:$0xff]
      %v2233 = vld [vmem:[#allocation2 + $0xa0] sm:$0xff]
      %v2234 = vld [vmem:[#allocation2 + $0xa8] sm:$0xff]
      %v2235 = vld [vmem:[#allocation2 + $0xb0] sm:$0xff]
      %v2236 = vld [vmem:[#allocation2 + $0xb8] sm:$0xff]
      %v2237 = vld [vmem:[#allocation2 + $0xc0] sm:$0xff]
      %v2238 = vld [vmem:[#allocation2 + $0xc8] sm:$0xff]
      %v2239 = vld [vmem:[#allocation2 + $0xd0] sm:$0xff]
      %v2240 = vld [vmem:[#allocation2 + $0xd8] sm:$0xff]
      %v2241 = vld [vmem:[#allocation2 + $0xe0] sm:$0xff]
      %v2242 = vld [vmem:[#allocation2 + $0xe8] sm:$0xff]
      %v2243 = vld [vmem:[#allocation2 + $0xf0] sm:$0xff]
      %v2244 = vld [vmem:[#allocation2 + $0xf8] sm:$0xff]
      %v2245 = vadd.f32 %v2213, %v2087
      %v2246 = vadd.f32 %v2214, %v2090
      %v2247 = vadd.f32 %v2215, %v2095
      %v2248 = vadd.f32 %v2216, %v2098
      %v2249 = vadd.f32 %v2217, %v2103
      %v2250 = vadd.f32 %v2218, %v2106
      %v2251 = vadd.f32 %v2219, %v2111
      %v2252 = vadd.f32 %v2220, %v2114
      %v2253 = vadd.f32 %v2221, %v2119
      %v2254 = vadd.f32 %v2222, %v2122
      %v2255 = vadd.f32 %v2223, %v2127
      %v2256 = vadd.f32 %v2224, %v2130
      %v2257 = vadd.f32 %v2225, %v2135
      %v2258 = vadd.f32 %v2226, %v2138
      %v2259 = vadd.f32 %v2227, %v2143
      %v2260 = vadd.f32 %v2228, %v2146
      %v2261 = vadd.f32 %v2229, %v2151
      %v2262 = vadd.f32 %v2230, %v2154
      %v2263 = vadd.f32 %v2231, %v2159
      %v2264 = vadd.f32 %v2232, %v2162
      %v2265 = vadd.f32 %v2233, %v2167
      %v2266 = vadd.f32 %v2234, %v2170
      %v2267 = vadd.f32 %v2235, %v2175
      %v2268 = vadd.f32 %v2236, %v2178
      %v2269 = vadd.f32 %v2237, %v2183
      %v2270 = vadd.f32 %v2238, %v2186
      %v2271 = vadd.f32 %v2239, %v2191
      %v2272 = vadd.f32 %v2240, %v2194
      %v2273 = vadd.f32 %v2241, %v2199
      %v2274 = vadd.f32 %v2242, %v2202
      %v2275 = vadd.f32 %v2243, %v2207
      %v2276 = vadd.f32 %v2244, %v2210
      %2277 = vst.msk [vmem:[#allocation2] sm:$0xff] %vm361, %v2245
      %2278 = vst.msk [vmem:[#allocation2 + $0x8] sm:$0xff] %vm361, %v2246
      %2279 = vst.msk [vmem:[#allocation2 + $0x10] sm:$0xff] %vm361, %v2247
      %2280 = vst.msk [vmem:[#allocation2 + $0x18] sm:$0xff] %vm361, %v2248
      %2281 = vst.msk [vmem:[#allocation2 + $0x20] sm:$0xff] %vm361, %v2249
      %2282 = vst.msk [vmem:[#allocation2 + $0x28] sm:$0xff] %vm361, %v2250
      %2283 = vst.msk [vmem:[#allocation2 + $0x30] sm:$0xff] %vm361, %v2251
      %2284 = vst.msk [vmem:[#allocation2 + $0x38] sm:$0xff] %vm361, %v2252
      %2285 = vst.msk [vmem:[#allocation2 + $0x40] sm:$0xff] %vm361, %v2253
      %2286 = vst.msk [vmem:[#allocation2 + $0x48] sm:$0xff] %vm361, %v2254
      %2287 = vst.msk [vmem:[#allocation2 + $0x50] sm:$0xff] %vm361, %v2255
      %2288 = vst.msk [vmem:[#allocation2 + $0x58] sm:$0xff] %vm361, %v2256
      %2289 = vst.msk [vmem:[#allocation2 + $0x60] sm:$0xff] %vm361, %v2257
      %2290 = vst.msk [vmem:[#allocation2 + $0x68] sm:$0xff] %vm361, %v2258
      %2291 = vst.msk [vmem:[#allocation2 + $0x70] sm:$0xff] %vm361, %v2259
      %2292 = vst.msk [vmem:[#allocation2 + $0x78] sm:$0xff] %vm361, %v2260
      %2293 = vst.msk [vmem:[#allocation2 + $0x80] sm:$0xff] %vm361, %v2261
      %2294 = vst.msk [vmem:[#allocation2 + $0x88] sm:$0xff] %vm361, %v2262
      %2295 = vst.msk [vmem:[#allocation2 + $0x90] sm:$0xff] %vm361, %v2263
      %2296 = vst.msk [vmem:[#allocation2 + $0x98] sm:$0xff] %vm361, %v2264
      %2297 = vst.msk [vmem:[#allocation2 + $0xa0] sm:$0xff] %vm361, %v2265
      %2298 = vst.msk [vmem:[#allocation2 + $0xa8] sm:$0xff] %vm361, %v2266
      %2299 = vst.msk [vmem:[#allocation2 + $0xb0] sm:$0xff] %vm361, %v2267
      %2300 = vst.msk [vmem:[#allocation2 + $0xb8] sm:$0xff] %vm361, %v2268
      %2301 = vst.msk [vmem:[#allocation2 + $0xc0] sm:$0xff] %vm361, %v2269
      %2302 = vst.msk [vmem:[#allocation2 + $0xc8] sm:$0xff] %vm361, %v2270
      %2303 = vst.msk [vmem:[#allocation2 + $0xd0] sm:$0xff] %vm361, %v2271
      %2304 = vst.msk [vmem:[#allocation2 + $0xd8] sm:$0xff] %vm361, %v2272
      %2305 = vst.msk [vmem:[#allocation2 + $0xe0] sm:$0xff] %vm361, %v2273
      %2306 = vst.msk [vmem:[#allocation2 + $0xe8] sm:$0xff] %vm361, %v2274
      %2307 = vst.msk [vmem:[#allocation2 + $0xf0] sm:$0xff] %vm361, %v2275
      %2308 = vst.msk [vmem:[#allocation2 + $0xf8] sm:$0xff] %vm361, %v2276
      %s2309 = sadd.s32 %s1458, 80
      %s2310 = smul.addr %s2309, 4
      %s2311 = scalar_lea.vmem %s220, %s2310
      %v2312 = vld [vmem:[%s2311] sm:$0xf]
      %v2313 = vld [vmem:[%s2311 + $0x4] sm:$0xf]
      %v2314 = vld [vmem:[%s2311 + $0x8] sm:$0xf]
      %v2315 = vld [vmem:[%s2311 + $0xc] sm:$0xf]
      %v2316 = vld [vmem:[%s2311 + $0x10] sm:$0xf]
      %v2317 = vld [vmem:[%s2311 + $0x14] sm:$0xf]
      %v2318 = vld [vmem:[%s2311 + $0x18] sm:$0xf]
      %v2319 = vld [vmem:[%s2311 + $0x1c] sm:$0xf]
      %v2320 = vld [vmem:[%s2311 + $0x20] sm:$0xf]
      %v2321 = vld [vmem:[%s2311 + $0x24] sm:$0xf]
      %v2322 = vld [vmem:[%s2311 + $0x28] sm:$0xf]
      %v2323 = vld [vmem:[%s2311 + $0x2c] sm:$0xf]
      %v2324 = vld [vmem:[%s2311 + $0x30] sm:$0xf]
      %v2325 = vld [vmem:[%s2311 + $0x34] sm:$0xf]
      %v2326 = vld [vmem:[%s2311 + $0x38] sm:$0xf]
      %v2327 = vld [vmem:[%s2311 + $0x3c] sm:$0xf]
      %v2328 = vld [vmem:[%s2311 + $0x40] sm:$0xf]
      %v2329 = vld [vmem:[%s2311 + $0x44] sm:$0xf]
      %v2330 = vld [vmem:[%s2311 + $0x48] sm:$0xf]
      %v2331 = vld [vmem:[%s2311 + $0x4c] sm:$0xf]
      %v2332 = vld [vmem:[%s2311 + $0x50] sm:$0xf]
      %v2333 = vld [vmem:[%s2311 + $0x54] sm:$0xf]
      %v2334 = vld [vmem:[%s2311 + $0x58] sm:$0xf]
      %v2335 = vld [vmem:[%s2311 + $0x5c] sm:$0xf]
      %v2336 = vld [vmem:[%s2311 + $0x60] sm:$0xf]
      %v2337 = vld [vmem:[%s2311 + $0x64] sm:$0xf]
      %v2338 = vld [vmem:[%s2311 + $0x68] sm:$0xf]
      %v2339 = vld [vmem:[%s2311 + $0x6c] sm:$0xf]
      %v2340 = vld [vmem:[%s2311 + $0x70] sm:$0xf]
      %v2341 = vld [vmem:[%s2311 + $0x74] sm:$0xf]
      %v2342 = vld [vmem:[%s2311 + $0x78] sm:$0xf]
      %v2343 = vld [vmem:[%s2311 + $0x7c] sm:$0xf]
      %s2344 = scalar_lea.vmem %s224, 10
      %v2345 = vld [vmem:[%s2344] sm:$0x3]
      %v2378 = vunpack.c.l.b16 %v2312
      %v2379 = vunpack.c.l.b16 %v2313
      %v2380 = vunpack.c.l.b16 %v2314
      %v2381 = vunpack.c.l.b16 %v2315
      %v2382 = vunpack.c.l.b16 %v2316
      %v2383 = vunpack.c.l.b16 %v2317
      %v2384 = vunpack.c.l.b16 %v2318
      %v2385 = vunpack.c.l.b16 %v2319
      %v2386 = vunpack.c.l.b16 %v2320
      %v2387 = vunpack.c.l.b16 %v2321
      %v2388 = vunpack.c.l.b16 %v2322
      %v2389 = vunpack.c.l.b16 %v2323
      %v2390 = vunpack.c.l.b16 %v2324
      %v2391 = vunpack.c.l.b16 %v2325
      %v2392 = vunpack.c.l.b16 %v2326
      %v2393 = vunpack.c.l.b16 %v2327
      %v2394 = vunpack.c.l.b16 %v2328
      %v2395 = vunpack.c.l.b16 %v2329
      %v2396 = vunpack.c.l.b16 %v2330
      %v2397 = vunpack.c.l.b16 %v2331
      %v2398 = vunpack.c.l.b16 %v2332
      %v2399 = vunpack.c.l.b16 %v2333
      %v2400 = vunpack.c.l.b16 %v2334
      %v2401 = vunpack.c.l.b16 %v2335
      %v2402 = vunpack.c.l.b16 %v2336
      %v2403 = vunpack.c.l.b16 %v2337
      %v2404 = vunpack.c.l.b16 %v2338
      %v2405 = vunpack.c.l.b16 %v2339
      %v2406 = vunpack.c.l.b16 %v2340
      %v2407 = vunpack.c.l.b16 %v2341
      %v2408 = vunpack.c.l.b16 %v2342
      %v2409 = vunpack.c.l.b16 %v2343
      %v2410 = vpack.c.b16 %v2379, %v2378
      %v2411 = vpack.c.b16 %v2381, %v2380
      %v2412 = vpack.c.b16 %v2383, %v2382
      %v2413 = vpack.c.b16 %v2385, %v2384
      %v2414 = vpack.c.b16 %v2387, %v2386
      %v2415 = vpack.c.b16 %v2389, %v2388
      %v2416 = vpack.c.b16 %v2391, %v2390
      %v2417 = vpack.c.b16 %v2393, %v2392
      %v2418 = vpack.c.b16 %v2395, %v2394
      %v2419 = vpack.c.b16 %v2397, %v2396
      %v2420 = vpack.c.b16 %v2399, %v2398
      %v2421 = vpack.c.b16 %v2401, %v2400
      %v2422 = vpack.c.b16 %v2403, %v2402
      %v2423 = vpack.c.b16 %v2405, %v2404
      %v2424 = vpack.c.b16 %v2407, %v2406
      %v2425 = vpack.c.b16 %v2409, %v2408
      %v2427 = vsel %vm361, %v2410, 0
      %v2430 = vsel %vm361, %v2411, 0
      %v2433 = vsel %vm361, %v2412, 0
      %v2436 = vsel %vm361, %v2413, 0
      %v2439 = vsel %vm361, %v2414, 0
      %v2442 = vsel %vm361, %v2415, 0
      %v2445 = vsel %vm361, %v2416, 0
      %v2448 = vsel %vm361, %v2417, 0
      %v2451 = vsel %vm361, %v2418, 0
      %v2454 = vsel %vm361, %v2419, 0
      %v2457 = vsel %vm361, %v2420, 0
      %v2460 = vsel %vm361, %v2421, 0
      %v2463 = vsel %vm361, %v2422, 0
      %v2466 = vsel %vm361, %v2423, 0
      %v2469 = vsel %vm361, %v2424, 0
      %v2472 = vsel %vm361, %v2425, 0
      %v2475 = vsel %vm410, %v2345, 0
      %2477 = vmatprep.subr.bf16.mxu0 0
      %2478 = vmatpush1.bf16.msra.mxu0 %v2475
      %2479 = vmatprep.subr.bf16.mxu0 0
      %2480 = vmatpush1.bf16.msra.mxu0 0
      %2481 = vmatprep.subr.bf16.mxu0 0
      %2482 = vmatpush1.bf16.msra.mxu0 0
      %2483 = vmatprep.subr.bf16.mxu0 0
      %2484 = vmatpush1.bf16.msra.mxu0 0
      %2485 = vmatprep.subr.bf16.mxu0 0
      %2486 = vmatpush1.bf16.msra.mxu0 0
      %2487 = vmatprep.subr.bf16.mxu0 0
      %2488 = vmatpush1.bf16.msra.mxu0 0
      %2489 = vmatprep.subr.bf16.mxu0 0
      %2490 = vmatpush1.bf16.msra.mxu0 0
      %2491 = vmatprep.subr.bf16.mxu0 0
      %2492 = vmatpush1.bf16.msra.mxu0 0
      %2493 = vmatprep.subr.bf16.mxu0 0
      %2494 = vmatpush1.bf16.msra.mxu0 0
      %2495 = vmatprep.subr.bf16.mxu0 0
      %2496 = vmatpush1.bf16.msra.mxu0 0
      %2497 = vmatprep.subr.bf16.mxu0 0
      %2498 = vmatpush1.bf16.msra.mxu0 0
      %2499 = vmatprep.subr.bf16.mxu0 0
      %2500 = vmatpush1.bf16.msra.mxu0 0
      %2501 = vmatprep.subr.bf16.mxu0 0
      %2502 = vmatpush1.bf16.msra.mxu0 0
      %2503 = vmatprep.subr.bf16.mxu0 0
      %2504 = vmatpush1.bf16.msra.mxu0 0
      %2505 = vmatprep.subr.bf16.mxu0 0
      %2506 = vmatpush1.bf16.msra.mxu0 0
      %2507 = vmatprep.subr.bf16.mxu0 0
      %2508 = vmatpush1.bf16.msra.mxu0 0
      %2509 = vmatprep.mubr.bf16.mxu0 0
      %2510 = vmatmul.mubr.bf16.gmra.mrb[0].mxu0 %v2427
      %v2511 = vpop.f32.mrb[0].mxu0
      %v2512 = vadd.f32 0.0, %v2511
      %v2513 = vpop.f32.mrb[0].mxu0
      %v2514 = vpop.f32.mrb[0].mxu0
      %v2515 = vadd.f32 0.0, %v2514
      %v2516 = vpop.f32.mrb[0].mxu0
      %2517 = vmatprep.mubr.bf16.mxu0 0
      %2518 = vmatmul.mubr.bf16.gmra.mrb[0].mxu0 %v2430
      %v2519 = vpop.f32.mrb[0].mxu0
      %v2520 = vadd.f32 0.0, %v2519
      %v2521 = vpop.f32.mrb[0].mxu0
      %v2522 = vpop.f32.mrb[0].mxu0
      %v2523 = vadd.f32 0.0, %v2522
      %v2524 = vpop.f32.mrb[0].mxu0
      %2525 = vmatprep.mubr.bf16.mxu0 0
      %2526 = vmatmul.mubr.bf16.gmra.mrb[0].mxu0 %v2433
      %v2527 = vpop.f32.mrb[0].mxu0
      %v2528 = vadd.f32 0.0, %v2527
      %v2529 = vpop.f32.mrb[0].mxu0
      %v2530 = vpop.f32.mrb[0].mxu0
      %v2531 = vadd.f32 0.0, %v2530
      %v2532 = vpop.f32.mrb[0].mxu0
      %2533 = vmatprep.mubr.bf16.mxu0 0
      %2534 = vmatmul.mubr.bf16.gmra.mrb[0].mxu0 %v2436
      %v2535 = vpop.f32.mrb[0].mxu0
      %v2536 = vadd.f32 0.0, %v2535
      %v2537 = vpop.f32.mrb[0].mxu0
      %v2538 = vpop.f32.mrb[0].mxu0
      %v2539 = vadd.f32 0.0, %v2538
      %v2540 = vpop.f32.mrb[0].mxu0
      %2541 = vmatprep.mubr.bf16.mxu0 0
      %2542 = vmatmul.mubr.bf16.gmra.mrb[0].mxu0 %v2439
      %v2543 = vpop.f32.mrb[0].mxu0
      %v2544 = vadd.f32 0.0, %v2543
      %v2545 = vpop.f32.mrb[0].mxu0
      %v2546 = vpop.f32.mrb[0].mxu0
      %v2547 = vadd.f32 0.0, %v2546
      %v2548 = vpop.f32.mrb[0].mxu0
      %2549 = vmatprep.mubr.bf16.mxu0 0
      %2550 = vmatmul.mubr.bf16.gmra.mrb[0].mxu0 %v2442
      %v2551 = vpop.f32.mrb[0].mxu0
      %v2552 = vadd.f32 0.0, %v2551
      %v2553 = vpop.f32.mrb[0].mxu0
      %v2554 = vpop.f32.mrb[0].mxu0
      %v2555 = vadd.f32 0.0, %v2554
      %v2556 = vpop.f32.mrb[0].mxu0
      %2557 = vmatprep.mubr.bf16.mxu0 0
      %2558 = vmatmul.mubr.bf16.gmra.mrb[0].mxu0 %v2445
      %v2559 = vpop.f32.mrb[0].mxu0
      %v2560 = vadd.f32 0.0, %v2559
      %v2561 = vpop.f32.mrb[0].mxu0
      %v2562 = vpop.f32.mrb[0].mxu0
      %v2563 = vadd.f32 0.0, %v2562
      %v2564 = vpop.f32.mrb[0].mxu0
      %2565 = vmatprep.mubr.bf16.mxu0 0
      %2566 = vmatmul.mubr.bf16.gmra.mrb[0].mxu0 %v2448
      %v2567 = vpop.f32.mrb[0].mxu0
      %v2568 = vadd.f32 0.0, %v2567
      %v2569 = vpop.f32.mrb[0].mxu0
      %v2570 = vpop.f32.mrb[0].mxu0
      %v2571 = vadd.f32 0.0, %v2570
      %v2572 = vpop.f32.mrb[0].mxu0
      %2573 = vmatprep.mubr.bf16.mxu0 0
      %2574 = vmatmul.mubr.bf16.gmra.mrb[0].mxu0 %v2451
      %v2575 = vpop.f32.mrb[0].mxu0
      %v2576 = vadd.f32 0.0, %v2575
      %v2577 = vpop.f32.mrb[0].mxu0
      %v2578 = vpop.f32.mrb[0].mxu0
      %v2579 = vadd.f32 0.0, %v2578
      %v2580 = vpop.f32.mrb[0].mxu0
      %2581 = vmatprep.mubr.bf16.mxu0 0
      %2582 = vmatmul.mubr.bf16.gmra.mrb[0].mxu0 %v2454
      %v2583 = vpop.f32.mrb[0].mxu0
      %v2584 = vadd.f32 0.0, %v2583
      %v2585 = vpop.f32.mrb[0].mxu0
      %v2586 = vpop.f32.mrb[0].mxu0
      %v2587 = vadd.f32 0.0, %v2586
      %v2588 = vpop.f32.mrb[0].mxu0
      %2589 = vmatprep.mubr.bf16.mxu0 0
      %2590 = vmatmul.mubr.bf16.gmra.mrb[0].mxu0 %v2457
      %v2591 = vpop.f32.mrb[0].mxu0
      %v2592 = vadd.f32 0.0, %v2591
      %v2593 = vpop.f32.mrb[0].mxu0
      %v2594 = vpop.f32.mrb[0].mxu0
      %v2595 = vadd.f32 0.0, %v2594
      %v2596 = vpop.f32.mrb[0].mxu0
      %2597 = vmatprep.mubr.bf16.mxu0 0
      %2598 = vmatmul.mubr.bf16.gmra.mrb[0].mxu0 %v2460
      %v2599 = vpop.f32.mrb[0].mxu0
      %v2600 = vadd.f32 0.0, %v2599
      %v2601 = vpop.f32.mrb[0].mxu0
      %v2602 = vpop.f32.mrb[0].mxu0
      %v2603 = vadd.f32 0.0, %v2602
      %v2604 = vpop.f32.mrb[0].mxu0
      %2605 = vmatprep.mubr.bf16.mxu0 0
      %2606 = vmatmul.mubr.bf16.gmra.mrb[0].mxu0 %v2463
      %v2607 = vpop.f32.mrb[0].mxu0
      %v2608 = vadd.f32 0.0, %v2607
      %v2609 = vpop.f32.mrb[0].mxu0
      %v2610 = vpop.f32.mrb[0].mxu0
      %v2611 = vadd.f32 0.0, %v2610
      %v2612 = vpop.f32.mrb[0].mxu0
      %2613 = vmatprep.mubr.bf16.mxu0 0
      %2614 = vmatmul.mubr.bf16.gmra.mrb[0].mxu0 %v2466
      %v2615 = vpop.f32.mrb[0].mxu0
      %v2616 = vadd.f32 0.0, %v2615
      %v2617 = vpop.f32.mrb[0].mxu0
      %v2618 = vpop.f32.mrb[0].mxu0
      %v2619 = vadd.f32 0.0, %v2618
      %v2620 = vpop.f32.mrb[0].mxu0
      %2621 = vmatprep.mubr.bf16.mxu0 0
      %2622 = vmatmul.mubr.bf16.gmra.mrb[0].mxu0 %v2469
      %v2623 = vpop.f32.mrb[0].mxu0
      %v2624 = vadd.f32 0.0, %v2623
      %v2625 = vpop.f32.mrb[0].mxu0
      %v2626 = vpop.f32.mrb[0].mxu0
      %v2627 = vadd.f32 0.0, %v2626
      %v2628 = vpop.f32.mrb[0].mxu0
      %2629 = vmatprep.mubr.bf16.mxu0 0
      %2630 = vmatmul.mubr.bf16.gmra.mrb[0].mxu0 %v2472
      %v2631 = vpop.f32.mrb[0].mxu0
      %v2632 = vadd.f32 0.0, %v2631
      %v2633 = vpop.f32.mrb[0].mxu0
      %v2634 = vpop.f32.mrb[0].mxu0
      %v2635 = vadd.f32 0.0, %v2634
      %v2636 = vpop.f32.mrb[0].mxu0
      %2637 = vdwg.mxu0
      %v2638 = vld [vmem:[#allocation2] sm:$0xff]
      %v2639 = vld [vmem:[#allocation2 + $0x8] sm:$0xff]
      %v2640 = vld [vmem:[#allocation2 + $0x10] sm:$0xff]
      %v2641 = vld [vmem:[#allocation2 + $0x18] sm:$0xff]
      %v2642 = vld [vmem:[#allocation2 + $0x20] sm:$0xff]
      %v2643 = vld [vmem:[#allocation2 + $0x28] sm:$0xff]
      %v2644 = vld [vmem:[#allocation2 + $0x30] sm:$0xff]
      %v2645 = vld [vmem:[#allocation2 + $0x38] sm:$0xff]
      %v2646 = vld [vmem:[#allocation2 + $0x40] sm:$0xff]
      %v2647 = vld [vmem:[#allocation2 + $0x48] sm:$0xff]
      %v2648 = vld [vmem:[#allocation2 + $0x50] sm:$0xff]
      %v2649 = vld [vmem:[#allocation2 + $0x58] sm:$0xff]
      %v2650 = vld [vmem:[#allocation2 + $0x60] sm:$0xff]
      %v2651 = vld [vmem:[#allocation2 + $0x68] sm:$0xff]
      %v2652 = vld [vmem:[#allocation2 + $0x70] sm:$0xff]
      %v2653 = vld [vmem:[#allocation2 + $0x78] sm:$0xff]
      %v2654 = vld [vmem:[#allocation2 + $0x80] sm:$0xff]
      %v2655 = vld [vmem:[#allocation2 + $0x88] sm:$0xff]
      %v2656 = vld [vmem:[#allocation2 + $0x90] sm:$0xff]
      %v2657 = vld [vmem:[#allocation2 + $0x98] sm:$0xff]
      %v2658 = vld [vmem:[#allocation2 + $0xa0] sm:$0xff]
      %v2659 = vld [vmem:[#allocation2 + $0xa8] sm:$0xff]
      %v2660 = vld [vmem:[#allocation2 + $0xb0] sm:$0xff]
      %v2661 = vld [vmem:[#allocation2 + $0xb8] sm:$0xff]
      %v2662 = vld [vmem:[#allocation2 + $0xc0] sm:$0xff]
      %v2663 = vld [vmem:[#allocation2 + $0xc8] sm:$0xff]
      %v2664 = vld [vmem:[#allocation2 + $0xd0] sm:$0xff]
      %v2665 = vld [vmem:[#allocation2 + $0xd8] sm:$0xff]
      %v2666 = vld [vmem:[#allocation2 + $0xe0] sm:$0xff]
      %v2667 = vld [vmem:[#allocation2 + $0xe8] sm:$0xff]
      %v2668 = vld [vmem:[#allocation2 + $0xf0] sm:$0xff]
      %v2669 = vld [vmem:[#allocation2 + $0xf8] sm:$0xff]
      %v2670 = vadd.f32 %v2638, %v2512
      %v2671 = vadd.f32 %v2639, %v2515
      %v2672 = vadd.f32 %v2640, %v2520
      %v2673 = vadd.f32 %v2641, %v2523
      %v2674 = vadd.f32 %v2642, %v2528
      %v2675 = vadd.f32 %v2643, %v2531
      %v2676 = vadd.f32 %v2644, %v2536
      %v2677 = vadd.f32 %v2645, %v2539
      %v2678 = vadd.f32 %v2646, %v2544
      %v2679 = vadd.f32 %v2647, %v2547
      %v2680 = vadd.f32 %v2648, %v2552
      %v2681 = vadd.f32 %v2649, %v2555
      %v2682 = vadd.f32 %v2650, %v2560
      %v2683 = vadd.f32 %v2651, %v2563
      %v2684 = vadd.f32 %v2652, %v2568
      %v2685 = vadd.f32 %v2653, %v2571
      %v2686 = vadd.f32 %v2654, %v2576
      %v2687 = vadd.f32 %v2655, %v2579
      %v2688 = vadd.f32 %v2656, %v2584
      %v2689 = vadd.f32 %v2657, %v2587
      %v2690 = vadd.f32 %v2658, %v2592
      %v2691 = vadd.f32 %v2659, %v2595
      %v2692 = vadd.f32 %v2660, %v2600
      %v2693 = vadd.f32 %v2661, %v2603
      %v2694 = vadd.f32 %v2662, %v2608
      %v2695 = vadd.f32 %v2663, %v2611
      %v2696 = vadd.f32 %v2664, %v2616
      %v2697 = vadd.f32 %v2665, %v2619
      %v2698 = vadd.f32 %v2666, %v2624
      %v2699 = vadd.f32 %v2667, %v2627
      %v2700 = vadd.f32 %v2668, %v2632
      %v2701 = vadd.f32 %v2669, %v2635
      %2702 = vst.msk [vmem:[#allocation2] sm:$0xff] %vm361, %v2670
      %2703 = vst.msk [vmem:[#allocation2 + $0x8] sm:$0xff] %vm361, %v2671
      %2704 = vst.msk [vmem:[#allocation2 + $0x10] sm:$0xff] %vm361, %v2672
      %2705 = vst.msk [vmem:[#allocation2 + $0x18] sm:$0xff] %vm361, %v2673
      %2706 = vst.msk [vmem:[#allocation2 + $0x20] sm:$0xff] %vm361, %v2674
      %2707 = vst.msk [vmem:[#allocation2 + $0x28] sm:$0xff] %vm361, %v2675
      %2708 = vst.msk [vmem:[#allocation2 + $0x30] sm:$0xff] %vm361, %v2676
      %2709 = vst.msk [vmem:[#allocation2 + $0x38] sm:$0xff] %vm361, %v2677
      %2710 = vst.msk [vmem:[#allocation2 + $0x40] sm:$0xff] %vm361, %v2678
      %2711 = vst.msk [vmem:[#allocation2 + $0x48] sm:$0xff] %vm361, %v2679
      %2712 = vst.msk [vmem:[#allocation2 + $0x50] sm:$0xff] %vm361, %v2680
      %2713 = vst.msk [vmem:[#allocation2 + $0x58] sm:$0xff] %vm361, %v2681
      %2714 = vst.msk [vmem:[#allocation2 + $0x60] sm:$0xff] %vm361, %v2682
      %2715 = vst.msk [vmem:[#allocation2 + $0x68] sm:$0xff] %vm361, %v2683
      %2716 = vst.msk [vmem:[#allocation2 + $0x70] sm:$0xff] %vm361, %v2684
      %2717 = vst.msk [vmem:[#allocation2 + $0x78] sm:$0xff] %vm361, %v2685
      %2718 = vst.msk [vmem:[#allocation2 + $0x80] sm:$0xff] %vm361, %v2686
      %2719 = vst.msk [vmem:[#allocation2 + $0x88] sm:$0xff] %vm361, %v2687
      %2720 = vst.msk [vmem:[#allocation2 + $0x90] sm:$0xff] %vm361, %v2688
      %2721 = vst.msk [vmem:[#allocation2 + $0x98] sm:$0xff] %vm361, %v2689
      %2722 = vst.msk [vmem:[#allocation2 + $0xa0] sm:$0xff] %vm361, %v2690
      %2723 = vst.msk [vmem:[#allocation2 + $0xa8] sm:$0xff] %vm361, %v2691
      %2724 = vst.msk [vmem:[#allocation2 + $0xb0] sm:$0xff] %vm361, %v2692
      %2725 = vst.msk [vmem:[#allocation2 + $0xb8] sm:$0xff] %vm361, %v2693
      %2726 = vst.msk [vmem:[#allocation2 + $0xc0] sm:$0xff] %vm361, %v2694
      %2727 = vst.msk [vmem:[#allocation2 + $0xc8] sm:$0xff] %vm361, %v2695
      %2728 = vst.msk [vmem:[#allocation2 + $0xd0] sm:$0xff] %vm361, %v2696
      %2729 = vst.msk [vmem:[#allocation2 + $0xd8] sm:$0xff] %vm361, %v2697
      %2730 = vst.msk [vmem:[#allocation2 + $0xe0] sm:$0xff] %vm361, %v2698
      %2731 = vst.msk [vmem:[#allocation2 + $0xe8] sm:$0xff] %vm361, %v2699
      %2732 = vst.msk [vmem:[#allocation2 + $0xf0] sm:$0xff] %vm361, %v2700
      %2733 = vst.msk [vmem:[#allocation2 + $0xf8] sm:$0xff] %vm361, %v2701
      %s2734 = sadd.s32 %s243, 64
      %s2735 = sshra.s32 %s2734, 3
      %s2736 = sand.u32 %s2734, 7
      %s2737 = smul.addr %s2735, 4
      %s2738 = scalar_lea.vmem %s220, %s2737
      %v2739 = vld [vmem:[%s2738] sm:$0xf]
      %v2740 = vld [vmem:[%s2738 + $0x4] sm:$0xf]
      %v2741 = vld [vmem:[%s2738 + $0x8] sm:$0xf]
      %v2742 = vld [vmem:[%s2738 + $0xc] sm:$0xf]
      %v2743 = vld [vmem:[%s2738 + $0x10] sm:$0xf]
      %v2744 = vld [vmem:[%s2738 + $0x14] sm:$0xf]
      %v2745 = vld [vmem:[%s2738 + $0x18] sm:$0xf]
      %v2746 = vld [vmem:[%s2738 + $0x1c] sm:$0xf]
      %v2747 = vld [vmem:[%s2738 + $0x20] sm:$0xf]
      %v2748 = vld [vmem:[%s2738 + $0x24] sm:$0xf]
      %v2749 = vld [vmem:[%s2738 + $0x28] sm:$0xf]
      %v2750 = vld [vmem:[%s2738 + $0x2c] sm:$0xf]
      %v2751 = vld [vmem:[%s2738 + $0x30] sm:$0xf]
      %v2752 = vld [vmem:[%s2738 + $0x34] sm:$0xf]
      %v2753 = vld [vmem:[%s2738 + $0x38] sm:$0xf]
      %v2754 = vld [vmem:[%s2738 + $0x3c] sm:$0xf]
      %v2755 = vld [vmem:[%s2738 + $0x40] sm:$0xf]
      %v2756 = vld [vmem:[%s2738 + $0x44] sm:$0xf]
      %v2757 = vld [vmem:[%s2738 + $0x48] sm:$0xf]
      %v2758 = vld [vmem:[%s2738 + $0x4c] sm:$0xf]
      %v2759 = vld [vmem:[%s2738 + $0x50] sm:$0xf]
      %v2760 = vld [vmem:[%s2738 + $0x54] sm:$0xf]
      %v2761 = vld [vmem:[%s2738 + $0x58] sm:$0xf]
      %v2762 = vld [vmem:[%s2738 + $0x5c] sm:$0xf]
      %v2763 = vld [vmem:[%s2738 + $0x60] sm:$0xf]
      %v2764 = vld [vmem:[%s2738 + $0x64] sm:$0xf]
      %v2765 = vld [vmem:[%s2738 + $0x68] sm:$0xf]
      %v2766 = vld [vmem:[%s2738 + $0x6c] sm:$0xf]
      %v2767 = vld [vmem:[%s2738 + $0x70] sm:$0xf]
      %v2768 = vld [vmem:[%s2738 + $0x74] sm:$0xf]
      %v2769 = vld [vmem:[%s2738 + $0x78] sm:$0xf]
      %v2770 = vld [vmem:[%s2738 + $0x7c] sm:$0xf]
      %s2771 = scalar_lea.vmem %s224, 12
      %v2772 = vld [vmem:[%s2771] sm:$0x3]
      %v2805 = vunpack.c.l.b16 %v2739
      %v2806 = vunpack.c.l.b16 %v2740
      %v2807 = vunpack.c.l.b16 %v2741
      %v2808 = vunpack.c.l.b16 %v2742
      %v2809 = vunpack.c.l.b16 %v2743
      %v2810 = vunpack.c.l.b16 %v2744
      %v2811 = vunpack.c.l.b16 %v2745
      %v2812 = vunpack.c.l.b16 %v2746
      %v2813 = vunpack.c.l.b16 %v2747
      %v2814 = vunpack.c.l.b16 %v2748
      %v2815 = vunpack.c.l.b16 %v2749
      %v2816 = vunpack.c.l.b16 %v2750
      %v2817 = vunpack.c.l.b16 %v2751
      %v2818 = vunpack.c.l.b16 %v2752
      %v2819 = vunpack.c.l.b16 %v2753
      %v2820 = vunpack.c.l.b16 %v2754
      %v2821 = vunpack.c.l.b16 %v2755
      %v2822 = vunpack.c.l.b16 %v2756
      %v2823 = vunpack.c.l.b16 %v2757
      %v2824 = vunpack.c.l.b16 %v2758
      %v2825 = vunpack.c.l.b16 %v2759
      %v2826 = vunpack.c.l.b16 %v2760
      %v2827 = vunpack.c.l.b16 %v2761
      %v2828 = vunpack.c.l.b16 %v2762
      %v2829 = vunpack.c.l.b16 %v2763
      %v2830 = vunpack.c.l.b16 %v2764
      %v2831 = vunpack.c.l.b16 %v2765
      %v2832 = vunpack.c.l.b16 %v2766
      %v2833 = vunpack.c.l.b16 %v2767
      %v2834 = vunpack.c.l.b16 %v2768
      %v2835 = vunpack.c.l.b16 %v2769
      %v2836 = vunpack.c.l.b16 %v2770
      %v2837 = vpack.c.b16 %v2806, %v2805
      %v2838 = vpack.c.b16 %v2808, %v2807
      %v2839 = vpack.c.b16 %v2810, %v2809
      %v2840 = vpack.c.b16 %v2812, %v2811
      %v2841 = vpack.c.b16 %v2814, %v2813
      %v2842 = vpack.c.b16 %v2816, %v2815
      %v2843 = vpack.c.b16 %v2818, %v2817
      %v2844 = vpack.c.b16 %v2820, %v2819
      %v2845 = vpack.c.b16 %v2822, %v2821
      %v2846 = vpack.c.b16 %v2824, %v2823
      %v2847 = vpack.c.b16 %v2826, %v2825
      %v2848 = vpack.c.b16 %v2828, %v2827
      %v2849 = vpack.c.b16 %v2830, %v2829
      %v2850 = vpack.c.b16 %v2832, %v2831
      %v2851 = vpack.c.b16 %v2834, %v2833
      %v2852 = vpack.c.b16 %v2836, %v2835
      %v2854 = vsel %vm361, %v2837, 0
      %v2857 = vsel %vm361, %v2838, 0
      %v2860 = vsel %vm361, %v2839, 0
      %v2863 = vsel %vm361, %v2840, 0
      %v2866 = vsel %vm361, %v2841, 0
      %v2869 = vsel %vm361, %v2842, 0
      %v2872 = vsel %vm361, %v2843, 0
      %v2875 = vsel %vm361, %v2844, 0
      %v2878 = vsel %vm361, %v2845, 0
      %v2881 = vsel %vm361, %v2846, 0
      %v2884 = vsel %vm361, %v2847, 0
      %v2887 = vsel %vm361, %v2848, 0
      %v2890 = vsel %vm361, %v2849, 0
      %v2893 = vsel %vm361, %v2850, 0
      %v2896 = vsel %vm361, %v2851, 0
      %v2899 = vsel %vm361, %v2852, 0
      %v2902 = vsel %vm410, %v2772, 0
      %2904 = vmatprep.subr.bf16.mxu0 0
      %2905 = vmatpush1.bf16.msra.mxu0 %v2902
      %2906 = vmatprep.subr.bf16.mxu0 0
      %2907 = vmatpush1.bf16.msra.mxu0 0
      %2908 = vmatprep.subr.bf16.mxu0 0
      %2909 = vmatpush1.bf16.msra.mxu0 0
      %2910 = vmatprep.subr.bf16.mxu0 0
      %2911 = vmatpush1.bf16.msra.mxu0 0
      %2912 = vmatprep.subr.bf16.mxu0 0
      %2913 = vmatpush1.bf16.msra.mxu0 0
      %2914 = vmatprep.subr.bf16.mxu0 0
      %2915 = vmatpush1.bf16.msra.mxu0 0
      %2916 = vmatprep.subr.bf16.mxu0 0
      %2917 = vmatpush1.bf16.msra.mxu0 0
      %2918 = vmatprep.subr.bf16.mxu0 0
      %2919 = vmatpush1.bf16.msra.mxu0 0
      %2920 = vmatprep.subr.bf16.mxu0 0
      %2921 = vmatpush1.bf16.msra.mxu0 0
      %2922 = vmatprep.subr.bf16.mxu0 0
      %2923 = vmatpush1.bf16.msra.mxu0 0
      %2924 = vmatprep.subr.bf16.mxu0 0
      %2925 = vmatpush1.bf16.msra.mxu0 0
      %2926 = vmatprep.subr.bf16.mxu0 0
      %2927 = vmatpush1.bf16.msra.mxu0 0
      %2928 = vmatprep.subr.bf16.mxu0 0
      %2929 = vmatpush1.bf16.msra.mxu0 0
      %2930 = vmatprep.subr.bf16.mxu0 0
      %2931 = vmatpush1.bf16.msra.mxu0 0
      %2932 = vmatprep.subr.bf16.mxu0 0
      %2933 = vmatpush1.bf16.msra.mxu0 0
      %2934 = vmatprep.subr.bf16.mxu0 0
      %2935 = vmatpush1.bf16.msra.mxu0 0
      %2936 = vmatprep.mubr.bf16.mxu0 0
      %2937 = vmatmul.mubr.bf16.gmra.mrb[0].mxu0 %v2854
      %v2938 = vpop.f32.mrb[0].mxu0
      %v2939 = vadd.f32 0.0, %v2938
      %v2940 = vpop.f32.mrb[0].mxu0
      %v2941 = vpop.f32.mrb[0].mxu0
      %v2942 = vadd.f32 0.0, %v2941
      %v2943 = vpop.f32.mrb[0].mxu0
      %2944 = vmatprep.mubr.bf16.mxu0 0
      %2945 = vmatmul.mubr.bf16.gmra.mrb[0].mxu0 %v2857
      %v2946 = vpop.f32.mrb[0].mxu0
      %v2947 = vadd.f32 0.0, %v2946
      %v2948 = vpop.f32.mrb[0].mxu0
      %v2949 = vpop.f32.mrb[0].mxu0
      %v2950 = vadd.f32 0.0, %v2949
      %v2951 = vpop.f32.mrb[0].mxu0
      %2952 = vmatprep.mubr.bf16.mxu0 0
      %2953 = vmatmul.mubr.bf16.gmra.mrb[0].mxu0 %v2860
      %v2954 = vpop.f32.mrb[0].mxu0
      %v2955 = vadd.f32 0.0, %v2954
      %v2956 = vpop.f32.mrb[0].mxu0
      %v2957 = vpop.f32.mrb[0].mxu0
      %v2958 = vadd.f32 0.0, %v2957
      %v2959 = vpop.f32.mrb[0].mxu0
      %2960 = vmatprep.mubr.bf16.mxu0 0
      %2961 = vmatmul.mubr.bf16.gmra.mrb[0].mxu0 %v2863
      %v2962 = vpop.f32.mrb[0].mxu0
      %v2963 = vadd.f32 0.0, %v2962
      %v2964 = vpop.f32.mrb[0].mxu0
      %v2965 = vpop.f32.mrb[0].mxu0
      %v2966 = vadd.f32 0.0, %v2965
      %v2967 = vpop.f32.mrb[0].mxu0
      %2968 = vmatprep.mubr.bf16.mxu0 0
      %2969 = vmatmul.mubr.bf16.gmra.mrb[0].mxu0 %v2866
      %v2970 = vpop.f32.mrb[0].mxu0
      %v2971 = vadd.f32 0.0, %v2970
      %v2972 = vpop.f32.mrb[0].mxu0
      %v2973 = vpop.f32.mrb[0].mxu0
      %v2974 = vadd.f32 0.0, %v2973
      %v2975 = vpop.f32.mrb[0].mxu0
      %2976 = vmatprep.mubr.bf16.mxu0 0
      %2977 = vmatmul.mubr.bf16.gmra.mrb[0].mxu0 %v2869
      %v2978 = vpop.f32.mrb[0].mxu0
      %v2979 = vadd.f32 0.0, %v2978
      %v2980 = vpop.f32.mrb[0].mxu0
      %v2981 = vpop.f32.mrb[0].mxu0
      %v2982 = vadd.f32 0.0, %v2981
      %v2983 = vpop.f32.mrb[0].mxu0
      %2984 = vmatprep.mubr.bf16.mxu0 0
      %2985 = vmatmul.mubr.bf16.gmra.mrb[0].mxu0 %v2872
      %v2986 = vpop.f32.mrb[0].mxu0
      %v2987 = vadd.f32 0.0, %v2986
      %v2988 = vpop.f32.mrb[0].mxu0
      %v2989 = vpop.f32.mrb[0].mxu0
      %v2990 = vadd.f32 0.0, %v2989
      %v2991 = vpop.f32.mrb[0].mxu0
      %2992 = vmatprep.mubr.bf16.mxu0 0
      %2993 = vmatmul.mubr.bf16.gmra.mrb[0].mxu0 %v2875
      %v2994 = vpop.f32.mrb[0].mxu0
      %v2995 = vadd.f32 0.0, %v2994
      %v2996 = vpop.f32.mrb[0].mxu0
      %v2997 = vpop.f32.mrb[0].mxu0
      %v2998 = vadd.f32 0.0, %v2997
      %v2999 = vpop.f32.mrb[0].mxu0
      %3000 = vmatprep.mubr.bf16.mxu0 0
      %3001 = vmatmul.mubr.bf16.gmra.mrb[0].mxu0 %v2878
      %v3002 = vpop.f32.mrb[0].mxu0
      %v3003 = vadd.f32 0.0, %v3002
      %v3004 = vpop.f32.mrb[0].mxu0
      %v3005 = vpop.f32.mrb[0].mxu0
      %v3006 = vadd.f32 0.0, %v3005
      %v3007 = vpop.f32.mrb[0].mxu0
      %3008 = vmatprep.mubr.bf16.mxu0 0
      %3009 = vmatmul.mubr.bf16.gmra.mrb[0].mxu0 %v2881
      %v3010 = vpop.f32.mrb[0].mxu0
      %v3011 = vadd.f32 0.0, %v3010
      %v3012 = vpop.f32.mrb[0].mxu0
      %v3013 = vpop.f32.mrb[0].mxu0
      %v3014 = vadd.f32 0.0, %v3013
      %v3015 = vpop.f32.mrb[0].mxu0
      %3016 = vmatprep.mubr.bf16.mxu0 0
      %3017 = vmatmul.mubr.bf16.gmra.mrb[0].mxu0 %v2884
      %v3018 = vpop.f32.mrb[0].mxu0
      %v3019 = vadd.f32 0.0, %v3018
      %v3020 = vpop.f32.mrb[0].mxu0
      %v3021 = vpop.f32.mrb[0].mxu0
      %v3022 = vadd.f32 0.0, %v3021
      %v3023 = vpop.f32.mrb[0].mxu0
      %3024 = vmatprep.mubr.bf16.mxu0 0
      %3025 = vmatmul.mubr.bf16.gmra.mrb[0].mxu0 %v2887
      %v3026 = vpop.f32.mrb[0].mxu0
      %v3027 = vadd.f32 0.0, %v3026
      %v3028 = vpop.f32.mrb[0].mxu0
      %v3029 = vpop.f32.mrb[0].mxu0
      %v3030 = vadd.f32 0.0, %v3029
      %v3031 = vpop.f32.mrb[0].mxu0
      %3032 = vmatprep.mubr.bf16.mxu0 0
      %3033 = vmatmul.mubr.bf16.gmra.mrb[0].mxu0 %v2890
      %v3034 = vpop.f32.mrb[0].mxu0
      %v3035 = vadd.f32 0.0, %v3034
      %v3036 = vpop.f32.mrb[0].mxu0
      %v3037 = vpop.f32.mrb[0].mxu0
      %v3038 = vadd.f32 0.0, %v3037
      %v3039 = vpop.f32.mrb[0].mxu0
      %3040 = vmatprep.mubr.bf16.mxu0 0
      %3041 = vmatmul.mubr.bf16.gmra.mrb[0].mxu0 %v2893
      %v3042 = vpop.f32.mrb[0].mxu0
      %v3043 = vadd.f32 0.0, %v3042
      %v3044 = vpop.f32.mrb[0].mxu0
      %v3045 = vpop.f32.mrb[0].mxu0
      %v3046 = vadd.f32 0.0, %v3045
      %v3047 = vpop.f32.mrb[0].mxu0
      %3048 = vmatprep.mubr.bf16.mxu0 0
      %3049 = vmatmul.mubr.bf16.gmra.mrb[0].mxu0 %v2896
      %v3050 = vpop.f32.mrb[0].mxu0
      %v3051 = vadd.f32 0.0, %v3050
      %v3052 = vpop.f32.mrb[0].mxu0
      %v3053 = vpop.f32.mrb[0].mxu0
      %v3054 = vadd.f32 0.0, %v3053
      %v3055 = vpop.f32.mrb[0].mxu0
      %3056 = vmatprep.mubr.bf16.mxu0 0
      %3057 = vmatmul.mubr.bf16.gmra.mrb[0].mxu0 %v2899
      %v3058 = vpop.f32.mrb[0].mxu0
      %v3059 = vadd.f32 0.0, %v3058
      %v3060 = vpop.f32.mrb[0].mxu0
      %v3061 = vpop.f32.mrb[0].mxu0
      %v3062 = vadd.f32 0.0, %v3061
      %v3063 = vpop.f32.mrb[0].mxu0
      %3064 = vdwg.mxu0
      %v3065 = vld [vmem:[#allocation2] sm:$0xff]
      %v3066 = vld [vmem:[#allocation2 + $0x8] sm:$0xff]
      %v3067 = vld [vmem:[#allocation2 + $0x10] sm:$0xff]
      %v3068 = vld [vmem:[#allocation2 + $0x18] sm:$0xff]
      %v3069 = vld [vmem:[#allocation2 + $0x20] sm:$0xff]
      %v3070 = vld [vmem:[#allocation2 + $0x28] sm:$0xff]
      %v3071 = vld [vmem:[#allocation2 + $0x30] sm:$0xff]
      %v3072 = vld [vmem:[#allocation2 + $0x38] sm:$0xff]
      %v3073 = vld [vmem:[#allocation2 + $0x40] sm:$0xff]
      %v3074 = vld [vmem:[#allocation2 + $0x48] sm:$0xff]
      %v3075 = vld [vmem:[#allocation2 + $0x50] sm:$0xff]
      %v3076 = vld [vmem:[#allocation2 + $0x58] sm:$0xff]
      %v3077 = vld [vmem:[#allocation2 + $0x60] sm:$0xff]
      %v3078 = vld [vmem:[#allocation2 + $0x68] sm:$0xff]
      %v3079 = vld [vmem:[#allocation2 + $0x70] sm:$0xff]
      %v3080 = vld [vmem:[#allocation2 + $0x78] sm:$0xff]
      %v3081 = vld [vmem:[#allocation2 + $0x80] sm:$0xff]
      %v3082 = vld [vmem:[#allocation2 + $0x88] sm:$0xff]
      %v3083 = vld [vmem:[#allocation2 + $0x90] sm:$0xff]
      %v3084 = vld [vmem:[#allocation2 + $0x98] sm:$0xff]
      %v3085 = vld [vmem:[#allocation2 + $0xa0] sm:$0xff]
      %v3086 = vld [vmem:[#allocation2 + $0xa8] sm:$0xff]
      %v3087 = vld [vmem:[#allocation2 + $0xb0] sm:$0xff]
      %v3088 = vld [vmem:[#allocation2 + $0xb8] sm:$0xff]
      %v3089 = vld [vmem:[#allocation2 + $0xc0] sm:$0xff]
      %v3090 = vld [vmem:[#allocation2 + $0xc8] sm:$0xff]
      %v3091 = vld [vmem:[#allocation2 + $0xd0] sm:$0xff]
      %v3092 = vld [vmem:[#allocation2 + $0xd8] sm:$0xff]
      %v3093 = vld [vmem:[#allocation2 + $0xe0] sm:$0xff]
      %v3094 = vld [vmem:[#allocation2 + $0xe8] sm:$0xff]
      %v3095 = vld [vmem:[#allocation2 + $0xf0] sm:$0xff]
      %v3096 = vld [vmem:[#allocation2 + $0xf8] sm:$0xff]
      %v3097 = vadd.f32 %v3065, %v2939
      %v3098 = vadd.f32 %v3066, %v2942
      %v3099 = vadd.f32 %v3067, %v2947
      %v3100 = vadd.f32 %v3068, %v2950
      %v3101 = vadd.f32 %v3069, %v2955
      %v3102 = vadd.f32 %v3070, %v2958
      %v3103 = vadd.f32 %v3071, %v2963
      %v3104 = vadd.f32 %v3072, %v2966
      %v3105 = vadd.f32 %v3073, %v2971
      %v3106 = vadd.f32 %v3074, %v2974
      %v3107 = vadd.f32 %v3075, %v2979
      %v3108 = vadd.f32 %v3076, %v2982
      %v3109 = vadd.f32 %v3077, %v2987
      %v3110 = vadd.f32 %v3078, %v2990
      %v3111 = vadd.f32 %v3079, %v2995
      %v3112 = vadd.f32 %v3080, %v2998
      %v3113 = vadd.f32 %v3081, %v3003
      %v3114 = vadd.f32 %v3082, %v3006
      %v3115 = vadd.f32 %v3083, %v3011
      %v3116 = vadd.f32 %v3084, %v3014
      %v3117 = vadd.f32 %v3085, %v3019
      %v3118 = vadd.f32 %v3086, %v3022
      %v3119 = vadd.f32 %v3087, %v3027
      %v3120 = vadd.f32 %v3088, %v3030
      %v3121 = vadd.f32 %v3089, %v3035
      %v3122 = vadd.f32 %v3090, %v3038
      %v3123 = vadd.f32 %v3091, %v3043
      %v3124 = vadd.f32 %v3092, %v3046
      %v3125 = vadd.f32 %v3093, %v3051
      %v3126 = vadd.f32 %v3094, %v3054
      %v3127 = vadd.f32 %v3095, %v3059
      %v3128 = vadd.f32 %v3096, %v3062
      %3129 = vst.msk [vmem:[#allocation2] sm:$0xff] %vm361, %v3097
      %3130 = vst.msk [vmem:[#allocation2 + $0x8] sm:$0xff] %vm361, %v3098
      %3131 = vst.msk [vmem:[#allocation2 + $0x10] sm:$0xff] %vm361, %v3099
      %3132 = vst.msk [vmem:[#allocation2 + $0x18] sm:$0xff] %vm361, %v3100
      %3133 = vst.msk [vmem:[#allocation2 + $0x20] sm:$0xff] %vm361, %v3101
      %3134 = vst.msk [vmem:[#allocation2 + $0x28] sm:$0xff] %vm361, %v3102
      %3135 = vst.msk [vmem:[#allocation2 + $0x30] sm:$0xff] %vm361, %v3103
      %3136 = vst.msk [vmem:[#allocation2 + $0x38] sm:$0xff] %vm361, %v3104
      %3137 = vst.msk [vmem:[#allocation2 + $0x40] sm:$0xff] %vm361, %v3105
      %3138 = vst.msk [vmem:[#allocation2 + $0x48] sm:$0xff] %vm361, %v3106
      %3139 = vst.msk [vmem:[#allocation2 + $0x50] sm:$0xff] %vm361, %v3107
      %3140 = vst.msk [vmem:[#allocation2 + $0x58] sm:$0xff] %vm361, %v3108
      %3141 = vst.msk [vmem:[#allocation2 + $0x60] sm:$0xff] %vm361, %v3109
      %3142 = vst.msk [vmem:[#allocation2 + $0x68] sm:$0xff] %vm361, %v3110
      %3143 = vst.msk [vmem:[#allocation2 + $0x70] sm:$0xff] %vm361, %v3111
      %3144 = vst.msk [vmem:[#allocation2 + $0x78] sm:$0xff] %vm361, %v3112
      %3145 = vst.msk [vmem:[#allocation2 + $0x80] sm:$0xff] %vm361, %v3113
      %3146 = vst.msk [vmem:[#allocation2 + $0x88] sm:$0xff] %vm361, %v3114
      %3147 = vst.msk [vmem:[#allocation2 + $0x90] sm:$0xff] %vm361, %v3115
      %3148 = vst.msk [vmem:[#allocation2 + $0x98] sm:$0xff] %vm361, %v3116
      %3149 = vst.msk [vmem:[#allocation2 + $0xa0] sm:$0xff] %vm361, %v3117
      %3150 = vst.msk [vmem:[#allocation2 + $0xa8] sm:$0xff] %vm361, %v3118
      %3151 = vst.msk [vmem:[#allocation2 + $0xb0] sm:$0xff] %vm361, %v3119
      %3152 = vst.msk [vmem:[#allocation2 + $0xb8] sm:$0xff] %vm361, %v3120
      %3153 = vst.msk [vmem:[#allocation2 + $0xc0] sm:$0xff] %vm361, %v3121
      %3154 = vst.msk [vmem:[#allocation2 + $0xc8] sm:$0xff] %vm361, %v3122
      %3155 = vst.msk [vmem:[#allocation2 + $0xd0] sm:$0xff] %vm361, %v3123
      %3156 = vst.msk [vmem:[#allocation2 + $0xd8] sm:$0xff] %vm361, %v3124
      %3157 = vst.msk [vmem:[#allocation2 + $0xe0] sm:$0xff] %vm361, %v3125
      %3158 = vst.msk [vmem:[#allocation2 + $0xe8] sm:$0xff] %vm361, %v3126
      %3159 = vst.msk [vmem:[#allocation2 + $0xf0] sm:$0xff] %vm361, %v3127
      %3160 = vst.msk [vmem:[#allocation2 + $0xf8] sm:$0xff] %vm361, %v3128
      %s3161 = sadd.s32 %s2735, 40
      %s3162 = smul.addr %s3161, 4
      %s3163 = scalar_lea.vmem %s220, %s3162
      %v3164 = vld [vmem:[%s3163] sm:$0xf]
      %v3165 = vld [vmem:[%s3163 + $0x4] sm:$0xf]
      %v3166 = vld [vmem:[%s3163 + $0x8] sm:$0xf]
      %v3167 = vld [vmem:[%s3163 + $0xc] sm:$0xf]
      %v3168 = vld [vmem:[%s3163 + $0x10] sm:$0xf]
      %v3169 = vld [vmem:[%s3163 + $0x14] sm:$0xf]
      %v3170 = vld [vmem:[%s3163 + $0x18] sm:$0xf]
      %v3171 = vld [vmem:[%s3163 + $0x1c] sm:$0xf]
      %v3172 = vld [vmem:[%s3163 + $0x20] sm:$0xf]
      %v3173 = vld [vmem:[%s3163 + $0x24] sm:$0xf]
      %v3174 = vld [vmem:[%s3163 + $0x28] sm:$0xf]
      %v3175 = vld [vmem:[%s3163 + $0x2c] sm:$0xf]
      %v3176 = vld [vmem:[%s3163 + $0x30] sm:$0xf]
      %v3177 = vld [vmem:[%s3163 + $0x34] sm:$0xf]
      %v3178 = vld [vmem:[%s3163 + $0x38] sm:$0xf]
      %v3179 = vld [vmem:[%s3163 + $0x3c] sm:$0xf]
      %v3180 = vld [vmem:[%s3163 + $0x40] sm:$0xf]
      %v3181 = vld [vmem:[%s3163 + $0x44] sm:$0xf]
      %v3182 = vld [vmem:[%s3163 + $0x48] sm:$0xf]
      %v3183 = vld [vmem:[%s3163 + $0x4c] sm:$0xf]
      %v3184 = vld [vmem:[%s3163 + $0x50] sm:$0xf]
      %v3185 = vld [vmem:[%s3163 + $0x54] sm:$0xf]
      %v3186 = vld [vmem:[%s3163 + $0x58] sm:$0xf]
      %v3187 = vld [vmem:[%s3163 + $0x5c] sm:$0xf]
      %v3188 = vld [vmem:[%s3163 + $0x60] sm:$0xf]
      %v3189 = vld [vmem:[%s3163 + $0x64] sm:$0xf]
      %v3190 = vld [vmem:[%s3163 + $0x68] sm:$0xf]
      %v3191 = vld [vmem:[%s3163 + $0x6c] sm:$0xf]
      %v3192 = vld [vmem:[%s3163 + $0x70] sm:$0xf]
      %v3193 = vld [vmem:[%s3163 + $0x74] sm:$0xf]
      %v3194 = vld [vmem:[%s3163 + $0x78] sm:$0xf]
      %v3195 = vld [vmem:[%s3163 + $0x7c] sm:$0xf]
      %s3196 = scalar_lea.vmem %s224, 14
      %v3197 = vld [vmem:[%s3196] sm:$0x3]
      %v3230 = vunpack.c.l.b16 %v3164
      %v3231 = vunpack.c.l.b16 %v3165
      %v3232 = vunpack.c.l.b16 %v3166
      %v3233 = vunpack.c.l.b16 %v3167
      %v3234 = vunpack.c.l.b16 %v3168
      %v3235 = vunpack.c.l.b16 %v3169
      %v3236 = vunpack.c.l.b16 %v3170
      %v3237 = vunpack.c.l.b16 %v3171
      %v3238 = vunpack.c.l.b16 %v3172
      %v3239 = vunpack.c.l.b16 %v3173
      %v3240 = vunpack.c.l.b16 %v3174
      %v3241 = vunpack.c.l.b16 %v3175
      %v3242 = vunpack.c.l.b16 %v3176
      %v3243 = vunpack.c.l.b16 %v3177
      %v3244 = vunpack.c.l.b16 %v3178
      %v3245 = vunpack.c.l.b16 %v3179
      %v3246 = vunpack.c.l.b16 %v3180
      %v3247 = vunpack.c.l.b16 %v3181
      %v3248 = vunpack.c.l.b16 %v3182
      %v3249 = vunpack.c.l.b16 %v3183
      %v3250 = vunpack.c.l.b16 %v3184
      %v3251 = vunpack.c.l.b16 %v3185
      %v3252 = vunpack.c.l.b16 %v3186
      %v3253 = vunpack.c.l.b16 %v3187
      %v3254 = vunpack.c.l.b16 %v3188
      %v3255 = vunpack.c.l.b16 %v3189
      %v3256 = vunpack.c.l.b16 %v3190
      %v3257 = vunpack.c.l.b16 %v3191
      %v3258 = vunpack.c.l.b16 %v3192
      %v3259 = vunpack.c.l.b16 %v3193
      %v3260 = vunpack.c.l.b16 %v3194
      %v3261 = vunpack.c.l.b16 %v3195
      %v3262 = vpack.c.b16 %v3231, %v3230
      %v3263 = vpack.c.b16 %v3233, %v3232
      %v3264 = vpack.c.b16 %v3235, %v3234
      %v3265 = vpack.c.b16 %v3237, %v3236
      %v3266 = vpack.c.b16 %v3239, %v3238
      %v3267 = vpack.c.b16 %v3241, %v3240
      %v3268 = vpack.c.b16 %v3243, %v3242
      %v3269 = vpack.c.b16 %v3245, %v3244
      %v3270 = vpack.c.b16 %v3247, %v3246
      %v3271 = vpack.c.b16 %v3249, %v3248
      %v3272 = vpack.c.b16 %v3251, %v3250
      %v3273 = vpack.c.b16 %v3253, %v3252
      %v3274 = vpack.c.b16 %v3255, %v3254
      %v3275 = vpack.c.b16 %v3257, %v3256
      %v3276 = vpack.c.b16 %v3259, %v3258
      %v3277 = vpack.c.b16 %v3261, %v3260
      %v3279 = vsel %vm361, %v3262, 0
      %v3282 = vsel %vm361, %v3263, 0
      %v3285 = vsel %vm361, %v3264, 0
      %v3288 = vsel %vm361, %v3265, 0
      %v3291 = vsel %vm361, %v3266, 0
      %v3294 = vsel %vm361, %v3267, 0
      %v3297 = vsel %vm361, %v3268, 0
      %v3300 = vsel %vm361, %v3269, 0
      %v3303 = vsel %vm361, %v3270, 0
      %v3306 = vsel %vm361, %v3271, 0
      %v3309 = vsel %vm361, %v3272, 0
      %v3312 = vsel %vm361, %v3273, 0
      %v3315 = vsel %vm361, %v3274, 0
      %v3318 = vsel %vm361, %v3275, 0
      %v3321 = vsel %vm361, %v3276, 0
      %v3324 = vsel %vm361, %v3277, 0
      %v3327 = vsel %vm410, %v3197, 0
      %3329 = vmatprep.subr.bf16.mxu0 0
      %3330 = vmatpush1.bf16.msra.mxu0 %v3327
      %3331 = vmatprep.subr.bf16.mxu0 0
      %3332 = vmatpush1.bf16.msra.mxu0 0
      %3333 = vmatprep.subr.bf16.mxu0 0
      %3334 = vmatpush1.bf16.msra.mxu0 0
      %3335 = vmatprep.subr.bf16.mxu0 0
      %3336 = vmatpush1.bf16.msra.mxu0 0
      %3337 = vmatprep.subr.bf16.mxu0 0
      %3338 = vmatpush1.bf16.msra.mxu0 0
      %3339 = vmatprep.subr.bf16.mxu0 0
      %3340 = vmatpush1.bf16.msra.mxu0 0
      %3341 = vmatprep.subr.bf16.mxu0 0
      %3342 = vmatpush1.bf16.msra.mxu0 0
      %3343 = vmatprep.subr.bf16.mxu0 0
      %3344 = vmatpush1.bf16.msra.mxu0 0
      %3345 = vmatprep.subr.bf16.mxu0 0
      %3346 = vmatpush1.bf16.msra.mxu0 0
      %3347 = vmatprep.subr.bf16.mxu0 0
      %3348 = vmatpush1.bf16.msra.mxu0 0
      %3349 = vmatprep.subr.bf16.mxu0 0
      %3350 = vmatpush1.bf16.msra.mxu0 0
      %3351 = vmatprep.subr.bf16.mxu0 0
      %3352 = vmatpush1.bf16.msra.mxu0 0
      %3353 = vmatprep.subr.bf16.mxu0 0
      %3354 = vmatpush1.bf16.msra.mxu0 0
      %3355 = vmatprep.subr.bf16.mxu0 0
      %3356 = vmatpush1.bf16.msra.mxu0 0
      %3357 = vmatprep.subr.bf16.mxu0 0
      %3358 = vmatpush1.bf16.msra.mxu0 0
      %3359 = vmatprep.subr.bf16.mxu0 0
      %3360 = vmatpush1.bf16.msra.mxu0 0
      %3361 = vmatprep.mubr.bf16.mxu0 0
      %3362 = vmatmul.mubr.bf16.gmra.mrb[0].mxu0 %v3279
      %v3363 = vpop.f32.mrb[0].mxu0
      %v3364 = vadd.f32 0.0, %v3363
      %v3365 = vpop.f32.mrb[0].mxu0
      %v3366 = vpop.f32.mrb[0].mxu0
      %v3367 = vadd.f32 0.0, %v3366
      %v3368 = vpop.f32.mrb[0].mxu0
      %3369 = vmatprep.mubr.bf16.mxu0 0
      %3370 = vmatmul.mubr.bf16.gmra.mrb[0].mxu0 %v3282
      %v3371 = vpop.f32.mrb[0].mxu0
      %v3372 = vadd.f32 0.0, %v3371
      %v3373 = vpop.f32.mrb[0].mxu0
      %v3374 = vpop.f32.mrb[0].mxu0
      %v3375 = vadd.f32 0.0, %v3374
      %v3376 = vpop.f32.mrb[0].mxu0
      %3377 = vmatprep.mubr.bf16.mxu0 0
      %3378 = vmatmul.mubr.bf16.gmra.mrb[0].mxu0 %v3285
      %v3379 = vpop.f32.mrb[0].mxu0
      %v3380 = vadd.f32 0.0, %v3379
      %v3381 = vpop.f32.mrb[0].mxu0
      %v3382 = vpop.f32.mrb[0].mxu0
      %v3383 = vadd.f32 0.0, %v3382
      %v3384 = vpop.f32.mrb[0].mxu0
      %3385 = vmatprep.mubr.bf16.mxu0 0
      %3386 = vmatmul.mubr.bf16.gmra.mrb[0].mxu0 %v3288
      %v3387 = vpop.f32.mrb[0].mxu0
      %v3388 = vadd.f32 0.0, %v3387
      %v3389 = vpop.f32.mrb[0].mxu0
      %v3390 = vpop.f32.mrb[0].mxu0
      %v3391 = vadd.f32 0.0, %v3390
      %v3392 = vpop.f32.mrb[0].mxu0
      %3393 = vmatprep.mubr.bf16.mxu0 0
      %3394 = vmatmul.mubr.bf16.gmra.mrb[0].mxu0 %v3291
      %v3395 = vpop.f32.mrb[0].mxu0
      %v3396 = vadd.f32 0.0, %v3395
      %v3397 = vpop.f32.mrb[0].mxu0
      %v3398 = vpop.f32.mrb[0].mxu0
      %v3399 = vadd.f32 0.0, %v3398
      %v3400 = vpop.f32.mrb[0].mxu0
      %3401 = vmatprep.mubr.bf16.mxu0 0
      %3402 = vmatmul.mubr.bf16.gmra.mrb[0].mxu0 %v3294
      %v3403 = vpop.f32.mrb[0].mxu0
      %v3404 = vadd.f32 0.0, %v3403
      %v3405 = vpop.f32.mrb[0].mxu0
      %v3406 = vpop.f32.mrb[0].mxu0
      %v3407 = vadd.f32 0.0, %v3406
      %v3408 = vpop.f32.mrb[0].mxu0
      %3409 = vmatprep.mubr.bf16.mxu0 0
      %3410 = vmatmul.mubr.bf16.gmra.mrb[0].mxu0 %v3297
      %v3411 = vpop.f32.mrb[0].mxu0
      %v3412 = vadd.f32 0.0, %v3411
      %v3413 = vpop.f32.mrb[0].mxu0
      %v3414 = vpop.f32.mrb[0].mxu0
      %v3415 = vadd.f32 0.0, %v3414
      %v3416 = vpop.f32.mrb[0].mxu0
      %3417 = vmatprep.mubr.bf16.mxu0 0
      %3418 = vmatmul.mubr.bf16.gmra.mrb[0].mxu0 %v3300
      %v3419 = vpop.f32.mrb[0].mxu0
      %v3420 = vadd.f32 0.0, %v3419
      %v3421 = vpop.f32.mrb[0].mxu0
      %v3422 = vpop.f32.mrb[0].mxu0
      %v3423 = vadd.f32 0.0, %v3422
      %v3424 = vpop.f32.mrb[0].mxu0
      %3425 = vmatprep.mubr.bf16.mxu0 0
      %3426 = vmatmul.mubr.bf16.gmra.mrb[0].mxu0 %v3303
      %v3427 = vpop.f32.mrb[0].mxu0
      %v3428 = vadd.f32 0.0, %v3427
      %v3429 = vpop.f32.mrb[0].mxu0
      %v3430 = vpop.f32.mrb[0].mxu0
      %v3431 = vadd.f32 0.0, %v3430
      %v3432 = vpop.f32.mrb[0].mxu0
      %3433 = vmatprep.mubr.bf16.mxu0 0
      %3434 = vmatmul.mubr.bf16.gmra.mrb[0].mxu0 %v3306
      %v3435 = vpop.f32.mrb[0].mxu0
      %v3436 = vadd.f32 0.0, %v3435
      %v3437 = vpop.f32.mrb[0].mxu0
      %v3438 = vpop.f32.mrb[0].mxu0
      %v3439 = vadd.f32 0.0, %v3438
      %v3440 = vpop.f32.mrb[0].mxu0
      %3441 = vmatprep.mubr.bf16.mxu0 0
      %3442 = vmatmul.mubr.bf16.gmra.mrb[0].mxu0 %v3309
      %v3443 = vpop.f32.mrb[0].mxu0
      %v3444 = vadd.f32 0.0, %v3443
      %v3445 = vpop.f32.mrb[0].mxu0
      %v3446 = vpop.f32.mrb[0].mxu0
      %v3447 = vadd.f32 0.0, %v3446
      %v3448 = vpop.f32.mrb[0].mxu0
      %3449 = vmatprep.mubr.bf16.mxu0 0
      %3450 = vmatmul.mubr.bf16.gmra.mrb[0].mxu0 %v3312
      %v3451 = vpop.f32.mrb[0].mxu0
      %v3452 = vadd.f32 0.0, %v3451
      %v3453 = vpop.f32.mrb[0].mxu0
      %v3454 = vpop.f32.mrb[0].mxu0
      %v3455 = vadd.f32 0.0, %v3454
      %v3456 = vpop.f32.mrb[0].mxu0
      %3457 = vmatprep.mubr.bf16.mxu0 0
      %3458 = vmatmul.mubr.bf16.gmra.mrb[0].mxu0 %v3315
      %v3459 = vpop.f32.mrb[0].mxu0
      %v3460 = vadd.f32 0.0, %v3459
      %v3461 = vpop.f32.mrb[0].mxu0
      %v3462 = vpop.f32.mrb[0].mxu0
      %v3463 = vadd.f32 0.0, %v3462
      %v3464 = vpop.f32.mrb[0].mxu0
      %3465 = vmatprep.mubr.bf16.mxu0 0
      %3466 = vmatmul.mubr.bf16.gmra.mrb[0].mxu0 %v3318
      %v3467 = vpop.f32.mrb[0].mxu0
      %v3468 = vadd.f32 0.0, %v3467
      %v3469 = vpop.f32.mrb[0].mxu0
      %v3470 = vpop.f32.mrb[0].mxu0
      %v3471 = vadd.f32 0.0, %v3470
      %v3472 = vpop.f32.mrb[0].mxu0
      %3473 = vmatprep.mubr.bf16.mxu0 0
      %3474 = vmatmul.mubr.bf16.gmra.mrb[0].mxu0 %v3321
      %v3475 = vpop.f32.mrb[0].mxu0
      %v3476 = vadd.f32 0.0, %v3475
      %v3477 = vpop.f32.mrb[0].mxu0
      %v3478 = vpop.f32.mrb[0].mxu0
      %v3479 = vadd.f32 0.0, %v3478
      %v3480 = vpop.f32.mrb[0].mxu0
      %3481 = vmatprep.mubr.bf16.mxu0 0
      %3482 = vmatmul.mubr.bf16.gmra.mrb[0].mxu0 %v3324
      %v3483 = vpop.f32.mrb[0].mxu0
      %v3484 = vadd.f32 0.0, %v3483
      %v3485 = vpop.f32.mrb[0].mxu0
      %v3486 = vpop.f32.mrb[0].mxu0
      %v3487 = vadd.f32 0.0, %v3486
      %v3488 = vpop.f32.mrb[0].mxu0
      %3489 = vdwg.mxu0
      %v3490 = vld [vmem:[#allocation2] sm:$0xff]
      %v3491 = vld [vmem:[#allocation2 + $0x8] sm:$0xff]
      %v3492 = vld [vmem:[#allocation2 + $0x10] sm:$0xff]
      %v3493 = vld [vmem:[#allocation2 + $0x18] sm:$0xff]
      %v3494 = vld [vmem:[#allocation2 + $0x20] sm:$0xff]
      %v3495 = vld [vmem:[#allocation2 + $0x28] sm:$0xff]
      %v3496 = vld [vmem:[#allocation2 + $0x30] sm:$0xff]
      %v3497 = vld [vmem:[#allocation2 + $0x38] sm:$0xff]
      %v3498 = vld [vmem:[#allocation2 + $0x40] sm:$0xff]
      %v3499 = vld [vmem:[#allocation2 + $0x48] sm:$0xff]
      %v3500 = vld [vmem:[#allocation2 + $0x50] sm:$0xff]
      %v3501 = vld [vmem:[#allocation2 + $0x58] sm:$0xff]
      %v3502 = vld [vmem:[#allocation2 + $0x60] sm:$0xff]
      %v3503 = vld [vmem:[#allocation2 + $0x68] sm:$0xff]
      %v3504 = vld [vmem:[#allocation2 + $0x70] sm:$0xff]
      %v3505 = vld [vmem:[#allocation2 + $0x78] sm:$0xff]
      %v3506 = vld [vmem:[#allocation2 + $0x80] sm:$0xff]
      %v3507 = vld [vmem:[#allocation2 + $0x88] sm:$0xff]
      %v3508 = vld [vmem:[#allocation2 + $0x90] sm:$0xff]
      %v3509 = vld [vmem:[#allocation2 + $0x98] sm:$0xff]
      %v3510 = vld [vmem:[#allocation2 + $0xa0] sm:$0xff]
      %v3511 = vld [vmem:[#allocation2 + $0xa8] sm:$0xff]
      %v3512 = vld [vmem:[#allocation2 + $0xb0] sm:$0xff]
      %v3513 = vld [vmem:[#allocation2 + $0xb8] sm:$0xff]
      %v3514 = vld [vmem:[#allocation2 + $0xc0] sm:$0xff]
      %v3515 = vld [vmem:[#allocation2 + $0xc8] sm:$0xff]
      %v3516 = vld [vmem:[#allocation2 + $0xd0] sm:$0xff]
      %v3517 = vld [vmem:[#allocation2 + $0xd8] sm:$0xff]
      %v3518 = vld [vmem:[#allocation2 + $0xe0] sm:$0xff]
      %v3519 = vld [vmem:[#allocation2 + $0xe8] sm:$0xff]
      %v3520 = vld [vmem:[#allocation2 + $0xf0] sm:$0xff]
      %v3521 = vld [vmem:[#allocation2 + $0xf8] sm:$0xff]
      %v3522 = vadd.f32 %v3490, %v3364
      %v3523 = vadd.f32 %v3491, %v3367
      %v3524 = vadd.f32 %v3492, %v3372
      %v3525 = vadd.f32 %v3493, %v3375
      %v3526 = vadd.f32 %v3494, %v3380
      %v3527 = vadd.f32 %v3495, %v3383
      %v3528 = vadd.f32 %v3496, %v3388
      %v3529 = vadd.f32 %v3497, %v3391
      %v3530 = vadd.f32 %v3498, %v3396
      %v3531 = vadd.f32 %v3499, %v3399
      %v3532 = vadd.f32 %v3500, %v3404
      %v3533 = vadd.f32 %v3501, %v3407
      %v3534 = vadd.f32 %v3502, %v3412
      %v3535 = vadd.f32 %v3503, %v3415
      %v3536 = vadd.f32 %v3504, %v3420
      %v3537 = vadd.f32 %v3505, %v3423
      %v3538 = vadd.f32 %v3506, %v3428
      %v3539 = vadd.f32 %v3507, %v3431
      %v3540 = vadd.f32 %v3508, %v3436
      %v3541 = vadd.f32 %v3509, %v3439
      %v3542 = vadd.f32 %v3510, %v3444
      %v3543 = vadd.f32 %v3511, %v3447
      %v3544 = vadd.f32 %v3512, %v3452
      %v3545 = vadd.f32 %v3513, %v3455
      %v3546 = vadd.f32 %v3514, %v3460
      %v3547 = vadd.f32 %v3515, %v3463
      %v3548 = vadd.f32 %v3516, %v3468
      %v3549 = vadd.f32 %v3517, %v3471
      %v3550 = vadd.f32 %v3518, %v3476
      %v3551 = vadd.f32 %v3519, %v3479
      %v3552 = vadd.f32 %v3520, %v3484
      %v3553 = vadd.f32 %v3521, %v3487
      %3554 = vst.msk [vmem:[#allocation2] sm:$0xff] %vm361, %v3522
      %3555 = vst.msk [vmem:[#allocation2 + $0x8] sm:$0xff] %vm361, %v3523
      %3556 = vst.msk [vmem:[#allocation2 + $0x10] sm:$0xff] %vm361, %v3524
      %3557 = vst.msk [vmem:[#allocation2 + $0x18] sm:$0xff] %vm361, %v3525
      %3558 = vst.msk [vmem:[#allocation2 + $0x20] sm:$0xff] %vm361, %v3526
      %3559 = vst.msk [vmem:[#allocation2 + $0x28] sm:$0xff] %vm361, %v3527
      %3560 = vst.msk [vmem:[#allocation2 + $0x30] sm:$0xff] %vm361, %v3528
      %3561 = vst.msk [vmem:[#allocation2 + $0x38] sm:$0xff] %vm361, %v3529
      %3562 = vst.msk [vmem:[#allocation2 + $0x40] sm:$0xff] %vm361, %v3530
      %3563 = vst.msk [vmem:[#allocation2 + $0x48] sm:$0xff] %vm361, %v3531
      %3564 = vst.msk [vmem:[#allocation2 + $0x50] sm:$0xff] %vm361, %v3532
      %3565 = vst.msk [vmem:[#allocation2 + $0x58] sm:$0xff] %vm361, %v3533
      %3566 = vst.msk [vmem:[#allocation2 + $0x60] sm:$0xff] %vm361, %v3534
      %3567 = vst.msk [vmem:[#allocation2 + $0x68] sm:$0xff] %vm361, %v3535
      %3568 = vst.msk [vmem:[#allocation2 + $0x70] sm:$0xff] %vm361, %v3536
      %3569 = vst.msk [vmem:[#allocation2 + $0x78] sm:$0xff] %vm361, %v3537
      %3570 = vst.msk [vmem:[#allocation2 + $0x80] sm:$0xff] %vm361, %v3538
      %3571 = vst.msk [vmem:[#allocation2 + $0x88] sm:$0xff] %vm361, %v3539
      %3572 = vst.msk [vmem:[#allocation2 + $0x90] sm:$0xff] %vm361, %v3540
      %3573 = vst.msk [vmem:[#allocation2 + $0x98] sm:$0xff] %vm361, %v3541
      %3574 = vst.msk [vmem:[#allocation2 + $0xa0] sm:$0xff] %vm361, %v3542
      %3575 = vst.msk [vmem:[#allocation2 + $0xa8] sm:$0xff] %vm361, %v3543
      %3576 = vst.msk [vmem:[#allocation2 + $0xb0] sm:$0xff] %vm361, %v3544
      %3577 = vst.msk [vmem:[#allocation2 + $0xb8] sm:$0xff] %vm361, %v3545
      %3578 = vst.msk [vmem:[#allocation2 + $0xc0] sm:$0xff] %vm361, %v3546
      %3579 = vst.msk [vmem:[#allocation2 + $0xc8] sm:$0xff] %vm361, %v3547
      %3580 = vst.msk [vmem:[#allocation2 + $0xd0] sm:$0xff] %vm361, %v3548
      %3581 = vst.msk [vmem:[#allocation2 + $0xd8] sm:$0xff] %vm361, %v3549
      %3582 = vst.msk [vmem:[#allocation2 + $0xe0] sm:$0xff] %vm361, %v3550
      %3583 = vst.msk [vmem:[#allocation2 + $0xe8] sm:$0xff] %vm361, %v3551
      %3584 = vst.msk [vmem:[#allocation2 + $0xf0] sm:$0xff] %vm361, %v3552
      %3585 = vst.msk [vmem:[#allocation2 + $0xf8] sm:$0xff] %vm361, %v3553
      %s3586 = sadd.s32 %s2735, 80
      %s3587 = smul.addr %s3586, 4
      %s3588 = scalar_lea.vmem %s220, %s3587
      %v3589 = vld [vmem:[%s3588] sm:$0xf]
      %v3590 = vld [vmem:[%s3588 + $0x4] sm:$0xf]
      %v3591 = vld [vmem:[%s3588 + $0x8] sm:$0xf]
      %v3592 = vld [vmem:[%s3588 + $0xc] sm:$0xf]
      %v3593 = vld [vmem:[%s3588 + $0x10] sm:$0xf]
      %v3594 = vld [vmem:[%s3588 + $0x14] sm:$0xf]
      %v3595 = vld [vmem:[%s3588 + $0x18] sm:$0xf]
      %v3596 = vld [vmem:[%s3588 + $0x1c] sm:$0xf]
      %v3597 = vld [vmem:[%s3588 + $0x20] sm:$0xf]
      %v3598 = vld [vmem:[%s3588 + $0x24] sm:$0xf]
      %v3599 = vld [vmem:[%s3588 + $0x28] sm:$0xf]
      %v3600 = vld [vmem:[%s3588 + $0x2c] sm:$0xf]
      %v3601 = vld [vmem:[%s3588 + $0x30] sm:$0xf]
      %v3602 = vld [vmem:[%s3588 + $0x34] sm:$0xf]
      %v3603 = vld [vmem:[%s3588 + $0x38] sm:$0xf]
      %v3604 = vld [vmem:[%s3588 + $0x3c] sm:$0xf]
      %v3605 = vld [vmem:[%s3588 + $0x40] sm:$0xf]
      %v3606 = vld [vmem:[%s3588 + $0x44] sm:$0xf]
      %v3607 = vld [vmem:[%s3588 + $0x48] sm:$0xf]
      %v3608 = vld [vmem:[%s3588 + $0x4c] sm:$0xf]
      %v3609 = vld [vmem:[%s3588 + $0x50] sm:$0xf]
      %v3610 = vld [vmem:[%s3588 + $0x54] sm:$0xf]
      %v3611 = vld [vmem:[%s3588 + $0x58] sm:$0xf]
      %v3612 = vld [vmem:[%s3588 + $0x5c] sm:$0xf]
      %v3613 = vld [vmem:[%s3588 + $0x60] sm:$0xf]
      %v3614 = vld [vmem:[%s3588 + $0x64] sm:$0xf]
      %v3615 = vld [vmem:[%s3588 + $0x68] sm:$0xf]
      %v3616 = vld [vmem:[%s3588 + $0x6c] sm:$0xf]
      %v3617 = vld [vmem:[%s3588 + $0x70] sm:$0xf]
      %v3618 = vld [vmem:[%s3588 + $0x74] sm:$0xf]
      %v3619 = vld [vmem:[%s3588 + $0x78] sm:$0xf]
      %v3620 = vld [vmem:[%s3588 + $0x7c] sm:$0xf]
      %s3621 = scalar_lea.vmem %s224, 16
      %v3622 = vld [vmem:[%s3621] sm:$0x3]
      %v3655 = vunpack.c.l.b16 %v3589
      %v3656 = vunpack.c.l.b16 %v3590
      %v3657 = vunpack.c.l.b16 %v3591
      %v3658 = vunpack.c.l.b16 %v3592
      %v3659 = vunpack.c.l.b16 %v3593
      %v3660 = vunpack.c.l.b16 %v3594
      %v3661 = vunpack.c.l.b16 %v3595
      %v3662 = vunpack.c.l.b16 %v3596
      %v3663 = vunpack.c.l.b16 %v3597
      %v3664 = vunpack.c.l.b16 %v3598
      %v3665 = vunpack.c.l.b16 %v3599
      %v3666 = vunpack.c.l.b16 %v3600
      %v3667 = vunpack.c.l.b16 %v3601
      %v3668 = vunpack.c.l.b16 %v3602
      %v3669 = vunpack.c.l.b16 %v3603
      %v3670 = vunpack.c.l.b16 %v3604
      %v3671 = vunpack.c.l.b16 %v3605
      %v3672 = vunpack.c.l.b16 %v3606
      %v3673 = vunpack.c.l.b16 %v3607
      %v3674 = vunpack.c.l.b16 %v3608
      %v3675 = vunpack.c.l.b16 %v3609
      %v3676 = vunpack.c.l.b16 %v3610
      %v3677 = vunpack.c.l.b16 %v3611
      %v3678 = vunpack.c.l.b16 %v3612
      %v3679 = vunpack.c.l.b16 %v3613
      %v3680 = vunpack.c.l.b16 %v3614
      %v3681 = vunpack.c.l.b16 %v3615
      %v3682 = vunpack.c.l.b16 %v3616
      %v3683 = vunpack.c.l.b16 %v3617
      %v3684 = vunpack.c.l.b16 %v3618
      %v3685 = vunpack.c.l.b16 %v3619
      %v3686 = vunpack.c.l.b16 %v3620
      %v3687 = vpack.c.b16 %v3656, %v3655
      %v3688 = vpack.c.b16 %v3658, %v3657
      %v3689 = vpack.c.b16 %v3660, %v3659
      %v3690 = vpack.c.b16 %v3662, %v3661
      %v3691 = vpack.c.b16 %v3664, %v3663
      %v3692 = vpack.c.b16 %v3666, %v3665
      %v3693 = vpack.c.b16 %v3668, %v3667
      %v3694 = vpack.c.b16 %v3670, %v3669
      %v3695 = vpack.c.b16 %v3672, %v3671
      %v3696 = vpack.c.b16 %v3674, %v3673
      %v3697 = vpack.c.b16 %v3676, %v3675
      %v3698 = vpack.c.b16 %v3678, %v3677
      %v3699 = vpack.c.b16 %v3680, %v3679
      %v3700 = vpack.c.b16 %v3682, %v3681
      %v3701 = vpack.c.b16 %v3684, %v3683
      %v3702 = vpack.c.b16 %v3686, %v3685
      %v3704 = vsel %vm361, %v3687, 0
      %v3707 = vsel %vm361, %v3688, 0
      %v3710 = vsel %vm361, %v3689, 0
      %v3713 = vsel %vm361, %v3690, 0
      %v3716 = vsel %vm361, %v3691, 0
      %v3719 = vsel %vm361, %v3692, 0
      %v3722 = vsel %vm361, %v3693, 0
      %v3725 = vsel %vm361, %v3694, 0
      %v3728 = vsel %vm361, %v3695, 0
      %v3731 = vsel %vm361, %v3696, 0
      %v3734 = vsel %vm361, %v3697, 0
      %v3737 = vsel %vm361, %v3698, 0
      %v3740 = vsel %vm361, %v3699, 0
      %v3743 = vsel %vm361, %v3700, 0
      %v3746 = vsel %vm361, %v3701, 0
      %v3749 = vsel %vm361, %v3702, 0
      %v3752 = vsel %vm410, %v3622, 0
      %3754 = vmatprep.subr.bf16.mxu0 0
      %3755 = vmatpush1.bf16.msra.mxu0 %v3752
      %3756 = vmatprep.subr.bf16.mxu0 0
      %3757 = vmatpush1.bf16.msra.mxu0 0
      %3758 = vmatprep.subr.bf16.mxu0 0
      %3759 = vmatpush1.bf16.msra.mxu0 0
      %3760 = vmatprep.subr.bf16.mxu0 0
      %3761 = vmatpush1.bf16.msra.mxu0 0
      %3762 = vmatprep.subr.bf16.mxu0 0
      %3763 = vmatpush1.bf16.msra.mxu0 0
      %3764 = vmatprep.subr.bf16.mxu0 0
      %3765 = vmatpush1.bf16.msra.mxu0 0
      %3766 = vmatprep.subr.bf16.mxu0 0
      %3767 = vmatpush1.bf16.msra.mxu0 0
      %3768 = vmatprep.subr.bf16.mxu0 0
      %3769 = vmatpush1.bf16.msra.mxu0 0
      %3770 = vmatprep.subr.bf16.mxu0 0
      %3771 = vmatpush1.bf16.msra.mxu0 0
      %3772 = vmatprep.subr.bf16.mxu0 0
      %3773 = vmatpush1.bf16.msra.mxu0 0
      %3774 = vmatprep.subr.bf16.mxu0 0
      %3775 = vmatpush1.bf16.msra.mxu0 0
      %3776 = vmatprep.subr.bf16.mxu0 0
      %3777 = vmatpush1.bf16.msra.mxu0 0
      %3778 = vmatprep.subr.bf16.mxu0 0
      %3779 = vmatpush1.bf16.msra.mxu0 0
      %3780 = vmatprep.subr.bf16.mxu0 0
      %3781 = vmatpush1.bf16.msra.mxu0 0
      %3782 = vmatprep.subr.bf16.mxu0 0
      %3783 = vmatpush1.bf16.msra.mxu0 0
      %3784 = vmatprep.subr.bf16.mxu0 0
      %3785 = vmatpush1.bf16.msra.mxu0 0
      %3786 = vmatprep.mubr.bf16.mxu0 0
      %3787 = vmatmul.mubr.bf16.gmra.mrb[0].mxu0 %v3704
      %v3788 = vpop.f32.mrb[0].mxu0
      %v3789 = vadd.f32 0.0, %v3788
      %v3790 = vpop.f32.mrb[0].mxu0
      %v3791 = vpop.f32.mrb[0].mxu0
      %v3792 = vadd.f32 0.0, %v3791
      %v3793 = vpop.f32.mrb[0].mxu0
      %3794 = vmatprep.mubr.bf16.mxu0 0
      %3795 = vmatmul.mubr.bf16.gmra.mrb[0].mxu0 %v3707
      %v3796 = vpop.f32.mrb[0].mxu0
      %v3797 = vadd.f32 0.0, %v3796
      %v3798 = vpop.f32.mrb[0].mxu0
      %v3799 = vpop.f32.mrb[0].mxu0
      %v3800 = vadd.f32 0.0, %v3799
      %v3801 = vpop.f32.mrb[0].mxu0
      %3802 = vmatprep.mubr.bf16.mxu0 0
      %3803 = vmatmul.mubr.bf16.gmra.mrb[0].mxu0 %v3710
      %v3804 = vpop.f32.mrb[0].mxu0
      %v3805 = vadd.f32 0.0, %v3804
      %v3806 = vpop.f32.mrb[0].mxu0
      %v3807 = vpop.f32.mrb[0].mxu0
      %v3808 = vadd.f32 0.0, %v3807
      %v3809 = vpop.f32.mrb[0].mxu0
      %3810 = vmatprep.mubr.bf16.mxu0 0
      %3811 = vmatmul.mubr.bf16.gmra.mrb[0].mxu0 %v3713
      %v3812 = vpop.f32.mrb[0].mxu0
      %v3813 = vadd.f32 0.0, %v3812
      %v3814 = vpop.f32.mrb[0].mxu0
      %v3815 = vpop.f32.mrb[0].mxu0
      %v3816 = vadd.f32 0.0, %v3815
      %v3817 = vpop.f32.mrb[0].mxu0
      %3818 = vmatprep.mubr.bf16.mxu0 0
      %3819 = vmatmul.mubr.bf16.gmra.mrb[0].mxu0 %v3716
      %v3820 = vpop.f32.mrb[0].mxu0
      %v3821 = vadd.f32 0.0, %v3820
      %v3822 = vpop.f32.mrb[0].mxu0
      %v3823 = vpop.f32.mrb[0].mxu0
      %v3824 = vadd.f32 0.0, %v3823
      %v3825 = vpop.f32.mrb[0].mxu0
      %3826 = vmatprep.mubr.bf16.mxu0 0
      %3827 = vmatmul.mubr.bf16.gmra.mrb[0].mxu0 %v3719
      %v3828 = vpop.f32.mrb[0].mxu0
      %v3829 = vadd.f32 0.0, %v3828
      %v3830 = vpop.f32.mrb[0].mxu0
      %v3831 = vpop.f32.mrb[0].mxu0
      %v3832 = vadd.f32 0.0, %v3831
      %v3833 = vpop.f32.mrb[0].mxu0
      %3834 = vmatprep.mubr.bf16.mxu0 0
      %3835 = vmatmul.mubr.bf16.gmra.mrb[0].mxu0 %v3722
      %v3836 = vpop.f32.mrb[0].mxu0
      %v3837 = vadd.f32 0.0, %v3836
      %v3838 = vpop.f32.mrb[0].mxu0
      %v3839 = vpop.f32.mrb[0].mxu0
      %v3840 = vadd.f32 0.0, %v3839
      %v3841 = vpop.f32.mrb[0].mxu0
      %3842 = vmatprep.mubr.bf16.mxu0 0
      %3843 = vmatmul.mubr.bf16.gmra.mrb[0].mxu0 %v3725
      %v3844 = vpop.f32.mrb[0].mxu0
      %v3845 = vadd.f32 0.0, %v3844
      %v3846 = vpop.f32.mrb[0].mxu0
      %v3847 = vpop.f32.mrb[0].mxu0
      %v3848 = vadd.f32 0.0, %v3847
      %v3849 = vpop.f32.mrb[0].mxu0
      %3850 = vmatprep.mubr.bf16.mxu0 0
      %3851 = vmatmul.mubr.bf16.gmra.mrb[0].mxu0 %v3728
      %v3852 = vpop.f32.mrb[0].mxu0
      %v3853 = vadd.f32 0.0, %v3852
      %v3854 = vpop.f32.mrb[0].mxu0
      %v3855 = vpop.f32.mrb[0].mxu0
      %v3856 = vadd.f32 0.0, %v3855
      %v3857 = vpop.f32.mrb[0].mxu0
      %3858 = vmatprep.mubr.bf16.mxu0 0
      %3859 = vmatmul.mubr.bf16.gmra.mrb[0].mxu0 %v3731
      %v3860 = vpop.f32.mrb[0].mxu0
      %v3861 = vadd.f32 0.0, %v3860
      %v3862 = vpop.f32.mrb[0].mxu0
      %v3863 = vpop.f32.mrb[0].mxu0
      %v3864 = vadd.f32 0.0, %v3863
      %v3865 = vpop.f32.mrb[0].mxu0
      %3866 = vmatprep.mubr.bf16.mxu0 0
      %3867 = vmatmul.mubr.bf16.gmra.mrb[0].mxu0 %v3734
      %v3868 = vpop.f32.mrb[0].mxu0
      %v3869 = vadd.f32 0.0, %v3868
      %v3870 = vpop.f32.mrb[0].mxu0
      %v3871 = vpop.f32.mrb[0].mxu0
      %v3872 = vadd.f32 0.0, %v3871
      %v3873 = vpop.f32.mrb[0].mxu0
      %3874 = vmatprep.mubr.bf16.mxu0 0
      %3875 = vmatmul.mubr.bf16.gmra.mrb[0].mxu0 %v3737
      %v3876 = vpop.f32.mrb[0].mxu0
      %v3877 = vadd.f32 0.0, %v3876
      %v3878 = vpop.f32.mrb[0].mxu0
      %v3879 = vpop.f32.mrb[0].mxu0
      %v3880 = vadd.f32 0.0, %v3879
      %v3881 = vpop.f32.mrb[0].mxu0
      %3882 = vmatprep.mubr.bf16.mxu0 0
      %3883 = vmatmul.mubr.bf16.gmra.mrb[0].mxu0 %v3740
      %v3884 = vpop.f32.mrb[0].mxu0
      %v3885 = vadd.f32 0.0, %v3884
      %v3886 = vpop.f32.mrb[0].mxu0
      %v3887 = vpop.f32.mrb[0].mxu0
      %v3888 = vadd.f32 0.0, %v3887
      %v3889 = vpop.f32.mrb[0].mxu0
      %3890 = vmatprep.mubr.bf16.mxu0 0
      %3891 = vmatmul.mubr.bf16.gmra.mrb[0].mxu0 %v3743
      %v3892 = vpop.f32.mrb[0].mxu0
      %v3893 = vadd.f32 0.0, %v3892
      %v3894 = vpop.f32.mrb[0].mxu0
      %v3895 = vpop.f32.mrb[0].mxu0
      %v3896 = vadd.f32 0.0, %v3895
      %v3897 = vpop.f32.mrb[0].mxu0
      %3898 = vmatprep.mubr.bf16.mxu0 0
      %3899 = vmatmul.mubr.bf16.gmra.mrb[0].mxu0 %v3746
      %v3900 = vpop.f32.mrb[0].mxu0
      %v3901 = vadd.f32 0.0, %v3900
      %v3902 = vpop.f32.mrb[0].mxu0
      %v3903 = vpop.f32.mrb[0].mxu0
      %v3904 = vadd.f32 0.0, %v3903
      %v3905 = vpop.f32.mrb[0].mxu0
      %3906 = vmatprep.mubr.bf16.mxu0 0
      %3907 = vmatmul.mubr.bf16.gmra.mrb[0].mxu0 %v3749
      %v3908 = vpop.f32.mrb[0].mxu0
      %v3909 = vadd.f32 0.0, %v3908
      %v3910 = vpop.f32.mrb[0].mxu0
      %v3911 = vpop.f32.mrb[0].mxu0
      %v3912 = vadd.f32 0.0, %v3911
      %v3913 = vpop.f32.mrb[0].mxu0
      %3914 = vdwg.mxu0
      %v3915 = vld [vmem:[#allocation2] sm:$0xff]
      %v3916 = vld [vmem:[#allocation2 + $0x8] sm:$0xff]
      %v3917 = vld [vmem:[#allocation2 + $0x10] sm:$0xff]
      %v3918 = vld [vmem:[#allocation2 + $0x18] sm:$0xff]
      %v3919 = vld [vmem:[#allocation2 + $0x20] sm:$0xff]
      %v3920 = vld [vmem:[#allocation2 + $0x28] sm:$0xff]
      %v3921 = vld [vmem:[#allocation2 + $0x30] sm:$0xff]
      %v3922 = vld [vmem:[#allocation2 + $0x38] sm:$0xff]
      %v3923 = vld [vmem:[#allocation2 + $0x40] sm:$0xff]
      %v3924 = vld [vmem:[#allocation2 + $0x48] sm:$0xff]
      %v3925 = vld [vmem:[#allocation2 + $0x50] sm:$0xff]
      %v3926 = vld [vmem:[#allocation2 + $0x58] sm:$0xff]
      %v3927 = vld [vmem:[#allocation2 + $0x60] sm:$0xff]
      %v3928 = vld [vmem:[#allocation2 + $0x68] sm:$0xff]
      %v3929 = vld [vmem:[#allocation2 + $0x70] sm:$0xff]
      %v3930 = vld [vmem:[#allocation2 + $0x78] sm:$0xff]
      %v3931 = vld [vmem:[#allocation2 + $0x80] sm:$0xff]
      %v3932 = vld [vmem:[#allocation2 + $0x88] sm:$0xff]
      %v3933 = vld [vmem:[#allocation2 + $0x90] sm:$0xff]
      %v3934 = vld [vmem:[#allocation2 + $0x98] sm:$0xff]
      %v3935 = vld [vmem:[#allocation2 + $0xa0] sm:$0xff]
      %v3936 = vld [vmem:[#allocation2 + $0xa8] sm:$0xff]
      %v3937 = vld [vmem:[#allocation2 + $0xb0] sm:$0xff]
      %v3938 = vld [vmem:[#allocation2 + $0xb8] sm:$0xff]
      %v3939 = vld [vmem:[#allocation2 + $0xc0] sm:$0xff]
      %v3940 = vld [vmem:[#allocation2 + $0xc8] sm:$0xff]
      %v3941 = vld [vmem:[#allocation2 + $0xd0] sm:$0xff]
      %v3942 = vld [vmem:[#allocation2 + $0xd8] sm:$0xff]
      %v3943 = vld [vmem:[#allocation2 + $0xe0] sm:$0xff]
      %v3944 = vld [vmem:[#allocation2 + $0xe8] sm:$0xff]
      %v3945 = vld [vmem:[#allocation2 + $0xf0] sm:$0xff]
      %v3946 = vld [vmem:[#allocation2 + $0xf8] sm:$0xff]
      %v3947 = vadd.f32 %v3915, %v3789
      %v3948 = vadd.f32 %v3916, %v3792
      %v3949 = vadd.f32 %v3917, %v3797
      %v3950 = vadd.f32 %v3918, %v3800
      %v3951 = vadd.f32 %v3919, %v3805
      %v3952 = vadd.f32 %v3920, %v3808
      %v3953 = vadd.f32 %v3921, %v3813
      %v3954 = vadd.f32 %v3922, %v3816
      %v3955 = vadd.f32 %v3923, %v3821
      %v3956 = vadd.f32 %v3924, %v3824
      %v3957 = vadd.f32 %v3925, %v3829
      %v3958 = vadd.f32 %v3926, %v3832
      %v3959 = vadd.f32 %v3927, %v3837
      %v3960 = vadd.f32 %v3928, %v3840
      %v3961 = vadd.f32 %v3929, %v3845
      %v3962 = vadd.f32 %v3930, %v3848
      %v3963 = vadd.f32 %v3931, %v3853
      %v3964 = vadd.f32 %v3932, %v3856
      %v3965 = vadd.f32 %v3933, %v3861
      %v3966 = vadd.f32 %v3934, %v3864
      %v3967 = vadd.f32 %v3935, %v3869
      %v3968 = vadd.f32 %v3936, %v3872
      %v3969 = vadd.f32 %v3937, %v3877
      %v3970 = vadd.f32 %v3938, %v3880
      %v3971 = vadd.f32 %v3939, %v3885
      %v3972 = vadd.f32 %v3940, %v3888
      %v3973 = vadd.f32 %v3941, %v3893
      %v3974 = vadd.f32 %v3942, %v3896
      %v3975 = vadd.f32 %v3943, %v3901
      %v3976 = vadd.f32 %v3944, %v3904
      %v3977 = vadd.f32 %v3945, %v3909
      %v3978 = vadd.f32 %v3946, %v3912
      %3979 = vst.msk [vmem:[#allocation2] sm:$0xff] %vm361, %v3947
      %3980 = vst.msk [vmem:[#allocation2 + $0x8] sm:$0xff] %vm361, %v3948
      %3981 = vst.msk [vmem:[#allocation2 + $0x10] sm:$0xff] %vm361, %v3949
      %3982 = vst.msk [vmem:[#allocation2 + $0x18] sm:$0xff] %vm361, %v3950
      %3983 = vst.msk [vmem:[#allocation2 + $0x20] sm:$0xff] %vm361, %v3951
      %3984 = vst.msk [vmem:[#allocation2 + $0x28] sm:$0xff] %vm361, %v3952
      %3985 = vst.msk [vmem:[#allocation2 + $0x30] sm:$0xff] %vm361, %v3953
      %3986 = vst.msk [vmem:[#allocation2 + $0x38] sm:$0xff] %vm361, %v3954
      %3987 = vst.msk [vmem:[#allocation2 + $0x40] sm:$0xff] %vm361, %v3955
      %3988 = vst.msk [vmem:[#allocation2 + $0x48] sm:$0xff] %vm361, %v3956
      %3989 = vst.msk [vmem:[#allocation2 + $0x50] sm:$0xff] %vm361, %v3957
      %3990 = vst.msk [vmem:[#allocation2 + $0x58] sm:$0xff] %vm361, %v3958
      %3991 = vst.msk [vmem:[#allocation2 + $0x60] sm:$0xff] %vm361, %v3959
      %3992 = vst.msk [vmem:[#allocation2 + $0x68] sm:$0xff] %vm361, %v3960
      %3993 = vst.msk [vmem:[#allocation2 + $0x70] sm:$0xff] %vm361, %v3961
      %3994 = vst.msk [vmem:[#allocation2 + $0x78] sm:$0xff] %vm361, %v3962
      %3995 = vst.msk [vmem:[#allocation2 + $0x80] sm:$0xff] %vm361, %v3963
      %3996 = vst.msk [vmem:[#allocation2 + $0x88] sm:$0xff] %vm361, %v3964
      %3997 = vst.msk [vmem:[#allocation2 + $0x90] sm:$0xff] %vm361, %v3965
      %3998 = vst.msk [vmem:[#allocation2 + $0x98] sm:$0xff] %vm361, %v3966
      %3999 = vst.msk [vmem:[#allocation2 + $0xa0] sm:$0xff] %vm361, %v3967
      %4000 = vst.msk [vmem:[#allocation2 + $0xa8] sm:$0xff] %vm361, %v3968
      %4001 = vst.msk [vmem:[#allocation2 + $0xb0] sm:$0xff] %vm361, %v3969
      %4002 = vst.msk [vmem:[#allocation2 + $0xb8] sm:$0xff] %vm361, %v3970
      %4003 = vst.msk [vmem:[#allocation2 + $0xc0] sm:$0xff] %vm361, %v3971
      %4004 = vst.msk [vmem:[#allocation2 + $0xc8] sm:$0xff] %vm361, %v3972
      %4005 = vst.msk [vmem:[#allocation2 + $0xd0] sm:$0xff] %vm361, %v3973
      %4006 = vst.msk [vmem:[#allocation2 + $0xd8] sm:$0xff] %vm361, %v3974
      %4007 = vst.msk [vmem:[#allocation2 + $0xe0] sm:$0xff] %vm361, %v3975
      %4008 = vst.msk [vmem:[#allocation2 + $0xe8] sm:$0xff] %vm361, %v3976
      %4009 = vst.msk [vmem:[#allocation2 + $0xf0] sm:$0xff] %vm361, %v3977
      %4010 = vst.msk [vmem:[#allocation2 + $0xf8] sm:$0xff] %vm361, %v3978
      %v4011 = vld [vmem:[#allocation2] sm:$0xff]
      %v4012 = vld [vmem:[#allocation2 + $0x8] sm:$0xff]
      %v4013 = vld [vmem:[#allocation2 + $0x10] sm:$0xff]
      %v4014 = vld [vmem:[#allocation2 + $0x18] sm:$0xff]
      %v4015 = vld [vmem:[#allocation2 + $0x20] sm:$0xff]
      %v4016 = vld [vmem:[#allocation2 + $0x28] sm:$0xff]
      %v4017 = vld [vmem:[#allocation2 + $0x30] sm:$0xff]
      %v4018 = vld [vmem:[#allocation2 + $0x38] sm:$0xff]
      %v4019 = vld [vmem:[#allocation2 + $0x40] sm:$0xff]
      %v4020 = vld [vmem:[#allocation2 + $0x48] sm:$0xff]
      %v4021 = vld [vmem:[#allocation2 + $0x50] sm:$0xff]
      %v4022 = vld [vmem:[#allocation2 + $0x58] sm:$0xff]
      %v4023 = vld [vmem:[#allocation2 + $0x60] sm:$0xff]
      %v4024 = vld [vmem:[#allocation2 + $0x68] sm:$0xff]
      %v4025 = vld [vmem:[#allocation2 + $0x70] sm:$0xff]
      %v4026 = vld [vmem:[#allocation2 + $0x78] sm:$0xff]
      %v4027 = vld [vmem:[#allocation2 + $0x80] sm:$0xff]
      %v4028 = vld [vmem:[#allocation2 + $0x88] sm:$0xff]
      %v4029 = vld [vmem:[#allocation2 + $0x90] sm:$0xff]
      %v4030 = vld [vmem:[#allocation2 + $0x98] sm:$0xff]
      %v4031 = vld [vmem:[#allocation2 + $0xa0] sm:$0xff]
      %v4032 = vld [vmem:[#allocation2 + $0xa8] sm:$0xff]
      %v4033 = vld [vmem:[#allocation2 + $0xb0] sm:$0xff]
      %v4034 = vld [vmem:[#allocation2 + $0xb8] sm:$0xff]
      %v4035 = vld [vmem:[#allocation2 + $0xc0] sm:$0xff]
      %v4036 = vld [vmem:[#allocation2 + $0xc8] sm:$0xff]
      %v4037 = vld [vmem:[#allocation2 + $0xd0] sm:$0xff]
      %v4038 = vld [vmem:[#allocation2 + $0xd8] sm:$0xff]
      %v4039 = vld [vmem:[#allocation2 + $0xe0] sm:$0xff]
      %v4040 = vld [vmem:[#allocation2 + $0xe8] sm:$0xff]
      %v4041 = vld [vmem:[#allocation2 + $0xf0] sm:$0xff]
      %v4042 = vld [vmem:[#allocation2 + $0xf8] sm:$0xff]
      %v4043 = vld [vmem:[%s227] sm:$0x1]
      %v4045 = vlaneseq
      %v4046 = vshrl.u32 %v4045, 7
      %v4047 = vsub.s32 0, %v4046
      %v4048 = vrot.slane %v4043, %v4047
      %v4050 = vadd.f32 %v4011, %v4048
      %v4051 = vadd.f32 %v4012, %v4048
      %v4052 = vadd.f32 %v4013, %v4048
      %v4053 = vadd.f32 %v4014, %v4048
      %v4054 = vadd.f32 %v4015, %v4048
      %v4055 = vadd.f32 %v4016, %v4048
      %v4056 = vadd.f32 %v4017, %v4048
      %v4057 = vadd.f32 %v4018, %v4048
      %v4058 = vadd.f32 %v4019, %v4048
      %v4059 = vadd.f32 %v4020, %v4048
      %v4060 = vadd.f32 %v4021, %v4048
      %v4061 = vadd.f32 %v4022, %v4048
      %v4062 = vadd.f32 %v4023, %v4048
      %v4063 = vadd.f32 %v4024, %v4048
      %v4064 = vadd.f32 %v4025, %v4048
      %v4065 = vadd.f32 %v4026, %v4048
      %v4066 = vadd.f32 %v4027, %v4048
      %v4067 = vadd.f32 %v4028, %v4048
      %v4068 = vadd.f32 %v4029, %v4048
      %v4069 = vadd.f32 %v4030, %v4048
      %v4070 = vadd.f32 %v4031, %v4048
      %v4071 = vadd.f32 %v4032, %v4048
      %v4072 = vadd.f32 %v4033, %v4048
      %v4073 = vadd.f32 %v4034, %v4048
      %v4074 = vadd.f32 %v4035, %v4048
      %v4075 = vadd.f32 %v4036, %v4048
      %v4076 = vadd.f32 %v4037, %v4048
      %v4077 = vadd.f32 %v4038, %v4048
      %v4078 = vadd.f32 %v4039, %v4048
      %v4079 = vadd.f32 %v4040, %v4048
      %v4080 = vadd.f32 %v4041, %v4048
      %v4081 = vadd.f32 %v4042, %v4048
      %v4082 = vmax.f32 %v4050, 0.0
      %v4083 = vmax.f32 %v4051, 0.0
      %v4084 = vmax.f32 %v4052, 0.0
      %v4085 = vmax.f32 %v4053, 0.0
      %v4086 = vmax.f32 %v4054, 0.0
      %v4087 = vmax.f32 %v4055, 0.0
      %v4088 = vmax.f32 %v4056, 0.0
      %v4089 = vmax.f32 %v4057, 0.0
      %v4090 = vmax.f32 %v4058, 0.0
      %v4091 = vmax.f32 %v4059, 0.0
      %v4092 = vmax.f32 %v4060, 0.0
      %v4093 = vmax.f32 %v4061, 0.0
      %v4094 = vmax.f32 %v4062, 0.0
      %v4095 = vmax.f32 %v4063, 0.0
      %v4096 = vmax.f32 %v4064, 0.0
      %v4097 = vmax.f32 %v4065, 0.0
      %v4098 = vmax.f32 %v4066, 0.0
      %v4099 = vmax.f32 %v4067, 0.0
      %v4100 = vmax.f32 %v4068, 0.0
      %v4101 = vmax.f32 %v4069, 0.0
      %v4102 = vmax.f32 %v4070, 0.0
      %v4103 = vmax.f32 %v4071, 0.0
      %v4104 = vmax.f32 %v4072, 0.0
      %v4105 = vmax.f32 %v4073, 0.0
      %v4106 = vmax.f32 %v4074, 0.0
      %v4107 = vmax.f32 %v4075, 0.0
      %v4108 = vmax.f32 %v4076, 0.0
      %v4109 = vmax.f32 %v4077, 0.0
      %v4110 = vmax.f32 %v4078, 0.0
      %v4111 = vmax.f32 %v4079, 0.0
      %v4112 = vmax.f32 %v4080, 0.0
      %v4113 = vmax.f32 %v4081, 0.0
      %v4114 = vpack.c.bf16 %v4083, %v4082
      %v4115 = vpack.c.bf16 %v4085, %v4084
      %v4116 = vpack.c.bf16 %v4087, %v4086
      %v4117 = vpack.c.bf16 %v4089, %v4088
      %v4118 = vpack.c.bf16 %v4091, %v4090
      %v4119 = vpack.c.bf16 %v4093, %v4092
      %v4120 = vpack.c.bf16 %v4095, %v4094
      %v4121 = vpack.c.bf16 %v4097, %v4096
      %v4122 = vpack.c.bf16 %v4099, %v4098
      %v4123 = vpack.c.bf16 %v4101, %v4100
      %v4124 = vpack.c.bf16 %v4103, %v4102
      %v4125 = vpack.c.bf16 %v4105, %v4104
      %v4126 = vpack.c.bf16 %v4107, %v4106
      %v4127 = vpack.c.bf16 %v4109, %v4108
      %v4128 = vpack.c.bf16 %v4111, %v4110
      %v4129 = vpack.c.bf16 %v4113, %v4112
      %v4146 = vunpack.c.l.b16 %v4114
      %v4147 = vunpack.c.h.b16 %v4114
      %v4148 = vunpack.c.l.b16 %v4115
      %v4149 = vunpack.c.h.b16 %v4115
      %v4150 = vunpack.c.l.b16 %v4116
      %v4151 = vunpack.c.h.b16 %v4116
      %v4152 = vunpack.c.l.b16 %v4117
      %v4153 = vunpack.c.h.b16 %v4117
      %v4154 = vunpack.c.l.b16 %v4118
      %v4155 = vunpack.c.h.b16 %v4118
      %v4156 = vunpack.c.l.b16 %v4119
      %v4157 = vunpack.c.h.b16 %v4119
      %v4158 = vunpack.c.l.b16 %v4120
      %v4159 = vunpack.c.h.b16 %v4120
      %v4160 = vunpack.c.l.b16 %v4121
      %v4161 = vunpack.c.h.b16 %v4121
      %v4162 = vunpack.c.l.b16 %v4122
      %v4163 = vunpack.c.h.b16 %v4122
      %v4164 = vunpack.c.l.b16 %v4123
      %v4165 = vunpack.c.h.b16 %v4123
      %v4166 = vunpack.c.l.b16 %v4124
      %v4167 = vunpack.c.h.b16 %v4124
      %v4168 = vunpack.c.l.b16 %v4125
      %v4169 = vunpack.c.h.b16 %v4125
      %v4170 = vunpack.c.l.b16 %v4126
      %v4171 = vunpack.c.h.b16 %v4126
      %v4172 = vunpack.c.l.b16 %v4127
      %v4173 = vunpack.c.h.b16 %v4127
      %v4174 = vunpack.c.l.b16 %v4128
      %v4175 = vunpack.c.h.b16 %v4128
      %v4176 = vunpack.c.l.b16 %v4129
      %v4177 = vunpack.c.h.b16 %v4129
      %v4178 = vpack.c.b16 %v4146, %v4146
      %v4179 = vpack.c.b16 %v4147, %v4147
      %v4180 = vpack.c.b16 %v4148, %v4148
      %v4181 = vpack.c.b16 %v4149, %v4149
      %v4182 = vpack.c.b16 %v4150, %v4150
      %v4183 = vpack.c.b16 %v4151, %v4151
      %v4184 = vpack.c.b16 %v4152, %v4152
      %v4185 = vpack.c.b16 %v4153, %v4153
      %v4186 = vpack.c.b16 %v4154, %v4154
      %v4187 = vpack.c.b16 %v4155, %v4155
      %v4188 = vpack.c.b16 %v4156, %v4156
      %v4189 = vpack.c.b16 %v4157, %v4157
      %v4190 = vpack.c.b16 %v4158, %v4158
      %v4191 = vpack.c.b16 %v4159, %v4159
      %v4192 = vpack.c.b16 %v4160, %v4160
      %v4193 = vpack.c.b16 %v4161, %v4161
      %v4194 = vpack.c.b16 %v4162, %v4162
      %v4195 = vpack.c.b16 %v4163, %v4163
      %v4196 = vpack.c.b16 %v4164, %v4164
      %v4197 = vpack.c.b16 %v4165, %v4165
      %v4198 = vpack.c.b16 %v4166, %v4166
      %v4199 = vpack.c.b16 %v4167, %v4167
      %v4200 = vpack.c.b16 %v4168, %v4168
      %v4201 = vpack.c.b16 %v4169, %v4169
      %v4202 = vpack.c.b16 %v4170, %v4170
      %v4203 = vpack.c.b16 %v4171, %v4171
      %v4204 = vpack.c.b16 %v4172, %v4172
      %v4205 = vpack.c.b16 %v4173, %v4173
      %v4206 = vpack.c.b16 %v4174, %v4174
      %v4207 = vpack.c.b16 %v4175, %v4175
      %v4208 = vpack.c.b16 %v4176, %v4176
      %v4209 = vpack.c.b16 %v4177, %v4177
      %vm4242 = vcmask 27648
      %4243 = vst.msk [vmem:[%s240] sm:$0xf] %vm4242, %v4178
      %4244 = vst.msk [vmem:[%s240 + $0x4] sm:$0xf] %vm4242, %v4179
      %4245 = vst.msk [vmem:[%s240 + $0x8] sm:$0xf] %vm4242, %v4180
      %4246 = vst.msk [vmem:[%s240 + $0xc] sm:$0xf] %vm4242, %v4181
      %4247 = vst.msk [vmem:[%s240 + $0x10] sm:$0xf] %vm4242, %v4182
      %4248 = vst.msk [vmem:[%s240 + $0x14] sm:$0xf] %vm4242, %v4183
      %4249 = vst.msk [vmem:[%s240 + $0x18] sm:$0xf] %vm4242, %v4184
      %4250 = vst.msk [vmem:[%s240 + $0x1c] sm:$0xf] %vm4242, %v4185
      %4251 = vst.msk [vmem:[%s240 + $0x20] sm:$0xf] %vm4242, %v4186
      %4252 = vst.msk [vmem:[%s240 + $0x24] sm:$0xf] %vm4242, %v4187
      %4253 = vst.msk [vmem:[%s240 + $0x28] sm:$0xf] %vm4242, %v4188
      %4254 = vst.msk [vmem:[%s240 + $0x2c] sm:$0xf] %vm4242, %v4189
      %4255 = vst.msk [vmem:[%s240 + $0x30] sm:$0xf] %vm4242, %v4190
      %4256 = vst.msk [vmem:[%s240 + $0x34] sm:$0xf] %vm4242, %v4191
      %4257 = vst.msk [vmem:[%s240 + $0x38] sm:$0xf] %vm4242, %v4192
      %4258 = vst.msk [vmem:[%s240 + $0x3c] sm:$0xf] %vm4242, %v4193
      %4259 = vst.msk [vmem:[%s240 + $0x40] sm:$0xf] %vm4242, %v4194
      %4260 = vst.msk [vmem:[%s240 + $0x44] sm:$0xf] %vm4242, %v4195
      %4261 = vst.msk [vmem:[%s240 + $0x48] sm:$0xf] %vm4242, %v4196
      %4262 = vst.msk [vmem:[%s240 + $0x4c] sm:$0xf] %vm4242, %v4197
      %4263 = vst.msk [vmem:[%s240 + $0x50] sm:$0xf] %vm4242, %v4198
      %4264 = vst.msk [vmem:[%s240 + $0x54] sm:$0xf] %vm4242, %v4199
      %4265 = vst.msk [vmem:[%s240 + $0x58] sm:$0xf] %vm4242, %v4200
      %4266 = vst.msk [vmem:[%s240 + $0x5c] sm:$0xf] %vm4242, %v4201
      %4267 = vst.msk [vmem:[%s240 + $0x60] sm:$0xf] %vm4242, %v4202
      %4268 = vst.msk [vmem:[%s240 + $0x64] sm:$0xf] %vm4242, %v4203
      %4269 = vst.msk [vmem:[%s240 + $0x68] sm:$0xf] %vm4242, %v4204
      %4270 = vst.msk [vmem:[%s240 + $0x6c] sm:$0xf] %vm4242, %v4205
      %4271 = vst.msk [vmem:[%s240 + $0x70] sm:$0xf] %vm4242, %v4206
      %4272 = vst.msk [vmem:[%s240 + $0x74] sm:$0xf] %vm4242, %v4207
      %4273 = vst.msk [vmem:[%s240 + $0x78] sm:$0xf] %vm4242, %v4208
      %4274 = vst.msk [vmem:[%s240 + $0x7c] sm:$0xf] %vm4242, %v4209
      %s4275 = smul.u32 16, %s21
      %p4276 = scmp.lt.s32.totalorder %s19, 1
      %s4277 = scalar_select %p4276, %s19, 1
      %p4278 = scmp.lt.s32.totalorder %s4275, 15
      %s4279 = scalar_select %p4278, %s4275, 15
      %p4280 = scmp.lt.s32.totalorder %s20, 0
      %s4281 = scalar_select %p4280, %s20, 0
      %s4282 = smul.addr %s4279, 2
      %s4283 = sadd.s32 %s4281, %s4282
      %s4284 = smul.addr %s4277, 32
      %s4285 = sadd.s32 %s4283, %s4284
      %s4286 = smul.addr %s4285, 4
      %s4287 = scalar_lea.vmem %s3, %s4286
      // Predicated region
      $region33: #{bottleneck_forward.5} parent=31 // pred_check
        %p4288 = pneg %p133
      $region34: #{bottleneck_forward.5} parent=31 // pred_check_branch
        %4290 = sbr.rel (%p4288) target = $region36
      $region35: #{bottleneck_forward.5} parent=31 // pred_region
        %s4291 = smul.u32 16, %s21
      $region36: #{bottleneck_forward.5} parent=31 // pred_fallthru
        _
    $region32: #{bottleneck_forward.5} parent=5 // pred_fallthru
      _
    %p4292 = scmp.le.s32.totalorder 2, %s9
    // Predicated region
    $region37: #{bottleneck_forward.5} parent=5 // pred_check
      %p4293 = pneg %p4292
    $region38: #{bottleneck_forward.5} parent=5 // pred_check_branch
      %4295 = sbr.rel (%p4293) target = $region40
    $region39: #{bottleneck_forward.5} parent=5 // pred_region
      %s4296 = ssub.s32 %s9, 2
      // Predicated region
      $region41: #{bottleneck_forward.5} parent=39 // pred_check
        %p4297 = pneg %p139
      $region42: #{bottleneck_forward.5} parent=39 // pred_check_branch
        %4299 = sbr.rel (%p4297) target = $region44
      $region43: #{bottleneck_forward.5} parent=39 // pred_region
        %s4300 = smul.u32 16, %s24
        %p4301 = scmp.lt.s32.totalorder %s22, 1
        %s4302 = scalar_select %p4301, %s22, 1
        %p4303 = scmp.lt.s32.totalorder %s4300, 15
        %s4304 = scalar_select %p4303, %s4300, 15
        %p4305 = scmp.lt.s32.totalorder %s23, 0
        %s4306 = scalar_select %p4305, %s23, 0
        %s4307 = smul.addr %s4304, 2
        %s4308 = sadd.s32 %s4306, %s4307
        %s4309 = smul.addr %s4302, 32
        %s4310 = sadd.s32 %s4308, %s4309
        %s4311 = smul.addr %s4310, 4
        %s4312 = scalar_lea.vmem %s3, %s4311
      $region44: #{bottleneck_forward.5} parent=39 // pred_fallthru
        _
    $region40: #{bottleneck_forward.5} parent=5 // pred_fallthru
      _
  $region6: #{bottleneck_forward.5} parent=0 // loop_footer
    %s13 = sadd.s32 1, %s9
  $region7: #{bottleneck_forward.5} parent=0 // loop_footer_branch
    %8 = sbr.rel target = $region3
  $region8: #{bottleneck_forward.5} parent=0 // loop_exit
    _

</llo_original>
